<compile_context>
chip_gen: v6e
topology: v6e:2x2x1
jax: 0.10.0
libtpu: 0.0.40
codegen_flags: <defaults>
</compile_context>

<pallas_src>
import jax
import jax.numpy as jnp
from jax import lax
from jax.experimental import pallas as pl
from jax.experimental.pallas import tpu as pltpu

# ----------------------------- problem sizes --------------------------------
N = 2            # batch
C_IN = 8         # in_channels (small synthetic size)
C0 = 128         # conv0 output channels (fixed by module)
C1 = 768         # conv1 output channels (fixed by module)
NUM_CLASSES = 10
H = W = 17       # input spatial size; avg_pool(5,3) -> 5x5, conv1(5x5) -> 1x1
P_HW = 5         # pooled spatial size
NUM_PATCH = P_HW * P_HW  # 25


def _build_pool_matrix():
    """(25, 289) matrix M with M[p, k] = 1/25 if flat pixel k lies in the 5x5
    window of pooled position p (stride 3), else 0.  pooled = M @ x_flat."""
    rows = []
    for i in range(P_HW):
        for j in range(P_HW):
            row = [0.0] * (H * W)
            for di in range(5):
                for dj in range(5):
                    row[(3 * i + di) * W + (3 * j + dj)] = 1.0 / 25.0
            rows.append(row)
    return jnp.asarray(rows, dtype=jnp.float32)


POOL_MAT = _build_pool_matrix()     # (25, 289) f32 constant


# ------------------------------- kernel -------------------------------------
def inception_aux_kernel(x_ref, p_ref, w0_ref, w1_ref, wfc_ref, b_ref, out_ref):
    # x_ref  : (N, 289, C_IN)  f32   NHWC with H*W flattened
    # p_ref  : (25, 289)       f32   avg-pool matrix (1/25 folded in)
    # w0_ref : (C_IN, 128)     bf16  conv0 1x1 weight, (in, out)
    # w1_ref : (3200, 768)     bf16  conv1 5x5 weight, row = p*128 + c_in
    # wfc_ref: (768, NUM_CLASSES) bf16
    # b_ref  : (1, NUM_CLASSES)   f32
    # out_ref: (N, NUM_CLASSES)   f32
    n_batch = x_ref.shape[0]
    pool_m = p_ref[...]                                   # (25, 289)

    # --- avg_pool2d(k=5, s=3) as one small matmul per batch element (f32)
    pooled_list = []
    for n in range(n_batch):                              # tiny unrolled loop (N=2)
        x_n = x_ref[n]                                    # (289, C_IN)
        pooled_list.append(
            jnp.dot(pool_m, x_n, preferred_element_type=jnp.float32))  # (25, C_IN)
    pooled = jnp.concatenate(pooled_list, axis=0)         # (N*25, C_IN)

    # --- conv0: 1x1 conv == channel matmul (bf16 on MXU, f32 accumulate) + ReLU
    a0 = jnp.dot(pooled.astype(jnp.bfloat16), w0_ref[...],
                 preferred_element_type=jnp.float32)      # (N*25, 128)
    a0 = jnp.maximum(a0, 0.0)

    # --- conv1: 5x5 valid conv on a 5x5 map == ONE (N, 3200) @ (3200, 768) matmul
    a0_flat = a0.reshape(n_batch, NUM_PATCH * C0)         # (N, 3200), col = p*128 + c
    a1 = jnp.dot(a0_flat.astype(jnp.bfloat16), w1_ref[...],
                 preferred_element_type=jnp.float32)      # (N, 768)
    a1 = jnp.maximum(a1, 0.0)

    # --- fc: (N, 768) @ (768, num_classes) + bias
    y = jnp.dot(a1.astype(jnp.bfloat16), wfc_ref[...],
                preferred_element_type=jnp.float32) + b_ref[...]
    out_ref[...] = y.astype(out_ref.dtype)                # (N, NUM_CLASSES)


# ------------------------------- wrapper -------------------------------------
def inception_aux_forward(x_nchw, w0, w1, wfc, bfc):
    """x_nchw: (N, C_IN, 17, 17); weights in PyTorch shapes:
       w0 (128, C_IN, 1, 1), w1 (768, 128, 5, 5), wfc (nc, 768), bfc (nc,)."""
    n = x_nchw.shape[0]

    # glue: layout plumbing only (transpose / flatten / dtype cast)
    x_flat = jnp.transpose(x_nchw, (0, 2, 3, 1)).reshape(n, H * W, C_IN)
    x_flat = x_flat.astype(jnp.float32)
    w0_k = jnp.transpose(w0.reshape(C0, C_IN), (1, 0)).astype(jnp.bfloat16)   # (C_IN,128)
    # row index of w1_k = (kh*5 + kw)*128 + c_in  -> matches a0_flat column order
    w1_k = jnp.transpose(w1, (2, 3, 1, 0)).reshape(NUM_PATCH * C0, C1)
    w1_k = w1_k.astype(jnp.bfloat16)                                          # (3200,768)
    wfc_k = jnp.transpose(wfc, (1, 0)).astype(jnp.bfloat16)                   # (768, nc)
    b_k = bfc.reshape(1, NUM_CLASSES).astype(jnp.float32)

    vmem_spec = pl.BlockSpec(memory_space=pltpu.MemorySpace.VMEM)
    out = pl.pallas_call(
        inception_aux_kernel,
        out_shape=jax.ShapeDtypeStruct((n, NUM_CLASSES), jnp.float32),
        # single invocation (no grid): every operand is resident in VMEM exactly
        # once -> no double-buffered copies of the 4.7 MiB bf16 conv1 weight.
        in_specs=[vmem_spec] * 6,
        out_specs=vmem_spec,
        compiler_params=pltpu.CompilerParams(
            vmem_limit_bytes=16 * 1024 * 1024,   # actual footprint ~6 MiB; < 64 MiB (v7x)
        ),
    )(x_flat, POOL_MAT, w0_k, w1_k, wfc_k, b_k)
    return out


# ------------------------- plain-JAX reference -------------------------------
def reference_forward(x_nchw, w0, w1, wfc, bfc):
    p = lax.reduce_window(x_nchw, 0.0, lax.add,
                          (1, 1, 5, 5), (1, 1, 3, 3), "VALID") / 25.0
    c0 = lax.conv_general_dilated(p, w0, (1, 1), "VALID",
                                  dimension_numbers=("NCHW", "OIHW", "NCHW"),
                                  precision=lax.Precision.HIGHEST)
    c0 = jnp.maximum(c0, 0.0)
    c1 = lax.conv_general_dilated(c0, w1, (1, 1), "VALID",
                                  dimension_numbers=("NCHW", "OIHW", "NCHW"),
                                  precision=lax.Precision.HIGHEST)
    c1 = jnp.maximum(c1, 0.0)
    flat = c1.reshape(c1.shape[0], -1)                       # (N, 768)
    return jnp.dot(flat, wfc.T, precision=lax.Precision.HIGHEST) + bfc


# --------------------------------- main ---------------------------------------
if __name__ == "__main__":
    key = jax.random.PRNGKey(0)
    kx, k0, k1, k2, k3 = jax.random.split(key, 5)

    # deterministic synthetic parameters (PyTorch shapes; conv bias=False)
    x = jax.random.normal(kx, (N, C_IN, H, W), jnp.float32)
    w0 = jax.random.normal(k0, (C0, C_IN, 1, 1), jnp.float32) * 0.1
    w1 = jax.random.normal(k1, (C1, C0, 5, 5), jnp.float32) * 0.03
    wfc = jax.random.normal(k2, (NUM_CLASSES, C1), jnp.float32) * 0.05
    bfc = jax.random.normal(k3, (NUM_CLASSES,), jnp.float32) * 0.05
    # TODO(synk): BasicConv2d's optional BatchNorm branch is unused (with_bn=False),
    # so it is intentionally not implemented.

    out = inception_aux_forward(x, w0, w1, wfc, bfc)
    out = jax.block_until_ready(out)

    ref = reference_forward(x, w0, w1, wfc, bfc)
    assert out.shape == (N, NUM_CLASSES)
    assert jnp.allclose(out, ref, rtol=5e-2, atol=5e-3), (
        f"mismatch: max abs err {float(jnp.max(jnp.abs(out - ref)))}")

    print("KERNEL_OK")
</pallas_src>

<mosaic_0001>
module attributes {stable_mosaic.version = 11 : i64} {
  func.func @inception_aux_kernel(%arg0: memref<2x289x8xf32, #tpu.memory_space<vmem>>, %arg1: memref<25x289xf32, #tpu.memory_space<vmem>>, %arg2: memref<8x128xbf16, #tpu.memory_space<vmem>>, %arg3: memref<3200x768xbf16, #tpu.memory_space<vmem>>, %arg4: memref<768x10xbf16, #tpu.memory_space<vmem>>, %arg5: memref<1x10xf32, #tpu.memory_space<vmem>>, %arg6: memref<2x10xf32, #tpu.memory_space<vmem>>) attributes {dimension_semantics = [], scalar_prefetch = 0 : i64, scratch_operands = 0 : i64, tpu.core_type = #tpu.core_type<tc>} {
    %c0 = arith.constant 0 : index
    %c0_0 = arith.constant 0 : index
    %0 = vector.load %arg1[%c0, %c0_0] : memref<25x289xf32, #tpu.memory_space<vmem>>, vector<25x289xf32>
    %c0_1 = arith.constant 0 : index
    %c0_2 = arith.constant 0 : index
    %c0_3 = arith.constant 0 : index
    %1 = vector.load %arg0[%c0_1, %c0_2, %c0_3] : memref<2x289x8xf32, #tpu.memory_space<vmem>>, vector<1x289x8xf32>
    %2 = vector.shape_cast %1 : vector<1x289x8xf32> to vector<289x8xf32>
    %cst = arith.constant dense<0.000000e+00> : vector<25x8xf32>
    %3 = tpu.matmul %0, %2, %cst {dimension_numbers = #tpu.dot_dimension_numbers<[1], [0], [0], [1], [0, 0, 1, 1], [], []>} : vector<25x289xf32>, vector<289x8xf32>, vector<25x8xf32> -> vector<25x8xf32>
    %c1 = arith.constant 1 : index
    %c0_4 = arith.constant 0 : index
    %c0_5 = arith.constant 0 : index
    %4 = vector.load %arg0[%c1, %c0_4, %c0_5] : memref<2x289x8xf32, #tpu.memory_space<vmem>>, vector<1x289x8xf32>
    %5 = vector.shape_cast %4 : vector<1x289x8xf32> to vector<289x8xf32>
    %cst_6 = arith.constant dense<0.000000e+00> : vector<25x8xf32>
    %6 = tpu.matmul %0, %5, %cst_6 {dimension_numbers = #tpu.dot_dimension_numbers<[1], [0], [0], [1], [0, 0, 1, 1], [], []>} : vector<25x289xf32>, vector<289x8xf32>, vector<25x8xf32> -> vector<25x8xf32>
    %7 = tpu.concatenate %3, %6 in 0 : vector<25x8xf32>, vector<25x8xf32> -> vector<50x8xf32>
    %8 = arith.truncf %7 : vector<50x8xf32> to vector<50x8xbf16>
    %c0_7 = arith.constant 0 : index
    %c0_8 = arith.constant 0 : index
    %9 = vector.load %arg2[%c0_7, %c0_8] : memref<8x128xbf16, #tpu.memory_space<vmem>>, vector<8x128xbf16>
    %cst_9 = arith.constant dense<0.000000e+00> : vector<50x128xf32>
    %10 = tpu.matmul %8, %9, %cst_9 {dimension_numbers = #tpu.dot_dimension_numbers<[1], [0], [0], [1], [0, 0, 1, 1], [], []>} : vector<50x8xbf16>, vector<8x128xbf16>, vector<50x128xf32> -> vector<50x128xf32>
    %cst_10 = arith.constant 0.000000e+00 : f32
    %11 = vector.broadcast %cst_10 : f32 to vector<50x128xf32>
    %12 = arith.maximumf %10, %11 : vector<50x128xf32>
    %13 = vector.shape_cast %12 : vector<50x128xf32> to vector<2x3200xf32>
    %14 = arith.truncf %13 : vector<2x3200xf32> to vector<2x3200xbf16>
    %c0_11 = arith.constant 0 : index
    %c0_12 = arith.constant 0 : index
    %15 = vector.load %arg3[%c0_11, %c0_12] : memref<3200x768xbf16, #tpu.memory_space<vmem>>, vector<3200x768xbf16>
    %cst_13 = arith.constant dense<0.000000e+00> : vector<2x768xf32>
    %16 = tpu.matmul %14, %15, %cst_13 {dimension_numbers = #tpu.dot_dimension_numbers<[1], [0], [0], [1], [0, 0, 1, 1], [], []>} : vector<2x3200xbf16>, vector<3200x768xbf16>, vector<2x768xf32> -> vector<2x768xf32>
    %cst_14 = arith.constant 0.000000e+00 : f32
    %17 = vector.broadcast %cst_14 : f32 to vector<2x768xf32>
    %18 = arith.maximumf %16, %17 : vector<2x768xf32>
    %19 = arith.truncf %18 : vector<2x768xf32> to vector<2x768xbf16>
    %c0_15 = arith.constant 0 : index
    %c0_16 = arith.constant 0 : index
    %20 = vector.load %arg4[%c0_15, %c0_16] : memref<768x10xbf16, #tpu.memory_space<vmem>>, vector<768x10xbf16>
    %cst_17 = arith.constant dense<0.000000e+00> : vector<2x10xf32>
    %21 = tpu.matmul %19, %20, %cst_17 {dimension_numbers = #tpu.dot_dimension_numbers<[1], [0], [0], [1], [0, 0, 1, 1], [], []>} : vector<2x768xbf16>, vector<768x10xbf16>, vector<2x10xf32> -> vector<2x10xf32>
    %c0_18 = arith.constant 0 : index
    %c0_19 = arith.constant 0 : index
    %22 = vector.load %arg5[%c0_18, %c0_19] : memref<1x10xf32, #tpu.memory_space<vmem>>, vector<1x10xf32>
    %23 = vector.broadcast %22 : vector<1x10xf32> to vector<2x10xf32>
    %24 = arith.addf %21, %23 : vector<2x10xf32>
    %c0_20 = arith.constant 0 : index
    %c0_21 = arith.constant 0 : index
    %25 = vector.load %arg6[%c0_20, %c0_21] : memref<2x10xf32, #tpu.memory_space<vmem>>, vector<2x10xf32>
    tpu.vector_store %arg6[%c0_20, %c0_21], %24 {strides = array<i32>} : memref<2x10xf32, #tpu.memory_space<vmem>>, vector<2x10xf32>,
    return
  }
}

</mosaic_0001>

<llo_original>
// kernel: tpu_custom_call.1
$region0: #{tpu_custom_call.1}
  #allocation0 [shape = 'u32[]', space=smem, size = 0x4, offset = 0x4, fixed_abs, tag = 'smem constant byte address 0x4 - core index']
  #allocation1 [shape = 'u32[144,128]{1,0:T(1,128)}', space=vmem, size = 0x12000, scoped, tag = 'internal scratch']
  %s0 = inlined_call_operand.vmem [shape: f32[2,289,8], index: 0, kind: input, shape index: {}]
  %s1 = inlined_call_operand.hbm [shape: f32[25,289], index: 1, kind: input, shape index: {}]
  %s2 = inlined_call_operand.hbm [shape: bf16[8,128], index: 2, kind: input, shape index: {}]
  %s3 = inlined_call_operand.hbm [shape: bf16[3200,768], index: 3, kind: input, shape index: {}]
  %s4 = inlined_call_operand.vmem [shape: bf16[768,10], index: 4, kind: input, shape index: {}]
  %s5 = inlined_call_operand.hbm [shape: f32[1,10], index: 5, kind: input, shape index: {}]
  %s6 = inlined_call_operand.hbm [shape: f32[2,10], index: 6, kind: output, shape index: {}]
  %s7 = sld [smem:[#allocation0]]
  $region50: #{tpu_custom_call.1} parent=0
    _
  %s9 = ssub.s32 1, %s7
  %s10 = scalar_select 0, %s9, %s7
  $region1: #{tpu_custom_call.1} parent=0
    #allocation2 [shape = 'u8[49152]{0}', space=vmem, size = 0xc000, scoped, tag = 'input window, operand 1, single buffered']
    #allocation3 [shape = 's32[1]{0}', space=sflag, size = 0x4, scoped, tag = 'scoped memory for tpu_custom_call.1']
    #allocation4 [shape = 's32[1]{0}', space=sflag, size = 0x4, scoped, tag = 'scoped memory for tpu_custom_call.1']
    #allocation5 [shape = 'u8[2048]{0}', space=vmem, size = 0x800, scoped, tag = 'input window, operand 2, single buffered']
    #allocation6 [shape = 's32[1]{0}', space=sflag, size = 0x4, scoped, tag = 'scoped memory for tpu_custom_call.1']
    #allocation7 [shape = 'u8[4915200]{0}', space=vmem, size = 0x4b0000, scoped, tag = 'input window, operand 3, single buffered']
    #allocation8 [shape = 'u8[512]{0}', space=vmem, size = 0x400, scoped, tag = 'input window, operand 5, single buffered']
    #allocation9 [shape = 's32[1]{0}', space=sflag, size = 0x4, scoped, tag = 'scoped memory for tpu_custom_call.1']
    #allocation10 [shape = 'u8[1024]{0}', space=vmem, size = 0x400, scoped, tag = 'output window, operand 0, single buffered']
    %11 = vsyncpa [#allocation3], 0
    %12 = vsyncpa [#allocation6], 0
    %13 = vsyncpa [#allocation9], 0
    %14 = vsyncpa [#allocation4], 0
    // Predicated region
    $region2: #{tpu_custom_call.1} parent=1 // pred_check
      _
    $region3: #{tpu_custom_call.1} parent=1 // pred_check_branch
      %16 = sbr.rel (0) target = $region5
    $region4: #{tpu_custom_call.1} parent=1 // pred_region
      _
    $region5: #{tpu_custom_call.1} parent=1 // pred_fallthru
      _
    // Predicated region
    $region6: #{tpu_custom_call.1} parent=1 // pred_check
      _
    $region7: #{tpu_custom_call.1} parent=1 // pred_check_branch
      %18 = sbr.rel (0) target = $region9
    $region8: #{tpu_custom_call.1} parent=1 // pred_region
      %s20 = ssub.s32 1536, 1536
      %21 = vsyncadd [#allocation3], %s20
      %s22 = sshll.u32 [#allocation2], 4
      %s23 = int_to_ptr.vmem [resolvable:$true] %s22
      %28 = dma.hbm_to_vmem [thread:$0]  %s1, 1536, %s23, [#allocation3], 384, 384, 24
    $region9: #{tpu_custom_call.1} parent=1 // pred_fallthru
      _
    // Predicated region
    $region10: #{tpu_custom_call.1} parent=1 // pred_check
      _
    $region11: #{tpu_custom_call.1} parent=1 // pred_check_branch
      %30 = sbr.rel (0) target = $region13
    $region12: #{tpu_custom_call.1} parent=1 // pred_region
      %s32 = ssub.s32 64, 64
      %33 = vsyncadd [#allocation6], %s32
      %s35 = sshll.u32 [#allocation5], 4
      %s36 = int_to_ptr.vmem [resolvable:$true] %s35
      %38 = dma.hbm_to_vmem [thread:$0]  %s2, 64, %s36, [#allocation6]
    $region13: #{tpu_custom_call.1} parent=1 // pred_fallthru
      _
    // Predicated region
    $region14: #{tpu_custom_call.1} parent=1 // pred_check
      _
    $region15: #{tpu_custom_call.1} parent=1 // pred_check_branch
      %40 = sbr.rel (0) target = $region17
    $region16: #{tpu_custom_call.1} parent=1 // pred_region
      %s42 = ssub.s32 153600, 153600
      %43 = vsyncadd [#allocation6], %s42
      %s44 = sshll.u32 [#allocation7], 4
      %s45 = int_to_ptr.vmem [resolvable:$true] %s44
      %50 = dma.hbm_to_vmem [thread:$0]  %s3, 153600, %s45, [#allocation6], 384, 384, 24
    $region17: #{tpu_custom_call.1} parent=1 // pred_fallthru
      _
    // Predicated region
    $region18: #{tpu_custom_call.1} parent=1 // pred_check
      _
    $region19: #{tpu_custom_call.1} parent=1 // pred_check_branch
      %52 = sbr.rel (0) target = $region21
    $region20: #{tpu_custom_call.1} parent=1 // pred_region
      _
    $region21: #{tpu_custom_call.1} parent=1 // pred_fallthru
      _
    // Predicated region
    $region22: #{tpu_custom_call.1} parent=1 // pred_check
      _
    $region23: #{tpu_custom_call.1} parent=1 // pred_check_branch
      %54 = sbr.rel (0) target = $region25
    $region24: #{tpu_custom_call.1} parent=1 // pred_region
      %s56 = ssub.s32 16, 16
      %57 = vsyncadd [#allocation9], %s56
      %s59 = sshll.u32 [#allocation8], 4
      %s60 = int_to_ptr.vmem [resolvable:$true] %s59
      %62 = dma.hbm_to_vmem [thread:$0]  %s5, 16, %s60, [#allocation9]
    $region25: #{tpu_custom_call.1} parent=1 // pred_fallthru
      _
    // Predicated region
    $region26: #{tpu_custom_call.1} parent=1 // pred_check
      _
    $region27: #{tpu_custom_call.1} parent=1 // pred_check_branch
      %64 = sbr.rel (0) target = $region29
    $region28: #{tpu_custom_call.1} parent=1 // pred_region
      %65 = dma.done [#allocation3], 1536
    $region29: #{tpu_custom_call.1} parent=1 // pred_fallthru
      _
    // Predicated region
    $region30: #{tpu_custom_call.1} parent=1 // pred_check
      _
    $region31: #{tpu_custom_call.1} parent=1 // pred_check_branch
      %67 = sbr.rel (0) target = $region33
    $region32: #{tpu_custom_call.1} parent=1 // pred_region
      %68 = dma.done [#allocation6], 64
    $region33: #{tpu_custom_call.1} parent=1 // pred_fallthru
      _
    // Predicated region
    $region34: #{tpu_custom_call.1} parent=1 // pred_check
      _
    $region35: #{tpu_custom_call.1} parent=1 // pred_check_branch
      %70 = sbr.rel (0) target = $region37
    $region36: #{tpu_custom_call.1} parent=1 // pred_region
      %71 = dma.done [#allocation6], 153600
    $region37: #{tpu_custom_call.1} parent=1 // pred_fallthru
      _
    // Predicated region
    $region38: #{tpu_custom_call.1} parent=1 // pred_check
      _
    $region39: #{tpu_custom_call.1} parent=1 // pred_check_branch
      %73 = sbr.rel (0) target = $region41
    $region40: #{tpu_custom_call.1} parent=1 // pred_region
      %74 = dma.done [#allocation9], 16
    $region41: #{tpu_custom_call.1} parent=1 // pred_fallthru
      _
    %v76 = vld [vmem:[#allocation2] sm:$0xff]
    %v77 = vld [vmem:[#allocation2 + $0x8] sm:$0xff]
    %v78 = vld [vmem:[#allocation2 + $0x10] sm:$0xff]
    %v79 = vld [vmem:[#allocation2 + $0x18] sm:$0xff]
    %v80 = vld [vmem:[#allocation2 + $0x20] sm:$0xff]
    %v81 = vld [vmem:[#allocation2 + $0x28] sm:$0xff]
    %v82 = vld [vmem:[#allocation2 + $0x30] sm:$0xff]
    %v83 = vld [vmem:[#allocation2 + $0x38] sm:$0xff]
    %v84 = vld [vmem:[#allocation2 + $0x40] sm:$0xff]
    %v85 = vld [vmem:[#allocation2 + $0x48] sm:$0x1]
    %v86 = vld [vmem:[#allocation2 + $0x50] sm:$0x1]
    %v87 = vld [vmem:[#allocation2 + $0x58] sm:$0x1]
    %v88 = vld [vmem:[%s0] sm:$0xff]
    %v89 = vld [vmem:[%s0 + $0x8] sm:$0xff]
    %v90 = vld [vmem:[%s0 + $0x10] sm:$0xff]
    %v91 = vld [vmem:[%s0 + $0x18] sm:$0xff]
    %v92 = vld [vmem:[%s0 + $0x20] sm:$0xff]
    %v93 = vld [vmem:[%s0 + $0x28] sm:$0xff]
    %v94 = vld [vmem:[%s0 + $0x30] sm:$0xff]
    %v95 = vld [vmem:[%s0 + $0x38] sm:$0xff]
    %v96 = vld [vmem:[%s0 + $0x40] sm:$0xff]
    %v97 = vld [vmem:[%s0 + $0x48] sm:$0xff]
    %v98 = vld [vmem:[%s0 + $0x50] sm:$0xff]
    %v99 = vld [vmem:[%s0 + $0x58] sm:$0xff]
    %v100 = vld [vmem:[%s0 + $0x60] sm:$0xff]
    %v101 = vld [vmem:[%s0 + $0x68] sm:$0xff]
    %v102 = vld [vmem:[%s0 + $0x70] sm:$0xff]
    %v103 = vld [vmem:[%s0 + $0x78] sm:$0xff]
    %v104 = vld [vmem:[%s0 + $0x80] sm:$0xff]
    %v105 = vld [vmem:[%s0 + $0x88] sm:$0xff]
    %v106 = vld [vmem:[%s0 + $0x90] sm:$0xff]
    %v107 = vld [vmem:[%s0 + $0x98] sm:$0xff]
    %v108 = vld [vmem:[%s0 + $0xa0] sm:$0xff]
    %v109 = vld [vmem:[%s0 + $0xa8] sm:$0xff]
    %v110 = vld [vmem:[%s0 + $0xb0] sm:$0xff]
    %v111 = vld [vmem:[%s0 + $0xb8] sm:$0xff]
    %v112 = vld [vmem:[%s0 + $0xc0] sm:$0xff]
    %v113 = vld [vmem:[%s0 + $0xc8] sm:$0xff]
    %v114 = vld [vmem:[%s0 + $0xd0] sm:$0xff]
    %v115 = vld [vmem:[%s0 + $0xd8] sm:$0xff]
    %v116 = vld [vmem:[%s0 + $0xe0] sm:$0xff]
    %v117 = vld [vmem:[%s0 + $0xe8] sm:$0xff]
    %v118 = vld [vmem:[%s0 + $0xf0] sm:$0xff]
    %v119 = vld [vmem:[%s0 + $0xf8] sm:$0xff]
    %v120 = vld [vmem:[%s0 + $0x100] sm:$0xff]
    %v121 = vld [vmem:[%s0 + $0x108] sm:$0xff]
    %v122 = vld [vmem:[%s0 + $0x110] sm:$0xff]
    %v123 = vld [vmem:[%s0 + $0x118] sm:$0xff]
    %v124 = vld [vmem:[%s0 + $0x120] sm:$0x1]
    %vm125 = vcmask 269312
    %v127 = vsel %vm125, %v78, 0
    %v130 = vsel %vm125, %v81, 0
    %v133 = vsel %vm125, %v84, 0
    %v136 = vsel %vm125, %v87, 0
    %vm138 = vcmask 1040384
    %v140 = vsel %vm138, %v124, 0
    %142 = vmatprep.subr.mxu0 0.0
    %143 = vmatpush1.msra.mxu0 %v103
    %144 = vmatprep.subr.mxu0 0.0
    %145 = vmatpush1.msra.mxu0 %v102
    %146 = vmatprep.subr.mxu0 0.0
    %147 = vmatpush1.msra.mxu0 %v101
    %148 = vmatprep.subr.mxu0 0.0
    %149 = vmatpush1.msra.mxu0 %v100
    %150 = vmatprep.subr.mxu0 0.0
    %151 = vmatpush1.msra.mxu0 %v99
    %152 = vmatprep.subr.mxu0 0.0
    %153 = vmatpush1.msra.mxu0 %v98
    %154 = vmatprep.subr.mxu0 0.0
    %155 = vmatpush1.msra.mxu0 %v97
    %156 = vmatprep.subr.mxu0 0.0
    %157 = vmatpush1.msra.mxu0 %v96
    %158 = vmatprep.subr.mxu0 0.0
    %159 = vmatpush1.msra.mxu0 %v95
    %160 = vmatprep.subr.mxu0 0.0
    %161 = vmatpush1.msra.mxu0 %v94
    %162 = vmatprep.subr.mxu0 0.0
    %163 = vmatpush1.msra.mxu0 %v93
    %164 = vmatprep.subr.mxu0 0.0
    %165 = vmatpush1.msra.mxu0 %v92
    %166 = vmatprep.subr.mxu0 0.0
    %167 = vmatpush1.msra.mxu0 %v91
    %168 = vmatprep.subr.mxu0 0.0
    %169 = vmatpush1.msra.mxu0 %v90
    %170 = vmatprep.subr.mxu0 0.0
    %171 = vmatpush1.msra.mxu0 %v89
    %172 = vmatprep.subr.mxu0 0.0
    %173 = vmatpush1.msra.mxu0 %v88
    %174 = vmatprep.subr.mxu0 0.0
    %175 = vmatpush2.msra.mxu0 %v119
    %176 = vmatprep.subr.mxu0 0.0
    %177 = vmatpush2.msra.mxu0 %v118
    %178 = vmatprep.subr.mxu0 0.0
    %179 = vmatpush2.msra.mxu0 %v117
    %180 = vmatprep.subr.mxu0 0.0
    %181 = vmatpush2.msra.mxu0 %v116
    %182 = vmatprep.subr.mxu0 0.0
    %183 = vmatpush2.msra.mxu0 %v115
    %184 = vmatprep.subr.mxu0 0.0
    %185 = vmatpush2.msra.mxu0 %v114
    %186 = vmatprep.subr.mxu0 0.0
    %187 = vmatpush2.msra.mxu0 %v113
    %188 = vmatprep.subr.mxu0 0.0
    %189 = vmatpush2.msra.mxu0 %v112
    %190 = vmatprep.subr.mxu0 0.0
    %191 = vmatpush2.msra.mxu0 %v111
    %192 = vmatprep.subr.mxu0 0.0
    %193 = vmatpush2.msra.mxu0 %v110
    %194 = vmatprep.subr.mxu0 0.0
    %195 = vmatpush2.msra.mxu0 %v109
    %196 = vmatprep.subr.mxu0 0.0
    %197 = vmatpush2.msra.mxu0 %v108
    %198 = vmatprep.subr.mxu0 0.0
    %199 = vmatpush2.msra.mxu0 %v107
    %200 = vmatprep.subr.mxu0 0.0
    %201 = vmatpush2.msra.mxu0 %v106
    %202 = vmatprep.subr.mxu0 0.0
    %203 = vmatpush2.msra.mxu0 %v105
    %204 = vmatprep.subr.mxu0 0.0
    %205 = vmatpush2.msra.mxu0 %v104
    %206 = vmatprep.mubr.f32.mxu0 %v77
    %207 = vmatmul.mubr.f32.gmra.mxu0 %v76
    %v208 = vpop.f32.mrf.mxu0
    %v209 = vadd.f32 0.0, %v208
    %v210 = vpop.f32.mrf.mxu0
    %211 = vmatprep.mubr.f32.mxu0 %v80
    %212 = vmatmul.mubr.f32.gmra.mxu0 %v79
    %v213 = vpop.f32.mrf.mxu0
    %v214 = vadd.f32 0.0, %v213
    %v215 = vpop.f32.mrf.mxu0
    %216 = vmatprep.mubr.f32.mxu0 %v83
    %217 = vmatmul.mubr.f32.gmra.mxu0 %v82
    %v218 = vpop.f32.mrf.mxu0
    %v219 = vadd.f32 0.0, %v218
    %v220 = vpop.f32.mrf.mxu0
    %221 = vmatprep.mubr.f32.mxu0 %v86
    %222 = vmatmul.mubr.f32.gmra.mxu0 %v85
    %v223 = vpop.f32.mrf.mxu0
    %v224 = vadd.f32 0.0, %v223
    %v225 = vpop.f32.mrf.mxu0
    %226 = vdwg.mxu0
    %227 = vmatprep.subr.mxu0 0.0
    %228 = vmatpush1.msra.mxu0 0.0
    %229 = vmatprep.subr.mxu0 0.0
    %230 = vmatpush1.msra.mxu0 0.0
    %231 = vmatprep.subr.mxu0 0.0
    %232 = vmatpush1.msra.mxu0 0.0
    %233 = vmatprep.subr.mxu0 0.0
    %234 = vmatpush1.msra.mxu0 0.0
    %235 = vmatprep.subr.mxu0 0.0
    %236 = vmatpush1.msra.mxu0 0.0
    %237 = vmatprep.subr.mxu0 0.0
    %238 = vmatpush1.msra.mxu0 0.0
    %239 = vmatprep.subr.mxu0 0.0
    %240 = vmatpush1.msra.mxu0 0.0
    %241 = vmatprep.subr.mxu0 0.0
    %242 = vmatpush1.msra.mxu0 0.0
    %243 = vmatprep.subr.mxu0 0.0
    %244 = vmatpush1.msra.mxu0 0.0
    %245 = vmatprep.subr.mxu0 0.0
    %246 = vmatpush1.msra.mxu0 0.0
    %247 = vmatprep.subr.mxu0 0.0
    %248 = vmatpush1.msra.mxu0 0.0
    %249 = vmatprep.subr.mxu0 0.0
    %250 = vmatpush1.msra.mxu0 %v140
    %251 = vmatprep.subr.mxu0 0.0
    %252 = vmatpush1.msra.mxu0 %v123
    %253 = vmatprep.subr.mxu0 0.0
    %254 = vmatpush1.msra.mxu0 %v122
    %255 = vmatprep.subr.mxu0 0.0
    %256 = vmatpush1.msra.mxu0 %v121
    %257 = vmatprep.subr.mxu0 0.0
    %258 = vmatpush1.msra.mxu0 %v120
    %259 = vmatprep.subr.mxu0 0.0
    %260 = vmatpush2.msra.mxu0 0.0
    %261 = vmatprep.subr.mxu0 0.0
    %262 = vmatpush2.msra.mxu0 0.0
    %263 = vmatprep.subr.mxu0 0.0
    %264 = vmatpush2.msra.mxu0 0.0
    %265 = vmatprep.subr.mxu0 0.0
    %266 = vmatpush2.msra.mxu0 0.0
    %267 = vmatprep.subr.mxu0 0.0
    %268 = vmatpush2.msra.mxu0 0.0
    %269 = vmatprep.subr.mxu0 0.0
    %270 = vmatpush2.msra.mxu0 0.0
    %271 = vmatprep.subr.mxu0 0.0
    %272 = vmatpush2.msra.mxu0 0.0
    %273 = vmatprep.subr.mxu0 0.0
    %274 = vmatpush2.msra.mxu0 0.0
    %275 = vmatprep.subr.mxu0 0.0
    %276 = vmatpush2.msra.mxu0 0.0
    %277 = vmatprep.subr.mxu0 0.0
    %278 = vmatpush2.msra.mxu0 0.0
    %279 = vmatprep.subr.mxu0 0.0
    %280 = vmatpush2.msra.mxu0 0.0
    %281 = vmatprep.subr.mxu0 0.0
    %282 = vmatpush2.msra.mxu0 0.0
    %283 = vmatprep.subr.mxu0 0.0
    %284 = vmatpush2.msra.mxu0 0.0
    %285 = vmatprep.subr.mxu0 0.0
    %286 = vmatpush2.msra.mxu0 0.0
    %287 = vmatprep.subr.mxu0 0.0
    %288 = vmatpush2.msra.mxu0 0.0
    %289 = vmatprep.subr.mxu0 0.0
    %290 = vmatpush2.msra.mxu0 0.0
    %291 = vmatprep.mubr.f32.mxu0 0.0
    %292 = vmatmul.mubr.f32.gmra.mxu0 %v127
    %v293 = vpop.f32.mrf.mxu0
    %v294 = vadd.f32 %v209, %v293
    %v295 = vpop.f32.mrf.mxu0
    %296 = vmatprep.mubr.f32.mxu0 0.0
    %297 = vmatmul.mubr.f32.gmra.mxu0 %v130
    %v298 = vpop.f32.mrf.mxu0
    %v299 = vadd.f32 %v214, %v298
    %v300 = vpop.f32.mrf.mxu0
    %301 = vmatprep.mubr.f32.mxu0 0.0
    %302 = vmatmul.mubr.f32.gmra.mxu0 %v133
    %v303 = vpop.f32.mrf.mxu0
    %v304 = vadd.f32 %v219, %v303
    %v305 = vpop.f32.mrf.mxu0
    %306 = vmatprep.mubr.f32.mxu0 0.0
    %307 = vmatmul.mubr.f32.gmra.mxu0 %v136
    %v308 = vpop.f32.mrf.mxu0
    %v309 = vadd.f32 %v224, %v308
    %v310 = vpop.f32.mrf.mxu0
    %311 = vdwg.mxu0
    %s312 = scalar_lea.vmem %s0, 296
    %v313 = vld [vmem:[%s312] sm:$0xff]
    %v314 = vld [vmem:[%s312 + $0x8] sm:$0xff]
    %v315 = vld [vmem:[%s312 + $0x10] sm:$0xff]
    %v316 = vld [vmem:[%s312 + $0x18] sm:$0xff]
    %v317 = vld [vmem:[%s312 + $0x20] sm:$0xff]
    %v318 = vld [vmem:[%s312 + $0x28] sm:$0xff]
    %v319 = vld [vmem:[%s312 + $0x30] sm:$0xff]
    %v320 = vld [vmem:[%s312 + $0x38] sm:$0xff]
    %v321 = vld [vmem:[%s312 + $0x40] sm:$0xff]
    %v322 = vld [vmem:[%s312 + $0x48] sm:$0xff]
    %v323 = vld [vmem:[%s312 + $0x50] sm:$0xff]
    %v324 = vld [vmem:[%s312 + $0x58] sm:$0xff]
    %v325 = vld [vmem:[%s312 + $0x60] sm:$0xff]
    %v326 = vld [vmem:[%s312 + $0x68] sm:$0xff]
    %v327 = vld [vmem:[%s312 + $0x70] sm:$0xff]
    %v328 = vld [vmem:[%s312 + $0x78] sm:$0xff]
    %v329 = vld [vmem:[%s312 + $0x80] sm:$0xff]
    %v330 = vld [vmem:[%s312 + $0x88] sm:$0xff]
    %v331 = vld [vmem:[%s312 + $0x90] sm:$0xff]
    %v332 = vld [vmem:[%s312 + $0x98] sm:$0xff]
    %v333 = vld [vmem:[%s312 + $0xa0] sm:$0xff]
    %v334 = vld [vmem:[%s312 + $0xa8] sm:$0xff]
    %v335 = vld [vmem:[%s312 + $0xb0] sm:$0xff]
    %v336 = vld [vmem:[%s312 + $0xb8] sm:$0xff]
    %v337 = vld [vmem:[%s312 + $0xc0] sm:$0xff]
    %v338 = vld [vmem:[%s312 + $0xc8] sm:$0xff]
    %v339 = vld [vmem:[%s312 + $0xd0] sm:$0xff]
    %v340 = vld [vmem:[%s312 + $0xd8] sm:$0xff]
    %v341 = vld [vmem:[%s312 + $0xe0] sm:$0xff]
    %v342 = vld [vmem:[%s312 + $0xe8] sm:$0xff]
    %v343 = vld [vmem:[%s312 + $0xf0] sm:$0xff]
    %v344 = vld [vmem:[%s312 + $0xf8] sm:$0xff]
    %v345 = vld [vmem:[%s312 + $0x100] sm:$0xff]
    %v346 = vld [vmem:[%s312 + $0x108] sm:$0xff]
    %v347 = vld [vmem:[%s312 + $0x110] sm:$0xff]
    %v348 = vld [vmem:[%s312 + $0x118] sm:$0xff]
    %v349 = vld [vmem:[%s312 + $0x120] sm:$0x1]
    %v351 = vsel %vm138, %v349, 0
    %353 = vmatprep.subr.mxu0 0.0
    %354 = vmatpush1.msra.mxu0 %v328
    %355 = vmatprep.subr.mxu0 0.0
    %356 = vmatpush1.msra.mxu0 %v327
    %357 = vmatprep.subr.mxu0 0.0
    %358 = vmatpush1.msra.mxu0 %v326
    %359 = vmatprep.subr.mxu0 0.0
    %360 = vmatpush1.msra.mxu0 %v325
    %361 = vmatprep.subr.mxu0 0.0
    %362 = vmatpush1.msra.mxu0 %v324
    %363 = vmatprep.subr.mxu0 0.0
    %364 = vmatpush1.msra.mxu0 %v323
    %365 = vmatprep.subr.mxu0 0.0
    %366 = vmatpush1.msra.mxu0 %v322
    %367 = vmatprep.subr.mxu0 0.0
    %368 = vmatpush1.msra.mxu0 %v321
    %369 = vmatprep.subr.mxu0 0.0
    %370 = vmatpush1.msra.mxu0 %v320
    %371 = vmatprep.subr.mxu0 0.0
    %372 = vmatpush1.msra.mxu0 %v319
    %373 = vmatprep.subr.mxu0 0.0
    %374 = vmatpush1.msra.mxu0 %v318
    %375 = vmatprep.subr.mxu0 0.0
    %376 = vmatpush1.msra.mxu0 %v317
    %377 = vmatprep.subr.mxu0 0.0
    %378 = vmatpush1.msra.mxu0 %v316
    %379 = vmatprep.subr.mxu0 0.0
    %380 = vmatpush1.msra.mxu0 %v315
    %381 = vmatprep.subr.mxu0 0.0
    %382 = vmatpush1.msra.mxu0 %v314
    %383 = vmatprep.subr.mxu0 0.0
    %384 = vmatpush1.msra.mxu0 %v313
    %385 = vmatprep.subr.mxu0 0.0
    %386 = vmatpush2.msra.mxu0 %v344
    %387 = vmatprep.subr.mxu0 0.0
    %388 = vmatpush2.msra.mxu0 %v343
    %389 = vmatprep.subr.mxu0 0.0
    %390 = vmatpush2.msra.mxu0 %v342
    %391 = vmatprep.subr.mxu0 0.0
    %392 = vmatpush2.msra.mxu0 %v341
    %393 = vmatprep.subr.mxu0 0.0
    %394 = vmatpush2.msra.mxu0 %v340
    %395 = vmatprep.subr.mxu0 0.0
    %396 = vmatpush2.msra.mxu0 %v339
    %397 = vmatprep.subr.mxu0 0.0
    %398 = vmatpush2.msra.mxu0 %v338
    %399 = vmatprep.subr.mxu0 0.0
    %400 = vmatpush2.msra.mxu0 %v337
    %401 = vmatprep.subr.mxu0 0.0
    %402 = vmatpush2.msra.mxu0 %v336
    %403 = vmatprep.subr.mxu0 0.0
    %404 = vmatpush2.msra.mxu0 %v335
    %405 = vmatprep.subr.mxu0 0.0
    %406 = vmatpush2.msra.mxu0 %v334
    %407 = vmatprep.subr.mxu0 0.0
    %408 = vmatpush2.msra.mxu0 %v333
    %409 = vmatprep.subr.mxu0 0.0
    %410 = vmatpush2.msra.mxu0 %v332
    %411 = vmatprep.subr.mxu0 0.0
    %412 = vmatpush2.msra.mxu0 %v331
    %413 = vmatprep.subr.mxu0 0.0
    %414 = vmatpush2.msra.mxu0 %v330
    %415 = vmatprep.subr.mxu0 0.0
    %416 = vmatpush2.msra.mxu0 %v329
    %417 = vmatprep.mubr.f32.mxu0 %v77
    %418 = vmatmul.mubr.f32.gmra.mxu0 %v76
    %v419 = vpop.f32.mrf.mxu0
    %v420 = vadd.f32 0.0, %v419
    %v421 = vpop.f32.mrf.mxu0
    %422 = vmatprep.mubr.f32.mxu0 %v80
    %423 = vmatmul.mubr.f32.gmra.mxu0 %v79
    %v424 = vpop.f32.mrf.mxu0
    %v425 = vadd.f32 0.0, %v424
    %v426 = vpop.f32.mrf.mxu0
    %427 = vmatprep.mubr.f32.mxu0 %v83
    %428 = vmatmul.mubr.f32.gmra.mxu0 %v82
    %v429 = vpop.f32.mrf.mxu0
    %v430 = vadd.f32 0.0, %v429
    %v431 = vpop.f32.mrf.mxu0
    %432 = vmatprep.mubr.f32.mxu0 %v86
    %433 = vmatmul.mubr.f32.gmra.mxu0 %v85
    %v434 = vpop.f32.mrf.mxu0
    %v435 = vadd.f32 0.0, %v434
    %v436 = vpop.f32.mrf.mxu0
    %437 = vdwg.mxu0
    %438 = vmatprep.subr.mxu0 0.0
    %439 = vmatpush1.msra.mxu0 0.0
    %440 = vmatprep.subr.mxu0 0.0
    %441 = vmatpush1.msra.mxu0 0.0
    %442 = vmatprep.subr.mxu0 0.0
    %443 = vmatpush1.msra.mxu0 0.0
    %444 = vmatprep.subr.mxu0 0.0
    %445 = vmatpush1.msra.mxu0 0.0
    %446 = vmatprep.subr.mxu0 0.0
    %447 = vmatpush1.msra.mxu0 0.0
    %448 = vmatprep.subr.mxu0 0.0
    %449 = vmatpush1.msra.mxu0 0.0
    %450 = vmatprep.subr.mxu0 0.0
    %451 = vmatpush1.msra.mxu0 0.0
    %452 = vmatprep.subr.mxu0 0.0
    %453 = vmatpush1.msra.mxu0 0.0
    %454 = vmatprep.subr.mxu0 0.0
    %455 = vmatpush1.msra.mxu0 0.0
    %456 = vmatprep.subr.mxu0 0.0
    %457 = vmatpush1.msra.mxu0 0.0
    %458 = vmatprep.subr.mxu0 0.0
    %459 = vmatpush1.msra.mxu0 0.0
    %460 = vmatprep.subr.mxu0 0.0
    %461 = vmatpush1.msra.mxu0 %v351
    %462 = vmatprep.subr.mxu0 0.0
    %463 = vmatpush1.msra.mxu0 %v348
    %464 = vmatprep.subr.mxu0 0.0
    %465 = vmatpush1.msra.mxu0 %v347
    %466 = vmatprep.subr.mxu0 0.0
    %467 = vmatpush1.msra.mxu0 %v346
    %468 = vmatprep.subr.mxu0 0.0
    %469 = vmatpush1.msra.mxu0 %v345
    %470 = vmatprep.subr.mxu0 0.0
    %471 = vmatpush2.msra.mxu0 0.0
    %472 = vmatprep.subr.mxu0 0.0
    %473 = vmatpush2.msra.mxu0 0.0
    %474 = vmatprep.subr.mxu0 0.0
    %475 = vmatpush2.msra.mxu0 0.0
    %476 = vmatprep.subr.mxu0 0.0
    %477 = vmatpush2.msra.mxu0 0.0
    %478 = vmatprep.subr.mxu0 0.0
    %479 = vmatpush2.msra.mxu0 0.0
    %480 = vmatprep.subr.mxu0 0.0
    %481 = vmatpush2.msra.mxu0 0.0
    %482 = vmatprep.subr.mxu0 0.0
    %483 = vmatpush2.msra.mxu0 0.0
    %484 = vmatprep.subr.mxu0 0.0
    %485 = vmatpush2.msra.mxu0 0.0
    %486 = vmatprep.subr.mxu0 0.0
    %487 = vmatpush2.msra.mxu0 0.0
    %488 = vmatprep.subr.mxu0 0.0
    %489 = vmatpush2.msra.mxu0 0.0
    %490 = vmatprep.subr.mxu0 0.0
    %491 = vmatpush2.msra.mxu0 0.0
    %492 = vmatprep.subr.mxu0 0.0
    %493 = vmatpush2.msra.mxu0 0.0
    %494 = vmatprep.subr.mxu0 0.0
    %495 = vmatpush2.msra.mxu0 0.0
    %496 = vmatprep.subr.mxu0 0.0
    %497 = vmatpush2.msra.mxu0 0.0
    %498 = vmatprep.subr.mxu0 0.0
    %499 = vmatpush2.msra.mxu0 0.0
    %500 = vmatprep.subr.mxu0 0.0
    %501 = vmatpush2.msra.mxu0 0.0
    %502 = vmatprep.mubr.f32.mxu0 0.0
    %503 = vmatmul.mubr.f32.gmra.mxu0 %v127
    %v504 = vpop.f32.mrf.mxu0
    %v505 = vadd.f32 %v420, %v504
    %v506 = vpop.f32.mrf.mxu0
    %507 = vmatprep.mubr.f32.mxu0 0.0
    %508 = vmatmul.mubr.f32.gmra.mxu0 %v130
    %v509 = vpop.f32.mrf.mxu0
    %v510 = vadd.f32 %v425, %v509
    %v511 = vpop.f32.mrf.mxu0
    %512 = vmatprep.mubr.f32.mxu0 0.0
    %513 = vmatmul.mubr.f32.gmra.mxu0 %v133
    %v514 = vpop.f32.mrf.mxu0
    %v515 = vadd.f32 %v430, %v514
    %v516 = vpop.f32.mrf.mxu0
    %517 = vmatprep.mubr.f32.mxu0 0.0
    %518 = vmatmul.mubr.f32.gmra.mxu0 %v136
    %v519 = vpop.f32.mrf.mxu0
    %v520 = vadd.f32 %v435, %v519
    %v521 = vpop.f32.mrf.mxu0
    %522 = vdwg.mxu0
    %v527 = vrot.slane %v505, 7
    %v528 = vrot.slane %v510, 7
    %v529 = vsel %vm138, %v527, %v528
    %v530 = vrot.slane %v515, 7
    %v531 = vsel %vm138, %v528, %v530
    %v532 = vrot.slane %v520, 7
    %v533 = vsel %vm138, %v530, %v532
    %v538 = vsel %vm138, %v309, %v527
    %v539 = vpack.c.bf16 %v299, %v294
    %v540 = vpack.c.bf16 %v538, %v304
    %v541 = vpack.c.bf16 %v531, %v529
    %v542 = vpack.c.bf16 %v533, %v533
    %v543 = vld [vmem:[#allocation5] sm:$0xf]
    %vm544 = vcmask 64512
    %v546 = vsel %vm544, %v539, 0
    %v549 = vsel %vm544, %v540, 0
    %v552 = vsel %vm544, %v541, 0
    %v555 = vsel %vm544, %v542, 0
    %vm557 = vcmask 1043456
    %v559 = vsel %vm557, %v543, 0
    %561 = vmatprep.subr.bf16.mxu0 0
    %562 = vmatpush1.bf16.msra.mxu0 0
    %563 = vmatprep.subr.bf16.mxu0 0
    %564 = vmatpush1.bf16.msra.mxu0 0
    %565 = vmatprep.subr.bf16.mxu0 0
    %566 = vmatpush1.bf16.msra.mxu0 0
    %567 = vmatprep.subr.bf16.mxu0 0
    %568 = vmatpush1.bf16.msra.mxu0 0
    %569 = vmatprep.subr.bf16.mxu0 0
    %570 = vmatpush1.bf16.msra.mxu0 0
    %571 = vmatprep.subr.bf16.mxu0 0
    %572 = vmatpush1.bf16.msra.mxu0 0
    %573 = vmatprep.subr.bf16.mxu0 0
    %574 = vmatpush1.bf16.msra.mxu0 0
    %575 = vmatprep.subr.bf16.mxu0 0
    %576 = vmatpush1.bf16.msra.mxu0 %v559
    %577 = vmatprep.subr.bf16.mxu0 0
    %578 = vmatpush2.bf16.msra.mxu0 0
    %579 = vmatprep.subr.bf16.mxu0 0
    %580 = vmatpush2.bf16.msra.mxu0 0
    %581 = vmatprep.subr.bf16.mxu0 0
    %582 = vmatpush2.bf16.msra.mxu0 0
    %583 = vmatprep.subr.bf16.mxu0 0
    %584 = vmatpush2.bf16.msra.mxu0 0
    %585 = vmatprep.subr.bf16.mxu0 0
    %586 = vmatpush2.bf16.msra.mxu0 0
    %587 = vmatprep.subr.bf16.mxu0 0
    %588 = vmatpush2.bf16.msra.mxu0 0
    %589 = vmatprep.subr.bf16.mxu0 0
    %590 = vmatpush2.bf16.msra.mxu0 0
    %591 = vmatprep.subr.bf16.mxu0 0
    %592 = vmatpush2.bf16.msra.mxu0 0
    %593 = vmatprep.mubr.bf16.mxu0 0
    %594 = vmatmul.mubr.bf16.gmra.mxu0 %v546
    %v595 = vpop.f32.mrf.mxu0
    %v596 = vadd.f32 0.0, %v595
    %v597 = vpop.f32.mrf.mxu0
    %v598 = vpop.f32.mrf.mxu0
    %v599 = vadd.f32 0.0, %v598
    %v600 = vpop.f32.mrf.mxu0
    %601 = vmatprep.mubr.bf16.mxu0 0
    %602 = vmatmul.mubr.bf16.gmra.mxu0 %v549
    %v603 = vpop.f32.mrf.mxu0
    %v604 = vadd.f32 0.0, %v603
    %v605 = vpop.f32.mrf.mxu0
    %v606 = vpop.f32.mrf.mxu0
    %v607 = vadd.f32 0.0, %v606
    %v608 = vpop.f32.mrf.mxu0
    %609 = vmatprep.mubr.bf16.mxu0 0
    %610 = vmatmul.mubr.bf16.gmra.mxu0 %v552
    %v611 = vpop.f32.mrf.mxu0
    %v612 = vadd.f32 0.0, %v611
    %v613 = vpop.f32.mrf.mxu0
    %v614 = vpop.f32.mrf.mxu0
    %v615 = vadd.f32 0.0, %v614
    %v616 = vpop.f32.mrf.mxu0
    %617 = vmatprep.mubr.bf16.mxu0 0
    %618 = vmatmul.mubr.bf16.gmra.mxu0 %v555
    %v619 = vpop.f32.mrf.mxu0
    %v620 = vadd.f32 0.0, %v619
    %v621 = vpop.f32.mrf.mxu0
    %v622 = vpop.f32.mrf.mxu0
    %v623 = vpop.f32.mrf.mxu0
    %624 = vdwg.mxu0
    %v625 = vmax.f32 %v596, 0.0
    %v626 = vmax.f32 %v599, 0.0
    %v627 = vmax.f32 %v604, 0.0
    %v628 = vmax.f32 %v607, 0.0
    %v629 = vmax.f32 %v612, 0.0
    %v630 = vmax.f32 %v615, 0.0
    %v631 = vmax.f32 %v620, 0.0
    %v632 = vsel %vm138, %v625, 0.0
    %vm633 = vcmask 1041409
    %v634 = vsel %vm633, %v628, %v632
    %v635 = vrot.slane %v625, 1
    %v636 = vsel %vm138, %v635, 0.0
    %v637 = vrot.slane %v628, 1
    %v638 = vsel %vm633, %v637, %v636
    %v639 = vrot.slane %v625, 2
    %v640 = vsel %vm138, %v639, 0.0
    %v641 = vrot.slane %v628, 2
    %v642 = vsel %vm633, %v641, %v640
    %v643 = vrot.slane %v625, 3
    %v644 = vsel %vm138, %v643, 0.0
    %v645 = vrot.slane %v628, 3
    %v646 = vsel %vm633, %v645, %v644
    %v647 = vrot.slane %v625, 4
    %v648 = vsel %vm138, %v647, 0.0
    %v649 = vrot.slane %v628, 4
    %v650 = vsel %vm633, %v649, %v648
    %v651 = vrot.slane %v625, 5
    %v652 = vsel %vm138, %v651, 0.0
    %v653 = vrot.slane %v628, 5
    %v654 = vsel %vm633, %v653, %v652
    %v655 = vrot.slane %v625, 6
    %v656 = vsel %vm138, %v655, 0.0
    %v657 = vrot.slane %v628, 6
    %v658 = vsel %vm633, %v657, %v656
    %v659 = vrot.slane %v625, 7
    %v660 = vsel %vm138, %v659, 0.0
    %v661 = vrot.slane %v629, 7
    %v662 = vsel %vm633, %v661, %v660
    %v663 = vsel %vm138, %v626, 0.0
    %v664 = vsel %vm633, %v629, %v663
    %v665 = vrot.slane %v626, 1
    %v666 = vsel %vm138, %v665, 0.0
    %v667 = vrot.slane %v629, 1
    %v668 = vsel %vm633, %v667, %v666
    %v669 = vrot.slane %v626, 2
    %v670 = vsel %vm138, %v669, 0.0
    %v671 = vrot.slane %v629, 2
    %v672 = vsel %vm633, %v671, %v670
    %v673 = vrot.slane %v626, 3
    %v674 = vsel %vm138, %v673, 0.0
    %v675 = vrot.slane %v629, 3
    %v676 = vsel %vm633, %v675, %v674
    %v677 = vrot.slane %v626, 4
    %v678 = vsel %vm138, %v677, 0.0
    %v679 = vrot.slane %v629, 4
    %v680 = vsel %vm633, %v679, %v678
    %v681 = vrot.slane %v626, 5
    %v682 = vsel %vm138, %v681, 0.0
    %v683 = vrot.slane %v629, 5
    %v684 = vsel %vm633, %v683, %v682
    %v685 = vrot.slane %v626, 6
    %v686 = vsel %vm138, %v685, 0.0
    %v687 = vrot.slane %v629, 6
    %v688 = vsel %vm633, %v687, %v686
    %v689 = vrot.slane %v626, 7
    %v690 = vsel %vm138, %v689, 0.0
    %v691 = vrot.slane %v630, 7
    %v692 = vsel %vm633, %v691, %v690
    %v693 = vsel %vm138, %v627, 0.0
    %v694 = vsel %vm633, %v630, %v693
    %v695 = vrot.slane %v627, 1
    %v696 = vsel %vm138, %v695, 0.0
    %v697 = vrot.slane %v630, 1
    %v698 = vsel %vm633, %v697, %v696
    %v699 = vrot.slane %v627, 2
    %v700 = vsel %vm138, %v699, 0.0
    %v701 = vrot.slane %v630, 2
    %v702 = vsel %vm633, %v701, %v700
    %v703 = vrot.slane %v627, 3
    %v704 = vsel %vm138, %v703, 0.0
    %v705 = vrot.slane %v630, 3
    %v706 = vsel %vm633, %v705, %v704
    %v707 = vrot.slane %v627, 4
    %v708 = vsel %vm138, %v707, 0.0
    %v709 = vrot.slane %v630, 4
    %v710 = vsel %vm633, %v709, %v708
    %v711 = vrot.slane %v627, 5
    %v712 = vsel %vm138, %v711, 0.0
    %v713 = vrot.slane %v630, 5
    %v714 = vsel %vm633, %v713, %v712
    %v715 = vrot.slane %v627, 6
    %v716 = vsel %vm138, %v715, 0.0
    %v717 = vrot.slane %v630, 6
    %v718 = vsel %vm633, %v717, %v716
    %v719 = vrot.slane %v627, 7
    %v720 = vsel %vm138, %v719, 0.0
    %v721 = vrot.slane %v631, 7
    %v722 = vsel %vm633, %v721, %v720
    %v723 = vsel %vm138, %v628, 0.0
    %v724 = vsel %vm633, %v631, %v723
    %v725 = vpack.c.bf16 %v634, %v634
    %v726 = vpack.c.bf16 %v638, %v638
    %v727 = vpack.c.bf16 %v642, %v642
    %v728 = vpack.c.bf16 %v646, %v646
    %v729 = vpack.c.bf16 %v650, %v650
    %v730 = vpack.c.bf16 %v654, %v654
    %v731 = vpack.c.bf16 %v658, %v658
    %v732 = vpack.c.bf16 %v662, %v662
    %v733 = vpack.c.bf16 %v664, %v664
    %v734 = vpack.c.bf16 %v668, %v668
    %v735 = vpack.c.bf16 %v672, %v672
    %v736 = vpack.c.bf16 %v676, %v676
    %v737 = vpack.c.bf16 %v680, %v680
    %v738 = vpack.c.bf16 %v684, %v684
    %v739 = vpack.c.bf16 %v688, %v688
    %v740 = vpack.c.bf16 %v692, %v692
    %v741 = vpack.c.bf16 %v694, %v694
    %v742 = vpack.c.bf16 %v698, %v698
    %v743 = vpack.c.bf16 %v702, %v702
    %v744 = vpack.c.bf16 %v706, %v706
    %v745 = vpack.c.bf16 %v710, %v710
    %v746 = vpack.c.bf16 %v714, %v714
    %v747 = vpack.c.bf16 %v718, %v718
    %v748 = vpack.c.bf16 %v722, %v722
    %v749 = vpack.c.bf16 %v724, %v724
    %v750 = vld [vmem:[#allocation7] sm:$0xff]
    %v751 = vld [vmem:[#allocation7 + $0x8] sm:$0xff]
    %v752 = vld [vmem:[#allocation7 + $0x10] sm:$0xff]
    %v753 = vld [vmem:[#allocation7 + $0x18] sm:$0xff]
    %v754 = vld [vmem:[#allocation7 + $0x20] sm:$0xff]
    %v755 = vld [vmem:[#allocation7 + $0x28] sm:$0xff]
    %v756 = vld [vmem:[#allocation7 + $0x30] sm:$0xff]
    %v757 = vld [vmem:[#allocation7 + $0x38] sm:$0xff]
    %v758 = vld [vmem:[#allocation7 + $0x40] sm:$0xff]
    %v759 = vld [vmem:[#allocation7 + $0x48] sm:$0xff]
    %v760 = vld [vmem:[#allocation7 + $0x50] sm:$0xff]
    %v761 = vld [vmem:[#allocation7 + $0x58] sm:$0xff]
    %v762 = vld [vmem:[#allocation7 + $0x60] sm:$0xff]
    %v763 = vld [vmem:[#allocation7 + $0x68] sm:$0xff]
    %v764 = vld [vmem:[#allocation7 + $0x70] sm:$0xff]
    %v765 = vld [vmem:[#allocation7 + $0x78] sm:$0xff]
    %v766 = vld [vmem:[#allocation7 + $0x80] sm:$0xff]
    %v767 = vld [vmem:[#allocation7 + $0x88] sm:$0xff]
    %v768 = vld [vmem:[#allocation7 + $0x90] sm:$0xff]
    %v769 = vld [vmem:[#allocation7 + $0x98] sm:$0xff]
    %v770 = vld [vmem:[#allocation7 + $0xa0] sm:$0xff]
    %v771 = vld [vmem:[#allocation7 + $0xa8] sm:$0xff]
    %v772 = vld [vmem:[#allocation7 + $0xb0] sm:$0xff]
    %v773 = vld [vmem:[#allocation7 + $0xb8] sm:$0xff]
    %v774 = vld [vmem:[#allocation7 + $0xc0] sm:$0xff]
    %v775 = vld [vmem:[#allocation7 + $0xc8] sm:$0xff]
    %v776 = vld [vmem:[#allocation7 + $0xd0] sm:$0xff]
    %v777 = vld [vmem:[#allocation7 + $0xd8] sm:$0xff]
    %v778 = vld [vmem:[#allocation7 + $0xe0] sm:$0xff]
    %v779 = vld [vmem:[#allocation7 + $0xe8] sm:$0xff]
    %v780 = vld [vmem:[#allocation7 + $0xf0] sm:$0xff]
    %v781 = vld [vmem:[#allocation7 + $0xf8] sm:$0xff]
    %v782 = vld [vmem:[#allocation7 + $0x100] sm:$0xff]
    %v783 = vld [vmem:[#allocation7 + $0x108] sm:$0xff]
    %v784 = vld [vmem:[#allocation7 + $0x110] sm:$0xff]
    %v785 = vld [vmem:[#allocation7 + $0x118] sm:$0xff]
    %v786 = vld [vmem:[#allocation7 + $0x120] sm:$0xff]
    %v787 = vld [vmem:[#allocation7 + $0x128] sm:$0xff]
    %v788 = vld [vmem:[#allocation7 + $0x130] sm:$0xff]
    %v789 = vld [vmem:[#allocation7 + $0x138] sm:$0xff]
    %v790 = vld [vmem:[#allocation7 + $0x140] sm:$0xff]
    %v791 = vld [vmem:[#allocation7 + $0x148] sm:$0xff]
    %v792 = vld [vmem:[#allocation7 + $0x150] sm:$0xff]
    %v793 = vld [vmem:[#allocation7 + $0x158] sm:$0xff]
    %v794 = vld [vmem:[#allocation7 + $0x160] sm:$0xff]
    %v795 = vld [vmem:[#allocation7 + $0x168] sm:$0xff]
    %v796 = vld [vmem:[#allocation7 + $0x170] sm:$0xff]
    %v797 = vld [vmem:[#allocation7 + $0x178] sm:$0xff]
    %v798 = vld [vmem:[#allocation7 + $0x180] sm:$0xff]
    %v799 = vld [vmem:[#allocation7 + $0x188] sm:$0xff]
    %v800 = vld [vmem:[#allocation7 + $0x190] sm:$0xff]
    %v801 = vld [vmem:[#allocation7 + $0x198] sm:$0xff]
    %v802 = vld [vmem:[#allocation7 + $0x1a0] sm:$0xff]
    %v803 = vld [vmem:[#allocation7 + $0x1a8] sm:$0xff]
    %v804 = vld [vmem:[#allocation7 + $0x1b0] sm:$0xff]
    %v805 = vld [vmem:[#allocation7 + $0x1b8] sm:$0xff]
    %v806 = vld [vmem:[#allocation7 + $0x1c0] sm:$0xff]
    %v807 = vld [vmem:[#allocation7 + $0x1c8] sm:$0xff]
    %v808 = vld [vmem:[#allocation7 + $0x1d0] sm:$0xff]
    %v809 = vld [vmem:[#allocation7 + $0x1d8] sm:$0xff]
    %v810 = vld [vmem:[#allocation7 + $0x1e0] sm:$0xff]
    %v811 = vld [vmem:[#allocation7 + $0x1e8] sm:$0xff]
    %v812 = vld [vmem:[#allocation7 + $0x1f0] sm:$0xff]
    %v813 = vld [vmem:[#allocation7 + $0x1f8] sm:$0xff]
    %v814 = vld [vmem:[#allocation7 + $0x200] sm:$0xff]
    %v815 = vld [vmem:[#allocation7 + $0x208] sm:$0xff]
    %v816 = vld [vmem:[#allocation7 + $0x210] sm:$0xff]
    %v817 = vld [vmem:[#allocation7 + $0x218] sm:$0xff]
    %v818 = vld [vmem:[#allocation7 + $0x220] sm:$0xff]
    %v819 = vld [vmem:[#allocation7 + $0x228] sm:$0xff]
    %v820 = vld [vmem:[#allocation7 + $0x230] sm:$0xff]
    %v821 = vld [vmem:[#allocation7 + $0x238] sm:$0xff]
    %v822 = vld [vmem:[#allocation7 + $0x240] sm:$0xff]
    %v823 = vld [vmem:[#allocation7 + $0x248] sm:$0xff]
    %v824 = vld [vmem:[#allocation7 + $0x250] sm:$0xff]
    %v825 = vld [vmem:[#allocation7 + $0x258] sm:$0xff]
    %v826 = vld [vmem:[#allocation7 + $0x260] sm:$0xff]
    %v827 = vld [vmem:[#allocation7 + $0x268] sm:$0xff]
    %v828 = vld [vmem:[#allocation7 + $0x270] sm:$0xff]
    %v829 = vld [vmem:[#allocation7 + $0x278] sm:$0xff]
    %v830 = vld [vmem:[#allocation7 + $0x280] sm:$0xff]
    %v831 = vld [vmem:[#allocation7 + $0x288] sm:$0xff]
    %v832 = vld [vmem:[#allocation7 + $0x290] sm:$0xff]
    %v833 = vld [vmem:[#allocation7 + $0x298] sm:$0xff]
    %v834 = vld [vmem:[#allocation7 + $0x2a0] sm:$0xff]
    %v835 = vld [vmem:[#allocation7 + $0x2a8] sm:$0xff]
    %v836 = vld [vmem:[#allocation7 + $0x2b0] sm:$0xff]
    %v837 = vld [vmem:[#allocation7 + $0x2b8] sm:$0xff]
    %v838 = vld [vmem:[#allocation7 + $0x2c0] sm:$0xff]
    %v839 = vld [vmem:[#allocation7 + $0x2c8] sm:$0xff]
    %v840 = vld [vmem:[#allocation7 + $0x2d0] sm:$0xff]
    %v841 = vld [vmem:[#allocation7 + $0x2d8] sm:$0xff]
    %v842 = vld [vmem:[#allocation7 + $0x2e0] sm:$0xff]
    %v843 = vld [vmem:[#allocation7 + $0x2e8] sm:$0xff]
    %v844 = vld [vmem:[#allocation7 + $0x2f0] sm:$0xff]
    %v845 = vld [vmem:[#allocation7 + $0x2f8] sm:$0xff]
    %v846 = vld [vmem:[#allocation7 + $0x300] sm:$0xff]
    %v847 = vld [vmem:[#allocation7 + $0x308] sm:$0xff]
    %v848 = vld [vmem:[#allocation7 + $0x310] sm:$0xff]
    %v849 = vld [vmem:[#allocation7 + $0x318] sm:$0xff]
    %v850 = vld [vmem:[#allocation7 + $0x320] sm:$0xff]
    %v851 = vld [vmem:[#allocation7 + $0x328] sm:$0xff]
    %v852 = vld [vmem:[#allocation7 + $0x330] sm:$0xff]
    %v853 = vld [vmem:[#allocation7 + $0x338] sm:$0xff]
    %v854 = vld [vmem:[#allocation7 + $0x340] sm:$0xff]
    %v855 = vld [vmem:[#allocation7 + $0x348] sm:$0xff]
    %v856 = vld [vmem:[#allocation7 + $0x350] sm:$0xff]
    %v857 = vld [vmem:[#allocation7 + $0x358] sm:$0xff]
    %v858 = vld [vmem:[#allocation7 + $0x360] sm:$0xff]
    %v859 = vld [vmem:[#allocation7 + $0x368] sm:$0xff]
    %v860 = vld [vmem:[#allocation7 + $0x370] sm:$0xff]
    %v861 = vld [vmem:[#allocation7 + $0x378] sm:$0xff]
    %v862 = vld [vmem:[#allocation7 + $0x380] sm:$0xff]
    %v863 = vld [vmem:[#allocation7 + $0x388] sm:$0xff]
    %v864 = vld [vmem:[#allocation7 + $0x390] sm:$0xff]
    %v865 = vld [vmem:[#allocation7 + $0x398] sm:$0xff]
    %v866 = vld [vmem:[#allocation7 + $0x3a0] sm:$0xff]
    %v867 = vld [vmem:[#allocation7 + $0x3a8] sm:$0xff]
    %v868 = vld [vmem:[#allocation7 + $0x3b0] sm:$0xff]
    %v869 = vld [vmem:[#allocation7 + $0x3b8] sm:$0xff]
    %v870 = vld [vmem:[#allocation7 + $0x3c0] sm:$0xff]
    %v871 = vld [vmem:[#allocation7 + $0x3c8] sm:$0xff]
    %v872 = vld [vmem:[#allocation7 + $0x3d0] sm:$0xff]
    %v873 = vld [vmem:[#allocation7 + $0x3d8] sm:$0xff]
    %v874 = vld [vmem:[#allocation7 + $0x3e0] sm:$0xff]
    %v875 = vld [vmem:[#allocation7 + $0x3e8] sm:$0xff]
    %v876 = vld [vmem:[#allocation7 + $0x3f0] sm:$0xff]
    %v877 = vld [vmem:[#allocation7 + $0x3f8] sm:$0xff]
    %v878 = vld [vmem:[#allocation7 + $0x400] sm:$0xff]
    %v879 = vld [vmem:[#allocation7 + $0x408] sm:$0xff]
    %v880 = vld [vmem:[#allocation7 + $0x410] sm:$0xff]
    %v881 = vld [vmem:[#allocation7 + $0x418] sm:$0xff]
    %v882 = vld [vmem:[#allocation7 + $0x420] sm:$0xff]
    %v883 = vld [vmem:[#allocation7 + $0x428] sm:$0xff]
    %v884 = vld [vmem:[#allocation7 + $0x430] sm:$0xff]
    %v885 = vld [vmem:[#allocation7 + $0x438] sm:$0xff]
    %v886 = vld [vmem:[#allocation7 + $0x440] sm:$0xff]
    %v887 = vld [vmem:[#allocation7 + $0x448] sm:$0xff]
    %v888 = vld [vmem:[#allocation7 + $0x450] sm:$0xff]
    %v889 = vld [vmem:[#allocation7 + $0x458] sm:$0xff]
    %v890 = vld [vmem:[#allocation7 + $0x460] sm:$0xff]
    %v891 = vld [vmem:[#allocation7 + $0x468] sm:$0xff]
    %v892 = vld [vmem:[#allocation7 + $0x470] sm:$0xff]
    %v893 = vld [vmem:[#allocation7 + $0x478] sm:$0xff]
    %v894 = vld [vmem:[#allocation7 + $0x480] sm:$0xff]
    %v895 = vld [vmem:[#allocation7 + $0x488] sm:$0xff]
    %v896 = vld [vmem:[#allocation7 + $0x490] sm:$0xff]
    %v897 = vld [vmem:[#allocation7 + $0x498] sm:$0xff]
    %v898 = vld [vmem:[#allocation7 + $0x4a0] sm:$0xff]
    %v899 = vld [vmem:[#allocation7 + $0x4a8] sm:$0xff]
    %v900 = vld [vmem:[#allocation7 + $0x4b0] sm:$0xff]
    %v901 = vld [vmem:[#allocation7 + $0x4b8] sm:$0xff]
    %v902 = vld [vmem:[#allocation7 + $0x4c0] sm:$0xff]
    %v903 = vld [vmem:[#allocation7 + $0x4c8] sm:$0xff]
    %v904 = vld [vmem:[#allocation7 + $0x4d0] sm:$0xff]
    %v905 = vld [vmem:[#allocation7 + $0x4d8] sm:$0xff]
    %v906 = vld [vmem:[#allocation7 + $0x4e0] sm:$0xff]
    %v907 = vld [vmem:[#allocation7 + $0x4e8] sm:$0xff]
    %v908 = vld [vmem:[#allocation7 + $0x4f0] sm:$0xff]
    %v909 = vld [vmem:[#allocation7 + $0x4f8] sm:$0xff]
    %v910 = vld [vmem:[#allocation7 + $0x500] sm:$0xff]
    %v911 = vld [vmem:[#allocation7 + $0x508] sm:$0xff]
    %v912 = vld [vmem:[#allocation7 + $0x510] sm:$0xff]
    %v913 = vld [vmem:[#allocation7 + $0x518] sm:$0xff]
    %v914 = vld [vmem:[#allocation7 + $0x520] sm:$0xff]
    %v915 = vld [vmem:[#allocation7 + $0x528] sm:$0xff]
    %v916 = vld [vmem:[#allocation7 + $0x530] sm:$0xff]
    %v917 = vld [vmem:[#allocation7 + $0x538] sm:$0xff]
    %v918 = vld [vmem:[#allocation7 + $0x540] sm:$0xff]
    %v919 = vld [vmem:[#allocation7 + $0x548] sm:$0xff]
    %v920 = vld [vmem:[#allocation7 + $0x550] sm:$0xff]
    %v921 = vld [vmem:[#allocation7 + $0x558] sm:$0xff]
    %v922 = vld [vmem:[#allocation7 + $0x560] sm:$0xff]
    %v923 = vld [vmem:[#allocation7 + $0x568] sm:$0xff]
    %v924 = vld [vmem:[#allocation7 + $0x570] sm:$0xff]
    %v925 = vld [vmem:[#allocation7 + $0x578] sm:$0xff]
    %v926 = vld [vmem:[#allocation7 + $0x580] sm:$0xff]
    %v927 = vld [vmem:[#allocation7 + $0x588] sm:$0xff]
    %v928 = vld [vmem:[#allocation7 + $0x590] sm:$0xff]
    %v929 = vld [vmem:[#allocation7 + $0x598] sm:$0xff]
    %v930 = vld [vmem:[#allocation7 + $0x5a0] sm:$0xff]
    %v931 = vld [vmem:[#allocation7 + $0x5a8] sm:$0xff]
    %v932 = vld [vmem:[#allocation7 + $0x5b0] sm:$0xff]
    %v933 = vld [vmem:[#allocation7 + $0x5b8] sm:$0xff]
    %v934 = vld [vmem:[#allocation7 + $0x5c0] sm:$0xff]
    %v935 = vld [vmem:[#allocation7 + $0x5c8] sm:$0xff]
    %v936 = vld [vmem:[#allocation7 + $0x5d0] sm:$0xff]
    %v937 = vld [vmem:[#allocation7 + $0x5d8] sm:$0xff]
    %v938 = vld [vmem:[#allocation7 + $0x5e0] sm:$0xff]
    %v939 = vld [vmem:[#allocation7 + $0x5e8] sm:$0xff]
    %v940 = vld [vmem:[#allocation7 + $0x5f0] sm:$0xff]
    %v941 = vld [vmem:[#allocation7 + $0x5f8] sm:$0xff]
    %v942 = vld [vmem:[#allocation7 + $0x600] sm:$0xff]
    %v943 = vld [vmem:[#allocation7 + $0x608] sm:$0xff]
    %v944 = vld [vmem:[#allocation7 + $0x610] sm:$0xff]
    %v945 = vld [vmem:[#allocation7 + $0x618] sm:$0xff]
    %v946 = vld [vmem:[#allocation7 + $0x620] sm:$0xff]
    %v947 = vld [vmem:[#allocation7 + $0x628] sm:$0xff]
    %v948 = vld [vmem:[#allocation7 + $0x630] sm:$0xff]
    %v949 = vld [vmem:[#allocation7 + $0x638] sm:$0xff]
    %v950 = vld [vmem:[#allocation7 + $0x640] sm:$0xff]
    %v951 = vld [vmem:[#allocation7 + $0x648] sm:$0xff]
    %v952 = vld [vmem:[#allocation7 + $0x650] sm:$0xff]
    %v953 = vld [vmem:[#allocation7 + $0x658] sm:$0xff]
    %v954 = vld [vmem:[#allocation7 + $0x660] sm:$0xff]
    %v955 = vld [vmem:[#allocation7 + $0x668] sm:$0xff]
    %v956 = vld [vmem:[#allocation7 + $0x670] sm:$0xff]
    %v957 = vld [vmem:[#allocation7 + $0x678] sm:$0xff]
    %v958 = vld [vmem:[#allocation7 + $0x680] sm:$0xff]
    %v959 = vld [vmem:[#allocation7 + $0x688] sm:$0xff]
    %v960 = vld [vmem:[#allocation7 + $0x690] sm:$0xff]
    %v961 = vld [vmem:[#allocation7 + $0x698] sm:$0xff]
    %v962 = vld [vmem:[#allocation7 + $0x6a0] sm:$0xff]
    %v963 = vld [vmem:[#allocation7 + $0x6a8] sm:$0xff]
    %v964 = vld [vmem:[#allocation7 + $0x6b0] sm:$0xff]
    %v965 = vld [vmem:[#allocation7 + $0x6b8] sm:$0xff]
    %v966 = vld [vmem:[#allocation7 + $0x6c0] sm:$0xff]
    %v967 = vld [vmem:[#allocation7 + $0x6c8] sm:$0xff]
    %v968 = vld [vmem:[#allocation7 + $0x6d0] sm:$0xff]
    %v969 = vld [vmem:[#allocation7 + $0x6d8] sm:$0xff]
    %v970 = vld [vmem:[#allocation7 + $0x6e0] sm:$0xff]
    %v971 = vld [vmem:[#allocation7 + $0x6e8] sm:$0xff]
    %v972 = vld [vmem:[#allocation7 + $0x6f0] sm:$0xff]
    %v973 = vld [vmem:[#allocation7 + $0x6f8] sm:$0xff]
    %v974 = vld [vmem:[#allocation7 + $0x700] sm:$0xff]
    %v975 = vld [vmem:[#allocation7 + $0x708] sm:$0xff]
    %v976 = vld [vmem:[#allocation7 + $0x710] sm:$0xff]
    %v977 = vld [vmem:[#allocation7 + $0x718] sm:$0xff]
    %v978 = vld [vmem:[#allocation7 + $0x720] sm:$0xff]
    %v979 = vld [vmem:[#allocation7 + $0x728] sm:$0xff]
    %v980 = vld [vmem:[#allocation7 + $0x730] sm:$0xff]
    %v981 = vld [vmem:[#allocation7 + $0x738] sm:$0xff]
    %v982 = vld [vmem:[#allocation7 + $0x740] sm:$0xff]
    %v983 = vld [vmem:[#allocation7 + $0x748] sm:$0xff]
    %v984 = vld [vmem:[#allocation7 + $0x750] sm:$0xff]
    %v985 = vld [vmem:[#allocation7 + $0x758] sm:$0xff]
    %v986 = vld [vmem:[#allocation7 + $0x760] sm:$0xff]
    %v987 = vld [vmem:[#allocation7 + $0x768] sm:$0xff]
    %v988 = vld [vmem:[#allocation7 + $0x770] sm:$0xff]
    %v989 = vld [vmem:[#allocation7 + $0x778] sm:$0xff]
    %v990 = vld [vmem:[#allocation7 + $0x780] sm:$0xff]
    %v991 = vld [vmem:[#allocation7 + $0x788] sm:$0xff]
    %v992 = vld [vmem:[#allocation7 + $0x790] sm:$0xff]
    %v993 = vld [vmem:[#allocation7 + $0x798] sm:$0xff]
    %v994 = vld [vmem:[#allocation7 + $0x7a0] sm:$0xff]
    %v995 = vld [vmem:[#allocation7 + $0x7a8] sm:$0xff]
    %v996 = vld [vmem:[#allocation7 + $0x7b0] sm:$0xff]
    %v997 = vld [vmem:[#allocation7 + $0x7b8] sm:$0xff]
    %v998 = vld [vmem:[#allocation7 + $0x7c0] sm:$0xff]
    %v999 = vld [vmem:[#allocation7 + $0x7c8] sm:$0xff]
    %v1000 = vld [vmem:[#allocation7 + $0x7d0] sm:$0xff]
    %v1001 = vld [vmem:[#allocation7 + $0x7d8] sm:$0xff]
    %v1002 = vld [vmem:[#allocation7 + $0x7e0] sm:$0xff]
    %v1003 = vld [vmem:[#allocation7 + $0x7e8] sm:$0xff]
    %v1004 = vld [vmem:[#allocation7 + $0x7f0] sm:$0xff]
    %v1005 = vld [vmem:[#allocation7 + $0x7f8] sm:$0xff]
    %v1006 = vld [vmem:[#allocation7 + $0x800] sm:$0xff]
    %v1007 = vld [vmem:[#allocation7 + $0x808] sm:$0xff]
    %v1008 = vld [vmem:[#allocation7 + $0x810] sm:$0xff]
    %v1009 = vld [vmem:[#allocation7 + $0x818] sm:$0xff]
    %v1010 = vld [vmem:[#allocation7 + $0x820] sm:$0xff]
    %v1011 = vld [vmem:[#allocation7 + $0x828] sm:$0xff]
    %v1012 = vld [vmem:[#allocation7 + $0x830] sm:$0xff]
    %v1013 = vld [vmem:[#allocation7 + $0x838] sm:$0xff]
    %v1014 = vld [vmem:[#allocation7 + $0x840] sm:$0xff]
    %v1015 = vld [vmem:[#allocation7 + $0x848] sm:$0xff]
    %v1016 = vld [vmem:[#allocation7 + $0x850] sm:$0xff]
    %v1017 = vld [vmem:[#allocation7 + $0x858] sm:$0xff]
    %v1018 = vld [vmem:[#allocation7 + $0x860] sm:$0xff]
    %v1019 = vld [vmem:[#allocation7 + $0x868] sm:$0xff]
    %v1020 = vld [vmem:[#allocation7 + $0x870] sm:$0xff]
    %v1021 = vld [vmem:[#allocation7 + $0x878] sm:$0xff]
    %v1022 = vld [vmem:[#allocation7 + $0x880] sm:$0xff]
    %v1023 = vld [vmem:[#allocation7 + $0x888] sm:$0xff]
    %v1024 = vld [vmem:[#allocation7 + $0x890] sm:$0xff]
    %v1025 = vld [vmem:[#allocation7 + $0x898] sm:$0xff]
    %v1026 = vld [vmem:[#allocation7 + $0x8a0] sm:$0xff]
    %v1027 = vld [vmem:[#allocation7 + $0x8a8] sm:$0xff]
    %v1028 = vld [vmem:[#allocation7 + $0x8b0] sm:$0xff]
    %v1029 = vld [vmem:[#allocation7 + $0x8b8] sm:$0xff]
    %v1030 = vld [vmem:[#allocation7 + $0x8c0] sm:$0xff]
    %v1031 = vld [vmem:[#allocation7 + $0x8c8] sm:$0xff]
    %v1032 = vld [vmem:[#allocation7 + $0x8d0] sm:$0xff]
    %v1033 = vld [vmem:[#allocation7 + $0x8d8] sm:$0xff]
    %v1034 = vld [vmem:[#allocation7 + $0x8e0] sm:$0xff]
    %v1035 = vld [vmem:[#allocation7 + $0x8e8] sm:$0xff]
    %v1036 = vld [vmem:[#allocation7 + $0x8f0] sm:$0xff]
    %v1037 = vld [vmem:[#allocation7 + $0x8f8] sm:$0xff]
    %v1038 = vld [vmem:[#allocation7 + $0x900] sm:$0xff]
    %v1039 = vld [vmem:[#allocation7 + $0x908] sm:$0xff]
    %v1040 = vld [vmem:[#allocation7 + $0x910] sm:$0xff]
    %v1041 = vld [vmem:[#allocation7 + $0x918] sm:$0xff]
    %v1042 = vld [vmem:[#allocation7 + $0x920] sm:$0xff]
    %v1043 = vld [vmem:[#allocation7 + $0x928] sm:$0xff]
    %v1044 = vld [vmem:[#allocation7 + $0x930] sm:$0xff]
    %v1045 = vld [vmem:[#allocation7 + $0x938] sm:$0xff]
    %v1046 = vld [vmem:[#allocation7 + $0x940] sm:$0xff]
    %v1047 = vld [vmem:[#allocation7 + $0x948] sm:$0xff]
    %v1048 = vld [vmem:[#allocation7 + $0x950] sm:$0xff]
    %v1049 = vld [vmem:[#allocation7 + $0x958] sm:$0xff]
    %v1050 = vld [vmem:[#allocation7 + $0x960] sm:$0xff]
    %v1051 = vld [vmem:[#allocation7 + $0x968] sm:$0xff]
    %v1052 = vld [vmem:[#allocation7 + $0x970] sm:$0xff]
    %v1053 = vld [vmem:[#allocation7 + $0x978] sm:$0xff]
    %v1054 = vld [vmem:[#allocation7 + $0x980] sm:$0xff]
    %v1055 = vld [vmem:[#allocation7 + $0x988] sm:$0xff]
    %v1056 = vld [vmem:[#allocation7 + $0x990] sm:$0xff]
    %v1057 = vld [vmem:[#allocation7 + $0x998] sm:$0xff]
    %v1058 = vld [vmem:[#allocation7 + $0x9a0] sm:$0xff]
    %v1059 = vld [vmem:[#allocation7 + $0x9a8] sm:$0xff]
    %v1060 = vld [vmem:[#allocation7 + $0x9b0] sm:$0xff]
    %v1061 = vld [vmem:[#allocation7 + $0x9b8] sm:$0xff]
    %v1062 = vld [vmem:[#allocation7 + $0x9c0] sm:$0xff]
    %v1063 = vld [vmem:[#allocation7 + $0x9c8] sm:$0xff]
    %v1064 = vld [vmem:[#allocation7 + $0x9d0] sm:$0xff]
    %v1065 = vld [vmem:[#allocation7 + $0x9d8] sm:$0xff]
    %v1066 = vld [vmem:[#allocation7 + $0x9e0] sm:$0xff]
    %v1067 = vld [vmem:[#allocation7 + $0x9e8] sm:$0xff]
    %v1068 = vld [vmem:[#allocation7 + $0x9f0] sm:$0xff]
    %v1069 = vld [vmem:[#allocation7 + $0x9f8] sm:$0xff]
    %v1070 = vld [vmem:[#allocation7 + $0xa00] sm:$0xff]
    %v1071 = vld [vmem:[#allocation7 + $0xa08] sm:$0xff]
    %v1072 = vld [vmem:[#allocation7 + $0xa10] sm:$0xff]
    %v1073 = vld [vmem:[#allocation7 + $0xa18] sm:$0xff]
    %v1074 = vld [vmem:[#allocation7 + $0xa20] sm:$0xff]
    %v1075 = vld [vmem:[#allocation7 + $0xa28] sm:$0xff]
    %v1076 = vld [vmem:[#allocation7 + $0xa30] sm:$0xff]
    %v1077 = vld [vmem:[#allocation7 + $0xa38] sm:$0xff]
    %v1078 = vld [vmem:[#allocation7 + $0xa40] sm:$0xff]
    %v1079 = vld [vmem:[#allocation7 + $0xa48] sm:$0xff]
    %v1080 = vld [vmem:[#allocation7 + $0xa50] sm:$0xff]
    %v1081 = vld [vmem:[#allocation7 + $0xa58] sm:$0xff]
    %v1082 = vld [vmem:[#allocation7 + $0xa60] sm:$0xff]
    %v1083 = vld [vmem:[#allocation7 + $0xa68] sm:$0xff]
    %v1084 = vld [vmem:[#allocation7 + $0xa70] sm:$0xff]
    %v1085 = vld [vmem:[#allocation7 + $0xa78] sm:$0xff]
    %v1086 = vld [vmem:[#allocation7 + $0xa80] sm:$0xff]
    %v1087 = vld [vmem:[#allocation7 + $0xa88] sm:$0xff]
    %v1088 = vld [vmem:[#allocation7 + $0xa90] sm:$0xff]
    %v1089 = vld [vmem:[#allocation7 + $0xa98] sm:$0xff]
    %v1090 = vld [vmem:[#allocation7 + $0xaa0] sm:$0xff]
    %v1091 = vld [vmem:[#allocation7 + $0xaa8] sm:$0xff]
    %v1092 = vld [vmem:[#allocation7 + $0xab0] sm:$0xff]
    %v1093 = vld [vmem:[#allocation7 + $0xab8] sm:$0xff]
    %v1094 = vld [vmem:[#allocation7 + $0xac0] sm:$0xff]
    %v1095 = vld [vmem:[#allocation7 + $0xac8] sm:$0xff]
    %v1096 = vld [vmem:[#allocation7 + $0xad0] sm:$0xff]
    %v1097 = vld [vmem:[#allocation7 + $0xad8] sm:$0xff]
    %v1098 = vld [vmem:[#allocation7 + $0xae0] sm:$0xff]
    %v1099 = vld [vmem:[#allocation7 + $0xae8] sm:$0xff]
    %v1100 = vld [vmem:[#allocation7 + $0xaf0] sm:$0xff]
    %v1101 = vld [vmem:[#allocation7 + $0xaf8] sm:$0xff]
    %v1102 = vld [vmem:[#allocation7 + $0xb00] sm:$0xff]
    %v1103 = vld [vmem:[#allocation7 + $0xb08] sm:$0xff]
    %v1104 = vld [vmem:[#allocation7 + $0xb10] sm:$0xff]
    %v1105 = vld [vmem:[#allocation7 + $0xb18] sm:$0xff]
    %v1106 = vld [vmem:[#allocation7 + $0xb20] sm:$0xff]
    %v1107 = vld [vmem:[#allocation7 + $0xb28] sm:$0xff]
    %v1108 = vld [vmem:[#allocation7 + $0xb30] sm:$0xff]
    %v1109 = vld [vmem:[#allocation7 + $0xb38] sm:$0xff]
    %v1110 = vld [vmem:[#allocation7 + $0xb40] sm:$0xff]
    %v1111 = vld [vmem:[#allocation7 + $0xb48] sm:$0xff]
    %v1112 = vld [vmem:[#allocation7 + $0xb50] sm:$0xff]
    %v1113 = vld [vmem:[#allocation7 + $0xb58] sm:$0xff]
    %v1114 = vld [vmem:[#allocation7 + $0xb60] sm:$0xff]
    %v1115 = vld [vmem:[#allocation7 + $0xb68] sm:$0xff]
    %v1116 = vld [vmem:[#allocation7 + $0xb70] sm:$0xff]
    %v1117 = vld [vmem:[#allocation7 + $0xb78] sm:$0xff]
    %v1118 = vld [vmem:[#allocation7 + $0xb80] sm:$0xff]
    %v1119 = vld [vmem:[#allocation7 + $0xb88] sm:$0xff]
    %v1120 = vld [vmem:[#allocation7 + $0xb90] sm:$0xff]
    %v1121 = vld [vmem:[#allocation7 + $0xb98] sm:$0xff]
    %v1122 = vld [vmem:[#allocation7 + $0xba0] sm:$0xff]
    %v1123 = vld [vmem:[#allocation7 + $0xba8] sm:$0xff]
    %v1124 = vld [vmem:[#allocation7 + $0xbb0] sm:$0xff]
    %v1125 = vld [vmem:[#allocation7 + $0xbb8] sm:$0xff]
    %v1126 = vld [vmem:[#allocation7 + $0xbc0] sm:$0xff]
    %v1127 = vld [vmem:[#allocation7 + $0xbc8] sm:$0xff]
    %v1128 = vld [vmem:[#allocation7 + $0xbd0] sm:$0xff]
    %v1129 = vld [vmem:[#allocation7 + $0xbd8] sm:$0xff]
    %v1130 = vld [vmem:[#allocation7 + $0xbe0] sm:$0xff]
    %v1131 = vld [vmem:[#allocation7 + $0xbe8] sm:$0xff]
    %v1132 = vld [vmem:[#allocation7 + $0xbf0] sm:$0xff]
    %v1133 = vld [vmem:[#allocation7 + $0xbf8] sm:$0xff]
    %v1134 = vld [vmem:[#allocation7 + $0xc00] sm:$0xff]
    %v1135 = vld [vmem:[#allocation7 + $0xc08] sm:$0xff]
    %v1136 = vld [vmem:[#allocation7 + $0xc10] sm:$0xff]
    %v1137 = vld [vmem:[#allocation7 + $0xc18] sm:$0xff]
    %v1138 = vld [vmem:[#allocation7 + $0xc20] sm:$0xff]
    %v1139 = vld [vmem:[#allocation7 + $0xc28] sm:$0xff]
    %v1140 = vld [vmem:[#allocation7 + $0xc30] sm:$0xff]
    %v1141 = vld [vmem:[#allocation7 + $0xc38] sm:$0xff]
    %v1142 = vld [vmem:[#allocation7 + $0xc40] sm:$0xff]
    %v1143 = vld [vmem:[#allocation7 + $0xc48] sm:$0xff]
    %v1144 = vld [vmem:[#allocation7 + $0xc50] sm:$0xff]
    %v1145 = vld [vmem:[#allocation7 + $0xc58] sm:$0xff]
    %v1146 = vld [vmem:[#allocation7 + $0xc60] sm:$0xff]
    %v1147 = vld [vmem:[#allocation7 + $0xc68] sm:$0xff]
    %v1148 = vld [vmem:[#allocation7 + $0xc70] sm:$0xff]
    %v1149 = vld [vmem:[#allocation7 + $0xc78] sm:$0xff]
    %v1150 = vld [vmem:[#allocation7 + $0xc80] sm:$0xff]
    %v1151 = vld [vmem:[#allocation7 + $0xc88] sm:$0xff]
    %v1152 = vld [vmem:[#allocation7 + $0xc90] sm:$0xff]
    %v1153 = vld [vmem:[#allocation7 + $0xc98] sm:$0xff]
    %v1154 = vld [vmem:[#allocation7 + $0xca0] sm:$0xff]
    %v1155 = vld [vmem:[#allocation7 + $0xca8] sm:$0xff]
    %v1156 = vld [vmem:[#allocation7 + $0xcb0] sm:$0xff]
    %v1157 = vld [vmem:[#allocation7 + $0xcb8] sm:$0xff]
    %v1158 = vld [vmem:[#allocation7 + $0xcc0] sm:$0xff]
    %v1159 = vld [vmem:[#allocation7 + $0xcc8] sm:$0xff]
    %v1160 = vld [vmem:[#allocation7 + $0xcd0] sm:$0xff]
    %v1161 = vld [vmem:[#allocation7 + $0xcd8] sm:$0xff]
    %v1162 = vld [vmem:[#allocation7 + $0xce0] sm:$0xff]
    %v1163 = vld [vmem:[#allocation7 + $0xce8] sm:$0xff]
    %v1164 = vld [vmem:[#allocation7 + $0xcf0] sm:$0xff]
    %v1165 = vld [vmem:[#allocation7 + $0xcf8] sm:$0xff]
    %v1166 = vld [vmem:[#allocation7 + $0xd00] sm:$0xff]
    %v1167 = vld [vmem:[#allocation7 + $0xd08] sm:$0xff]
    %v1168 = vld [vmem:[#allocation7 + $0xd10] sm:$0xff]
    %v1169 = vld [vmem:[#allocation7 + $0xd18] sm:$0xff]
    %v1170 = vld [vmem:[#allocation7 + $0xd20] sm:$0xff]
    %v1171 = vld [vmem:[#allocation7 + $0xd28] sm:$0xff]
    %v1172 = vld [vmem:[#allocation7 + $0xd30] sm:$0xff]
    %v1173 = vld [vmem:[#allocation7 + $0xd38] sm:$0xff]
    %v1174 = vld [vmem:[#allocation7 + $0xd40] sm:$0xff]
    %v1175 = vld [vmem:[#allocation7 + $0xd48] sm:$0xff]
    %v1176 = vld [vmem:[#allocation7 + $0xd50] sm:$0xff]
    %v1177 = vld [vmem:[#allocation7 + $0xd58] sm:$0xff]
    %v1178 = vld [vmem:[#allocation7 + $0xd60] sm:$0xff]
    %v1179 = vld [vmem:[#allocation7 + $0xd68] sm:$0xff]
    %v1180 = vld [vmem:[#allocation7 + $0xd70] sm:$0xff]
    %v1181 = vld [vmem:[#allocation7 + $0xd78] sm:$0xff]
    %v1182 = vld [vmem:[#allocation7 + $0xd80] sm:$0xff]
    %v1183 = vld [vmem:[#allocation7 + $0xd88] sm:$0xff]
    %v1184 = vld [vmem:[#allocation7 + $0xd90] sm:$0xff]
    %v1185 = vld [vmem:[#allocation7 + $0xd98] sm:$0xff]
    %v1186 = vld [vmem:[#allocation7 + $0xda0] sm:$0xff]
    %v1187 = vld [vmem:[#allocation7 + $0xda8] sm:$0xff]
    %v1188 = vld [vmem:[#allocation7 + $0xdb0] sm:$0xff]
    %v1189 = vld [vmem:[#allocation7 + $0xdb8] sm:$0xff]
    %v1190 = vld [vmem:[#allocation7 + $0xdc0] sm:$0xff]
    %v1191 = vld [vmem:[#allocation7 + $0xdc8] sm:$0xff]
    %v1192 = vld [vmem:[#allocation7 + $0xdd0] sm:$0xff]
    %v1193 = vld [vmem:[#allocation7 + $0xdd8] sm:$0xff]
    %v1194 = vld [vmem:[#allocation7 + $0xde0] sm:$0xff]
    %v1195 = vld [vmem:[#allocation7 + $0xde8] sm:$0xff]
    %v1196 = vld [vmem:[#allocation7 + $0xdf0] sm:$0xff]
    %v1197 = vld [vmem:[#allocation7 + $0xdf8] sm:$0xff]
    %v1198 = vld [vmem:[#allocation7 + $0xe00] sm:$0xff]
    %v1199 = vld [vmem:[#allocation7 + $0xe08] sm:$0xff]
    %v1200 = vld [vmem:[#allocation7 + $0xe10] sm:$0xff]
    %v1201 = vld [vmem:[#allocation7 + $0xe18] sm:$0xff]
    %v1202 = vld [vmem:[#allocation7 + $0xe20] sm:$0xff]
    %v1203 = vld [vmem:[#allocation7 + $0xe28] sm:$0xff]
    %v1204 = vld [vmem:[#allocation7 + $0xe30] sm:$0xff]
    %v1205 = vld [vmem:[#allocation7 + $0xe38] sm:$0xff]
    %v1206 = vld [vmem:[#allocation7 + $0xe40] sm:$0xff]
    %v1207 = vld [vmem:[#allocation7 + $0xe48] sm:$0xff]
    %v1208 = vld [vmem:[#allocation7 + $0xe50] sm:$0xff]
    %v1209 = vld [vmem:[#allocation7 + $0xe58] sm:$0xff]
    %v1210 = vld [vmem:[#allocation7 + $0xe60] sm:$0xff]
    %v1211 = vld [vmem:[#allocation7 + $0xe68] sm:$0xff]
    %v1212 = vld [vmem:[#allocation7 + $0xe70] sm:$0xff]
    %v1213 = vld [vmem:[#allocation7 + $0xe78] sm:$0xff]
    %v1214 = vld [vmem:[#allocation7 + $0xe80] sm:$0xff]
    %v1215 = vld [vmem:[#allocation7 + $0xe88] sm:$0xff]
    %v1216 = vld [vmem:[#allocation7 + $0xe90] sm:$0xff]
    %v1217 = vld [vmem:[#allocation7 + $0xe98] sm:$0xff]
    %v1218 = vld [vmem:[#allocation7 + $0xea0] sm:$0xff]
    %v1219 = vld [vmem:[#allocation7 + $0xea8] sm:$0xff]
    %v1220 = vld [vmem:[#allocation7 + $0xeb0] sm:$0xff]
    %v1221 = vld [vmem:[#allocation7 + $0xeb8] sm:$0xff]
    %v1222 = vld [vmem:[#allocation7 + $0xec0] sm:$0xff]
    %v1223 = vld [vmem:[#allocation7 + $0xec8] sm:$0xff]
    %v1224 = vld [vmem:[#allocation7 + $0xed0] sm:$0xff]
    %v1225 = vld [vmem:[#allocation7 + $0xed8] sm:$0xff]
    %v1226 = vld [vmem:[#allocation7 + $0xee0] sm:$0xff]
    %v1227 = vld [vmem:[#allocation7 + $0xee8] sm:$0xff]
    %v1228 = vld [vmem:[#allocation7 + $0xef0] sm:$0xff]
    %v1229 = vld [vmem:[#allocation7 + $0xef8] sm:$0xff]
    %v1230 = vld [vmem:[#allocation7 + $0xf00] sm:$0xff]
    %v1231 = vld [vmem:[#allocation7 + $0xf08] sm:$0xff]
    %v1232 = vld [vmem:[#allocation7 + $0xf10] sm:$0xff]
    %v1233 = vld [vmem:[#allocation7 + $0xf18] sm:$0xff]
    %v1234 = vld [vmem:[#allocation7 + $0xf20] sm:$0xff]
    %v1235 = vld [vmem:[#allocation7 + $0xf28] sm:$0xff]
    %v1236 = vld [vmem:[#allocation7 + $0xf30] sm:$0xff]
    %v1237 = vld [vmem:[#allocation7 + $0xf38] sm:$0xff]
    %v1238 = vld [vmem:[#allocation7 + $0xf40] sm:$0xff]
    %v1239 = vld [vmem:[#allocation7 + $0xf48] sm:$0xff]
    %v1240 = vld [vmem:[#allocation7 + $0xf50] sm:$0xff]
    %v1241 = vld [vmem:[#allocation7 + $0xf58] sm:$0xff]
    %v1242 = vld [vmem:[#allocation7 + $0xf60] sm:$0xff]
    %v1243 = vld [vmem:[#allocation7 + $0xf68] sm:$0xff]
    %v1244 = vld [vmem:[#allocation7 + $0xf70] sm:$0xff]
    %v1245 = vld [vmem:[#allocation7 + $0xf78] sm:$0xff]
    %v1246 = vld [vmem:[#allocation7 + $0xf80] sm:$0xff]
    %v1247 = vld [vmem:[#allocation7 + $0xf88] sm:$0xff]
    %v1248 = vld [vmem:[#allocation7 + $0xf90] sm:$0xff]
    %v1249 = vld [vmem:[#allocation7 + $0xf98] sm:$0xff]
    %v1250 = vld [vmem:[#allocation7 + $0xfa0] sm:$0xff]
    %v1251 = vld [vmem:[#allocation7 + $0xfa8] sm:$0xff]
    %v1252 = vld [vmem:[#allocation7 + $0xfb0] sm:$0xff]
    %v1253 = vld [vmem:[#allocation7 + $0xfb8] sm:$0xff]
    %v1254 = vld [vmem:[#allocation7 + $0xfc0] sm:$0xff]
    %v1255 = vld [vmem:[#allocation7 + $0xfc8] sm:$0xff]
    %v1256 = vld [vmem:[#allocation7 + $0xfd0] sm:$0xff]
    %v1257 = vld [vmem:[#allocation7 + $0xfd8] sm:$0xff]
    %v1258 = vld [vmem:[#allocation7 + $0xfe0] sm:$0xff]
    %v1259 = vld [vmem:[#allocation7 + $0xfe8] sm:$0xff]
    %v1260 = vld [vmem:[#allocation7 + $0xff0] sm:$0xff]
    %v1261 = vld [vmem:[#allocation7 + $0xff8] sm:$0xff]
    %v1262 = vld [vmem:[#allocation7 + $0x1000] sm:$0xff]
    %v1263 = vld [vmem:[#allocation7 + $0x1008] sm:$0xff]
    %v1264 = vld [vmem:[#allocation7 + $0x1010] sm:$0xff]
    %v1265 = vld [vmem:[#allocation7 + $0x1018] sm:$0xff]
    %v1266 = vld [vmem:[#allocation7 + $0x1020] sm:$0xff]
    %v1267 = vld [vmem:[#allocation7 + $0x1028] sm:$0xff]
    %v1268 = vld [vmem:[#allocation7 + $0x1030] sm:$0xff]
    %v1269 = vld [vmem:[#allocation7 + $0x1038] sm:$0xff]
    %v1270 = vld [vmem:[#allocation7 + $0x1040] sm:$0xff]
    %v1271 = vld [vmem:[#allocation7 + $0x1048] sm:$0xff]
    %v1272 = vld [vmem:[#allocation7 + $0x1050] sm:$0xff]
    %v1273 = vld [vmem:[#allocation7 + $0x1058] sm:$0xff]
    %v1274 = vld [vmem:[#allocation7 + $0x1060] sm:$0xff]
    %v1275 = vld [vmem:[#allocation7 + $0x1068] sm:$0xff]
    %v1276 = vld [vmem:[#allocation7 + $0x1070] sm:$0xff]
    %v1277 = vld [vmem:[#allocation7 + $0x1078] sm:$0xff]
    %v1278 = vld [vmem:[#allocation7 + $0x1080] sm:$0xff]
    %v1279 = vld [vmem:[#allocation7 + $0x1088] sm:$0xff]
    %v1280 = vld [vmem:[#allocation7 + $0x1090] sm:$0xff]
    %v1281 = vld [vmem:[#allocation7 + $0x1098] sm:$0xff]
    %v1282 = vld [vmem:[#allocation7 + $0x10a0] sm:$0xff]
    %v1283 = vld [vmem:[#allocation7 + $0x10a8] sm:$0xff]
    %v1284 = vld [vmem:[#allocation7 + $0x10b0] sm:$0xff]
    %v1285 = vld [vmem:[#allocation7 + $0x10b8] sm:$0xff]
    %v1286 = vld [vmem:[#allocation7 + $0x10c0] sm:$0xff]
    %v1287 = vld [vmem:[#allocation7 + $0x10c8] sm:$0xff]
    %v1288 = vld [vmem:[#allocation7 + $0x10d0] sm:$0xff]
    %v1289 = vld [vmem:[#allocation7 + $0x10d8] sm:$0xff]
    %v1290 = vld [vmem:[#allocation7 + $0x10e0] sm:$0xff]
    %v1291 = vld [vmem:[#allocation7 + $0x10e8] sm:$0xff]
    %v1292 = vld [vmem:[#allocation7 + $0x10f0] sm:$0xff]
    %v1293 = vld [vmem:[#allocation7 + $0x10f8] sm:$0xff]
    %v1294 = vld [vmem:[#allocation7 + $0x1100] sm:$0xff]
    %v1295 = vld [vmem:[#allocation7 + $0x1108] sm:$0xff]
    %v1296 = vld [vmem:[#allocation7 + $0x1110] sm:$0xff]
    %v1297 = vld [vmem:[#allocation7 + $0x1118] sm:$0xff]
    %v1298 = vld [vmem:[#allocation7 + $0x1120] sm:$0xff]
    %v1299 = vld [vmem:[#allocation7 + $0x1128] sm:$0xff]
    %v1300 = vld [vmem:[#allocation7 + $0x1130] sm:$0xff]
    %v1301 = vld [vmem:[#allocation7 + $0x1138] sm:$0xff]
    %v1302 = vld [vmem:[#allocation7 + $0x1140] sm:$0xff]
    %v1303 = vld [vmem:[#allocation7 + $0x1148] sm:$0xff]
    %v1304 = vld [vmem:[#allocation7 + $0x1150] sm:$0xff]
    %v1305 = vld [vmem:[#allocation7 + $0x1158] sm:$0xff]
    %v1306 = vld [vmem:[#allocation7 + $0x1160] sm:$0xff]
    %v1307 = vld [vmem:[#allocation7 + $0x1168] sm:$0xff]
    %v1308 = vld [vmem:[#allocation7 + $0x1170] sm:$0xff]
    %v1309 = vld [vmem:[#allocation7 + $0x1178] sm:$0xff]
    %v1310 = vld [vmem:[#allocation7 + $0x1180] sm:$0xff]
    %v1311 = vld [vmem:[#allocation7 + $0x1188] sm:$0xff]
    %v1312 = vld [vmem:[#allocation7 + $0x1190] sm:$0xff]
    %v1313 = vld [vmem:[#allocation7 + $0x1198] sm:$0xff]
    %v1314 = vld [vmem:[#allocation7 + $0x11a0] sm:$0xff]
    %v1315 = vld [vmem:[#allocation7 + $0x11a8] sm:$0xff]
    %v1316 = vld [vmem:[#allocation7 + $0x11b0] sm:$0xff]
    %v1317 = vld [vmem:[#allocation7 + $0x11b8] sm:$0xff]
    %v1318 = vld [vmem:[#allocation7 + $0x11c0] sm:$0xff]
    %v1319 = vld [vmem:[#allocation7 + $0x11c8] sm:$0xff]
    %v1320 = vld [vmem:[#allocation7 + $0x11d0] sm:$0xff]
    %v1321 = vld [vmem:[#allocation7 + $0x11d8] sm:$0xff]
    %v1322 = vld [vmem:[#allocation7 + $0x11e0] sm:$0xff]
    %v1323 = vld [vmem:[#allocation7 + $0x11e8] sm:$0xff]
    %v1324 = vld [vmem:[#allocation7 + $0x11f0] sm:$0xff]
    %v1325 = vld [vmem:[#allocation7 + $0x11f8] sm:$0xff]
    %v1326 = vld [vmem:[#allocation7 + $0x1200] sm:$0xff]
    %v1327 = vld [vmem:[#allocation7 + $0x1208] sm:$0xff]
    %v1328 = vld [vmem:[#allocation7 + $0x1210] sm:$0xff]
    %v1329 = vld [vmem:[#allocation7 + $0x1218] sm:$0xff]
    %v1330 = vld [vmem:[#allocation7 + $0x1220] sm:$0xff]
    %v1331 = vld [vmem:[#allocation7 + $0x1228] sm:$0xff]
    %v1332 = vld [vmem:[#allocation7 + $0x1230] sm:$0xff]
    %v1333 = vld [vmem:[#allocation7 + $0x1238] sm:$0xff]
    %v1334 = vld [vmem:[#allocation7 + $0x1240] sm:$0xff]
    %v1335 = vld [vmem:[#allocation7 + $0x1248] sm:$0xff]
    %v1336 = vld [vmem:[#allocation7 + $0x1250] sm:$0xff]
    %v1337 = vld [vmem:[#allocation7 + $0x1258] sm:$0xff]
    %v1338 = vld [vmem:[#allocation7 + $0x1260] sm:$0xff]
    %v1339 = vld [vmem:[#allocation7 + $0x1268] sm:$0xff]
    %v1340 = vld [vmem:[#allocation7 + $0x1270] sm:$0xff]
    %v1341 = vld [vmem:[#allocation7 + $0x1278] sm:$0xff]
    %v1342 = vld [vmem:[#allocation7 + $0x1280] sm:$0xff]
    %v1343 = vld [vmem:[#allocation7 + $0x1288] sm:$0xff]
    %v1344 = vld [vmem:[#allocation7 + $0x1290] sm:$0xff]
    %v1345 = vld [vmem:[#allocation7 + $0x1298] sm:$0xff]
    %v1346 = vld [vmem:[#allocation7 + $0x12a0] sm:$0xff]
    %v1347 = vld [vmem:[#allocation7 + $0x12a8] sm:$0xff]
    %v1348 = vld [vmem:[#allocation7 + $0x12b0] sm:$0xff]
    %v1349 = vld [vmem:[#allocation7 + $0x12b8] sm:$0xff]
    %v1350 = vld [vmem:[#allocation7 + $0x12c0] sm:$0xff]
    %v1351 = vld [vmem:[#allocation7 + $0x12c8] sm:$0xff]
    %v1352 = vld [vmem:[#allocation7 + $0x12d0] sm:$0xff]
    %v1353 = vld [vmem:[#allocation7 + $0x12d8] sm:$0xff]
    %v1354 = vld [vmem:[#allocation7 + $0x12e0] sm:$0xff]
    %v1355 = vld [vmem:[#allocation7 + $0x12e8] sm:$0xff]
    %v1356 = vld [vmem:[#allocation7 + $0x12f0] sm:$0xff]
    %v1357 = vld [vmem:[#allocation7 + $0x12f8] sm:$0xff]
    %v1358 = vld [vmem:[#allocation7 + $0x1300] sm:$0xff]
    %v1359 = vld [vmem:[#allocation7 + $0x1308] sm:$0xff]
    %v1360 = vld [vmem:[#allocation7 + $0x1310] sm:$0xff]
    %v1361 = vld [vmem:[#allocation7 + $0x1318] sm:$0xff]
    %v1362 = vld [vmem:[#allocation7 + $0x1320] sm:$0xff]
    %v1363 = vld [vmem:[#allocation7 + $0x1328] sm:$0xff]
    %v1364 = vld [vmem:[#allocation7 + $0x1330] sm:$0xff]
    %v1365 = vld [vmem:[#allocation7 + $0x1338] sm:$0xff]
    %v1366 = vld [vmem:[#allocation7 + $0x1340] sm:$0xff]
    %v1367 = vld [vmem:[#allocation7 + $0x1348] sm:$0xff]
    %v1368 = vld [vmem:[#allocation7 + $0x1350] sm:$0xff]
    %v1369 = vld [vmem:[#allocation7 + $0x1358] sm:$0xff]
    %v1370 = vld [vmem:[#allocation7 + $0x1360] sm:$0xff]
    %v1371 = vld [vmem:[#allocation7 + $0x1368] sm:$0xff]
    %v1372 = vld [vmem:[#allocation7 + $0x1370] sm:$0xff]
    %v1373 = vld [vmem:[#allocation7 + $0x1378] sm:$0xff]
    %v1374 = vld [vmem:[#allocation7 + $0x1380] sm:$0xff]
    %v1375 = vld [vmem:[#allocation7 + $0x1388] sm:$0xff]
    %v1376 = vld [vmem:[#allocation7 + $0x1390] sm:$0xff]
    %v1377 = vld [vmem:[#allocation7 + $0x1398] sm:$0xff]
    %v1378 = vld [vmem:[#allocation7 + $0x13a0] sm:$0xff]
    %v1379 = vld [vmem:[#allocation7 + $0x13a8] sm:$0xff]
    %v1380 = vld [vmem:[#allocation7 + $0x13b0] sm:$0xff]
    %v1381 = vld [vmem:[#allocation7 + $0x13b8] sm:$0xff]
    %v1382 = vld [vmem:[#allocation7 + $0x13c0] sm:$0xff]
    %v1383 = vld [vmem:[#allocation7 + $0x13c8] sm:$0xff]
    %v1384 = vld [vmem:[#allocation7 + $0x13d0] sm:$0xff]
    %v1385 = vld [vmem:[#allocation7 + $0x13d8] sm:$0xff]
    %v1386 = vld [vmem:[#allocation7 + $0x13e0] sm:$0xff]
    %v1387 = vld [vmem:[#allocation7 + $0x13e8] sm:$0xff]
    %v1388 = vld [vmem:[#allocation7 + $0x13f0] sm:$0xff]
    %v1389 = vld [vmem:[#allocation7 + $0x13f8] sm:$0xff]
    %v1390 = vld [vmem:[#allocation7 + $0x1400] sm:$0xff]
    %v1391 = vld [vmem:[#allocation7 + $0x1408] sm:$0xff]
    %v1392 = vld [vmem:[#allocation7 + $0x1410] sm:$0xff]
    %v1393 = vld [vmem:[#allocation7 + $0x1418] sm:$0xff]
    %v1394 = vld [vmem:[#allocation7 + $0x1420] sm:$0xff]
    %v1395 = vld [vmem:[#allocation7 + $0x1428] sm:$0xff]
    %v1396 = vld [vmem:[#allocation7 + $0x1430] sm:$0xff]
    %v1397 = vld [vmem:[#allocation7 + $0x1438] sm:$0xff]
    %v1398 = vld [vmem:[#allocation7 + $0x1440] sm:$0xff]
    %v1399 = vld [vmem:[#allocation7 + $0x1448] sm:$0xff]
    %v1400 = vld [vmem:[#allocation7 + $0x1450] sm:$0xff]
    %v1401 = vld [vmem:[#allocation7 + $0x1458] sm:$0xff]
    %v1402 = vld [vmem:[#allocation7 + $0x1460] sm:$0xff]
    %v1403 = vld [vmem:[#allocation7 + $0x1468] sm:$0xff]
    %v1404 = vld [vmem:[#allocation7 + $0x1470] sm:$0xff]
    %v1405 = vld [vmem:[#allocation7 + $0x1478] sm:$0xff]
    %v1406 = vld [vmem:[#allocation7 + $0x1480] sm:$0xff]
    %v1407 = vld [vmem:[#allocation7 + $0x1488] sm:$0xff]
    %v1408 = vld [vmem:[#allocation7 + $0x1490] sm:$0xff]
    %v1409 = vld [vmem:[#allocation7 + $0x1498] sm:$0xff]
    %v1410 = vld [vmem:[#allocation7 + $0x14a0] sm:$0xff]
    %v1411 = vld [vmem:[#allocation7 + $0x14a8] sm:$0xff]
    %v1412 = vld [vmem:[#allocation7 + $0x14b0] sm:$0xff]
    %v1413 = vld [vmem:[#allocation7 + $0x14b8] sm:$0xff]
    %v1414 = vld [vmem:[#allocation7 + $0x14c0] sm:$0xff]
    %v1415 = vld [vmem:[#allocation7 + $0x14c8] sm:$0xff]
    %v1416 = vld [vmem:[#allocation7 + $0x14d0] sm:$0xff]
    %v1417 = vld [vmem:[#allocation7 + $0x14d8] sm:$0xff]
    %v1418 = vld [vmem:[#allocation7 + $0x14e0] sm:$0xff]
    %v1419 = vld [vmem:[#allocation7 + $0x14e8] sm:$0xff]
    %v1420 = vld [vmem:[#allocation7 + $0x14f0] sm:$0xff]
    %v1421 = vld [vmem:[#allocation7 + $0x14f8] sm:$0xff]
    %v1422 = vld [vmem:[#allocation7 + $0x1500] sm:$0xff]
    %v1423 = vld [vmem:[#allocation7 + $0x1508] sm:$0xff]
    %v1424 = vld [vmem:[#allocation7 + $0x1510] sm:$0xff]
    %v1425 = vld [vmem:[#allocation7 + $0x1518] sm:$0xff]
    %v1426 = vld [vmem:[#allocation7 + $0x1520] sm:$0xff]
    %v1427 = vld [vmem:[#allocation7 + $0x1528] sm:$0xff]
    %v1428 = vld [vmem:[#allocation7 + $0x1530] sm:$0xff]
    %v1429 = vld [vmem:[#allocation7 + $0x1538] sm:$0xff]
    %v1430 = vld [vmem:[#allocation7 + $0x1540] sm:$0xff]
    %v1431 = vld [vmem:[#allocation7 + $0x1548] sm:$0xff]
    %v1432 = vld [vmem:[#allocation7 + $0x1550] sm:$0xff]
    %v1433 = vld [vmem:[#allocation7 + $0x1558] sm:$0xff]
    %v1434 = vld [vmem:[#allocation7 + $0x1560] sm:$0xff]
    %v1435 = vld [vmem:[#allocation7 + $0x1568] sm:$0xff]
    %v1436 = vld [vmem:[#allocation7 + $0x1570] sm:$0xff]
    %v1437 = vld [vmem:[#allocation7 + $0x1578] sm:$0xff]
    %v1438 = vld [vmem:[#allocation7 + $0x1580] sm:$0xff]
    %v1439 = vld [vmem:[#allocation7 + $0x1588] sm:$0xff]
    %v1440 = vld [vmem:[#allocation7 + $0x1590] sm:$0xff]
    %v1441 = vld [vmem:[#allocation7 + $0x1598] sm:$0xff]
    %v1442 = vld [vmem:[#allocation7 + $0x15a0] sm:$0xff]
    %v1443 = vld [vmem:[#allocation7 + $0x15a8] sm:$0xff]
    %v1444 = vld [vmem:[#allocation7 + $0x15b0] sm:$0xff]
    %v1445 = vld [vmem:[#allocation7 + $0x15b8] sm:$0xff]
    %v1446 = vld [vmem:[#allocation7 + $0x15c0] sm:$0xff]
    %v1447 = vld [vmem:[#allocation7 + $0x15c8] sm:$0xff]
    %v1448 = vld [vmem:[#allocation7 + $0x15d0] sm:$0xff]
    %v1449 = vld [vmem:[#allocation7 + $0x15d8] sm:$0xff]
    %v1450 = vld [vmem:[#allocation7 + $0x15e0] sm:$0xff]
    %v1451 = vld [vmem:[#allocation7 + $0x15e8] sm:$0xff]
    %v1452 = vld [vmem:[#allocation7 + $0x15f0] sm:$0xff]
    %v1453 = vld [vmem:[#allocation7 + $0x15f8] sm:$0xff]
    %v1454 = vld [vmem:[#allocation7 + $0x1600] sm:$0xff]
    %v1455 = vld [vmem:[#allocation7 + $0x1608] sm:$0xff]
    %v1456 = vld [vmem:[#allocation7 + $0x1610] sm:$0xff]
    %v1457 = vld [vmem:[#allocation7 + $0x1618] sm:$0xff]
    %v1458 = vld [vmem:[#allocation7 + $0x1620] sm:$0xff]
    %v1459 = vld [vmem:[#allocation7 + $0x1628] sm:$0xff]
    %v1460 = vld [vmem:[#allocation7 + $0x1630] sm:$0xff]
    %v1461 = vld [vmem:[#allocation7 + $0x1638] sm:$0xff]
    %v1462 = vld [vmem:[#allocation7 + $0x1640] sm:$0xff]
    %v1463 = vld [vmem:[#allocation7 + $0x1648] sm:$0xff]
    %v1464 = vld [vmem:[#allocation7 + $0x1650] sm:$0xff]
    %v1465 = vld [vmem:[#allocation7 + $0x1658] sm:$0xff]
    %v1466 = vld [vmem:[#allocation7 + $0x1660] sm:$0xff]
    %v1467 = vld [vmem:[#allocation7 + $0x1668] sm:$0xff]
    %v1468 = vld [vmem:[#allocation7 + $0x1670] sm:$0xff]
    %v1469 = vld [vmem:[#allocation7 + $0x1678] sm:$0xff]
    %v1470 = vld [vmem:[#allocation7 + $0x1680] sm:$0xff]
    %v1471 = vld [vmem:[#allocation7 + $0x1688] sm:$0xff]
    %v1472 = vld [vmem:[#allocation7 + $0x1690] sm:$0xff]
    %v1473 = vld [vmem:[#allocation7 + $0x1698] sm:$0xff]
    %v1474 = vld [vmem:[#allocation7 + $0x16a0] sm:$0xff]
    %v1475 = vld [vmem:[#allocation7 + $0x16a8] sm:$0xff]
    %v1476 = vld [vmem:[#allocation7 + $0x16b0] sm:$0xff]
    %v1477 = vld [vmem:[#allocation7 + $0x16b8] sm:$0xff]
    %v1478 = vld [vmem:[#allocation7 + $0x16c0] sm:$0xff]
    %v1479 = vld [vmem:[#allocation7 + $0x16c8] sm:$0xff]
    %v1480 = vld [vmem:[#allocation7 + $0x16d0] sm:$0xff]
    %v1481 = vld [vmem:[#allocation7 + $0x16d8] sm:$0xff]
    %v1482 = vld [vmem:[#allocation7 + $0x16e0] sm:$0xff]
    %v1483 = vld [vmem:[#allocation7 + $0x16e8] sm:$0xff]
    %v1484 = vld [vmem:[#allocation7 + $0x16f0] sm:$0xff]
    %v1485 = vld [vmem:[#allocation7 + $0x16f8] sm:$0xff]
    %v1486 = vld [vmem:[#allocation7 + $0x1700] sm:$0xff]
    %v1487 = vld [vmem:[#allocation7 + $0x1708] sm:$0xff]
    %v1488 = vld [vmem:[#allocation7 + $0x1710] sm:$0xff]
    %v1489 = vld [vmem:[#allocation7 + $0x1718] sm:$0xff]
    %v1490 = vld [vmem:[#allocation7 + $0x1720] sm:$0xff]
    %v1491 = vld [vmem:[#allocation7 + $0x1728] sm:$0xff]
    %v1492 = vld [vmem:[#allocation7 + $0x1730] sm:$0xff]
    %v1493 = vld [vmem:[#allocation7 + $0x1738] sm:$0xff]
    %v1494 = vld [vmem:[#allocation7 + $0x1740] sm:$0xff]
    %v1495 = vld [vmem:[#allocation7 + $0x1748] sm:$0xff]
    %v1496 = vld [vmem:[#allocation7 + $0x1750] sm:$0xff]
    %v1497 = vld [vmem:[#allocation7 + $0x1758] sm:$0xff]
    %v1498 = vld [vmem:[#allocation7 + $0x1760] sm:$0xff]
    %v1499 = vld [vmem:[#allocation7 + $0x1768] sm:$0xff]
    %v1500 = vld [vmem:[#allocation7 + $0x1770] sm:$0xff]
    %v1501 = vld [vmem:[#allocation7 + $0x1778] sm:$0xff]
    %v1502 = vld [vmem:[#allocation7 + $0x1780] sm:$0xff]
    %v1503 = vld [vmem:[#allocation7 + $0x1788] sm:$0xff]
    %v1504 = vld [vmem:[#allocation7 + $0x1790] sm:$0xff]
    %v1505 = vld [vmem:[#allocation7 + $0x1798] sm:$0xff]
    %v1506 = vld [vmem:[#allocation7 + $0x17a0] sm:$0xff]
    %v1507 = vld [vmem:[#allocation7 + $0x17a8] sm:$0xff]
    %v1508 = vld [vmem:[#allocation7 + $0x17b0] sm:$0xff]
    %v1509 = vld [vmem:[#allocation7 + $0x17b8] sm:$0xff]
    %v1510 = vld [vmem:[#allocation7 + $0x17c0] sm:$0xff]
    %v1511 = vld [vmem:[#allocation7 + $0x17c8] sm:$0xff]
    %v1512 = vld [vmem:[#allocation7 + $0x17d0] sm:$0xff]
    %v1513 = vld [vmem:[#allocation7 + $0x17d8] sm:$0xff]
    %v1514 = vld [vmem:[#allocation7 + $0x17e0] sm:$0xff]
    %v1515 = vld [vmem:[#allocation7 + $0x17e8] sm:$0xff]
    %v1516 = vld [vmem:[#allocation7 + $0x17f0] sm:$0xff]
    %v1517 = vld [vmem:[#allocation7 + $0x17f8] sm:$0xff]
    %v1518 = vld [vmem:[#allocation7 + $0x1800] sm:$0xff]
    %v1519 = vld [vmem:[#allocation7 + $0x1808] sm:$0xff]
    %v1520 = vld [vmem:[#allocation7 + $0x1810] sm:$0xff]
    %v1521 = vld [vmem:[#allocation7 + $0x1818] sm:$0xff]
    %v1522 = vld [vmem:[#allocation7 + $0x1820] sm:$0xff]
    %v1523 = vld [vmem:[#allocation7 + $0x1828] sm:$0xff]
    %v1524 = vld [vmem:[#allocation7 + $0x1830] sm:$0xff]
    %v1525 = vld [vmem:[#allocation7 + $0x1838] sm:$0xff]
    %v1526 = vld [vmem:[#allocation7 + $0x1840] sm:$0xff]
    %v1527 = vld [vmem:[#allocation7 + $0x1848] sm:$0xff]
    %v1528 = vld [vmem:[#allocation7 + $0x1850] sm:$0xff]
    %v1529 = vld [vmem:[#allocation7 + $0x1858] sm:$0xff]
    %v1530 = vld [vmem:[#allocation7 + $0x1860] sm:$0xff]
    %v1531 = vld [vmem:[#allocation7 + $0x1868] sm:$0xff]
    %v1532 = vld [vmem:[#allocation7 + $0x1870] sm:$0xff]
    %v1533 = vld [vmem:[#allocation7 + $0x1878] sm:$0xff]
    %v1534 = vld [vmem:[#allocation7 + $0x1880] sm:$0xff]
    %v1535 = vld [vmem:[#allocation7 + $0x1888] sm:$0xff]
    %v1536 = vld [vmem:[#allocation7 + $0x1890] sm:$0xff]
    %v1537 = vld [vmem:[#allocation7 + $0x1898] sm:$0xff]
    %v1538 = vld [vmem:[#allocation7 + $0x18a0] sm:$0xff]
    %v1539 = vld [vmem:[#allocation7 + $0x18a8] sm:$0xff]
    %v1540 = vld [vmem:[#allocation7 + $0x18b0] sm:$0xff]
    %v1541 = vld [vmem:[#allocation7 + $0x18b8] sm:$0xff]
    %v1542 = vld [vmem:[#allocation7 + $0x18c0] sm:$0xff]
    %v1543 = vld [vmem:[#allocation7 + $0x18c8] sm:$0xff]
    %v1544 = vld [vmem:[#allocation7 + $0x18d0] sm:$0xff]
    %v1545 = vld [vmem:[#allocation7 + $0x18d8] sm:$0xff]
    %v1546 = vld [vmem:[#allocation7 + $0x18e0] sm:$0xff]
    %v1547 = vld [vmem:[#allocation7 + $0x18e8] sm:$0xff]
    %v1548 = vld [vmem:[#allocation7 + $0x18f0] sm:$0xff]
    %v1549 = vld [vmem:[#allocation7 + $0x18f8] sm:$0xff]
    %v1550 = vld [vmem:[#allocation7 + $0x1900] sm:$0xff]
    %v1551 = vld [vmem:[#allocation7 + $0x1908] sm:$0xff]
    %v1552 = vld [vmem:[#allocation7 + $0x1910] sm:$0xff]
    %v1553 = vld [vmem:[#allocation7 + $0x1918] sm:$0xff]
    %v1554 = vld [vmem:[#allocation7 + $0x1920] sm:$0xff]
    %v1555 = vld [vmem:[#allocation7 + $0x1928] sm:$0xff]
    %v1556 = vld [vmem:[#allocation7 + $0x1930] sm:$0xff]
    %v1557 = vld [vmem:[#allocation7 + $0x1938] sm:$0xff]
    %v1558 = vld [vmem:[#allocation7 + $0x1940] sm:$0xff]
    %v1559 = vld [vmem:[#allocation7 + $0x1948] sm:$0xff]
    %v1560 = vld [vmem:[#allocation7 + $0x1950] sm:$0xff]
    %v1561 = vld [vmem:[#allocation7 + $0x1958] sm:$0xff]
    %v1562 = vld [vmem:[#allocation7 + $0x1960] sm:$0xff]
    %v1563 = vld [vmem:[#allocation7 + $0x1968] sm:$0xff]
    %v1564 = vld [vmem:[#allocation7 + $0x1970] sm:$0xff]
    %v1565 = vld [vmem:[#allocation7 + $0x1978] sm:$0xff]
    %v1566 = vld [vmem:[#allocation7 + $0x1980] sm:$0xff]
    %v1567 = vld [vmem:[#allocation7 + $0x1988] sm:$0xff]
    %v1568 = vld [vmem:[#allocation7 + $0x1990] sm:$0xff]
    %v1569 = vld [vmem:[#allocation7 + $0x1998] sm:$0xff]
    %v1570 = vld [vmem:[#allocation7 + $0x19a0] sm:$0xff]
    %v1571 = vld [vmem:[#allocation7 + $0x19a8] sm:$0xff]
    %v1572 = vld [vmem:[#allocation7 + $0x19b0] sm:$0xff]
    %v1573 = vld [vmem:[#allocation7 + $0x19b8] sm:$0xff]
    %v1574 = vld [vmem:[#allocation7 + $0x19c0] sm:$0xff]
    %v1575 = vld [vmem:[#allocation7 + $0x19c8] sm:$0xff]
    %v1576 = vld [vmem:[#allocation7 + $0x19d0] sm:$0xff]
    %v1577 = vld [vmem:[#allocation7 + $0x19d8] sm:$0xff]
    %v1578 = vld [vmem:[#allocation7 + $0x19e0] sm:$0xff]
    %v1579 = vld [vmem:[#allocation7 + $0x19e8] sm:$0xff]
    %v1580 = vld [vmem:[#allocation7 + $0x19f0] sm:$0xff]
    %v1581 = vld [vmem:[#allocation7 + $0x19f8] sm:$0xff]
    %v1582 = vld [vmem:[#allocation7 + $0x1a00] sm:$0xff]
    %v1583 = vld [vmem:[#allocation7 + $0x1a08] sm:$0xff]
    %v1584 = vld [vmem:[#allocation7 + $0x1a10] sm:$0xff]
    %v1585 = vld [vmem:[#allocation7 + $0x1a18] sm:$0xff]
    %v1586 = vld [vmem:[#allocation7 + $0x1a20] sm:$0xff]
    %v1587 = vld [vmem:[#allocation7 + $0x1a28] sm:$0xff]
    %v1588 = vld [vmem:[#allocation7 + $0x1a30] sm:$0xff]
    %v1589 = vld [vmem:[#allocation7 + $0x1a38] sm:$0xff]
    %v1590 = vld [vmem:[#allocation7 + $0x1a40] sm:$0xff]
    %v1591 = vld [vmem:[#allocation7 + $0x1a48] sm:$0xff]
    %v1592 = vld [vmem:[#allocation7 + $0x1a50] sm:$0xff]
    %v1593 = vld [vmem:[#allocation7 + $0x1a58] sm:$0xff]
    %v1594 = vld [vmem:[#allocation7 + $0x1a60] sm:$0xff]
    %v1595 = vld [vmem:[#allocation7 + $0x1a68] sm:$0xff]
    %v1596 = vld [vmem:[#allocation7 + $0x1a70] sm:$0xff]
    %v1597 = vld [vmem:[#allocation7 + $0x1a78] sm:$0xff]
    %v1598 = vld [vmem:[#allocation7 + $0x1a80] sm:$0xff]
    %v1599 = vld [vmem:[#allocation7 + $0x1a88] sm:$0xff]
    %v1600 = vld [vmem:[#allocation7 + $0x1a90] sm:$0xff]
    %v1601 = vld [vmem:[#allocation7 + $0x1a98] sm:$0xff]
    %v1602 = vld [vmem:[#allocation7 + $0x1aa0] sm:$0xff]
    %v1603 = vld [vmem:[#allocation7 + $0x1aa8] sm:$0xff]
    %v1604 = vld [vmem:[#allocation7 + $0x1ab0] sm:$0xff]
    %v1605 = vld [vmem:[#allocation7 + $0x1ab8] sm:$0xff]
    %v1606 = vld [vmem:[#allocation7 + $0x1ac0] sm:$0xff]
    %v1607 = vld [vmem:[#allocation7 + $0x1ac8] sm:$0xff]
    %v1608 = vld [vmem:[#allocation7 + $0x1ad0] sm:$0xff]
    %v1609 = vld [vmem:[#allocation7 + $0x1ad8] sm:$0xff]
    %v1610 = vld [vmem:[#allocation7 + $0x1ae0] sm:$0xff]
    %v1611 = vld [vmem:[#allocation7 + $0x1ae8] sm:$0xff]
    %v1612 = vld [vmem:[#allocation7 + $0x1af0] sm:$0xff]
    %v1613 = vld [vmem:[#allocation7 + $0x1af8] sm:$0xff]
    %v1614 = vld [vmem:[#allocation7 + $0x1b00] sm:$0xff]
    %v1615 = vld [vmem:[#allocation7 + $0x1b08] sm:$0xff]
    %v1616 = vld [vmem:[#allocation7 + $0x1b10] sm:$0xff]
    %v1617 = vld [vmem:[#allocation7 + $0x1b18] sm:$0xff]
    %v1618 = vld [vmem:[#allocation7 + $0x1b20] sm:$0xff]
    %v1619 = vld [vmem:[#allocation7 + $0x1b28] sm:$0xff]
    %v1620 = vld [vmem:[#allocation7 + $0x1b30] sm:$0xff]
    %v1621 = vld [vmem:[#allocation7 + $0x1b38] sm:$0xff]
    %v1622 = vld [vmem:[#allocation7 + $0x1b40] sm:$0xff]
    %v1623 = vld [vmem:[#allocation7 + $0x1b48] sm:$0xff]
    %v1624 = vld [vmem:[#allocation7 + $0x1b50] sm:$0xff]
    %v1625 = vld [vmem:[#allocation7 + $0x1b58] sm:$0xff]
    %v1626 = vld [vmem:[#allocation7 + $0x1b60] sm:$0xff]
    %v1627 = vld [vmem:[#allocation7 + $0x1b68] sm:$0xff]
    %v1628 = vld [vmem:[#allocation7 + $0x1b70] sm:$0xff]
    %v1629 = vld [vmem:[#allocation7 + $0x1b78] sm:$0xff]
    %v1630 = vld [vmem:[#allocation7 + $0x1b80] sm:$0xff]
    %v1631 = vld [vmem:[#allocation7 + $0x1b88] sm:$0xff]
    %v1632 = vld [vmem:[#allocation7 + $0x1b90] sm:$0xff]
    %v1633 = vld [vmem:[#allocation7 + $0x1b98] sm:$0xff]
    %v1634 = vld [vmem:[#allocation7 + $0x1ba0] sm:$0xff]
    %v1635 = vld [vmem:[#allocation7 + $0x1ba8] sm:$0xff]
    %v1636 = vld [vmem:[#allocation7 + $0x1bb0] sm:$0xff]
    %v1637 = vld [vmem:[#allocation7 + $0x1bb8] sm:$0xff]
    %v1638 = vld [vmem:[#allocation7 + $0x1bc0] sm:$0xff]
    %v1639 = vld [vmem:[#allocation7 + $0x1bc8] sm:$0xff]
    %v1640 = vld [vmem:[#allocation7 + $0x1bd0] sm:$0xff]
    %v1641 = vld [vmem:[#allocation7 + $0x1bd8] sm:$0xff]
    %v1642 = vld [vmem:[#allocation7 + $0x1be0] sm:$0xff]
    %v1643 = vld [vmem:[#allocation7 + $0x1be8] sm:$0xff]
    %v1644 = vld [vmem:[#allocation7 + $0x1bf0] sm:$0xff]
    %v1645 = vld [vmem:[#allocation7 + $0x1bf8] sm:$0xff]
    %v1646 = vld [vmem:[#allocation7 + $0x1c00] sm:$0xff]
    %v1647 = vld [vmem:[#allocation7 + $0x1c08] sm:$0xff]
    %v1648 = vld [vmem:[#allocation7 + $0x1c10] sm:$0xff]
    %v1649 = vld [vmem:[#allocation7 + $0x1c18] sm:$0xff]
    %v1650 = vld [vmem:[#allocation7 + $0x1c20] sm:$0xff]
    %v1651 = vld [vmem:[#allocation7 + $0x1c28] sm:$0xff]
    %v1652 = vld [vmem:[#allocation7 + $0x1c30] sm:$0xff]
    %v1653 = vld [vmem:[#allocation7 + $0x1c38] sm:$0xff]
    %v1654 = vld [vmem:[#allocation7 + $0x1c40] sm:$0xff]
    %v1655 = vld [vmem:[#allocation7 + $0x1c48] sm:$0xff]
    %v1656 = vld [vmem:[#allocation7 + $0x1c50] sm:$0xff]
    %v1657 = vld [vmem:[#allocation7 + $0x1c58] sm:$0xff]
    %v1658 = vld [vmem:[#allocation7 + $0x1c60] sm:$0xff]
    %v1659 = vld [vmem:[#allocation7 + $0x1c68] sm:$0xff]
    %v1660 = vld [vmem:[#allocation7 + $0x1c70] sm:$0xff]
    %v1661 = vld [vmem:[#allocation7 + $0x1c78] sm:$0xff]
    %v1662 = vld [vmem:[#allocation7 + $0x1c80] sm:$0xff]
    %v1663 = vld [vmem:[#allocation7 + $0x1c88] sm:$0xff]
    %v1664 = vld [vmem:[#allocation7 + $0x1c90] sm:$0xff]
    %v1665 = vld [vmem:[#allocation7 + $0x1c98] sm:$0xff]
    %v1666 = vld [vmem:[#allocation7 + $0x1ca0] sm:$0xff]
    %v1667 = vld [vmem:[#allocation7 + $0x1ca8] sm:$0xff]
    %v1668 = vld [vmem:[#allocation7 + $0x1cb0] sm:$0xff]
    %v1669 = vld [vmem:[#allocation7 + $0x1cb8] sm:$0xff]
    %v1670 = vld [vmem:[#allocation7 + $0x1cc0] sm:$0xff]
    %v1671 = vld [vmem:[#allocation7 + $0x1cc8] sm:$0xff]
    %v1672 = vld [vmem:[#allocation7 + $0x1cd0] sm:$0xff]
    %v1673 = vld [vmem:[#allocation7 + $0x1cd8] sm:$0xff]
    %v1674 = vld [vmem:[#allocation7 + $0x1ce0] sm:$0xff]
    %v1675 = vld [vmem:[#allocation7 + $0x1ce8] sm:$0xff]
    %v1676 = vld [vmem:[#allocation7 + $0x1cf0] sm:$0xff]
    %v1677 = vld [vmem:[#allocation7 + $0x1cf8] sm:$0xff]
    %v1678 = vld [vmem:[#allocation7 + $0x1d00] sm:$0xff]
    %v1679 = vld [vmem:[#allocation7 + $0x1d08] sm:$0xff]
    %v1680 = vld [vmem:[#allocation7 + $0x1d10] sm:$0xff]
    %v1681 = vld [vmem:[#allocation7 + $0x1d18] sm:$0xff]
    %v1682 = vld [vmem:[#allocation7 + $0x1d20] sm:$0xff]
    %v1683 = vld [vmem:[#allocation7 + $0x1d28] sm:$0xff]
    %v1684 = vld [vmem:[#allocation7 + $0x1d30] sm:$0xff]
    %v1685 = vld [vmem:[#allocation7 + $0x1d38] sm:$0xff]
    %v1686 = vld [vmem:[#allocation7 + $0x1d40] sm:$0xff]
    %v1687 = vld [vmem:[#allocation7 + $0x1d48] sm:$0xff]
    %v1688 = vld [vmem:[#allocation7 + $0x1d50] sm:$0xff]
    %v1689 = vld [vmem:[#allocation7 + $0x1d58] sm:$0xff]
    %v1690 = vld [vmem:[#allocation7 + $0x1d60] sm:$0xff]
    %v1691 = vld [vmem:[#allocation7 + $0x1d68] sm:$0xff]
    %v1692 = vld [vmem:[#allocation7 + $0x1d70] sm:$0xff]
    %v1693 = vld [vmem:[#allocation7 + $0x1d78] sm:$0xff]
    %v1694 = vld [vmem:[#allocation7 + $0x1d80] sm:$0xff]
    %v1695 = vld [vmem:[#allocation7 + $0x1d88] sm:$0xff]
    %v1696 = vld [vmem:[#allocation7 + $0x1d90] sm:$0xff]
    %v1697 = vld [vmem:[#allocation7 + $0x1d98] sm:$0xff]
    %v1698 = vld [vmem:[#allocation7 + $0x1da0] sm:$0xff]
    %v1699 = vld [vmem:[#allocation7 + $0x1da8] sm:$0xff]
    %v1700 = vld [vmem:[#allocation7 + $0x1db0] sm:$0xff]
    %v1701 = vld [vmem:[#allocation7 + $0x1db8] sm:$0xff]
    %v1702 = vld [vmem:[#allocation7 + $0x1dc0] sm:$0xff]
    %v1703 = vld [vmem:[#allocation7 + $0x1dc8] sm:$0xff]
    %v1704 = vld [vmem:[#allocation7 + $0x1dd0] sm:$0xff]
    %v1705 = vld [vmem:[#allocation7 + $0x1dd8] sm:$0xff]
    %v1706 = vld [vmem:[#allocation7 + $0x1de0] sm:$0xff]
    %v1707 = vld [vmem:[#allocation7 + $0x1de8] sm:$0xff]
    %v1708 = vld [vmem:[#allocation7 + $0x1df0] sm:$0xff]
    %v1709 = vld [vmem:[#allocation7 + $0x1df8] sm:$0xff]
    %v1710 = vld [vmem:[#allocation7 + $0x1e00] sm:$0xff]
    %v1711 = vld [vmem:[#allocation7 + $0x1e08] sm:$0xff]
    %v1712 = vld [vmem:[#allocation7 + $0x1e10] sm:$0xff]
    %v1713 = vld [vmem:[#allocation7 + $0x1e18] sm:$0xff]
    %v1714 = vld [vmem:[#allocation7 + $0x1e20] sm:$0xff]
    %v1715 = vld [vmem:[#allocation7 + $0x1e28] sm:$0xff]
    %v1716 = vld [vmem:[#allocation7 + $0x1e30] sm:$0xff]
    %v1717 = vld [vmem:[#allocation7 + $0x1e38] sm:$0xff]
    %v1718 = vld [vmem:[#allocation7 + $0x1e40] sm:$0xff]
    %v1719 = vld [vmem:[#allocation7 + $0x1e48] sm:$0xff]
    %v1720 = vld [vmem:[#allocation7 + $0x1e50] sm:$0xff]
    %v1721 = vld [vmem:[#allocation7 + $0x1e58] sm:$0xff]
    %v1722 = vld [vmem:[#allocation7 + $0x1e60] sm:$0xff]
    %v1723 = vld [vmem:[#allocation7 + $0x1e68] sm:$0xff]
    %v1724 = vld [vmem:[#allocation7 + $0x1e70] sm:$0xff]
    %v1725 = vld [vmem:[#allocation7 + $0x1e78] sm:$0xff]
    %v1726 = vld [vmem:[#allocation7 + $0x1e80] sm:$0xff]
    %v1727 = vld [vmem:[#allocation7 + $0x1e88] sm:$0xff]
    %v1728 = vld [vmem:[#allocation7 + $0x1e90] sm:$0xff]
    %v1729 = vld [vmem:[#allocation7 + $0x1e98] sm:$0xff]
    %v1730 = vld [vmem:[#allocation7 + $0x1ea0] sm:$0xff]
    %v1731 = vld [vmem:[#allocation7 + $0x1ea8] sm:$0xff]
    %v1732 = vld [vmem:[#allocation7 + $0x1eb0] sm:$0xff]
    %v1733 = vld [vmem:[#allocation7 + $0x1eb8] sm:$0xff]
    %v1734 = vld [vmem:[#allocation7 + $0x1ec0] sm:$0xff]
    %v1735 = vld [vmem:[#allocation7 + $0x1ec8] sm:$0xff]
    %v1736 = vld [vmem:[#allocation7 + $0x1ed0] sm:$0xff]
    %v1737 = vld [vmem:[#allocation7 + $0x1ed8] sm:$0xff]
    %v1738 = vld [vmem:[#allocation7 + $0x1ee0] sm:$0xff]
    %v1739 = vld [vmem:[#allocation7 + $0x1ee8] sm:$0xff]
    %v1740 = vld [vmem:[#allocation7 + $0x1ef0] sm:$0xff]
    %v1741 = vld [vmem:[#allocation7 + $0x1ef8] sm:$0xff]
    %v1742 = vld [vmem:[#allocation7 + $0x1f00] sm:$0xff]
    %v1743 = vld [vmem:[#allocation7 + $0x1f08] sm:$0xff]
    %v1744 = vld [vmem:[#allocation7 + $0x1f10] sm:$0xff]
    %v1745 = vld [vmem:[#allocation7 + $0x1f18] sm:$0xff]
    %v1746 = vld [vmem:[#allocation7 + $0x1f20] sm:$0xff]
    %v1747 = vld [vmem:[#allocation7 + $0x1f28] sm:$0xff]
    %v1748 = vld [vmem:[#allocation7 + $0x1f30] sm:$0xff]
    %v1749 = vld [vmem:[#allocation7 + $0x1f38] sm:$0xff]
    %v1750 = vld [vmem:[#allocation7 + $0x1f40] sm:$0xff]
    %v1751 = vld [vmem:[#allocation7 + $0x1f48] sm:$0xff]
    %v1752 = vld [vmem:[#allocation7 + $0x1f50] sm:$0xff]
    %v1753 = vld [vmem:[#allocation7 + $0x1f58] sm:$0xff]
    %v1754 = vld [vmem:[#allocation7 + $0x1f60] sm:$0xff]
    %v1755 = vld [vmem:[#allocation7 + $0x1f68] sm:$0xff]
    %v1756 = vld [vmem:[#allocation7 + $0x1f70] sm:$0xff]
    %v1757 = vld [vmem:[#allocation7 + $0x1f78] sm:$0xff]
    %v1758 = vld [vmem:[#allocation7 + $0x1f80] sm:$0xff]
    %v1759 = vld [vmem:[#allocation7 + $0x1f88] sm:$0xff]
    %v1760 = vld [vmem:[#allocation7 + $0x1f90] sm:$0xff]
    %v1761 = vld [vmem:[#allocation7 + $0x1f98] sm:$0xff]
    %v1762 = vld [vmem:[#allocation7 + $0x1fa0] sm:$0xff]
    %v1763 = vld [vmem:[#allocation7 + $0x1fa8] sm:$0xff]
    %v1764 = vld [vmem:[#allocation7 + $0x1fb0] sm:$0xff]
    %v1765 = vld [vmem:[#allocation7 + $0x1fb8] sm:$0xff]
    %v1766 = vld [vmem:[#allocation7 + $0x1fc0] sm:$0xff]
    %v1767 = vld [vmem:[#allocation7 + $0x1fc8] sm:$0xff]
    %v1768 = vld [vmem:[#allocation7 + $0x1fd0] sm:$0xff]
    %v1769 = vld [vmem:[#allocation7 + $0x1fd8] sm:$0xff]
    %v1770 = vld [vmem:[#allocation7 + $0x1fe0] sm:$0xff]
    %v1771 = vld [vmem:[#allocation7 + $0x1fe8] sm:$0xff]
    %v1772 = vld [vmem:[#allocation7 + $0x1ff0] sm:$0xff]
    %v1773 = vld [vmem:[#allocation7 + $0x1ff8] sm:$0xff]
    %v1774 = vld [vmem:[#allocation7 + $0x2000] sm:$0xff]
    %v1775 = vld [vmem:[#allocation7 + $0x2008] sm:$0xff]
    %v1776 = vld [vmem:[#allocation7 + $0x2010] sm:$0xff]
    %v1777 = vld [vmem:[#allocation7 + $0x2018] sm:$0xff]
    %v1778 = vld [vmem:[#allocation7 + $0x2020] sm:$0xff]
    %v1779 = vld [vmem:[#allocation7 + $0x2028] sm:$0xff]
    %v1780 = vld [vmem:[#allocation7 + $0x2030] sm:$0xff]
    %v1781 = vld [vmem:[#allocation7 + $0x2038] sm:$0xff]
    %v1782 = vld [vmem:[#allocation7 + $0x2040] sm:$0xff]
    %v1783 = vld [vmem:[#allocation7 + $0x2048] sm:$0xff]
    %v1784 = vld [vmem:[#allocation7 + $0x2050] sm:$0xff]
    %v1785 = vld [vmem:[#allocation7 + $0x2058] sm:$0xff]
    %v1786 = vld [vmem:[#allocation7 + $0x2060] sm:$0xff]
    %v1787 = vld [vmem:[#allocation7 + $0x2068] sm:$0xff]
    %v1788 = vld [vmem:[#allocation7 + $0x2070] sm:$0xff]
    %v1789 = vld [vmem:[#allocation7 + $0x2078] sm:$0xff]
    %v1790 = vld [vmem:[#allocation7 + $0x2080] sm:$0xff]
    %v1791 = vld [vmem:[#allocation7 + $0x2088] sm:$0xff]
    %v1792 = vld [vmem:[#allocation7 + $0x2090] sm:$0xff]
    %v1793 = vld [vmem:[#allocation7 + $0x2098] sm:$0xff]
    %v1794 = vld [vmem:[#allocation7 + $0x20a0] sm:$0xff]
    %v1795 = vld [vmem:[#allocation7 + $0x20a8] sm:$0xff]
    %v1796 = vld [vmem:[#allocation7 + $0x20b0] sm:$0xff]
    %v1797 = vld [vmem:[#allocation7 + $0x20b8] sm:$0xff]
    %v1798 = vld [vmem:[#allocation7 + $0x20c0] sm:$0xff]
    %v1799 = vld [vmem:[#allocation7 + $0x20c8] sm:$0xff]
    %v1800 = vld [vmem:[#allocation7 + $0x20d0] sm:$0xff]
    %v1801 = vld [vmem:[#allocation7 + $0x20d8] sm:$0xff]
    %v1802 = vld [vmem:[#allocation7 + $0x20e0] sm:$0xff]
    %v1803 = vld [vmem:[#allocation7 + $0x20e8] sm:$0xff]
    %v1804 = vld [vmem:[#allocation7 + $0x20f0] sm:$0xff]
    %v1805 = vld [vmem:[#allocation7 + $0x20f8] sm:$0xff]
    %v1806 = vld [vmem:[#allocation7 + $0x2100] sm:$0xff]
    %v1807 = vld [vmem:[#allocation7 + $0x2108] sm:$0xff]
    %v1808 = vld [vmem:[#allocation7 + $0x2110] sm:$0xff]
    %v1809 = vld [vmem:[#allocation7 + $0x2118] sm:$0xff]
    %v1810 = vld [vmem:[#allocation7 + $0x2120] sm:$0xff]
    %v1811 = vld [vmem:[#allocation7 + $0x2128] sm:$0xff]
    %v1812 = vld [vmem:[#allocation7 + $0x2130] sm:$0xff]
    %v1813 = vld [vmem:[#allocation7 + $0x2138] sm:$0xff]
    %v1814 = vld [vmem:[#allocation7 + $0x2140] sm:$0xff]
    %v1815 = vld [vmem:[#allocation7 + $0x2148] sm:$0xff]
    %v1816 = vld [vmem:[#allocation7 + $0x2150] sm:$0xff]
    %v1817 = vld [vmem:[#allocation7 + $0x2158] sm:$0xff]
    %v1818 = vld [vmem:[#allocation7 + $0x2160] sm:$0xff]
    %v1819 = vld [vmem:[#allocation7 + $0x2168] sm:$0xff]
    %v1820 = vld [vmem:[#allocation7 + $0x2170] sm:$0xff]
    %v1821 = vld [vmem:[#allocation7 + $0x2178] sm:$0xff]
    %v1822 = vld [vmem:[#allocation7 + $0x2180] sm:$0xff]
    %v1823 = vld [vmem:[#allocation7 + $0x2188] sm:$0xff]
    %v1824 = vld [vmem:[#allocation7 + $0x2190] sm:$0xff]
    %v1825 = vld [vmem:[#allocation7 + $0x2198] sm:$0xff]
    %v1826 = vld [vmem:[#allocation7 + $0x21a0] sm:$0xff]
    %v1827 = vld [vmem:[#allocation7 + $0x21a8] sm:$0xff]
    %v1828 = vld [vmem:[#allocation7 + $0x21b0] sm:$0xff]
    %v1829 = vld [vmem:[#allocation7 + $0x21b8] sm:$0xff]
    %v1830 = vld [vmem:[#allocation7 + $0x21c0] sm:$0xff]
    %v1831 = vld [vmem:[#allocation7 + $0x21c8] sm:$0xff]
    %v1832 = vld [vmem:[#allocation7 + $0x21d0] sm:$0xff]
    %v1833 = vld [vmem:[#allocation7 + $0x21d8] sm:$0xff]
    %v1834 = vld [vmem:[#allocation7 + $0x21e0] sm:$0xff]
    %v1835 = vld [vmem:[#allocation7 + $0x21e8] sm:$0xff]
    %v1836 = vld [vmem:[#allocation7 + $0x21f0] sm:$0xff]
    %v1837 = vld [vmem:[#allocation7 + $0x21f8] sm:$0xff]
    %v1838 = vld [vmem:[#allocation7 + $0x2200] sm:$0xff]
    %v1839 = vld [vmem:[#allocation7 + $0x2208] sm:$0xff]
    %v1840 = vld [vmem:[#allocation7 + $0x2210] sm:$0xff]
    %v1841 = vld [vmem:[#allocation7 + $0x2218] sm:$0xff]
    %v1842 = vld [vmem:[#allocation7 + $0x2220] sm:$0xff]
    %v1843 = vld [vmem:[#allocation7 + $0x2228] sm:$0xff]
    %v1844 = vld [vmem:[#allocation7 + $0x2230] sm:$0xff]
    %v1845 = vld [vmem:[#allocation7 + $0x2238] sm:$0xff]
    %v1846 = vld [vmem:[#allocation7 + $0x2240] sm:$0xff]
    %v1847 = vld [vmem:[#allocation7 + $0x2248] sm:$0xff]
    %v1848 = vld [vmem:[#allocation7 + $0x2250] sm:$0xff]
    %v1849 = vld [vmem:[#allocation7 + $0x2258] sm:$0xff]
    %v1850 = vld [vmem:[#allocation7 + $0x2260] sm:$0xff]
    %v1851 = vld [vmem:[#allocation7 + $0x2268] sm:$0xff]
    %v1852 = vld [vmem:[#allocation7 + $0x2270] sm:$0xff]
    %v1853 = vld [vmem:[#allocation7 + $0x2278] sm:$0xff]
    %v1854 = vld [vmem:[#allocation7 + $0x2280] sm:$0xff]
    %v1855 = vld [vmem:[#allocation7 + $0x2288] sm:$0xff]
    %v1856 = vld [vmem:[#allocation7 + $0x2290] sm:$0xff]
    %v1857 = vld [vmem:[#allocation7 + $0x2298] sm:$0xff]
    %v1858 = vld [vmem:[#allocation7 + $0x22a0] sm:$0xff]
    %v1859 = vld [vmem:[#allocation7 + $0x22a8] sm:$0xff]
    %v1860 = vld [vmem:[#allocation7 + $0x22b0] sm:$0xff]
    %v1861 = vld [vmem:[#allocation7 + $0x22b8] sm:$0xff]
    %v1862 = vld [vmem:[#allocation7 + $0x22c0] sm:$0xff]
    %v1863 = vld [vmem:[#allocation7 + $0x22c8] sm:$0xff]
    %v1864 = vld [vmem:[#allocation7 + $0x22d0] sm:$0xff]
    %v1865 = vld [vmem:[#allocation7 + $0x22d8] sm:$0xff]
    %v1866 = vld [vmem:[#allocation7 + $0x22e0] sm:$0xff]
    %v1867 = vld [vmem:[#allocation7 + $0x22e8] sm:$0xff]
    %v1868 = vld [vmem:[#allocation7 + $0x22f0] sm:$0xff]
    %v1869 = vld [vmem:[#allocation7 + $0x22f8] sm:$0xff]
    %v1870 = vld [vmem:[#allocation7 + $0x2300] sm:$0xff]
    %v1871 = vld [vmem:[#allocation7 + $0x2308] sm:$0xff]
    %v1872 = vld [vmem:[#allocation7 + $0x2310] sm:$0xff]
    %v1873 = vld [vmem:[#allocation7 + $0x2318] sm:$0xff]
    %v1874 = vld [vmem:[#allocation7 + $0x2320] sm:$0xff]
    %v1875 = vld [vmem:[#allocation7 + $0x2328] sm:$0xff]
    %v1876 = vld [vmem:[#allocation7 + $0x2330] sm:$0xff]
    %v1877 = vld [vmem:[#allocation7 + $0x2338] sm:$0xff]
    %v1878 = vld [vmem:[#allocation7 + $0x2340] sm:$0xff]
    %v1879 = vld [vmem:[#allocation7 + $0x2348] sm:$0xff]
    %v1880 = vld [vmem:[#allocation7 + $0x2350] sm:$0xff]
    %v1881 = vld [vmem:[#allocation7 + $0x2358] sm:$0xff]
    %v1882 = vld [vmem:[#allocation7 + $0x2360] sm:$0xff]
    %v1883 = vld [vmem:[#allocation7 + $0x2368] sm:$0xff]
    %v1884 = vld [vmem:[#allocation7 + $0x2370] sm:$0xff]
    %v1885 = vld [vmem:[#allocation7 + $0x2378] sm:$0xff]
    %v1886 = vld [vmem:[#allocation7 + $0x2380] sm:$0xff]
    %v1887 = vld [vmem:[#allocation7 + $0x2388] sm:$0xff]
    %v1888 = vld [vmem:[#allocation7 + $0x2390] sm:$0xff]
    %v1889 = vld [vmem:[#allocation7 + $0x2398] sm:$0xff]
    %v1890 = vld [vmem:[#allocation7 + $0x23a0] sm:$0xff]
    %v1891 = vld [vmem:[#allocation7 + $0x23a8] sm:$0xff]
    %v1892 = vld [vmem:[#allocation7 + $0x23b0] sm:$0xff]
    %v1893 = vld [vmem:[#allocation7 + $0x23b8] sm:$0xff]
    %v1894 = vld [vmem:[#allocation7 + $0x23c0] sm:$0xff]
    %v1895 = vld [vmem:[#allocation7 + $0x23c8] sm:$0xff]
    %v1896 = vld [vmem:[#allocation7 + $0x23d0] sm:$0xff]
    %v1897 = vld [vmem:[#allocation7 + $0x23d8] sm:$0xff]
    %v1898 = vld [vmem:[#allocation7 + $0x23e0] sm:$0xff]
    %v1899 = vld [vmem:[#allocation7 + $0x23e8] sm:$0xff]
    %v1900 = vld [vmem:[#allocation7 + $0x23f0] sm:$0xff]
    %v1901 = vld [vmem:[#allocation7 + $0x23f8] sm:$0xff]
    %v1902 = vld [vmem:[#allocation7 + $0x2400] sm:$0xff]
    %v1903 = vld [vmem:[#allocation7 + $0x2408] sm:$0xff]
    %v1904 = vld [vmem:[#allocation7 + $0x2410] sm:$0xff]
    %v1905 = vld [vmem:[#allocation7 + $0x2418] sm:$0xff]
    %v1906 = vld [vmem:[#allocation7 + $0x2420] sm:$0xff]
    %v1907 = vld [vmem:[#allocation7 + $0x2428] sm:$0xff]
    %v1908 = vld [vmem:[#allocation7 + $0x2430] sm:$0xff]
    %v1909 = vld [vmem:[#allocation7 + $0x2438] sm:$0xff]
    %v1910 = vld [vmem:[#allocation7 + $0x2440] sm:$0xff]
    %v1911 = vld [vmem:[#allocation7 + $0x2448] sm:$0xff]
    %v1912 = vld [vmem:[#allocation7 + $0x2450] sm:$0xff]
    %v1913 = vld [vmem:[#allocation7 + $0x2458] sm:$0xff]
    %v1914 = vld [vmem:[#allocation7 + $0x2460] sm:$0xff]
    %v1915 = vld [vmem:[#allocation7 + $0x2468] sm:$0xff]
    %v1916 = vld [vmem:[#allocation7 + $0x2470] sm:$0xff]
    %v1917 = vld [vmem:[#allocation7 + $0x2478] sm:$0xff]
    %v1918 = vld [vmem:[#allocation7 + $0x2480] sm:$0xff]
    %v1919 = vld [vmem:[#allocation7 + $0x2488] sm:$0xff]
    %v1920 = vld [vmem:[#allocation7 + $0x2490] sm:$0xff]
    %v1921 = vld [vmem:[#allocation7 + $0x2498] sm:$0xff]
    %v1922 = vld [vmem:[#allocation7 + $0x24a0] sm:$0xff]
    %v1923 = vld [vmem:[#allocation7 + $0x24a8] sm:$0xff]
    %v1924 = vld [vmem:[#allocation7 + $0x24b0] sm:$0xff]
    %v1925 = vld [vmem:[#allocation7 + $0x24b8] sm:$0xff]
    %v1926 = vld [vmem:[#allocation7 + $0x24c0] sm:$0xff]
    %v1927 = vld [vmem:[#allocation7 + $0x24c8] sm:$0xff]
    %v1928 = vld [vmem:[#allocation7 + $0x24d0] sm:$0xff]
    %v1929 = vld [vmem:[#allocation7 + $0x24d8] sm:$0xff]
    %v1930 = vld [vmem:[#allocation7 + $0x24e0] sm:$0xff]
    %v1931 = vld [vmem:[#allocation7 + $0x24e8] sm:$0xff]
    %v1932 = vld [vmem:[#allocation7 + $0x24f0] sm:$0xff]
    %v1933 = vld [vmem:[#allocation7 + $0x24f8] sm:$0xff]
    %v1934 = vld [vmem:[#allocation7 + $0x2500] sm:$0xff]
    %v1935 = vld [vmem:[#allocation7 + $0x2508] sm:$0xff]
    %v1936 = vld [vmem:[#allocation7 + $0x2510] sm:$0xff]
    %v1937 = vld [vmem:[#allocation7 + $0x2518] sm:$0xff]
    %v1938 = vld [vmem:[#allocation7 + $0x2520] sm:$0xff]
    %v1939 = vld [vmem:[#allocation7 + $0x2528] sm:$0xff]
    %v1940 = vld [vmem:[#allocation7 + $0x2530] sm:$0xff]
    %v1941 = vld [vmem:[#allocation7 + $0x2538] sm:$0xff]
    %v1942 = vld [vmem:[#allocation7 + $0x2540] sm:$0xff]
    %v1943 = vld [vmem:[#allocation7 + $0x2548] sm:$0xff]
    %v1944 = vld [vmem:[#allocation7 + $0x2550] sm:$0xff]
    %v1945 = vld [vmem:[#allocation7 + $0x2558] sm:$0xff]
    %v1946 = vld [vmem:[#allocation7 + $0x2560] sm:$0xff]
    %v1947 = vld [vmem:[#allocation7 + $0x2568] sm:$0xff]
    %v1948 = vld [vmem:[#allocation7 + $0x2570] sm:$0xff]
    %v1949 = vld [vmem:[#allocation7 + $0x2578] sm:$0xff]
    %v3150 = vunpack.c.l.b16 %v750
    %v3151 = vunpack.c.h.b16 %v750
    %v3152 = vunpack.c.l.b16 %v751
    %v3153 = vunpack.c.h.b16 %v751
    %v3154 = vunpack.c.l.b16 %v752
    %v3155 = vunpack.c.h.b16 %v752
    %v3156 = vunpack.c.l.b16 %v753
    %v3157 = vunpack.c.h.b16 %v753
    %v3158 = vunpack.c.l.b16 %v754
    %v3159 = vunpack.c.h.b16 %v754
    %v3160 = vunpack.c.l.b16 %v755
    %v3161 = vunpack.c.h.b16 %v755
    %v3162 = vunpack.c.l.b16 %v756
    %v3163 = vunpack.c.h.b16 %v756
    %v3164 = vunpack.c.l.b16 %v757
    %v3165 = vunpack.c.h.b16 %v757
    %v3166 = vunpack.c.l.b16 %v758
    %v3167 = vunpack.c.h.b16 %v758
    %v3168 = vunpack.c.l.b16 %v759
    %v3169 = vunpack.c.h.b16 %v759
    %v3170 = vunpack.c.l.b16 %v760
    %v3171 = vunpack.c.h.b16 %v760
    %v3172 = vunpack.c.l.b16 %v761
    %v3173 = vunpack.c.h.b16 %v761
    %v3174 = vunpack.c.l.b16 %v762
    %v3175 = vunpack.c.h.b16 %v762
    %v3176 = vunpack.c.l.b16 %v763
    %v3177 = vunpack.c.h.b16 %v763
    %v3178 = vunpack.c.l.b16 %v764
    %v3179 = vunpack.c.h.b16 %v764
    %v3180 = vunpack.c.l.b16 %v765
    %v3181 = vunpack.c.h.b16 %v765
    %v3182 = vunpack.c.l.b16 %v766
    %v3183 = vunpack.c.h.b16 %v766
    %v3184 = vunpack.c.l.b16 %v767
    %v3185 = vunpack.c.h.b16 %v767
    %v3186 = vunpack.c.l.b16 %v768
    %v3187 = vunpack.c.h.b16 %v768
    %v3188 = vunpack.c.l.b16 %v769
    %v3189 = vunpack.c.h.b16 %v769
    %v3190 = vunpack.c.l.b16 %v770
    %v3191 = vunpack.c.h.b16 %v770
    %v3192 = vunpack.c.l.b16 %v771
    %v3193 = vunpack.c.h.b16 %v771
    %v3194 = vunpack.c.l.b16 %v772
    %v3195 = vunpack.c.h.b16 %v772
    %v3196 = vunpack.c.l.b16 %v773
    %v3197 = vunpack.c.h.b16 %v773
    %v3198 = vunpack.c.l.b16 %v774
    %v3199 = vunpack.c.h.b16 %v774
    %v3200 = vunpack.c.l.b16 %v775
    %v3201 = vunpack.c.h.b16 %v775
    %v3202 = vunpack.c.l.b16 %v776
    %v3203 = vunpack.c.h.b16 %v776
    %v3204 = vunpack.c.l.b16 %v777
    %v3205 = vunpack.c.h.b16 %v777
    %v3206 = vunpack.c.l.b16 %v778
    %v3207 = vunpack.c.h.b16 %v778
    %v3208 = vunpack.c.l.b16 %v779
    %v3209 = vunpack.c.h.b16 %v779
    %v3210 = vunpack.c.l.b16 %v780
    %v3211 = vunpack.c.h.b16 %v780
    %v3212 = vunpack.c.l.b16 %v781
    %v3213 = vunpack.c.h.b16 %v781
    %v3214 = vunpack.c.l.b16 %v782
    %v3215 = vunpack.c.h.b16 %v782
    %v3216 = vunpack.c.l.b16 %v783
    %v3217 = vunpack.c.h.b16 %v783
    %v3218 = vunpack.c.l.b16 %v784
    %v3219 = vunpack.c.h.b16 %v784
    %v3220 = vunpack.c.l.b16 %v785
    %v3221 = vunpack.c.h.b16 %v785
    %v3222 = vunpack.c.l.b16 %v786
    %v3223 = vunpack.c.h.b16 %v786
    %v3224 = vunpack.c.l.b16 %v787
    %v3225 = vunpack.c.h.b16 %v787
    %v3226 = vunpack.c.l.b16 %v788
    %v3227 = vunpack.c.h.b16 %v788
    %v3228 = vunpack.c.l.b16 %v789
    %v3229 = vunpack.c.h.b16 %v789
    %v3230 = vunpack.c.l.b16 %v790
    %v3231 = vunpack.c.h.b16 %v790
    %v3232 = vunpack.c.l.b16 %v791
    %v3233 = vunpack.c.h.b16 %v791
    %v3234 = vunpack.c.l.b16 %v792
    %v3235 = vunpack.c.h.b16 %v792
    %v3236 = vunpack.c.l.b16 %v793
    %v3237 = vunpack.c.h.b16 %v793
    %v3238 = vunpack.c.l.b16 %v794
    %v3239 = vunpack.c.h.b16 %v794
    %v3240 = vunpack.c.l.b16 %v795
    %v3241 = vunpack.c.h.b16 %v795
    %v3242 = vunpack.c.l.b16 %v796
    %v3243 = vunpack.c.h.b16 %v796
    %v3244 = vunpack.c.l.b16 %v797
    %v3245 = vunpack.c.h.b16 %v797
    %v3246 = vunpack.c.l.b16 %v798
    %v3247 = vunpack.c.h.b16 %v798
    %v3248 = vunpack.c.l.b16 %v799
    %v3249 = vunpack.c.h.b16 %v799
    %v3250 = vunpack.c.l.b16 %v800
    %v3251 = vunpack.c.h.b16 %v800
    %v3252 = vunpack.c.l.b16 %v801
    %v3253 = vunpack.c.h.b16 %v801
    %v3254 = vunpack.c.l.b16 %v802
    %v3255 = vunpack.c.h.b16 %v802
    %v3256 = vunpack.c.l.b16 %v803
    %v3257 = vunpack.c.h.b16 %v803
    %v3258 = vunpack.c.l.b16 %v804
    %v3259 = vunpack.c.h.b16 %v804
    %v3260 = vunpack.c.l.b16 %v805
    %v3261 = vunpack.c.h.b16 %v805
    %v3262 = vunpack.c.l.b16 %v806
    %v3263 = vunpack.c.h.b16 %v806
    %v3264 = vunpack.c.l.b16 %v807
    %v3265 = vunpack.c.h.b16 %v807
    %v3266 = vunpack.c.l.b16 %v808
    %v3267 = vunpack.c.h.b16 %v808
    %v3268 = vunpack.c.l.b16 %v809
    %v3269 = vunpack.c.h.b16 %v809
    %v3270 = vunpack.c.l.b16 %v810
    %v3271 = vunpack.c.h.b16 %v810
    %v3272 = vunpack.c.l.b16 %v811
    %v3273 = vunpack.c.h.b16 %v811
    %v3274 = vunpack.c.l.b16 %v812
    %v3275 = vunpack.c.h.b16 %v812
    %v3276 = vunpack.c.l.b16 %v813
    %v3277 = vunpack.c.h.b16 %v813
    %v3278 = vunpack.c.l.b16 %v814
    %v3279 = vunpack.c.h.b16 %v814
    %v3280 = vunpack.c.l.b16 %v815
    %v3281 = vunpack.c.h.b16 %v815
    %v3282 = vunpack.c.l.b16 %v816
    %v3283 = vunpack.c.h.b16 %v816
    %v3284 = vunpack.c.l.b16 %v817
    %v3285 = vunpack.c.h.b16 %v817
    %v3286 = vunpack.c.l.b16 %v818
    %v3287 = vunpack.c.h.b16 %v818
    %v3288 = vunpack.c.l.b16 %v819
    %v3289 = vunpack.c.h.b16 %v819
    %v3290 = vunpack.c.l.b16 %v820
    %v3291 = vunpack.c.h.b16 %v820
    %v3292 = vunpack.c.l.b16 %v821
    %v3293 = vunpack.c.h.b16 %v821
    %v3294 = vunpack.c.l.b16 %v822
    %v3295 = vunpack.c.h.b16 %v822
    %v3296 = vunpack.c.l.b16 %v823
    %v3297 = vunpack.c.h.b16 %v823
    %v3298 = vunpack.c.l.b16 %v824
    %v3299 = vunpack.c.h.b16 %v824
    %v3300 = vunpack.c.l.b16 %v825
    %v3301 = vunpack.c.h.b16 %v825
    %v3302 = vunpack.c.l.b16 %v826
    %v3303 = vunpack.c.h.b16 %v826
    %v3304 = vunpack.c.l.b16 %v827
    %v3305 = vunpack.c.h.b16 %v827
    %v3306 = vunpack.c.l.b16 %v828
    %v3307 = vunpack.c.h.b16 %v828
    %v3308 = vunpack.c.l.b16 %v829
    %v3309 = vunpack.c.h.b16 %v829
    %v3310 = vunpack.c.l.b16 %v830
    %v3311 = vunpack.c.h.b16 %v830
    %v3312 = vunpack.c.l.b16 %v831
    %v3313 = vunpack.c.h.b16 %v831
    %v3314 = vunpack.c.l.b16 %v832
    %v3315 = vunpack.c.h.b16 %v832
    %v3316 = vunpack.c.l.b16 %v833
    %v3317 = vunpack.c.h.b16 %v833
    %v3318 = vunpack.c.l.b16 %v834
    %v3319 = vunpack.c.h.b16 %v834
    %v3320 = vunpack.c.l.b16 %v835
    %v3321 = vunpack.c.h.b16 %v835
    %v3322 = vunpack.c.l.b16 %v836
    %v3323 = vunpack.c.h.b16 %v836
    %v3324 = vunpack.c.l.b16 %v837
    %v3325 = vunpack.c.h.b16 %v837
    %v3326 = vunpack.c.l.b16 %v838
    %v3327 = vunpack.c.h.b16 %v838
    %v3328 = vunpack.c.l.b16 %v839
    %v3329 = vunpack.c.h.b16 %v839
    %v3330 = vunpack.c.l.b16 %v840
    %v3331 = vunpack.c.h.b16 %v840
    %v3332 = vunpack.c.l.b16 %v841
    %v3333 = vunpack.c.h.b16 %v841
    %v3334 = vunpack.c.l.b16 %v842
    %v3335 = vunpack.c.h.b16 %v842
    %v3336 = vunpack.c.l.b16 %v843
    %v3337 = vunpack.c.h.b16 %v843
    %v3338 = vunpack.c.l.b16 %v844
    %v3339 = vunpack.c.h.b16 %v844
    %v3340 = vunpack.c.l.b16 %v845
    %v3341 = vunpack.c.h.b16 %v845
    %v3342 = vunpack.c.l.b16 %v846
    %v3343 = vunpack.c.h.b16 %v846
    %v3344 = vunpack.c.l.b16 %v847
    %v3345 = vunpack.c.h.b16 %v847
    %v3346 = vunpack.c.l.b16 %v848
    %v3347 = vunpack.c.h.b16 %v848
    %v3348 = vunpack.c.l.b16 %v849
    %v3349 = vunpack.c.h.b16 %v849
    %v3350 = vunpack.c.l.b16 %v850
    %v3351 = vunpack.c.h.b16 %v850
    %v3352 = vunpack.c.l.b16 %v851
    %v3353 = vunpack.c.h.b16 %v851
    %v3354 = vunpack.c.l.b16 %v852
    %v3355 = vunpack.c.h.b16 %v852
    %v3356 = vunpack.c.l.b16 %v853
    %v3357 = vunpack.c.h.b16 %v853
    %v3358 = vunpack.c.l.b16 %v854
    %v3359 = vunpack.c.h.b16 %v854
    %v3360 = vunpack.c.l.b16 %v855
    %v3361 = vunpack.c.h.b16 %v855
    %v3362 = vunpack.c.l.b16 %v856
    %v3363 = vunpack.c.h.b16 %v856
    %v3364 = vunpack.c.l.b16 %v857
    %v3365 = vunpack.c.h.b16 %v857
    %v3366 = vunpack.c.l.b16 %v858
    %v3367 = vunpack.c.h.b16 %v858
    %v3368 = vunpack.c.l.b16 %v859
    %v3369 = vunpack.c.h.b16 %v859
    %v3370 = vunpack.c.l.b16 %v860
    %v3371 = vunpack.c.h.b16 %v860
    %v3372 = vunpack.c.l.b16 %v861
    %v3373 = vunpack.c.h.b16 %v861
    %v3374 = vunpack.c.l.b16 %v862
    %v3375 = vunpack.c.h.b16 %v862
    %v3376 = vunpack.c.l.b16 %v863
    %v3377 = vunpack.c.h.b16 %v863
    %v3378 = vunpack.c.l.b16 %v864
    %v3379 = vunpack.c.h.b16 %v864
    %v3380 = vunpack.c.l.b16 %v865
    %v3381 = vunpack.c.h.b16 %v865
    %v3382 = vunpack.c.l.b16 %v866
    %v3383 = vunpack.c.h.b16 %v866
    %v3384 = vunpack.c.l.b16 %v867
    %v3385 = vunpack.c.h.b16 %v867
    %v3386 = vunpack.c.l.b16 %v868
    %v3387 = vunpack.c.h.b16 %v868
    %v3388 = vunpack.c.l.b16 %v869
    %v3389 = vunpack.c.h.b16 %v869
    %v3390 = vunpack.c.l.b16 %v870
    %v3391 = vunpack.c.h.b16 %v870
    %v3392 = vunpack.c.l.b16 %v871
    %v3393 = vunpack.c.h.b16 %v871
    %v3394 = vunpack.c.l.b16 %v872
    %v3395 = vunpack.c.h.b16 %v872
    %v3396 = vunpack.c.l.b16 %v873
    %v3397 = vunpack.c.h.b16 %v873
    %v3398 = vunpack.c.l.b16 %v874
    %v3399 = vunpack.c.h.b16 %v874
    %v3400 = vunpack.c.l.b16 %v875
    %v3401 = vunpack.c.h.b16 %v875
    %v3402 = vunpack.c.l.b16 %v876
    %v3403 = vunpack.c.h.b16 %v876
    %v3404 = vunpack.c.l.b16 %v877
    %v3405 = vunpack.c.h.b16 %v877
    %v3406 = vunpack.c.l.b16 %v878
    %v3407 = vunpack.c.h.b16 %v878
    %v3408 = vunpack.c.l.b16 %v879
    %v3409 = vunpack.c.h.b16 %v879
    %v3410 = vunpack.c.l.b16 %v880
    %v3411 = vunpack.c.h.b16 %v880
    %v3412 = vunpack.c.l.b16 %v881
    %v3413 = vunpack.c.h.b16 %v881
    %v3414 = vunpack.c.l.b16 %v882
    %v3415 = vunpack.c.h.b16 %v882
    %v3416 = vunpack.c.l.b16 %v883
    %v3417 = vunpack.c.h.b16 %v883
    %v3418 = vunpack.c.l.b16 %v884
    %v3419 = vunpack.c.h.b16 %v884
    %v3420 = vunpack.c.l.b16 %v885
    %v3421 = vunpack.c.h.b16 %v885
    %v3422 = vunpack.c.l.b16 %v886
    %v3423 = vunpack.c.h.b16 %v886
    %v3424 = vunpack.c.l.b16 %v887
    %v3425 = vunpack.c.h.b16 %v887
    %v3426 = vunpack.c.l.b16 %v888
    %v3427 = vunpack.c.h.b16 %v888
    %v3428 = vunpack.c.l.b16 %v889
    %v3429 = vunpack.c.h.b16 %v889
    %v3430 = vunpack.c.l.b16 %v890
    %v3431 = vunpack.c.h.b16 %v890
    %v3432 = vunpack.c.l.b16 %v891
    %v3433 = vunpack.c.h.b16 %v891
    %v3434 = vunpack.c.l.b16 %v892
    %v3435 = vunpack.c.h.b16 %v892
    %v3436 = vunpack.c.l.b16 %v893
    %v3437 = vunpack.c.h.b16 %v893
    %v3438 = vunpack.c.l.b16 %v894
    %v3439 = vunpack.c.h.b16 %v894
    %v3440 = vunpack.c.l.b16 %v895
    %v3441 = vunpack.c.h.b16 %v895
    %v3442 = vunpack.c.l.b16 %v896
    %v3443 = vunpack.c.h.b16 %v896
    %v3444 = vunpack.c.l.b16 %v897
    %v3445 = vunpack.c.h.b16 %v897
    %v3446 = vunpack.c.l.b16 %v898
    %v3447 = vunpack.c.h.b16 %v898
    %v3448 = vunpack.c.l.b16 %v899
    %v3449 = vunpack.c.h.b16 %v899
    %v3450 = vunpack.c.l.b16 %v900
    %v3451 = vunpack.c.h.b16 %v900
    %v3452 = vunpack.c.l.b16 %v901
    %v3453 = vunpack.c.h.b16 %v901
    %v3454 = vunpack.c.l.b16 %v902
    %v3455 = vunpack.c.h.b16 %v902
    %v3456 = vunpack.c.l.b16 %v903
    %v3457 = vunpack.c.h.b16 %v903
    %v3458 = vunpack.c.l.b16 %v904
    %v3459 = vunpack.c.h.b16 %v904
    %v3460 = vunpack.c.l.b16 %v905
    %v3461 = vunpack.c.h.b16 %v905
    %v3462 = vunpack.c.l.b16 %v906
    %v3463 = vunpack.c.h.b16 %v906
    %v3464 = vunpack.c.l.b16 %v907
    %v3465 = vunpack.c.h.b16 %v907
    %v3466 = vunpack.c.l.b16 %v908
    %v3467 = vunpack.c.h.b16 %v908
    %v3468 = vunpack.c.l.b16 %v909
    %v3469 = vunpack.c.h.b16 %v909
    %v3470 = vunpack.c.l.b16 %v910
    %v3471 = vunpack.c.h.b16 %v910
    %v3472 = vunpack.c.l.b16 %v911
    %v3473 = vunpack.c.h.b16 %v911
    %v3474 = vunpack.c.l.b16 %v912
    %v3475 = vunpack.c.h.b16 %v912
    %v3476 = vunpack.c.l.b16 %v913
    %v3477 = vunpack.c.h.b16 %v913
    %v3478 = vunpack.c.l.b16 %v914
    %v3479 = vunpack.c.h.b16 %v914
    %v3480 = vunpack.c.l.b16 %v915
    %v3481 = vunpack.c.h.b16 %v915
    %v3482 = vunpack.c.l.b16 %v916
    %v3483 = vunpack.c.h.b16 %v916
    %v3484 = vunpack.c.l.b16 %v917
    %v3485 = vunpack.c.h.b16 %v917
    %v3486 = vunpack.c.l.b16 %v918
    %v3487 = vunpack.c.h.b16 %v918
    %v3488 = vunpack.c.l.b16 %v919
    %v3489 = vunpack.c.h.b16 %v919
    %v3490 = vunpack.c.l.b16 %v920
    %v3491 = vunpack.c.h.b16 %v920
    %v3492 = vunpack.c.l.b16 %v921
    %v3493 = vunpack.c.h.b16 %v921
    %v3494 = vunpack.c.l.b16 %v922
    %v3495 = vunpack.c.h.b16 %v922
    %v3496 = vunpack.c.l.b16 %v923
    %v3497 = vunpack.c.h.b16 %v923
    %v3498 = vunpack.c.l.b16 %v924
    %v3499 = vunpack.c.h.b16 %v924
    %v3500 = vunpack.c.l.b16 %v925
    %v3501 = vunpack.c.h.b16 %v925
    %v3502 = vunpack.c.l.b16 %v926
    %v3503 = vunpack.c.h.b16 %v926
    %v3504 = vunpack.c.l.b16 %v927
    %v3505 = vunpack.c.h.b16 %v927
    %v3506 = vunpack.c.l.b16 %v928
    %v3507 = vunpack.c.h.b16 %v928
    %v3508 = vunpack.c.l.b16 %v929
    %v3509 = vunpack.c.h.b16 %v929
    %v3510 = vunpack.c.l.b16 %v930
    %v3511 = vunpack.c.h.b16 %v930
    %v3512 = vunpack.c.l.b16 %v931
    %v3513 = vunpack.c.h.b16 %v931
    %v3514 = vunpack.c.l.b16 %v932
    %v3515 = vunpack.c.h.b16 %v932
    %v3516 = vunpack.c.l.b16 %v933
    %v3517 = vunpack.c.h.b16 %v933
    %v3518 = vunpack.c.l.b16 %v934
    %v3519 = vunpack.c.h.b16 %v934
    %v3520 = vunpack.c.l.b16 %v935
    %v3521 = vunpack.c.h.b16 %v935
    %v3522 = vunpack.c.l.b16 %v936
    %v3523 = vunpack.c.h.b16 %v936
    %v3524 = vunpack.c.l.b16 %v937
    %v3525 = vunpack.c.h.b16 %v937
    %v3526 = vunpack.c.l.b16 %v938
    %v3527 = vunpack.c.h.b16 %v938
    %v3528 = vunpack.c.l.b16 %v939
    %v3529 = vunpack.c.h.b16 %v939
    %v3530 = vunpack.c.l.b16 %v940
    %v3531 = vunpack.c.h.b16 %v940
    %v3532 = vunpack.c.l.b16 %v941
    %v3533 = vunpack.c.h.b16 %v941
    %v3534 = vunpack.c.l.b16 %v942
    %v3535 = vunpack.c.h.b16 %v942
    %v3536 = vunpack.c.l.b16 %v943
    %v3537 = vunpack.c.h.b16 %v943
    %v3538 = vunpack.c.l.b16 %v944
    %v3539 = vunpack.c.h.b16 %v944
    %v3540 = vunpack.c.l.b16 %v945
    %v3541 = vunpack.c.h.b16 %v945
    %v3542 = vunpack.c.l.b16 %v946
    %v3543 = vunpack.c.h.b16 %v946
    %v3544 = vunpack.c.l.b16 %v947
    %v3545 = vunpack.c.h.b16 %v947
    %v3546 = vunpack.c.l.b16 %v948
    %v3547 = vunpack.c.h.b16 %v948
    %v3548 = vunpack.c.l.b16 %v949
    %v3549 = vunpack.c.h.b16 %v949
    %v3550 = vunpack.c.l.b16 %v950
    %v3551 = vunpack.c.h.b16 %v950
    %v3552 = vunpack.c.l.b16 %v951
    %v3553 = vunpack.c.h.b16 %v951
    %v3554 = vunpack.c.l.b16 %v952
    %v3555 = vunpack.c.h.b16 %v952
    %v3556 = vunpack.c.l.b16 %v953
    %v3557 = vunpack.c.h.b16 %v953
    %v3558 = vunpack.c.l.b16 %v954
    %v3559 = vunpack.c.h.b16 %v954
    %v3560 = vunpack.c.l.b16 %v955
    %v3561 = vunpack.c.h.b16 %v955
    %v3562 = vunpack.c.l.b16 %v956
    %v3563 = vunpack.c.h.b16 %v956
    %v3564 = vunpack.c.l.b16 %v957
    %v3565 = vunpack.c.h.b16 %v957
    %v3566 = vunpack.c.l.b16 %v958
    %v3567 = vunpack.c.h.b16 %v958
    %v3568 = vunpack.c.l.b16 %v959
    %v3569 = vunpack.c.h.b16 %v959
    %v3570 = vunpack.c.l.b16 %v960
    %v3571 = vunpack.c.h.b16 %v960
    %v3572 = vunpack.c.l.b16 %v961
    %v3573 = vunpack.c.h.b16 %v961
    %v3574 = vunpack.c.l.b16 %v962
    %v3575 = vunpack.c.h.b16 %v962
    %v3576 = vunpack.c.l.b16 %v963
    %v3577 = vunpack.c.h.b16 %v963
    %v3578 = vunpack.c.l.b16 %v964
    %v3579 = vunpack.c.h.b16 %v964
    %v3580 = vunpack.c.l.b16 %v965
    %v3581 = vunpack.c.h.b16 %v965
    %v3582 = vunpack.c.l.b16 %v966
    %v3583 = vunpack.c.h.b16 %v966
    %v3584 = vunpack.c.l.b16 %v967
    %v3585 = vunpack.c.h.b16 %v967
    %v3586 = vunpack.c.l.b16 %v968
    %v3587 = vunpack.c.h.b16 %v968
    %v3588 = vunpack.c.l.b16 %v969
    %v3589 = vunpack.c.h.b16 %v969
    %v3590 = vunpack.c.l.b16 %v970
    %v3591 = vunpack.c.h.b16 %v970
    %v3592 = vunpack.c.l.b16 %v971
    %v3593 = vunpack.c.h.b16 %v971
    %v3594 = vunpack.c.l.b16 %v972
    %v3595 = vunpack.c.h.b16 %v972
    %v3596 = vunpack.c.l.b16 %v973
    %v3597 = vunpack.c.h.b16 %v973
    %v3598 = vunpack.c.l.b16 %v974
    %v3599 = vunpack.c.h.b16 %v974
    %v3600 = vunpack.c.l.b16 %v975
    %v3601 = vunpack.c.h.b16 %v975
    %v3602 = vunpack.c.l.b16 %v976
    %v3603 = vunpack.c.h.b16 %v976
    %v3604 = vunpack.c.l.b16 %v977
    %v3605 = vunpack.c.h.b16 %v977
    %v3606 = vunpack.c.l.b16 %v978
    %v3607 = vunpack.c.h.b16 %v978
    %v3608 = vunpack.c.l.b16 %v979
    %v3609 = vunpack.c.h.b16 %v979
    %v3610 = vunpack.c.l.b16 %v980
    %v3611 = vunpack.c.h.b16 %v980
    %v3612 = vunpack.c.l.b16 %v981
    %v3613 = vunpack.c.h.b16 %v981
    %v3614 = vunpack.c.l.b16 %v982
    %v3615 = vunpack.c.h.b16 %v982
    %v3616 = vunpack.c.l.b16 %v983
    %v3617 = vunpack.c.h.b16 %v983
    %v3618 = vunpack.c.l.b16 %v984
    %v3619 = vunpack.c.h.b16 %v984
    %v3620 = vunpack.c.l.b16 %v985
    %v3621 = vunpack.c.h.b16 %v985
    %v3622 = vunpack.c.l.b16 %v986
    %v3623 = vunpack.c.h.b16 %v986
    %v3624 = vunpack.c.l.b16 %v987
    %v3625 = vunpack.c.h.b16 %v987
    %v3626 = vunpack.c.l.b16 %v988
    %v3627 = vunpack.c.h.b16 %v988
    %v3628 = vunpack.c.l.b16 %v989
    %v3629 = vunpack.c.h.b16 %v989
    %v3630 = vunpack.c.l.b16 %v990
    %v3631 = vunpack.c.h.b16 %v990
    %v3632 = vunpack.c.l.b16 %v991
    %v3633 = vunpack.c.h.b16 %v991
    %v3634 = vunpack.c.l.b16 %v992
    %v3635 = vunpack.c.h.b16 %v992
    %v3636 = vunpack.c.l.b16 %v993
    %v3637 = vunpack.c.h.b16 %v993
    %v3638 = vunpack.c.l.b16 %v994
    %v3639 = vunpack.c.h.b16 %v994
    %v3640 = vunpack.c.l.b16 %v995
    %v3641 = vunpack.c.h.b16 %v995
    %v3642 = vunpack.c.l.b16 %v996
    %v3643 = vunpack.c.h.b16 %v996
    %v3644 = vunpack.c.l.b16 %v997
    %v3645 = vunpack.c.h.b16 %v997
    %v3646 = vunpack.c.l.b16 %v998
    %v3647 = vunpack.c.h.b16 %v998
    %v3648 = vunpack.c.l.b16 %v999
    %v3649 = vunpack.c.h.b16 %v999
    %v3650 = vunpack.c.l.b16 %v1000
    %v3651 = vunpack.c.h.b16 %v1000
    %v3652 = vunpack.c.l.b16 %v1001
    %v3653 = vunpack.c.h.b16 %v1001
    %v3654 = vunpack.c.l.b16 %v1002
    %v3655 = vunpack.c.h.b16 %v1002
    %v3656 = vunpack.c.l.b16 %v1003
    %v3657 = vunpack.c.h.b16 %v1003
    %v3658 = vunpack.c.l.b16 %v1004
    %v3659 = vunpack.c.h.b16 %v1004
    %v3660 = vunpack.c.l.b16 %v1005
    %v3661 = vunpack.c.h.b16 %v1005
    %v3662 = vunpack.c.l.b16 %v1006
    %v3663 = vunpack.c.h.b16 %v1006
    %v3664 = vunpack.c.l.b16 %v1007
    %v3665 = vunpack.c.h.b16 %v1007
    %v3666 = vunpack.c.l.b16 %v1008
    %v3667 = vunpack.c.h.b16 %v1008
    %v3668 = vunpack.c.l.b16 %v1009
    %v3669 = vunpack.c.h.b16 %v1009
    %v3670 = vunpack.c.l.b16 %v1010
    %v3671 = vunpack.c.h.b16 %v1010
    %v3672 = vunpack.c.l.b16 %v1011
    %v3673 = vunpack.c.h.b16 %v1011
    %v3674 = vunpack.c.l.b16 %v1012
    %v3675 = vunpack.c.h.b16 %v1012
    %v3676 = vunpack.c.l.b16 %v1013
    %v3677 = vunpack.c.h.b16 %v1013
    %v3678 = vunpack.c.l.b16 %v1014
    %v3679 = vunpack.c.h.b16 %v1014
    %v3680 = vunpack.c.l.b16 %v1015
    %v3681 = vunpack.c.h.b16 %v1015
    %v3682 = vunpack.c.l.b16 %v1016
    %v3683 = vunpack.c.h.b16 %v1016
    %v3684 = vunpack.c.l.b16 %v1017
    %v3685 = vunpack.c.h.b16 %v1017
    %v3686 = vunpack.c.l.b16 %v1018
    %v3687 = vunpack.c.h.b16 %v1018
    %v3688 = vunpack.c.l.b16 %v1019
    %v3689 = vunpack.c.h.b16 %v1019
    %v3690 = vunpack.c.l.b16 %v1020
    %v3691 = vunpack.c.h.b16 %v1020
    %v3692 = vunpack.c.l.b16 %v1021
    %v3693 = vunpack.c.h.b16 %v1021
    %v3694 = vunpack.c.l.b16 %v1022
    %v3695 = vunpack.c.h.b16 %v1022
    %v3696 = vunpack.c.l.b16 %v1023
    %v3697 = vunpack.c.h.b16 %v1023
    %v3698 = vunpack.c.l.b16 %v1024
    %v3699 = vunpack.c.h.b16 %v1024
    %v3700 = vunpack.c.l.b16 %v1025
    %v3701 = vunpack.c.h.b16 %v1025
    %v3702 = vunpack.c.l.b16 %v1026
    %v3703 = vunpack.c.h.b16 %v1026
    %v3704 = vunpack.c.l.b16 %v1027
    %v3705 = vunpack.c.h.b16 %v1027
    %v3706 = vunpack.c.l.b16 %v1028
    %v3707 = vunpack.c.h.b16 %v1028
    %v3708 = vunpack.c.l.b16 %v1029
    %v3709 = vunpack.c.h.b16 %v1029
    %v3710 = vunpack.c.l.b16 %v1030
    %v3711 = vunpack.c.h.b16 %v1030
    %v3712 = vunpack.c.l.b16 %v1031
    %v3713 = vunpack.c.h.b16 %v1031
    %v3714 = vunpack.c.l.b16 %v1032
    %v3715 = vunpack.c.h.b16 %v1032
    %v3716 = vunpack.c.l.b16 %v1033
    %v3717 = vunpack.c.h.b16 %v1033
    %v3718 = vunpack.c.l.b16 %v1034
    %v3719 = vunpack.c.h.b16 %v1034
    %v3720 = vunpack.c.l.b16 %v1035
    %v3721 = vunpack.c.h.b16 %v1035
    %v3722 = vunpack.c.l.b16 %v1036
    %v3723 = vunpack.c.h.b16 %v1036
    %v3724 = vunpack.c.l.b16 %v1037
    %v3725 = vunpack.c.h.b16 %v1037
    %v3726 = vunpack.c.l.b16 %v1038
    %v3727 = vunpack.c.h.b16 %v1038
    %v3728 = vunpack.c.l.b16 %v1039
    %v3729 = vunpack.c.h.b16 %v1039
    %v3730 = vunpack.c.l.b16 %v1040
    %v3731 = vunpack.c.h.b16 %v1040
    %v3732 = vunpack.c.l.b16 %v1041
    %v3733 = vunpack.c.h.b16 %v1041
    %v3734 = vunpack.c.l.b16 %v1042
    %v3735 = vunpack.c.h.b16 %v1042
    %v3736 = vunpack.c.l.b16 %v1043
    %v3737 = vunpack.c.h.b16 %v1043
    %v3738 = vunpack.c.l.b16 %v1044
    %v3739 = vunpack.c.h.b16 %v1044
    %v3740 = vunpack.c.l.b16 %v1045
    %v3741 = vunpack.c.h.b16 %v1045
    %v3742 = vunpack.c.l.b16 %v1046
    %v3743 = vunpack.c.h.b16 %v1046
    %v3744 = vunpack.c.l.b16 %v1047
    %v3745 = vunpack.c.h.b16 %v1047
    %v3746 = vunpack.c.l.b16 %v1048
    %v3747 = vunpack.c.h.b16 %v1048
    %v3748 = vunpack.c.l.b16 %v1049
    %v3749 = vunpack.c.h.b16 %v1049
    %v3750 = vunpack.c.l.b16 %v1050
    %v3751 = vunpack.c.h.b16 %v1050
    %v3752 = vunpack.c.l.b16 %v1051
    %v3753 = vunpack.c.h.b16 %v1051
    %v3754 = vunpack.c.l.b16 %v1052
    %v3755 = vunpack.c.h.b16 %v1052
    %v3756 = vunpack.c.l.b16 %v1053
    %v3757 = vunpack.c.h.b16 %v1053
    %v3758 = vunpack.c.l.b16 %v1054
    %v3759 = vunpack.c.h.b16 %v1054
    %v3760 = vunpack.c.l.b16 %v1055
    %v3761 = vunpack.c.h.b16 %v1055
    %v3762 = vunpack.c.l.b16 %v1056
    %v3763 = vunpack.c.h.b16 %v1056
    %v3764 = vunpack.c.l.b16 %v1057
    %v3765 = vunpack.c.h.b16 %v1057
    %v3766 = vunpack.c.l.b16 %v1058
    %v3767 = vunpack.c.h.b16 %v1058
    %v3768 = vunpack.c.l.b16 %v1059
    %v3769 = vunpack.c.h.b16 %v1059
    %v3770 = vunpack.c.l.b16 %v1060
    %v3771 = vunpack.c.h.b16 %v1060
    %v3772 = vunpack.c.l.b16 %v1061
    %v3773 = vunpack.c.h.b16 %v1061
    %v3774 = vunpack.c.l.b16 %v1062
    %v3775 = vunpack.c.h.b16 %v1062
    %v3776 = vunpack.c.l.b16 %v1063
    %v3777 = vunpack.c.h.b16 %v1063
    %v3778 = vunpack.c.l.b16 %v1064
    %v3779 = vunpack.c.h.b16 %v1064
    %v3780 = vunpack.c.l.b16 %v1065
    %v3781 = vunpack.c.h.b16 %v1065
    %v3782 = vunpack.c.l.b16 %v1066
    %v3783 = vunpack.c.h.b16 %v1066
    %v3784 = vunpack.c.l.b16 %v1067
    %v3785 = vunpack.c.h.b16 %v1067
    %v3786 = vunpack.c.l.b16 %v1068
    %v3787 = vunpack.c.h.b16 %v1068
    %v3788 = vunpack.c.l.b16 %v1069
    %v3789 = vunpack.c.h.b16 %v1069
    %v3790 = vunpack.c.l.b16 %v1070
    %v3791 = vunpack.c.h.b16 %v1070
    %v3792 = vunpack.c.l.b16 %v1071
    %v3793 = vunpack.c.h.b16 %v1071
    %v3794 = vunpack.c.l.b16 %v1072
    %v3795 = vunpack.c.h.b16 %v1072
    %v3796 = vunpack.c.l.b16 %v1073
    %v3797 = vunpack.c.h.b16 %v1073
    %v3798 = vunpack.c.l.b16 %v1074
    %v3799 = vunpack.c.h.b16 %v1074
    %v3800 = vunpack.c.l.b16 %v1075
    %v3801 = vunpack.c.h.b16 %v1075
    %v3802 = vunpack.c.l.b16 %v1076
    %v3803 = vunpack.c.h.b16 %v1076
    %v3804 = vunpack.c.l.b16 %v1077
    %v3805 = vunpack.c.h.b16 %v1077
    %v3806 = vunpack.c.l.b16 %v1078
    %v3807 = vunpack.c.h.b16 %v1078
    %v3808 = vunpack.c.l.b16 %v1079
    %v3809 = vunpack.c.h.b16 %v1079
    %v3810 = vunpack.c.l.b16 %v1080
    %v3811 = vunpack.c.h.b16 %v1080
    %v3812 = vunpack.c.l.b16 %v1081
    %v3813 = vunpack.c.h.b16 %v1081
    %v3814 = vunpack.c.l.b16 %v1082
    %v3815 = vunpack.c.h.b16 %v1082
    %v3816 = vunpack.c.l.b16 %v1083
    %v3817 = vunpack.c.h.b16 %v1083
    %v3818 = vunpack.c.l.b16 %v1084
    %v3819 = vunpack.c.h.b16 %v1084
    %v3820 = vunpack.c.l.b16 %v1085
    %v3821 = vunpack.c.h.b16 %v1085
    %v3822 = vunpack.c.l.b16 %v1086
    %v3823 = vunpack.c.h.b16 %v1086
    %v3824 = vunpack.c.l.b16 %v1087
    %v3825 = vunpack.c.h.b16 %v1087
    %v3826 = vunpack.c.l.b16 %v1088
    %v3827 = vunpack.c.h.b16 %v1088
    %v3828 = vunpack.c.l.b16 %v1089
    %v3829 = vunpack.c.h.b16 %v1089
    %v3830 = vunpack.c.l.b16 %v1090
    %v3831 = vunpack.c.h.b16 %v1090
    %v3832 = vunpack.c.l.b16 %v1091
    %v3833 = vunpack.c.h.b16 %v1091
    %v3834 = vunpack.c.l.b16 %v1092
    %v3835 = vunpack.c.h.b16 %v1092
    %v3836 = vunpack.c.l.b16 %v1093
    %v3837 = vunpack.c.h.b16 %v1093
    %v3838 = vunpack.c.l.b16 %v1094
    %v3839 = vunpack.c.h.b16 %v1094
    %v3840 = vunpack.c.l.b16 %v1095
    %v3841 = vunpack.c.h.b16 %v1095
    %v3842 = vunpack.c.l.b16 %v1096
    %v3843 = vunpack.c.h.b16 %v1096
    %v3844 = vunpack.c.l.b16 %v1097
    %v3845 = vunpack.c.h.b16 %v1097
    %v3846 = vunpack.c.l.b16 %v1098
    %v3847 = vunpack.c.h.b16 %v1098
    %v3848 = vunpack.c.l.b16 %v1099
    %v3849 = vunpack.c.h.b16 %v1099
    %v3850 = vunpack.c.l.b16 %v1100
    %v3851 = vunpack.c.h.b16 %v1100
    %v3852 = vunpack.c.l.b16 %v1101
    %v3853 = vunpack.c.h.b16 %v1101
    %v3854 = vunpack.c.l.b16 %v1102
    %v3855 = vunpack.c.h.b16 %v1102
    %v3856 = vunpack.c.l.b16 %v1103
    %v3857 = vunpack.c.h.b16 %v1103
    %v3858 = vunpack.c.l.b16 %v1104
    %v3859 = vunpack.c.h.b16 %v1104
    %v3860 = vunpack.c.l.b16 %v1105
    %v3861 = vunpack.c.h.b16 %v1105
    %v3862 = vunpack.c.l.b16 %v1106
    %v3863 = vunpack.c.h.b16 %v1106
    %v3864 = vunpack.c.l.b16 %v1107
    %v3865 = vunpack.c.h.b16 %v1107
    %v3866 = vunpack.c.l.b16 %v1108
    %v3867 = vunpack.c.h.b16 %v1108
    %v3868 = vunpack.c.l.b16 %v1109
    %v3869 = vunpack.c.h.b16 %v1109
    %v3870 = vunpack.c.l.b16 %v1110
    %v3871 = vunpack.c.h.b16 %v1110
    %v3872 = vunpack.c.l.b16 %v1111
    %v3873 = vunpack.c.h.b16 %v1111
    %v3874 = vunpack.c.l.b16 %v1112
    %v3875 = vunpack.c.h.b16 %v1112
    %v3876 = vunpack.c.l.b16 %v1113
    %v3877 = vunpack.c.h.b16 %v1113
    %v3878 = vunpack.c.l.b16 %v1114
    %v3879 = vunpack.c.h.b16 %v1114
    %v3880 = vunpack.c.l.b16 %v1115
    %v3881 = vunpack.c.h.b16 %v1115
    %v3882 = vunpack.c.l.b16 %v1116
    %v3883 = vunpack.c.h.b16 %v1116
    %v3884 = vunpack.c.l.b16 %v1117
    %v3885 = vunpack.c.h.b16 %v1117
    %v3886 = vunpack.c.l.b16 %v1118
    %v3887 = vunpack.c.h.b16 %v1118
    %v3888 = vunpack.c.l.b16 %v1119
    %v3889 = vunpack.c.h.b16 %v1119
    %v3890 = vunpack.c.l.b16 %v1120
    %v3891 = vunpack.c.h.b16 %v1120
    %v3892 = vunpack.c.l.b16 %v1121
    %v3893 = vunpack.c.h.b16 %v1121
    %v3894 = vunpack.c.l.b16 %v1122
    %v3895 = vunpack.c.h.b16 %v1122
    %v3896 = vunpack.c.l.b16 %v1123
    %v3897 = vunpack.c.h.b16 %v1123
    %v3898 = vunpack.c.l.b16 %v1124
    %v3899 = vunpack.c.h.b16 %v1124
    %v3900 = vunpack.c.l.b16 %v1125
    %v3901 = vunpack.c.h.b16 %v1125
    %v3902 = vunpack.c.l.b16 %v1126
    %v3903 = vunpack.c.h.b16 %v1126
    %v3904 = vunpack.c.l.b16 %v1127
    %v3905 = vunpack.c.h.b16 %v1127
    %v3906 = vunpack.c.l.b16 %v1128
    %v3907 = vunpack.c.h.b16 %v1128
    %v3908 = vunpack.c.l.b16 %v1129
    %v3909 = vunpack.c.h.b16 %v1129
    %v3910 = vunpack.c.l.b16 %v1130
    %v3911 = vunpack.c.h.b16 %v1130
    %v3912 = vunpack.c.l.b16 %v1131
    %v3913 = vunpack.c.h.b16 %v1131
    %v3914 = vunpack.c.l.b16 %v1132
    %v3915 = vunpack.c.h.b16 %v1132
    %v3916 = vunpack.c.l.b16 %v1133
    %v3917 = vunpack.c.h.b16 %v1133
    %v3918 = vunpack.c.l.b16 %v1134
    %v3919 = vunpack.c.h.b16 %v1134
    %v3920 = vunpack.c.l.b16 %v1135
    %v3921 = vunpack.c.h.b16 %v1135
    %v3922 = vunpack.c.l.b16 %v1136
    %v3923 = vunpack.c.h.b16 %v1136
    %v3924 = vunpack.c.l.b16 %v1137
    %v3925 = vunpack.c.h.b16 %v1137
    %v3926 = vunpack.c.l.b16 %v1138
    %v3927 = vunpack.c.h.b16 %v1138
    %v3928 = vunpack.c.l.b16 %v1139
    %v3929 = vunpack.c.h.b16 %v1139
    %v3930 = vunpack.c.l.b16 %v1140
    %v3931 = vunpack.c.h.b16 %v1140
    %v3932 = vunpack.c.l.b16 %v1141
    %v3933 = vunpack.c.h.b16 %v1141
    %v3934 = vunpack.c.l.b16 %v1142
    %v3935 = vunpack.c.h.b16 %v1142
    %v3936 = vunpack.c.l.b16 %v1143
    %v3937 = vunpack.c.h.b16 %v1143
    %v3938 = vunpack.c.l.b16 %v1144
    %v3939 = vunpack.c.h.b16 %v1144
    %v3940 = vunpack.c.l.b16 %v1145
    %v3941 = vunpack.c.h.b16 %v1145
    %v3942 = vunpack.c.l.b16 %v1146
    %v3943 = vunpack.c.h.b16 %v1146
    %v3944 = vunpack.c.l.b16 %v1147
    %v3945 = vunpack.c.h.b16 %v1147
    %v3946 = vunpack.c.l.b16 %v1148
    %v3947 = vunpack.c.h.b16 %v1148
    %v3948 = vunpack.c.l.b16 %v1149
    %v3949 = vunpack.c.h.b16 %v1149
    %v3950 = vunpack.c.l.b16 %v1150
    %v3951 = vunpack.c.h.b16 %v1150
    %v3952 = vunpack.c.l.b16 %v1151
    %v3953 = vunpack.c.h.b16 %v1151
    %v3954 = vunpack.c.l.b16 %v1152
    %v3955 = vunpack.c.h.b16 %v1152
    %v3956 = vunpack.c.l.b16 %v1153
    %v3957 = vunpack.c.h.b16 %v1153
    %v3958 = vunpack.c.l.b16 %v1154
    %v3959 = vunpack.c.h.b16 %v1154
    %v3960 = vunpack.c.l.b16 %v1155
    %v3961 = vunpack.c.h.b16 %v1155
    %v3962 = vunpack.c.l.b16 %v1156
    %v3963 = vunpack.c.h.b16 %v1156
    %v3964 = vunpack.c.l.b16 %v1157
    %v3965 = vunpack.c.h.b16 %v1157
    %v3966 = vunpack.c.l.b16 %v1158
    %v3967 = vunpack.c.h.b16 %v1158
    %v3968 = vunpack.c.l.b16 %v1159
    %v3969 = vunpack.c.h.b16 %v1159
    %v3970 = vunpack.c.l.b16 %v1160
    %v3971 = vunpack.c.h.b16 %v1160
    %v3972 = vunpack.c.l.b16 %v1161
    %v3973 = vunpack.c.h.b16 %v1161
    %v3974 = vunpack.c.l.b16 %v1162
    %v3975 = vunpack.c.h.b16 %v1162
    %v3976 = vunpack.c.l.b16 %v1163
    %v3977 = vunpack.c.h.b16 %v1163
    %v3978 = vunpack.c.l.b16 %v1164
    %v3979 = vunpack.c.h.b16 %v1164
    %v3980 = vunpack.c.l.b16 %v1165
    %v3981 = vunpack.c.h.b16 %v1165
    %v3982 = vunpack.c.l.b16 %v1166
    %v3983 = vunpack.c.h.b16 %v1166
    %v3984 = vunpack.c.l.b16 %v1167
    %v3985 = vunpack.c.h.b16 %v1167
    %v3986 = vunpack.c.l.b16 %v1168
    %v3987 = vunpack.c.h.b16 %v1168
    %v3988 = vunpack.c.l.b16 %v1169
    %v3989 = vunpack.c.h.b16 %v1169
    %v3990 = vunpack.c.l.b16 %v1170
    %v3991 = vunpack.c.h.b16 %v1170
    %v3992 = vunpack.c.l.b16 %v1171
    %v3993 = vunpack.c.h.b16 %v1171
    %v3994 = vunpack.c.l.b16 %v1172
    %v3995 = vunpack.c.h.b16 %v1172
    %v3996 = vunpack.c.l.b16 %v1173
    %v3997 = vunpack.c.h.b16 %v1173
    %v3998 = vunpack.c.l.b16 %v1174
    %v3999 = vunpack.c.h.b16 %v1174
    %v4000 = vunpack.c.l.b16 %v1175
    %v4001 = vunpack.c.h.b16 %v1175
    %v4002 = vunpack.c.l.b16 %v1176
    %v4003 = vunpack.c.h.b16 %v1176
    %v4004 = vunpack.c.l.b16 %v1177
    %v4005 = vunpack.c.h.b16 %v1177
    %v4006 = vunpack.c.l.b16 %v1178
    %v4007 = vunpack.c.h.b16 %v1178
    %v4008 = vunpack.c.l.b16 %v1179
    %v4009 = vunpack.c.h.b16 %v1179
    %v4010 = vunpack.c.l.b16 %v1180
    %v4011 = vunpack.c.h.b16 %v1180
    %v4012 = vunpack.c.l.b16 %v1181
    %v4013 = vunpack.c.h.b16 %v1181
    %v4014 = vunpack.c.l.b16 %v1182
    %v4015 = vunpack.c.h.b16 %v1182
    %v4016 = vunpack.c.l.b16 %v1183
    %v4017 = vunpack.c.h.b16 %v1183
    %v4018 = vunpack.c.l.b16 %v1184
    %v4019 = vunpack.c.h.b16 %v1184
    %v4020 = vunpack.c.l.b16 %v1185
    %v4021 = vunpack.c.h.b16 %v1185
    %v4022 = vunpack.c.l.b16 %v1186
    %v4023 = vunpack.c.h.b16 %v1186
    %v4024 = vunpack.c.l.b16 %v1187
    %v4025 = vunpack.c.h.b16 %v1187
    %v4026 = vunpack.c.l.b16 %v1188
    %v4027 = vunpack.c.h.b16 %v1188
    %v4028 = vunpack.c.l.b16 %v1189
    %v4029 = vunpack.c.h.b16 %v1189
    %v4030 = vunpack.c.l.b16 %v1190
    %v4031 = vunpack.c.h.b16 %v1190
    %v4032 = vunpack.c.l.b16 %v1191
    %v4033 = vunpack.c.h.b16 %v1191
    %v4034 = vunpack.c.l.b16 %v1192
    %v4035 = vunpack.c.h.b16 %v1192
    %v4036 = vunpack.c.l.b16 %v1193
    %v4037 = vunpack.c.h.b16 %v1193
    %v4038 = vunpack.c.l.b16 %v1194
    %v4039 = vunpack.c.h.b16 %v1194
    %v4040 = vunpack.c.l.b16 %v1195
    %v4041 = vunpack.c.h.b16 %v1195
    %v4042 = vunpack.c.l.b16 %v1196
    %v4043 = vunpack.c.h.b16 %v1196
    %v4044 = vunpack.c.l.b16 %v1197
    %v4045 = vunpack.c.h.b16 %v1197
    %v4046 = vunpack.c.l.b16 %v1198
    %v4047 = vunpack.c.h.b16 %v1198
    %v4048 = vunpack.c.l.b16 %v1199
    %v4049 = vunpack.c.h.b16 %v1199
    %v4050 = vunpack.c.l.b16 %v1200
    %v4051 = vunpack.c.h.b16 %v1200
    %v4052 = vunpack.c.l.b16 %v1201
    %v4053 = vunpack.c.h.b16 %v1201
    %v4054 = vunpack.c.l.b16 %v1202
    %v4055 = vunpack.c.h.b16 %v1202
    %v4056 = vunpack.c.l.b16 %v1203
    %v4057 = vunpack.c.h.b16 %v1203
    %v4058 = vunpack.c.l.b16 %v1204
    %v4059 = vunpack.c.h.b16 %v1204
    %v4060 = vunpack.c.l.b16 %v1205
    %v4061 = vunpack.c.h.b16 %v1205
    %v4062 = vunpack.c.l.b16 %v1206
    %v4063 = vunpack.c.h.b16 %v1206
    %v4064 = vunpack.c.l.b16 %v1207
    %v4065 = vunpack.c.h.b16 %v1207
    %v4066 = vunpack.c.l.b16 %v1208
    %v4067 = vunpack.c.h.b16 %v1208
    %v4068 = vunpack.c.l.b16 %v1209
    %v4069 = vunpack.c.h.b16 %v1209
    %v4070 = vunpack.c.l.b16 %v1210
    %v4071 = vunpack.c.h.b16 %v1210
    %v4072 = vunpack.c.l.b16 %v1211
    %v4073 = vunpack.c.h.b16 %v1211
    %v4074 = vunpack.c.l.b16 %v1212
    %v4075 = vunpack.c.h.b16 %v1212
    %v4076 = vunpack.c.l.b16 %v1213
    %v4077 = vunpack.c.h.b16 %v1213
    %v4078 = vunpack.c.l.b16 %v1214
    %v4079 = vunpack.c.h.b16 %v1214
    %v4080 = vunpack.c.l.b16 %v1215
    %v4081 = vunpack.c.h.b16 %v1215
    %v4082 = vunpack.c.l.b16 %v1216
    %v4083 = vunpack.c.h.b16 %v1216
    %v4084 = vunpack.c.l.b16 %v1217
    %v4085 = vunpack.c.h.b16 %v1217
    %v4086 = vunpack.c.l.b16 %v1218
    %v4087 = vunpack.c.h.b16 %v1218
    %v4088 = vunpack.c.l.b16 %v1219
    %v4089 = vunpack.c.h.b16 %v1219
    %v4090 = vunpack.c.l.b16 %v1220
    %v4091 = vunpack.c.h.b16 %v1220
    %v4092 = vunpack.c.l.b16 %v1221
    %v4093 = vunpack.c.h.b16 %v1221
    %v4094 = vunpack.c.l.b16 %v1222
    %v4095 = vunpack.c.h.b16 %v1222
    %v4096 = vunpack.c.l.b16 %v1223
    %v4097 = vunpack.c.h.b16 %v1223
    %v4098 = vunpack.c.l.b16 %v1224
    %v4099 = vunpack.c.h.b16 %v1224
    %v4100 = vunpack.c.l.b16 %v1225
    %v4101 = vunpack.c.h.b16 %v1225
    %v4102 = vunpack.c.l.b16 %v1226
    %v4103 = vunpack.c.h.b16 %v1226
    %v4104 = vunpack.c.l.b16 %v1227
    %v4105 = vunpack.c.h.b16 %v1227
    %v4106 = vunpack.c.l.b16 %v1228
    %v4107 = vunpack.c.h.b16 %v1228
    %v4108 = vunpack.c.l.b16 %v1229
    %v4109 = vunpack.c.h.b16 %v1229
    %v4110 = vunpack.c.l.b16 %v1230
    %v4111 = vunpack.c.h.b16 %v1230
    %v4112 = vunpack.c.l.b16 %v1231
    %v4113 = vunpack.c.h.b16 %v1231
    %v4114 = vunpack.c.l.b16 %v1232
    %v4115 = vunpack.c.h.b16 %v1232
    %v4116 = vunpack.c.l.b16 %v1233
    %v4117 = vunpack.c.h.b16 %v1233
    %v4118 = vunpack.c.l.b16 %v1234
    %v4119 = vunpack.c.h.b16 %v1234
    %v4120 = vunpack.c.l.b16 %v1235
    %v4121 = vunpack.c.h.b16 %v1235
    %v4122 = vunpack.c.l.b16 %v1236
    %v4123 = vunpack.c.h.b16 %v1236
    %v4124 = vunpack.c.l.b16 %v1237
    %v4125 = vunpack.c.h.b16 %v1237
    %v4126 = vunpack.c.l.b16 %v1238
    %v4127 = vunpack.c.h.b16 %v1238
    %v4128 = vunpack.c.l.b16 %v1239
    %v4129 = vunpack.c.h.b16 %v1239
    %v4130 = vunpack.c.l.b16 %v1240
    %v4131 = vunpack.c.h.b16 %v1240
    %v4132 = vunpack.c.l.b16 %v1241
    %v4133 = vunpack.c.h.b16 %v1241
    %v4134 = vunpack.c.l.b16 %v1242
    %v4135 = vunpack.c.h.b16 %v1242
    %v4136 = vunpack.c.l.b16 %v1243
    %v4137 = vunpack.c.h.b16 %v1243
    %v4138 = vunpack.c.l.b16 %v1244
    %v4139 = vunpack.c.h.b16 %v1244
    %v4140 = vunpack.c.l.b16 %v1245
    %v4141 = vunpack.c.h.b16 %v1245
    %v4142 = vunpack.c.l.b16 %v1246
    %v4143 = vunpack.c.h.b16 %v1246
    %v4144 = vunpack.c.l.b16 %v1247
    %v4145 = vunpack.c.h.b16 %v1247
    %v4146 = vunpack.c.l.b16 %v1248
    %v4147 = vunpack.c.h.b16 %v1248
    %v4148 = vunpack.c.l.b16 %v1249
    %v4149 = vunpack.c.h.b16 %v1249
    %v4150 = vunpack.c.l.b16 %v1250
    %v4151 = vunpack.c.h.b16 %v1250
    %v4152 = vunpack.c.l.b16 %v1251
    %v4153 = vunpack.c.h.b16 %v1251
    %v4154 = vunpack.c.l.b16 %v1252
    %v4155 = vunpack.c.h.b16 %v1252
    %v4156 = vunpack.c.l.b16 %v1253
    %v4157 = vunpack.c.h.b16 %v1253
    %v4158 = vunpack.c.l.b16 %v1254
    %v4159 = vunpack.c.h.b16 %v1254
    %v4160 = vunpack.c.l.b16 %v1255
    %v4161 = vunpack.c.h.b16 %v1255
    %v4162 = vunpack.c.l.b16 %v1256
    %v4163 = vunpack.c.h.b16 %v1256
    %v4164 = vunpack.c.l.b16 %v1257
    %v4165 = vunpack.c.h.b16 %v1257
    %v4166 = vunpack.c.l.b16 %v1258
    %v4167 = vunpack.c.h.b16 %v1258
    %v4168 = vunpack.c.l.b16 %v1259
    %v4169 = vunpack.c.h.b16 %v1259
    %v4170 = vunpack.c.l.b16 %v1260
    %v4171 = vunpack.c.h.b16 %v1260
    %v4172 = vunpack.c.l.b16 %v1261
    %v4173 = vunpack.c.h.b16 %v1261
    %v4174 = vunpack.c.l.b16 %v1262
    %v4175 = vunpack.c.h.b16 %v1262
    %v4176 = vunpack.c.l.b16 %v1263
    %v4177 = vunpack.c.h.b16 %v1263
    %v4178 = vunpack.c.l.b16 %v1264
    %v4179 = vunpack.c.h.b16 %v1264
    %v4180 = vunpack.c.l.b16 %v1265
    %v4181 = vunpack.c.h.b16 %v1265
    %v4182 = vunpack.c.l.b16 %v1266
    %v4183 = vunpack.c.h.b16 %v1266
    %v4184 = vunpack.c.l.b16 %v1267
    %v4185 = vunpack.c.h.b16 %v1267
    %v4186 = vunpack.c.l.b16 %v1268
    %v4187 = vunpack.c.h.b16 %v1268
    %v4188 = vunpack.c.l.b16 %v1269
    %v4189 = vunpack.c.h.b16 %v1269
    %v4190 = vunpack.c.l.b16 %v1270
    %v4191 = vunpack.c.h.b16 %v1270
    %v4192 = vunpack.c.l.b16 %v1271
    %v4193 = vunpack.c.h.b16 %v1271
    %v4194 = vunpack.c.l.b16 %v1272
    %v4195 = vunpack.c.h.b16 %v1272
    %v4196 = vunpack.c.l.b16 %v1273
    %v4197 = vunpack.c.h.b16 %v1273
    %v4198 = vunpack.c.l.b16 %v1274
    %v4199 = vunpack.c.h.b16 %v1274
    %v4200 = vunpack.c.l.b16 %v1275
    %v4201 = vunpack.c.h.b16 %v1275
    %v4202 = vunpack.c.l.b16 %v1276
    %v4203 = vunpack.c.h.b16 %v1276
    %v4204 = vunpack.c.l.b16 %v1277
    %v4205 = vunpack.c.h.b16 %v1277
    %v4206 = vunpack.c.l.b16 %v1278
    %v4207 = vunpack.c.h.b16 %v1278
    %v4208 = vunpack.c.l.b16 %v1279
    %v4209 = vunpack.c.h.b16 %v1279
    %v4210 = vunpack.c.l.b16 %v1280
    %v4211 = vunpack.c.h.b16 %v1280
    %v4212 = vunpack.c.l.b16 %v1281
    %v4213 = vunpack.c.h.b16 %v1281
    %v4214 = vunpack.c.l.b16 %v1282
    %v4215 = vunpack.c.h.b16 %v1282
    %v4216 = vunpack.c.l.b16 %v1283
    %v4217 = vunpack.c.h.b16 %v1283
    %v4218 = vunpack.c.l.b16 %v1284
    %v4219 = vunpack.c.h.b16 %v1284
    %v4220 = vunpack.c.l.b16 %v1285
    %v4221 = vunpack.c.h.b16 %v1285
    %v4222 = vunpack.c.l.b16 %v1286
    %v4223 = vunpack.c.h.b16 %v1286
    %v4224 = vunpack.c.l.b16 %v1287
    %v4225 = vunpack.c.h.b16 %v1287
    %v4226 = vunpack.c.l.b16 %v1288
    %v4227 = vunpack.c.h.b16 %v1288
    %v4228 = vunpack.c.l.b16 %v1289
    %v4229 = vunpack.c.h.b16 %v1289
    %v4230 = vunpack.c.l.b16 %v1290
    %v4231 = vunpack.c.h.b16 %v1290
    %v4232 = vunpack.c.l.b16 %v1291
    %v4233 = vunpack.c.h.b16 %v1291
    %v4234 = vunpack.c.l.b16 %v1292
    %v4235 = vunpack.c.h.b16 %v1292
    %v4236 = vunpack.c.l.b16 %v1293
    %v4237 = vunpack.c.h.b16 %v1293
    %v4238 = vunpack.c.l.b16 %v1294
    %v4239 = vunpack.c.h.b16 %v1294
    %v4240 = vunpack.c.l.b16 %v1295
    %v4241 = vunpack.c.h.b16 %v1295
    %v4242 = vunpack.c.l.b16 %v1296
    %v4243 = vunpack.c.h.b16 %v1296
    %v4244 = vunpack.c.l.b16 %v1297
    %v4245 = vunpack.c.h.b16 %v1297
    %v4246 = vunpack.c.l.b16 %v1298
    %v4247 = vunpack.c.h.b16 %v1298
    %v4248 = vunpack.c.l.b16 %v1299
    %v4249 = vunpack.c.h.b16 %v1299
    %v4250 = vunpack.c.l.b16 %v1300
    %v4251 = vunpack.c.h.b16 %v1300
    %v4252 = vunpack.c.l.b16 %v1301
    %v4253 = vunpack.c.h.b16 %v1301
    %v4254 = vunpack.c.l.b16 %v1302
    %v4255 = vunpack.c.h.b16 %v1302
    %v4256 = vunpack.c.l.b16 %v1303
    %v4257 = vunpack.c.h.b16 %v1303
    %v4258 = vunpack.c.l.b16 %v1304
    %v4259 = vunpack.c.h.b16 %v1304
    %v4260 = vunpack.c.l.b16 %v1305
    %v4261 = vunpack.c.h.b16 %v1305
    %v4262 = vunpack.c.l.b16 %v1306
    %v4263 = vunpack.c.h.b16 %v1306
    %v4264 = vunpack.c.l.b16 %v1307
    %v4265 = vunpack.c.h.b16 %v1307
    %v4266 = vunpack.c.l.b16 %v1308
    %v4267 = vunpack.c.h.b16 %v1308
    %v4268 = vunpack.c.l.b16 %v1309
    %v4269 = vunpack.c.h.b16 %v1309
    %v4270 = vunpack.c.l.b16 %v1310
    %v4271 = vunpack.c.h.b16 %v1310
    %v4272 = vunpack.c.l.b16 %v1311
    %v4273 = vunpack.c.h.b16 %v1311
    %v4274 = vunpack.c.l.b16 %v1312
    %v4275 = vunpack.c.h.b16 %v1312
    %v4276 = vunpack.c.l.b16 %v1313
    %v4277 = vunpack.c.h.b16 %v1313
    %v4278 = vunpack.c.l.b16 %v1314
    %v4279 = vunpack.c.h.b16 %v1314
    %v4280 = vunpack.c.l.b16 %v1315
    %v4281 = vunpack.c.h.b16 %v1315
    %v4282 = vunpack.c.l.b16 %v1316
    %v4283 = vunpack.c.h.b16 %v1316
    %v4284 = vunpack.c.l.b16 %v1317
    %v4285 = vunpack.c.h.b16 %v1317
    %v4286 = vunpack.c.l.b16 %v1318
    %v4287 = vunpack.c.h.b16 %v1318
    %v4288 = vunpack.c.l.b16 %v1319
    %v4289 = vunpack.c.h.b16 %v1319
    %v4290 = vunpack.c.l.b16 %v1320
    %v4291 = vunpack.c.h.b16 %v1320
    %v4292 = vunpack.c.l.b16 %v1321
    %v4293 = vunpack.c.h.b16 %v1321
    %v4294 = vunpack.c.l.b16 %v1322
    %v4295 = vunpack.c.h.b16 %v1322
    %v4296 = vunpack.c.l.b16 %v1323
    %v4297 = vunpack.c.h.b16 %v1323
    %v4298 = vunpack.c.l.b16 %v1324
    %v4299 = vunpack.c.h.b16 %v1324
    %v4300 = vunpack.c.l.b16 %v1325
    %v4301 = vunpack.c.h.b16 %v1325
    %v4302 = vunpack.c.l.b16 %v1326
    %v4303 = vunpack.c.h.b16 %v1326
    %v4304 = vunpack.c.l.b16 %v1327
    %v4305 = vunpack.c.h.b16 %v1327
    %v4306 = vunpack.c.l.b16 %v1328
    %v4307 = vunpack.c.h.b16 %v1328
    %v4308 = vunpack.c.l.b16 %v1329
    %v4309 = vunpack.c.h.b16 %v1329
    %v4310 = vunpack.c.l.b16 %v1330
    %v4311 = vunpack.c.h.b16 %v1330
    %v4312 = vunpack.c.l.b16 %v1331
    %v4313 = vunpack.c.h.b16 %v1331
    %v4314 = vunpack.c.l.b16 %v1332
    %v4315 = vunpack.c.h.b16 %v1332
    %v4316 = vunpack.c.l.b16 %v1333
    %v4317 = vunpack.c.h.b16 %v1333
    %v4318 = vunpack.c.l.b16 %v1334
    %v4319 = vunpack.c.h.b16 %v1334
    %v4320 = vunpack.c.l.b16 %v1335
    %v4321 = vunpack.c.h.b16 %v1335
    %v4322 = vunpack.c.l.b16 %v1336
    %v4323 = vunpack.c.h.b16 %v1336
    %v4324 = vunpack.c.l.b16 %v1337
    %v4325 = vunpack.c.h.b16 %v1337
    %v4326 = vunpack.c.l.b16 %v1338
    %v4327 = vunpack.c.h.b16 %v1338
    %v4328 = vunpack.c.l.b16 %v1339
    %v4329 = vunpack.c.h.b16 %v1339
    %v4330 = vunpack.c.l.b16 %v1340
    %v4331 = vunpack.c.h.b16 %v1340
    %v4332 = vunpack.c.l.b16 %v1341
    %v4333 = vunpack.c.h.b16 %v1341
    %v4334 = vunpack.c.l.b16 %v1342
    %v4335 = vunpack.c.h.b16 %v1342
    %v4336 = vunpack.c.l.b16 %v1343
    %v4337 = vunpack.c.h.b16 %v1343
    %v4338 = vunpack.c.l.b16 %v1344
    %v4339 = vunpack.c.h.b16 %v1344
    %v4340 = vunpack.c.l.b16 %v1345
    %v4341 = vunpack.c.h.b16 %v1345
    %v4342 = vunpack.c.l.b16 %v1346
    %v4343 = vunpack.c.h.b16 %v1346
    %v4344 = vunpack.c.l.b16 %v1347
    %v4345 = vunpack.c.h.b16 %v1347
    %v4346 = vunpack.c.l.b16 %v1348
    %v4347 = vunpack.c.h.b16 %v1348
    %v4348 = vunpack.c.l.b16 %v1349
    %v4349 = vunpack.c.h.b16 %v1349
    %v4350 = vunpack.c.l.b16 %v1350
    %v4351 = vunpack.c.h.b16 %v1350
    %v4352 = vunpack.c.l.b16 %v1351
    %v4353 = vunpack.c.h.b16 %v1351
    %v4354 = vunpack.c.l.b16 %v1352
    %v4355 = vunpack.c.h.b16 %v1352
    %v4356 = vunpack.c.l.b16 %v1353
    %v4357 = vunpack.c.h.b16 %v1353
    %v4358 = vunpack.c.l.b16 %v1354
    %v4359 = vunpack.c.h.b16 %v1354
    %v4360 = vunpack.c.l.b16 %v1355
    %v4361 = vunpack.c.h.b16 %v1355
    %v4362 = vunpack.c.l.b16 %v1356
    %v4363 = vunpack.c.h.b16 %v1356
    %v4364 = vunpack.c.l.b16 %v1357
    %v4365 = vunpack.c.h.b16 %v1357
    %v4366 = vunpack.c.l.b16 %v1358
    %v4367 = vunpack.c.h.b16 %v1358
    %v4368 = vunpack.c.l.b16 %v1359
    %v4369 = vunpack.c.h.b16 %v1359
    %v4370 = vunpack.c.l.b16 %v1360
    %v4371 = vunpack.c.h.b16 %v1360
    %v4372 = vunpack.c.l.b16 %v1361
    %v4373 = vunpack.c.h.b16 %v1361
    %v4374 = vunpack.c.l.b16 %v1362
    %v4375 = vunpack.c.h.b16 %v1362
    %v4376 = vunpack.c.l.b16 %v1363
    %v4377 = vunpack.c.h.b16 %v1363
    %v4378 = vunpack.c.l.b16 %v1364
    %v4379 = vunpack.c.h.b16 %v1364
    %v4380 = vunpack.c.l.b16 %v1365
    %v4381 = vunpack.c.h.b16 %v1365
    %v4382 = vunpack.c.l.b16 %v1366
    %v4383 = vunpack.c.h.b16 %v1366
    %v4384 = vunpack.c.l.b16 %v1367
    %v4385 = vunpack.c.h.b16 %v1367
    %v4386 = vunpack.c.l.b16 %v1368
    %v4387 = vunpack.c.h.b16 %v1368
    %v4388 = vunpack.c.l.b16 %v1369
    %v4389 = vunpack.c.h.b16 %v1369
    %v4390 = vunpack.c.l.b16 %v1370
    %v4391 = vunpack.c.h.b16 %v1370
    %v4392 = vunpack.c.l.b16 %v1371
    %v4393 = vunpack.c.h.b16 %v1371
    %v4394 = vunpack.c.l.b16 %v1372
    %v4395 = vunpack.c.h.b16 %v1372
    %v4396 = vunpack.c.l.b16 %v1373
    %v4397 = vunpack.c.h.b16 %v1373
    %v4398 = vunpack.c.l.b16 %v1374
    %v4399 = vunpack.c.h.b16 %v1374
    %v4400 = vunpack.c.l.b16 %v1375
    %v4401 = vunpack.c.h.b16 %v1375
    %v4402 = vunpack.c.l.b16 %v1376
    %v4403 = vunpack.c.h.b16 %v1376
    %v4404 = vunpack.c.l.b16 %v1377
    %v4405 = vunpack.c.h.b16 %v1377
    %v4406 = vunpack.c.l.b16 %v1378
    %v4407 = vunpack.c.h.b16 %v1378
    %v4408 = vunpack.c.l.b16 %v1379
    %v4409 = vunpack.c.h.b16 %v1379
    %v4410 = vunpack.c.l.b16 %v1380
    %v4411 = vunpack.c.h.b16 %v1380
    %v4412 = vunpack.c.l.b16 %v1381
    %v4413 = vunpack.c.h.b16 %v1381
    %v4414 = vunpack.c.l.b16 %v1382
    %v4415 = vunpack.c.h.b16 %v1382
    %v4416 = vunpack.c.l.b16 %v1383
    %v4417 = vunpack.c.h.b16 %v1383
    %v4418 = vunpack.c.l.b16 %v1384
    %v4419 = vunpack.c.h.b16 %v1384
    %v4420 = vunpack.c.l.b16 %v1385
    %v4421 = vunpack.c.h.b16 %v1385
    %v4422 = vunpack.c.l.b16 %v1386
    %v4423 = vunpack.c.h.b16 %v1386
    %v4424 = vunpack.c.l.b16 %v1387
    %v4425 = vunpack.c.h.b16 %v1387
    %v4426 = vunpack.c.l.b16 %v1388
    %v4427 = vunpack.c.h.b16 %v1388
    %v4428 = vunpack.c.l.b16 %v1389
    %v4429 = vunpack.c.h.b16 %v1389
    %v4430 = vunpack.c.l.b16 %v1390
    %v4431 = vunpack.c.h.b16 %v1390
    %v4432 = vunpack.c.l.b16 %v1391
    %v4433 = vunpack.c.h.b16 %v1391
    %v4434 = vunpack.c.l.b16 %v1392
    %v4435 = vunpack.c.h.b16 %v1392
    %v4436 = vunpack.c.l.b16 %v1393
    %v4437 = vunpack.c.h.b16 %v1393
    %v4438 = vunpack.c.l.b16 %v1394
    %v4439 = vunpack.c.h.b16 %v1394
    %v4440 = vunpack.c.l.b16 %v1395
    %v4441 = vunpack.c.h.b16 %v1395
    %v4442 = vunpack.c.l.b16 %v1396
    %v4443 = vunpack.c.h.b16 %v1396
    %v4444 = vunpack.c.l.b16 %v1397
    %v4445 = vunpack.c.h.b16 %v1397
    %v4446 = vunpack.c.l.b16 %v1398
    %v4447 = vunpack.c.h.b16 %v1398
    %v4448 = vunpack.c.l.b16 %v1399
    %v4449 = vunpack.c.h.b16 %v1399
    %v4450 = vunpack.c.l.b16 %v1400
    %v4451 = vunpack.c.h.b16 %v1400
    %v4452 = vunpack.c.l.b16 %v1401
    %v4453 = vunpack.c.h.b16 %v1401
    %v4454 = vunpack.c.l.b16 %v1402
    %v4455 = vunpack.c.h.b16 %v1402
    %v4456 = vunpack.c.l.b16 %v1403
    %v4457 = vunpack.c.h.b16 %v1403
    %v4458 = vunpack.c.l.b16 %v1404
    %v4459 = vunpack.c.h.b16 %v1404
    %v4460 = vunpack.c.l.b16 %v1405
    %v4461 = vunpack.c.h.b16 %v1405
    %v4462 = vunpack.c.l.b16 %v1406
    %v4463 = vunpack.c.h.b16 %v1406
    %v4464 = vunpack.c.l.b16 %v1407
    %v4465 = vunpack.c.h.b16 %v1407
    %v4466 = vunpack.c.l.b16 %v1408
    %v4467 = vunpack.c.h.b16 %v1408
    %v4468 = vunpack.c.l.b16 %v1409
    %v4469 = vunpack.c.h.b16 %v1409
    %v4470 = vunpack.c.l.b16 %v1410
    %v4471 = vunpack.c.h.b16 %v1410
    %v4472 = vunpack.c.l.b16 %v1411
    %v4473 = vunpack.c.h.b16 %v1411
    %v4474 = vunpack.c.l.b16 %v1412
    %v4475 = vunpack.c.h.b16 %v1412
    %v4476 = vunpack.c.l.b16 %v1413
    %v4477 = vunpack.c.h.b16 %v1413
    %v4478 = vunpack.c.l.b16 %v1414
    %v4479 = vunpack.c.h.b16 %v1414
    %v4480 = vunpack.c.l.b16 %v1415
    %v4481 = vunpack.c.h.b16 %v1415
    %v4482 = vunpack.c.l.b16 %v1416
    %v4483 = vunpack.c.h.b16 %v1416
    %v4484 = vunpack.c.l.b16 %v1417
    %v4485 = vunpack.c.h.b16 %v1417
    %v4486 = vunpack.c.l.b16 %v1418
    %v4487 = vunpack.c.h.b16 %v1418
    %v4488 = vunpack.c.l.b16 %v1419
    %v4489 = vunpack.c.h.b16 %v1419
    %v4490 = vunpack.c.l.b16 %v1420
    %v4491 = vunpack.c.h.b16 %v1420
    %v4492 = vunpack.c.l.b16 %v1421
    %v4493 = vunpack.c.h.b16 %v1421
    %v4494 = vunpack.c.l.b16 %v1422
    %v4495 = vunpack.c.h.b16 %v1422
    %v4496 = vunpack.c.l.b16 %v1423
    %v4497 = vunpack.c.h.b16 %v1423
    %v4498 = vunpack.c.l.b16 %v1424
    %v4499 = vunpack.c.h.b16 %v1424
    %v4500 = vunpack.c.l.b16 %v1425
    %v4501 = vunpack.c.h.b16 %v1425
    %v4502 = vunpack.c.l.b16 %v1426
    %v4503 = vunpack.c.h.b16 %v1426
    %v4504 = vunpack.c.l.b16 %v1427
    %v4505 = vunpack.c.h.b16 %v1427
    %v4506 = vunpack.c.l.b16 %v1428
    %v4507 = vunpack.c.h.b16 %v1428
    %v4508 = vunpack.c.l.b16 %v1429
    %v4509 = vunpack.c.h.b16 %v1429
    %v4510 = vunpack.c.l.b16 %v1430
    %v4511 = vunpack.c.h.b16 %v1430
    %v4512 = vunpack.c.l.b16 %v1431
    %v4513 = vunpack.c.h.b16 %v1431
    %v4514 = vunpack.c.l.b16 %v1432
    %v4515 = vunpack.c.h.b16 %v1432
    %v4516 = vunpack.c.l.b16 %v1433
    %v4517 = vunpack.c.h.b16 %v1433
    %v4518 = vunpack.c.l.b16 %v1434
    %v4519 = vunpack.c.h.b16 %v1434
    %v4520 = vunpack.c.l.b16 %v1435
    %v4521 = vunpack.c.h.b16 %v1435
    %v4522 = vunpack.c.l.b16 %v1436
    %v4523 = vunpack.c.h.b16 %v1436
    %v4524 = vunpack.c.l.b16 %v1437
    %v4525 = vunpack.c.h.b16 %v1437
    %v4526 = vunpack.c.l.b16 %v1438
    %v4527 = vunpack.c.h.b16 %v1438
    %v4528 = vunpack.c.l.b16 %v1439
    %v4529 = vunpack.c.h.b16 %v1439
    %v4530 = vunpack.c.l.b16 %v1440
    %v4531 = vunpack.c.h.b16 %v1440
    %v4532 = vunpack.c.l.b16 %v1441
    %v4533 = vunpack.c.h.b16 %v1441
    %v4534 = vunpack.c.l.b16 %v1442
    %v4535 = vunpack.c.h.b16 %v1442
    %v4536 = vunpack.c.l.b16 %v1443
    %v4537 = vunpack.c.h.b16 %v1443
    %v4538 = vunpack.c.l.b16 %v1444
    %v4539 = vunpack.c.h.b16 %v1444
    %v4540 = vunpack.c.l.b16 %v1445
    %v4541 = vunpack.c.h.b16 %v1445
    %v4542 = vunpack.c.l.b16 %v1446
    %v4543 = vunpack.c.h.b16 %v1446
    %v4544 = vunpack.c.l.b16 %v1447
    %v4545 = vunpack.c.h.b16 %v1447
    %v4546 = vunpack.c.l.b16 %v1448
    %v4547 = vunpack.c.h.b16 %v1448
    %v4548 = vunpack.c.l.b16 %v1449
    %v4549 = vunpack.c.h.b16 %v1449
    %v4550 = vunpack.c.l.b16 %v1450
    %v4551 = vunpack.c.h.b16 %v1450
    %v4552 = vunpack.c.l.b16 %v1451
    %v4553 = vunpack.c.h.b16 %v1451
    %v4554 = vunpack.c.l.b16 %v1452
    %v4555 = vunpack.c.h.b16 %v1452
    %v4556 = vunpack.c.l.b16 %v1453
    %v4557 = vunpack.c.h.b16 %v1453
    %v4558 = vunpack.c.l.b16 %v1454
    %v4559 = vunpack.c.h.b16 %v1454
    %v4560 = vunpack.c.l.b16 %v1455
    %v4561 = vunpack.c.h.b16 %v1455
    %v4562 = vunpack.c.l.b16 %v1456
    %v4563 = vunpack.c.h.b16 %v1456
    %v4564 = vunpack.c.l.b16 %v1457
    %v4565 = vunpack.c.h.b16 %v1457
    %v4566 = vunpack.c.l.b16 %v1458
    %v4567 = vunpack.c.h.b16 %v1458
    %v4568 = vunpack.c.l.b16 %v1459
    %v4569 = vunpack.c.h.b16 %v1459
    %v4570 = vunpack.c.l.b16 %v1460
    %v4571 = vunpack.c.h.b16 %v1460
    %v4572 = vunpack.c.l.b16 %v1461
    %v4573 = vunpack.c.h.b16 %v1461
    %v4574 = vunpack.c.l.b16 %v1462
    %v4575 = vunpack.c.h.b16 %v1462
    %v4576 = vunpack.c.l.b16 %v1463
    %v4577 = vunpack.c.h.b16 %v1463
    %v4578 = vunpack.c.l.b16 %v1464
    %v4579 = vunpack.c.h.b16 %v1464
    %v4580 = vunpack.c.l.b16 %v1465
    %v4581 = vunpack.c.h.b16 %v1465
    %v4582 = vunpack.c.l.b16 %v1466
    %v4583 = vunpack.c.h.b16 %v1466
    %v4584 = vunpack.c.l.b16 %v1467
    %v4585 = vunpack.c.h.b16 %v1467
    %v4586 = vunpack.c.l.b16 %v1468
    %v4587 = vunpack.c.h.b16 %v1468
    %v4588 = vunpack.c.l.b16 %v1469
    %v4589 = vunpack.c.h.b16 %v1469
    %v4590 = vunpack.c.l.b16 %v1470
    %v4591 = vunpack.c.h.b16 %v1470
    %v4592 = vunpack.c.l.b16 %v1471
    %v4593 = vunpack.c.h.b16 %v1471
    %v4594 = vunpack.c.l.b16 %v1472
    %v4595 = vunpack.c.h.b16 %v1472
    %v4596 = vunpack.c.l.b16 %v1473
    %v4597 = vunpack.c.h.b16 %v1473
    %v4598 = vunpack.c.l.b16 %v1474
    %v4599 = vunpack.c.h.b16 %v1474
    %v4600 = vunpack.c.l.b16 %v1475
    %v4601 = vunpack.c.h.b16 %v1475
    %v4602 = vunpack.c.l.b16 %v1476
    %v4603 = vunpack.c.h.b16 %v1476
    %v4604 = vunpack.c.l.b16 %v1477
    %v4605 = vunpack.c.h.b16 %v1477
    %v4606 = vunpack.c.l.b16 %v1478
    %v4607 = vunpack.c.h.b16 %v1478
    %v4608 = vunpack.c.l.b16 %v1479
    %v4609 = vunpack.c.h.b16 %v1479
    %v4610 = vunpack.c.l.b16 %v1480
    %v4611 = vunpack.c.h.b16 %v1480
    %v4612 = vunpack.c.l.b16 %v1481
    %v4613 = vunpack.c.h.b16 %v1481
    %v4614 = vunpack.c.l.b16 %v1482
    %v4615 = vunpack.c.h.b16 %v1482
    %v4616 = vunpack.c.l.b16 %v1483
    %v4617 = vunpack.c.h.b16 %v1483
    %v4618 = vunpack.c.l.b16 %v1484
    %v4619 = vunpack.c.h.b16 %v1484
    %v4620 = vunpack.c.l.b16 %v1485
    %v4621 = vunpack.c.h.b16 %v1485
    %v4622 = vunpack.c.l.b16 %v1486
    %v4623 = vunpack.c.h.b16 %v1486
    %v4624 = vunpack.c.l.b16 %v1487
    %v4625 = vunpack.c.h.b16 %v1487
    %v4626 = vunpack.c.l.b16 %v1488
    %v4627 = vunpack.c.h.b16 %v1488
    %v4628 = vunpack.c.l.b16 %v1489
    %v4629 = vunpack.c.h.b16 %v1489
    %v4630 = vunpack.c.l.b16 %v1490
    %v4631 = vunpack.c.h.b16 %v1490
    %v4632 = vunpack.c.l.b16 %v1491
    %v4633 = vunpack.c.h.b16 %v1491
    %v4634 = vunpack.c.l.b16 %v1492
    %v4635 = vunpack.c.h.b16 %v1492
    %v4636 = vunpack.c.l.b16 %v1493
    %v4637 = vunpack.c.h.b16 %v1493
    %v4638 = vunpack.c.l.b16 %v1494
    %v4639 = vunpack.c.h.b16 %v1494
    %v4640 = vunpack.c.l.b16 %v1495
    %v4641 = vunpack.c.h.b16 %v1495
    %v4642 = vunpack.c.l.b16 %v1496
    %v4643 = vunpack.c.h.b16 %v1496
    %v4644 = vunpack.c.l.b16 %v1497
    %v4645 = vunpack.c.h.b16 %v1497
    %v4646 = vunpack.c.l.b16 %v1498
    %v4647 = vunpack.c.h.b16 %v1498
    %v4648 = vunpack.c.l.b16 %v1499
    %v4649 = vunpack.c.h.b16 %v1499
    %v4650 = vunpack.c.l.b16 %v1500
    %v4651 = vunpack.c.h.b16 %v1500
    %v4652 = vunpack.c.l.b16 %v1501
    %v4653 = vunpack.c.h.b16 %v1501
    %v4654 = vunpack.c.l.b16 %v1502
    %v4655 = vunpack.c.h.b16 %v1502
    %v4656 = vunpack.c.l.b16 %v1503
    %v4657 = vunpack.c.h.b16 %v1503
    %v4658 = vunpack.c.l.b16 %v1504
    %v4659 = vunpack.c.h.b16 %v1504
    %v4660 = vunpack.c.l.b16 %v1505
    %v4661 = vunpack.c.h.b16 %v1505
    %v4662 = vunpack.c.l.b16 %v1506
    %v4663 = vunpack.c.h.b16 %v1506
    %v4664 = vunpack.c.l.b16 %v1507
    %v4665 = vunpack.c.h.b16 %v1507
    %v4666 = vunpack.c.l.b16 %v1508
    %v4667 = vunpack.c.h.b16 %v1508
    %v4668 = vunpack.c.l.b16 %v1509
    %v4669 = vunpack.c.h.b16 %v1509
    %v4670 = vunpack.c.l.b16 %v1510
    %v4671 = vunpack.c.h.b16 %v1510
    %v4672 = vunpack.c.l.b16 %v1511
    %v4673 = vunpack.c.h.b16 %v1511
    %v4674 = vunpack.c.l.b16 %v1512
    %v4675 = vunpack.c.h.b16 %v1512
    %v4676 = vunpack.c.l.b16 %v1513
    %v4677 = vunpack.c.h.b16 %v1513
    %v4678 = vunpack.c.l.b16 %v1514
    %v4679 = vunpack.c.h.b16 %v1514
    %v4680 = vunpack.c.l.b16 %v1515
    %v4681 = vunpack.c.h.b16 %v1515
    %v4682 = vunpack.c.l.b16 %v1516
    %v4683 = vunpack.c.h.b16 %v1516
    %v4684 = vunpack.c.l.b16 %v1517
    %v4685 = vunpack.c.h.b16 %v1517
    %v4686 = vunpack.c.l.b16 %v1518
    %v4687 = vunpack.c.h.b16 %v1518
    %v4688 = vunpack.c.l.b16 %v1519
    %v4689 = vunpack.c.h.b16 %v1519
    %v4690 = vunpack.c.l.b16 %v1520
    %v4691 = vunpack.c.h.b16 %v1520
    %v4692 = vunpack.c.l.b16 %v1521
    %v4693 = vunpack.c.h.b16 %v1521
    %v4694 = vunpack.c.l.b16 %v1522
    %v4695 = vunpack.c.h.b16 %v1522
    %v4696 = vunpack.c.l.b16 %v1523
    %v4697 = vunpack.c.h.b16 %v1523
    %v4698 = vunpack.c.l.b16 %v1524
    %v4699 = vunpack.c.h.b16 %v1524
    %v4700 = vunpack.c.l.b16 %v1525
    %v4701 = vunpack.c.h.b16 %v1525
    %v4702 = vunpack.c.l.b16 %v1526
    %v4703 = vunpack.c.h.b16 %v1526
    %v4704 = vunpack.c.l.b16 %v1527
    %v4705 = vunpack.c.h.b16 %v1527
    %v4706 = vunpack.c.l.b16 %v1528
    %v4707 = vunpack.c.h.b16 %v1528
    %v4708 = vunpack.c.l.b16 %v1529
    %v4709 = vunpack.c.h.b16 %v1529
    %v4710 = vunpack.c.l.b16 %v1530
    %v4711 = vunpack.c.h.b16 %v1530
    %v4712 = vunpack.c.l.b16 %v1531
    %v4713 = vunpack.c.h.b16 %v1531
    %v4714 = vunpack.c.l.b16 %v1532
    %v4715 = vunpack.c.h.b16 %v1532
    %v4716 = vunpack.c.l.b16 %v1533
    %v4717 = vunpack.c.h.b16 %v1533
    %v4718 = vunpack.c.l.b16 %v1534
    %v4719 = vunpack.c.h.b16 %v1534
    %v4720 = vunpack.c.l.b16 %v1535
    %v4721 = vunpack.c.h.b16 %v1535
    %v4722 = vunpack.c.l.b16 %v1536
    %v4723 = vunpack.c.h.b16 %v1536
    %v4724 = vunpack.c.l.b16 %v1537
    %v4725 = vunpack.c.h.b16 %v1537
    %v4726 = vunpack.c.l.b16 %v1538
    %v4727 = vunpack.c.h.b16 %v1538
    %v4728 = vunpack.c.l.b16 %v1539
    %v4729 = vunpack.c.h.b16 %v1539
    %v4730 = vunpack.c.l.b16 %v1540
    %v4731 = vunpack.c.h.b16 %v1540
    %v4732 = vunpack.c.l.b16 %v1541
    %v4733 = vunpack.c.h.b16 %v1541
    %v4734 = vunpack.c.l.b16 %v1542
    %v4735 = vunpack.c.h.b16 %v1542
    %v4736 = vunpack.c.l.b16 %v1543
    %v4737 = vunpack.c.h.b16 %v1543
    %v4738 = vunpack.c.l.b16 %v1544
    %v4739 = vunpack.c.h.b16 %v1544
    %v4740 = vunpack.c.l.b16 %v1545
    %v4741 = vunpack.c.h.b16 %v1545
    %v4742 = vunpack.c.l.b16 %v1546
    %v4743 = vunpack.c.h.b16 %v1546
    %v4744 = vunpack.c.l.b16 %v1547
    %v4745 = vunpack.c.h.b16 %v1547
    %v4746 = vunpack.c.l.b16 %v1548
    %v4747 = vunpack.c.h.b16 %v1548
    %v4748 = vunpack.c.l.b16 %v1549
    %v4749 = vunpack.c.h.b16 %v1549
    %v4750 = vunpack.c.l.b16 %v1550
    %v4751 = vunpack.c.h.b16 %v1550
    %v4752 = vunpack.c.l.b16 %v1551
    %v4753 = vunpack.c.h.b16 %v1551
    %v4754 = vunpack.c.l.b16 %v1552
    %v4755 = vunpack.c.h.b16 %v1552
    %v4756 = vunpack.c.l.b16 %v1553
    %v4757 = vunpack.c.h.b16 %v1553
    %v4758 = vunpack.c.l.b16 %v1554
    %v4759 = vunpack.c.h.b16 %v1554
    %v4760 = vunpack.c.l.b16 %v1555
    %v4761 = vunpack.c.h.b16 %v1555
    %v4762 = vunpack.c.l.b16 %v1556
    %v4763 = vunpack.c.h.b16 %v1556
    %v4764 = vunpack.c.l.b16 %v1557
    %v4765 = vunpack.c.h.b16 %v1557
    %v4766 = vunpack.c.l.b16 %v1558
    %v4767 = vunpack.c.h.b16 %v1558
    %v4768 = vunpack.c.l.b16 %v1559
    %v4769 = vunpack.c.h.b16 %v1559
    %v4770 = vunpack.c.l.b16 %v1560
    %v4771 = vunpack.c.h.b16 %v1560
    %v4772 = vunpack.c.l.b16 %v1561
    %v4773 = vunpack.c.h.b16 %v1561
    %v4774 = vunpack.c.l.b16 %v1562
    %v4775 = vunpack.c.h.b16 %v1562
    %v4776 = vunpack.c.l.b16 %v1563
    %v4777 = vunpack.c.h.b16 %v1563
    %v4778 = vunpack.c.l.b16 %v1564
    %v4779 = vunpack.c.h.b16 %v1564
    %v4780 = vunpack.c.l.b16 %v1565
    %v4781 = vunpack.c.h.b16 %v1565
    %v4782 = vunpack.c.l.b16 %v1566
    %v4783 = vunpack.c.h.b16 %v1566
    %v4784 = vunpack.c.l.b16 %v1567
    %v4785 = vunpack.c.h.b16 %v1567
    %v4786 = vunpack.c.l.b16 %v1568
    %v4787 = vunpack.c.h.b16 %v1568
    %v4788 = vunpack.c.l.b16 %v1569
    %v4789 = vunpack.c.h.b16 %v1569
    %v4790 = vunpack.c.l.b16 %v1570
    %v4791 = vunpack.c.h.b16 %v1570
    %v4792 = vunpack.c.l.b16 %v1571
    %v4793 = vunpack.c.h.b16 %v1571
    %v4794 = vunpack.c.l.b16 %v1572
    %v4795 = vunpack.c.h.b16 %v1572
    %v4796 = vunpack.c.l.b16 %v1573
    %v4797 = vunpack.c.h.b16 %v1573
    %v4798 = vunpack.c.l.b16 %v1574
    %v4799 = vunpack.c.h.b16 %v1574
    %v4800 = vunpack.c.l.b16 %v1575
    %v4801 = vunpack.c.h.b16 %v1575
    %v4802 = vunpack.c.l.b16 %v1576
    %v4803 = vunpack.c.h.b16 %v1576
    %v4804 = vunpack.c.l.b16 %v1577
    %v4805 = vunpack.c.h.b16 %v1577
    %v4806 = vunpack.c.l.b16 %v1578
    %v4807 = vunpack.c.h.b16 %v1578
    %v4808 = vunpack.c.l.b16 %v1579
    %v4809 = vunpack.c.h.b16 %v1579
    %v4810 = vunpack.c.l.b16 %v1580
    %v4811 = vunpack.c.h.b16 %v1580
    %v4812 = vunpack.c.l.b16 %v1581
    %v4813 = vunpack.c.h.b16 %v1581
    %v4814 = vunpack.c.l.b16 %v1582
    %v4815 = vunpack.c.h.b16 %v1582
    %v4816 = vunpack.c.l.b16 %v1583
    %v4817 = vunpack.c.h.b16 %v1583
    %v4818 = vunpack.c.l.b16 %v1584
    %v4819 = vunpack.c.h.b16 %v1584
    %v4820 = vunpack.c.l.b16 %v1585
    %v4821 = vunpack.c.h.b16 %v1585
    %v4822 = vunpack.c.l.b16 %v1586
    %v4823 = vunpack.c.h.b16 %v1586
    %v4824 = vunpack.c.l.b16 %v1587
    %v4825 = vunpack.c.h.b16 %v1587
    %v4826 = vunpack.c.l.b16 %v1588
    %v4827 = vunpack.c.h.b16 %v1588
    %v4828 = vunpack.c.l.b16 %v1589
    %v4829 = vunpack.c.h.b16 %v1589
    %v4830 = vunpack.c.l.b16 %v1590
    %v4831 = vunpack.c.h.b16 %v1590
    %v4832 = vunpack.c.l.b16 %v1591
    %v4833 = vunpack.c.h.b16 %v1591
    %v4834 = vunpack.c.l.b16 %v1592
    %v4835 = vunpack.c.h.b16 %v1592
    %v4836 = vunpack.c.l.b16 %v1593
    %v4837 = vunpack.c.h.b16 %v1593
    %v4838 = vunpack.c.l.b16 %v1594
    %v4839 = vunpack.c.h.b16 %v1594
    %v4840 = vunpack.c.l.b16 %v1595
    %v4841 = vunpack.c.h.b16 %v1595
    %v4842 = vunpack.c.l.b16 %v1596
    %v4843 = vunpack.c.h.b16 %v1596
    %v4844 = vunpack.c.l.b16 %v1597
    %v4845 = vunpack.c.h.b16 %v1597
    %v4846 = vunpack.c.l.b16 %v1598
    %v4847 = vunpack.c.h.b16 %v1598
    %v4848 = vunpack.c.l.b16 %v1599
    %v4849 = vunpack.c.h.b16 %v1599
    %v4850 = vunpack.c.l.b16 %v1600
    %v4851 = vunpack.c.h.b16 %v1600
    %v4852 = vunpack.c.l.b16 %v1601
    %v4853 = vunpack.c.h.b16 %v1601
    %v4854 = vunpack.c.l.b16 %v1602
    %v4855 = vunpack.c.h.b16 %v1602
    %v4856 = vunpack.c.l.b16 %v1603
    %v4857 = vunpack.c.h.b16 %v1603
    %v4858 = vunpack.c.l.b16 %v1604
    %v4859 = vunpack.c.h.b16 %v1604
    %v4860 = vunpack.c.l.b16 %v1605
    %v4861 = vunpack.c.h.b16 %v1605
    %v4862 = vunpack.c.l.b16 %v1606
    %v4863 = vunpack.c.h.b16 %v1606
    %v4864 = vunpack.c.l.b16 %v1607
    %v4865 = vunpack.c.h.b16 %v1607
    %v4866 = vunpack.c.l.b16 %v1608
    %v4867 = vunpack.c.h.b16 %v1608
    %v4868 = vunpack.c.l.b16 %v1609
    %v4869 = vunpack.c.h.b16 %v1609
    %v4870 = vunpack.c.l.b16 %v1610
    %v4871 = vunpack.c.h.b16 %v1610
    %v4872 = vunpack.c.l.b16 %v1611
    %v4873 = vunpack.c.h.b16 %v1611
    %v4874 = vunpack.c.l.b16 %v1612
    %v4875 = vunpack.c.h.b16 %v1612
    %v4876 = vunpack.c.l.b16 %v1613
    %v4877 = vunpack.c.h.b16 %v1613
    %v4878 = vunpack.c.l.b16 %v1614
    %v4879 = vunpack.c.h.b16 %v1614
    %v4880 = vunpack.c.l.b16 %v1615
    %v4881 = vunpack.c.h.b16 %v1615
    %v4882 = vunpack.c.l.b16 %v1616
    %v4883 = vunpack.c.h.b16 %v1616
    %v4884 = vunpack.c.l.b16 %v1617
    %v4885 = vunpack.c.h.b16 %v1617
    %v4886 = vunpack.c.l.b16 %v1618
    %v4887 = vunpack.c.h.b16 %v1618
    %v4888 = vunpack.c.l.b16 %v1619
    %v4889 = vunpack.c.h.b16 %v1619
    %v4890 = vunpack.c.l.b16 %v1620
    %v4891 = vunpack.c.h.b16 %v1620
    %v4892 = vunpack.c.l.b16 %v1621
    %v4893 = vunpack.c.h.b16 %v1621
    %v4894 = vunpack.c.l.b16 %v1622
    %v4895 = vunpack.c.h.b16 %v1622
    %v4896 = vunpack.c.l.b16 %v1623
    %v4897 = vunpack.c.h.b16 %v1623
    %v4898 = vunpack.c.l.b16 %v1624
    %v4899 = vunpack.c.h.b16 %v1624
    %v4900 = vunpack.c.l.b16 %v1625
    %v4901 = vunpack.c.h.b16 %v1625
    %v4902 = vunpack.c.l.b16 %v1626
    %v4903 = vunpack.c.h.b16 %v1626
    %v4904 = vunpack.c.l.b16 %v1627
    %v4905 = vunpack.c.h.b16 %v1627
    %v4906 = vunpack.c.l.b16 %v1628
    %v4907 = vunpack.c.h.b16 %v1628
    %v4908 = vunpack.c.l.b16 %v1629
    %v4909 = vunpack.c.h.b16 %v1629
    %v4910 = vunpack.c.l.b16 %v1630
    %v4911 = vunpack.c.h.b16 %v1630
    %v4912 = vunpack.c.l.b16 %v1631
    %v4913 = vunpack.c.h.b16 %v1631
    %v4914 = vunpack.c.l.b16 %v1632
    %v4915 = vunpack.c.h.b16 %v1632
    %v4916 = vunpack.c.l.b16 %v1633
    %v4917 = vunpack.c.h.b16 %v1633
    %v4918 = vunpack.c.l.b16 %v1634
    %v4919 = vunpack.c.h.b16 %v1634
    %v4920 = vunpack.c.l.b16 %v1635
    %v4921 = vunpack.c.h.b16 %v1635
    %v4922 = vunpack.c.l.b16 %v1636
    %v4923 = vunpack.c.h.b16 %v1636
    %v4924 = vunpack.c.l.b16 %v1637
    %v4925 = vunpack.c.h.b16 %v1637
    %v4926 = vunpack.c.l.b16 %v1638
    %v4927 = vunpack.c.h.b16 %v1638
    %v4928 = vunpack.c.l.b16 %v1639
    %v4929 = vunpack.c.h.b16 %v1639
    %v4930 = vunpack.c.l.b16 %v1640
    %v4931 = vunpack.c.h.b16 %v1640
    %v4932 = vunpack.c.l.b16 %v1641
    %v4933 = vunpack.c.h.b16 %v1641
    %v4934 = vunpack.c.l.b16 %v1642
    %v4935 = vunpack.c.h.b16 %v1642
    %v4936 = vunpack.c.l.b16 %v1643
    %v4937 = vunpack.c.h.b16 %v1643
    %v4938 = vunpack.c.l.b16 %v1644
    %v4939 = vunpack.c.h.b16 %v1644
    %v4940 = vunpack.c.l.b16 %v1645
    %v4941 = vunpack.c.h.b16 %v1645
    %v4942 = vunpack.c.l.b16 %v1646
    %v4943 = vunpack.c.h.b16 %v1646
    %v4944 = vunpack.c.l.b16 %v1647
    %v4945 = vunpack.c.h.b16 %v1647
    %v4946 = vunpack.c.l.b16 %v1648
    %v4947 = vunpack.c.h.b16 %v1648
    %v4948 = vunpack.c.l.b16 %v1649
    %v4949 = vunpack.c.h.b16 %v1649
    %v4950 = vunpack.c.l.b16 %v1650
    %v4951 = vunpack.c.h.b16 %v1650
    %v4952 = vunpack.c.l.b16 %v1651
    %v4953 = vunpack.c.h.b16 %v1651
    %v4954 = vunpack.c.l.b16 %v1652
    %v4955 = vunpack.c.h.b16 %v1652
    %v4956 = vunpack.c.l.b16 %v1653
    %v4957 = vunpack.c.h.b16 %v1653
    %v4958 = vunpack.c.l.b16 %v1654
    %v4959 = vunpack.c.h.b16 %v1654
    %v4960 = vunpack.c.l.b16 %v1655
    %v4961 = vunpack.c.h.b16 %v1655
    %v4962 = vunpack.c.l.b16 %v1656
    %v4963 = vunpack.c.h.b16 %v1656
    %v4964 = vunpack.c.l.b16 %v1657
    %v4965 = vunpack.c.h.b16 %v1657
    %v4966 = vunpack.c.l.b16 %v1658
    %v4967 = vunpack.c.h.b16 %v1658
    %v4968 = vunpack.c.l.b16 %v1659
    %v4969 = vunpack.c.h.b16 %v1659
    %v4970 = vunpack.c.l.b16 %v1660
    %v4971 = vunpack.c.h.b16 %v1660
    %v4972 = vunpack.c.l.b16 %v1661
    %v4973 = vunpack.c.h.b16 %v1661
    %v4974 = vunpack.c.l.b16 %v1662
    %v4975 = vunpack.c.h.b16 %v1662
    %v4976 = vunpack.c.l.b16 %v1663
    %v4977 = vunpack.c.h.b16 %v1663
    %v4978 = vunpack.c.l.b16 %v1664
    %v4979 = vunpack.c.h.b16 %v1664
    %v4980 = vunpack.c.l.b16 %v1665
    %v4981 = vunpack.c.h.b16 %v1665
    %v4982 = vunpack.c.l.b16 %v1666
    %v4983 = vunpack.c.h.b16 %v1666
    %v4984 = vunpack.c.l.b16 %v1667
    %v4985 = vunpack.c.h.b16 %v1667
    %v4986 = vunpack.c.l.b16 %v1668
    %v4987 = vunpack.c.h.b16 %v1668
    %v4988 = vunpack.c.l.b16 %v1669
    %v4989 = vunpack.c.h.b16 %v1669
    %v4990 = vunpack.c.l.b16 %v1670
    %v4991 = vunpack.c.h.b16 %v1670
    %v4992 = vunpack.c.l.b16 %v1671
    %v4993 = vunpack.c.h.b16 %v1671
    %v4994 = vunpack.c.l.b16 %v1672
    %v4995 = vunpack.c.h.b16 %v1672
    %v4996 = vunpack.c.l.b16 %v1673
    %v4997 = vunpack.c.h.b16 %v1673
    %v4998 = vunpack.c.l.b16 %v1674
    %v4999 = vunpack.c.h.b16 %v1674
    %v5000 = vunpack.c.l.b16 %v1675
    %v5001 = vunpack.c.h.b16 %v1675
    %v5002 = vunpack.c.l.b16 %v1676
    %v5003 = vunpack.c.h.b16 %v1676
    %v5004 = vunpack.c.l.b16 %v1677
    %v5005 = vunpack.c.h.b16 %v1677
    %v5006 = vunpack.c.l.b16 %v1678
    %v5007 = vunpack.c.h.b16 %v1678
    %v5008 = vunpack.c.l.b16 %v1679
    %v5009 = vunpack.c.h.b16 %v1679
    %v5010 = vunpack.c.l.b16 %v1680
    %v5011 = vunpack.c.h.b16 %v1680
    %v5012 = vunpack.c.l.b16 %v1681
    %v5013 = vunpack.c.h.b16 %v1681
    %v5014 = vunpack.c.l.b16 %v1682
    %v5015 = vunpack.c.h.b16 %v1682
    %v5016 = vunpack.c.l.b16 %v1683
    %v5017 = vunpack.c.h.b16 %v1683
    %v5018 = vunpack.c.l.b16 %v1684
    %v5019 = vunpack.c.h.b16 %v1684
    %v5020 = vunpack.c.l.b16 %v1685
    %v5021 = vunpack.c.h.b16 %v1685
    %v5022 = vunpack.c.l.b16 %v1686
    %v5023 = vunpack.c.h.b16 %v1686
    %v5024 = vunpack.c.l.b16 %v1687
    %v5025 = vunpack.c.h.b16 %v1687
    %v5026 = vunpack.c.l.b16 %v1688
    %v5027 = vunpack.c.h.b16 %v1688
    %v5028 = vunpack.c.l.b16 %v1689
    %v5029 = vunpack.c.h.b16 %v1689
    %v5030 = vunpack.c.l.b16 %v1690
    %v5031 = vunpack.c.h.b16 %v1690
    %v5032 = vunpack.c.l.b16 %v1691
    %v5033 = vunpack.c.h.b16 %v1691
    %v5034 = vunpack.c.l.b16 %v1692
    %v5035 = vunpack.c.h.b16 %v1692
    %v5036 = vunpack.c.l.b16 %v1693
    %v5037 = vunpack.c.h.b16 %v1693
    %v5038 = vunpack.c.l.b16 %v1694
    %v5039 = vunpack.c.h.b16 %v1694
    %v5040 = vunpack.c.l.b16 %v1695
    %v5041 = vunpack.c.h.b16 %v1695
    %v5042 = vunpack.c.l.b16 %v1696
    %v5043 = vunpack.c.h.b16 %v1696
    %v5044 = vunpack.c.l.b16 %v1697
    %v5045 = vunpack.c.h.b16 %v1697
    %v5046 = vunpack.c.l.b16 %v1698
    %v5047 = vunpack.c.h.b16 %v1698
    %v5048 = vunpack.c.l.b16 %v1699
    %v5049 = vunpack.c.h.b16 %v1699
    %v5050 = vunpack.c.l.b16 %v1700
    %v5051 = vunpack.c.h.b16 %v1700
    %v5052 = vunpack.c.l.b16 %v1701
    %v5053 = vunpack.c.h.b16 %v1701
    %v5054 = vunpack.c.l.b16 %v1702
    %v5055 = vunpack.c.h.b16 %v1702
    %v5056 = vunpack.c.l.b16 %v1703
    %v5057 = vunpack.c.h.b16 %v1703
    %v5058 = vunpack.c.l.b16 %v1704
    %v5059 = vunpack.c.h.b16 %v1704
    %v5060 = vunpack.c.l.b16 %v1705
    %v5061 = vunpack.c.h.b16 %v1705
    %v5062 = vunpack.c.l.b16 %v1706
    %v5063 = vunpack.c.h.b16 %v1706
    %v5064 = vunpack.c.l.b16 %v1707
    %v5065 = vunpack.c.h.b16 %v1707
    %v5066 = vunpack.c.l.b16 %v1708
    %v5067 = vunpack.c.h.b16 %v1708
    %v5068 = vunpack.c.l.b16 %v1709
    %v5069 = vunpack.c.h.b16 %v1709
    %v5070 = vunpack.c.l.b16 %v1710
    %v5071 = vunpack.c.h.b16 %v1710
    %v5072 = vunpack.c.l.b16 %v1711
    %v5073 = vunpack.c.h.b16 %v1711
    %v5074 = vunpack.c.l.b16 %v1712
    %v5075 = vunpack.c.h.b16 %v1712
    %v5076 = vunpack.c.l.b16 %v1713
    %v5077 = vunpack.c.h.b16 %v1713
    %v5078 = vunpack.c.l.b16 %v1714
    %v5079 = vunpack.c.h.b16 %v1714
    %v5080 = vunpack.c.l.b16 %v1715
    %v5081 = vunpack.c.h.b16 %v1715
    %v5082 = vunpack.c.l.b16 %v1716
    %v5083 = vunpack.c.h.b16 %v1716
    %v5084 = vunpack.c.l.b16 %v1717
    %v5085 = vunpack.c.h.b16 %v1717
    %v5086 = vunpack.c.l.b16 %v1718
    %v5087 = vunpack.c.h.b16 %v1718
    %v5088 = vunpack.c.l.b16 %v1719
    %v5089 = vunpack.c.h.b16 %v1719
    %v5090 = vunpack.c.l.b16 %v1720
    %v5091 = vunpack.c.h.b16 %v1720
    %v5092 = vunpack.c.l.b16 %v1721
    %v5093 = vunpack.c.h.b16 %v1721
    %v5094 = vunpack.c.l.b16 %v1722
    %v5095 = vunpack.c.h.b16 %v1722
    %v5096 = vunpack.c.l.b16 %v1723
    %v5097 = vunpack.c.h.b16 %v1723
    %v5098 = vunpack.c.l.b16 %v1724
    %v5099 = vunpack.c.h.b16 %v1724
    %v5100 = vunpack.c.l.b16 %v1725
    %v5101 = vunpack.c.h.b16 %v1725
    %v5102 = vunpack.c.l.b16 %v1726
    %v5103 = vunpack.c.h.b16 %v1726
    %v5104 = vunpack.c.l.b16 %v1727
    %v5105 = vunpack.c.h.b16 %v1727
    %v5106 = vunpack.c.l.b16 %v1728
    %v5107 = vunpack.c.h.b16 %v1728
    %v5108 = vunpack.c.l.b16 %v1729
    %v5109 = vunpack.c.h.b16 %v1729
    %v5110 = vunpack.c.l.b16 %v1730
    %v5111 = vunpack.c.h.b16 %v1730
    %v5112 = vunpack.c.l.b16 %v1731
    %v5113 = vunpack.c.h.b16 %v1731
    %v5114 = vunpack.c.l.b16 %v1732
    %v5115 = vunpack.c.h.b16 %v1732
    %v5116 = vunpack.c.l.b16 %v1733
    %v5117 = vunpack.c.h.b16 %v1733
    %v5118 = vunpack.c.l.b16 %v1734
    %v5119 = vunpack.c.h.b16 %v1734
    %v5120 = vunpack.c.l.b16 %v1735
    %v5121 = vunpack.c.h.b16 %v1735
    %v5122 = vunpack.c.l.b16 %v1736
    %v5123 = vunpack.c.h.b16 %v1736
    %v5124 = vunpack.c.l.b16 %v1737
    %v5125 = vunpack.c.h.b16 %v1737
    %v5126 = vunpack.c.l.b16 %v1738
    %v5127 = vunpack.c.h.b16 %v1738
    %v5128 = vunpack.c.l.b16 %v1739
    %v5129 = vunpack.c.h.b16 %v1739
    %v5130 = vunpack.c.l.b16 %v1740
    %v5131 = vunpack.c.h.b16 %v1740
    %v5132 = vunpack.c.l.b16 %v1741
    %v5133 = vunpack.c.h.b16 %v1741
    %v5134 = vunpack.c.l.b16 %v1742
    %v5135 = vunpack.c.h.b16 %v1742
    %v5136 = vunpack.c.l.b16 %v1743
    %v5137 = vunpack.c.h.b16 %v1743
    %v5138 = vunpack.c.l.b16 %v1744
    %v5139 = vunpack.c.h.b16 %v1744
    %v5140 = vunpack.c.l.b16 %v1745
    %v5141 = vunpack.c.h.b16 %v1745
    %v5142 = vunpack.c.l.b16 %v1746
    %v5143 = vunpack.c.h.b16 %v1746
    %v5144 = vunpack.c.l.b16 %v1747
    %v5145 = vunpack.c.h.b16 %v1747
    %v5146 = vunpack.c.l.b16 %v1748
    %v5147 = vunpack.c.h.b16 %v1748
    %v5148 = vunpack.c.l.b16 %v1749
    %v5149 = vunpack.c.h.b16 %v1749
    %v5150 = vunpack.c.l.b16 %v1750
    %v5151 = vunpack.c.h.b16 %v1750
    %v5152 = vunpack.c.l.b16 %v1751
    %v5153 = vunpack.c.h.b16 %v1751
    %v5154 = vunpack.c.l.b16 %v1752
    %v5155 = vunpack.c.h.b16 %v1752
    %v5156 = vunpack.c.l.b16 %v1753
    %v5157 = vunpack.c.h.b16 %v1753
    %v5158 = vunpack.c.l.b16 %v1754
    %v5159 = vunpack.c.h.b16 %v1754
    %v5160 = vunpack.c.l.b16 %v1755
    %v5161 = vunpack.c.h.b16 %v1755
    %v5162 = vunpack.c.l.b16 %v1756
    %v5163 = vunpack.c.h.b16 %v1756
    %v5164 = vunpack.c.l.b16 %v1757
    %v5165 = vunpack.c.h.b16 %v1757
    %v5166 = vunpack.c.l.b16 %v1758
    %v5167 = vunpack.c.h.b16 %v1758
    %v5168 = vunpack.c.l.b16 %v1759
    %v5169 = vunpack.c.h.b16 %v1759
    %v5170 = vunpack.c.l.b16 %v1760
    %v5171 = vunpack.c.h.b16 %v1760
    %v5172 = vunpack.c.l.b16 %v1761
    %v5173 = vunpack.c.h.b16 %v1761
    %v5174 = vunpack.c.l.b16 %v1762
    %v5175 = vunpack.c.h.b16 %v1762
    %v5176 = vunpack.c.l.b16 %v1763
    %v5177 = vunpack.c.h.b16 %v1763
    %v5178 = vunpack.c.l.b16 %v1764
    %v5179 = vunpack.c.h.b16 %v1764
    %v5180 = vunpack.c.l.b16 %v1765
    %v5181 = vunpack.c.h.b16 %v1765
    %v5182 = vunpack.c.l.b16 %v1766
    %v5183 = vunpack.c.h.b16 %v1766
    %v5184 = vunpack.c.l.b16 %v1767
    %v5185 = vunpack.c.h.b16 %v1767
    %v5186 = vunpack.c.l.b16 %v1768
    %v5187 = vunpack.c.h.b16 %v1768
    %v5188 = vunpack.c.l.b16 %v1769
    %v5189 = vunpack.c.h.b16 %v1769
    %v5190 = vunpack.c.l.b16 %v1770
    %v5191 = vunpack.c.h.b16 %v1770
    %v5192 = vunpack.c.l.b16 %v1771
    %v5193 = vunpack.c.h.b16 %v1771
    %v5194 = vunpack.c.l.b16 %v1772
    %v5195 = vunpack.c.h.b16 %v1772
    %v5196 = vunpack.c.l.b16 %v1773
    %v5197 = vunpack.c.h.b16 %v1773
    %v5198 = vunpack.c.l.b16 %v1774
    %v5199 = vunpack.c.h.b16 %v1774
    %v5200 = vunpack.c.l.b16 %v1775
    %v5201 = vunpack.c.h.b16 %v1775
    %v5202 = vunpack.c.l.b16 %v1776
    %v5203 = vunpack.c.h.b16 %v1776
    %v5204 = vunpack.c.l.b16 %v1777
    %v5205 = vunpack.c.h.b16 %v1777
    %v5206 = vunpack.c.l.b16 %v1778
    %v5207 = vunpack.c.h.b16 %v1778
    %v5208 = vunpack.c.l.b16 %v1779
    %v5209 = vunpack.c.h.b16 %v1779
    %v5210 = vunpack.c.l.b16 %v1780
    %v5211 = vunpack.c.h.b16 %v1780
    %v5212 = vunpack.c.l.b16 %v1781
    %v5213 = vunpack.c.h.b16 %v1781
    %v5214 = vunpack.c.l.b16 %v1782
    %v5215 = vunpack.c.h.b16 %v1782
    %v5216 = vunpack.c.l.b16 %v1783
    %v5217 = vunpack.c.h.b16 %v1783
    %v5218 = vunpack.c.l.b16 %v1784
    %v5219 = vunpack.c.h.b16 %v1784
    %v5220 = vunpack.c.l.b16 %v1785
    %v5221 = vunpack.c.h.b16 %v1785
    %v5222 = vunpack.c.l.b16 %v1786
    %v5223 = vunpack.c.h.b16 %v1786
    %v5224 = vunpack.c.l.b16 %v1787
    %v5225 = vunpack.c.h.b16 %v1787
    %v5226 = vunpack.c.l.b16 %v1788
    %v5227 = vunpack.c.h.b16 %v1788
    %v5228 = vunpack.c.l.b16 %v1789
    %v5229 = vunpack.c.h.b16 %v1789
    %v5230 = vunpack.c.l.b16 %v1790
    %v5231 = vunpack.c.h.b16 %v1790
    %v5232 = vunpack.c.l.b16 %v1791
    %v5233 = vunpack.c.h.b16 %v1791
    %v5234 = vunpack.c.l.b16 %v1792
    %v5235 = vunpack.c.h.b16 %v1792
    %v5236 = vunpack.c.l.b16 %v1793
    %v5237 = vunpack.c.h.b16 %v1793
    %v5238 = vunpack.c.l.b16 %v1794
    %v5239 = vunpack.c.h.b16 %v1794
    %v5240 = vunpack.c.l.b16 %v1795
    %v5241 = vunpack.c.h.b16 %v1795
    %v5242 = vunpack.c.l.b16 %v1796
    %v5243 = vunpack.c.h.b16 %v1796
    %v5244 = vunpack.c.l.b16 %v1797
    %v5245 = vunpack.c.h.b16 %v1797
    %v5246 = vunpack.c.l.b16 %v1798
    %v5247 = vunpack.c.h.b16 %v1798
    %v5248 = vunpack.c.l.b16 %v1799
    %v5249 = vunpack.c.h.b16 %v1799
    %v5250 = vunpack.c.l.b16 %v1800
    %v5251 = vunpack.c.h.b16 %v1800
    %v5252 = vunpack.c.l.b16 %v1801
    %v5253 = vunpack.c.h.b16 %v1801
    %v5254 = vunpack.c.l.b16 %v1802
    %v5255 = vunpack.c.h.b16 %v1802
    %v5256 = vunpack.c.l.b16 %v1803
    %v5257 = vunpack.c.h.b16 %v1803
    %v5258 = vunpack.c.l.b16 %v1804
    %v5259 = vunpack.c.h.b16 %v1804
    %v5260 = vunpack.c.l.b16 %v1805
    %v5261 = vunpack.c.h.b16 %v1805
    %v5262 = vunpack.c.l.b16 %v1806
    %v5263 = vunpack.c.h.b16 %v1806
    %v5264 = vunpack.c.l.b16 %v1807
    %v5265 = vunpack.c.h.b16 %v1807
    %v5266 = vunpack.c.l.b16 %v1808
    %v5267 = vunpack.c.h.b16 %v1808
    %v5268 = vunpack.c.l.b16 %v1809
    %v5269 = vunpack.c.h.b16 %v1809
    %v5270 = vunpack.c.l.b16 %v1810
    %v5271 = vunpack.c.h.b16 %v1810
    %v5272 = vunpack.c.l.b16 %v1811
    %v5273 = vunpack.c.h.b16 %v1811
    %v5274 = vunpack.c.l.b16 %v1812
    %v5275 = vunpack.c.h.b16 %v1812
    %v5276 = vunpack.c.l.b16 %v1813
    %v5277 = vunpack.c.h.b16 %v1813
    %v5278 = vunpack.c.l.b16 %v1814
    %v5279 = vunpack.c.h.b16 %v1814
    %v5280 = vunpack.c.l.b16 %v1815
    %v5281 = vunpack.c.h.b16 %v1815
    %v5282 = vunpack.c.l.b16 %v1816
    %v5283 = vunpack.c.h.b16 %v1816
    %v5284 = vunpack.c.l.b16 %v1817
    %v5285 = vunpack.c.h.b16 %v1817
    %v5286 = vunpack.c.l.b16 %v1818
    %v5287 = vunpack.c.h.b16 %v1818
    %v5288 = vunpack.c.l.b16 %v1819
    %v5289 = vunpack.c.h.b16 %v1819
    %v5290 = vunpack.c.l.b16 %v1820
    %v5291 = vunpack.c.h.b16 %v1820
    %v5292 = vunpack.c.l.b16 %v1821
    %v5293 = vunpack.c.h.b16 %v1821
    %v5294 = vunpack.c.l.b16 %v1822
    %v5295 = vunpack.c.h.b16 %v1822
    %v5296 = vunpack.c.l.b16 %v1823
    %v5297 = vunpack.c.h.b16 %v1823
    %v5298 = vunpack.c.l.b16 %v1824
    %v5299 = vunpack.c.h.b16 %v1824
    %v5300 = vunpack.c.l.b16 %v1825
    %v5301 = vunpack.c.h.b16 %v1825
    %v5302 = vunpack.c.l.b16 %v1826
    %v5303 = vunpack.c.h.b16 %v1826
    %v5304 = vunpack.c.l.b16 %v1827
    %v5305 = vunpack.c.h.b16 %v1827
    %v5306 = vunpack.c.l.b16 %v1828
    %v5307 = vunpack.c.h.b16 %v1828
    %v5308 = vunpack.c.l.b16 %v1829
    %v5309 = vunpack.c.h.b16 %v1829
    %v5310 = vunpack.c.l.b16 %v1830
    %v5311 = vunpack.c.h.b16 %v1830
    %v5312 = vunpack.c.l.b16 %v1831
    %v5313 = vunpack.c.h.b16 %v1831
    %v5314 = vunpack.c.l.b16 %v1832
    %v5315 = vunpack.c.h.b16 %v1832
    %v5316 = vunpack.c.l.b16 %v1833
    %v5317 = vunpack.c.h.b16 %v1833
    %v5318 = vunpack.c.l.b16 %v1834
    %v5319 = vunpack.c.h.b16 %v1834
    %v5320 = vunpack.c.l.b16 %v1835
    %v5321 = vunpack.c.h.b16 %v1835
    %v5322 = vunpack.c.l.b16 %v1836
    %v5323 = vunpack.c.h.b16 %v1836
    %v5324 = vunpack.c.l.b16 %v1837
    %v5325 = vunpack.c.h.b16 %v1837
    %v5326 = vunpack.c.l.b16 %v1838
    %v5327 = vunpack.c.h.b16 %v1838
    %v5328 = vunpack.c.l.b16 %v1839
    %v5329 = vunpack.c.h.b16 %v1839
    %v5330 = vunpack.c.l.b16 %v1840
    %v5331 = vunpack.c.h.b16 %v1840
    %v5332 = vunpack.c.l.b16 %v1841
    %v5333 = vunpack.c.h.b16 %v1841
    %v5334 = vunpack.c.l.b16 %v1842
    %v5335 = vunpack.c.h.b16 %v1842
    %v5336 = vunpack.c.l.b16 %v1843
    %v5337 = vunpack.c.h.b16 %v1843
    %v5338 = vunpack.c.l.b16 %v1844
    %v5339 = vunpack.c.h.b16 %v1844
    %v5340 = vunpack.c.l.b16 %v1845
    %v5341 = vunpack.c.h.b16 %v1845
    %v5342 = vunpack.c.l.b16 %v1846
    %v5343 = vunpack.c.h.b16 %v1846
    %v5344 = vunpack.c.l.b16 %v1847
    %v5345 = vunpack.c.h.b16 %v1847
    %v5346 = vunpack.c.l.b16 %v1848
    %v5347 = vunpack.c.h.b16 %v1848
    %v5348 = vunpack.c.l.b16 %v1849
    %v5349 = vunpack.c.h.b16 %v1849
    %v5350 = vunpack.c.l.b16 %v1850
    %v5351 = vunpack.c.h.b16 %v1850
    %v5352 = vunpack.c.l.b16 %v1851
    %v5353 = vunpack.c.h.b16 %v1851
    %v5354 = vunpack.c.l.b16 %v1852
    %v5355 = vunpack.c.h.b16 %v1852
    %v5356 = vunpack.c.l.b16 %v1853
    %v5357 = vunpack.c.h.b16 %v1853
    %v5358 = vunpack.c.l.b16 %v1854
    %v5359 = vunpack.c.h.b16 %v1854
    %v5360 = vunpack.c.l.b16 %v1855
    %v5361 = vunpack.c.h.b16 %v1855
    %v5362 = vunpack.c.l.b16 %v1856
    %v5363 = vunpack.c.h.b16 %v1856
    %v5364 = vunpack.c.l.b16 %v1857
    %v5365 = vunpack.c.h.b16 %v1857
    %v5366 = vunpack.c.l.b16 %v1858
    %v5367 = vunpack.c.h.b16 %v1858
    %v5368 = vunpack.c.l.b16 %v1859
    %v5369 = vunpack.c.h.b16 %v1859
    %v5370 = vunpack.c.l.b16 %v1860
    %v5371 = vunpack.c.h.b16 %v1860
    %v5372 = vunpack.c.l.b16 %v1861
    %v5373 = vunpack.c.h.b16 %v1861
    %v5374 = vunpack.c.l.b16 %v1862
    %v5375 = vunpack.c.h.b16 %v1862
    %v5376 = vunpack.c.l.b16 %v1863
    %v5377 = vunpack.c.h.b16 %v1863
    %v5378 = vunpack.c.l.b16 %v1864
    %v5379 = vunpack.c.h.b16 %v1864
    %v5380 = vunpack.c.l.b16 %v1865
    %v5381 = vunpack.c.h.b16 %v1865
    %v5382 = vunpack.c.l.b16 %v1866
    %v5383 = vunpack.c.h.b16 %v1866
    %v5384 = vunpack.c.l.b16 %v1867
    %v5385 = vunpack.c.h.b16 %v1867
    %v5386 = vunpack.c.l.b16 %v1868
    %v5387 = vunpack.c.h.b16 %v1868
    %v5388 = vunpack.c.l.b16 %v1869
    %v5389 = vunpack.c.h.b16 %v1869
    %v5390 = vunpack.c.l.b16 %v1870
    %v5391 = vunpack.c.h.b16 %v1870
    %v5392 = vunpack.c.l.b16 %v1871
    %v5393 = vunpack.c.h.b16 %v1871
    %v5394 = vunpack.c.l.b16 %v1872
    %v5395 = vunpack.c.h.b16 %v1872
    %v5396 = vunpack.c.l.b16 %v1873
    %v5397 = vunpack.c.h.b16 %v1873
    %v5398 = vunpack.c.l.b16 %v1874
    %v5399 = vunpack.c.h.b16 %v1874
    %v5400 = vunpack.c.l.b16 %v1875
    %v5401 = vunpack.c.h.b16 %v1875
    %v5402 = vunpack.c.l.b16 %v1876
    %v5403 = vunpack.c.h.b16 %v1876
    %v5404 = vunpack.c.l.b16 %v1877
    %v5405 = vunpack.c.h.b16 %v1877
    %v5406 = vunpack.c.l.b16 %v1878
    %v5407 = vunpack.c.h.b16 %v1878
    %v5408 = vunpack.c.l.b16 %v1879
    %v5409 = vunpack.c.h.b16 %v1879
    %v5410 = vunpack.c.l.b16 %v1880
    %v5411 = vunpack.c.h.b16 %v1880
    %v5412 = vunpack.c.l.b16 %v1881
    %v5413 = vunpack.c.h.b16 %v1881
    %v5414 = vunpack.c.l.b16 %v1882
    %v5415 = vunpack.c.h.b16 %v1882
    %v5416 = vunpack.c.l.b16 %v1883
    %v5417 = vunpack.c.h.b16 %v1883
    %v5418 = vunpack.c.l.b16 %v1884
    %v5419 = vunpack.c.h.b16 %v1884
    %v5420 = vunpack.c.l.b16 %v1885
    %v5421 = vunpack.c.h.b16 %v1885
    %v5422 = vunpack.c.l.b16 %v1886
    %v5423 = vunpack.c.h.b16 %v1886
    %v5424 = vunpack.c.l.b16 %v1887
    %v5425 = vunpack.c.h.b16 %v1887
    %v5426 = vunpack.c.l.b16 %v1888
    %v5427 = vunpack.c.h.b16 %v1888
    %v5428 = vunpack.c.l.b16 %v1889
    %v5429 = vunpack.c.h.b16 %v1889
    %v5430 = vunpack.c.l.b16 %v1890
    %v5431 = vunpack.c.h.b16 %v1890
    %v5432 = vunpack.c.l.b16 %v1891
    %v5433 = vunpack.c.h.b16 %v1891
    %v5434 = vunpack.c.l.b16 %v1892
    %v5435 = vunpack.c.h.b16 %v1892
    %v5436 = vunpack.c.l.b16 %v1893
    %v5437 = vunpack.c.h.b16 %v1893
    %v5438 = vunpack.c.l.b16 %v1894
    %v5439 = vunpack.c.h.b16 %v1894
    %v5440 = vunpack.c.l.b16 %v1895
    %v5441 = vunpack.c.h.b16 %v1895
    %v5442 = vunpack.c.l.b16 %v1896
    %v5443 = vunpack.c.h.b16 %v1896
    %v5444 = vunpack.c.l.b16 %v1897
    %v5445 = vunpack.c.h.b16 %v1897
    %v5446 = vunpack.c.l.b16 %v1898
    %v5447 = vunpack.c.h.b16 %v1898
    %v5448 = vunpack.c.l.b16 %v1899
    %v5449 = vunpack.c.h.b16 %v1899
    %v5450 = vunpack.c.l.b16 %v1900
    %v5451 = vunpack.c.h.b16 %v1900
    %v5452 = vunpack.c.l.b16 %v1901
    %v5453 = vunpack.c.h.b16 %v1901
    %v5454 = vunpack.c.l.b16 %v1902
    %v5455 = vunpack.c.h.b16 %v1902
    %v5456 = vunpack.c.l.b16 %v1903
    %v5457 = vunpack.c.h.b16 %v1903
    %v5458 = vunpack.c.l.b16 %v1904
    %v5459 = vunpack.c.h.b16 %v1904
    %v5460 = vunpack.c.l.b16 %v1905
    %v5461 = vunpack.c.h.b16 %v1905
    %v5462 = vunpack.c.l.b16 %v1906
    %v5463 = vunpack.c.h.b16 %v1906
    %v5464 = vunpack.c.l.b16 %v1907
    %v5465 = vunpack.c.h.b16 %v1907
    %v5466 = vunpack.c.l.b16 %v1908
    %v5467 = vunpack.c.h.b16 %v1908
    %v5468 = vunpack.c.l.b16 %v1909
    %v5469 = vunpack.c.h.b16 %v1909
    %v5470 = vunpack.c.l.b16 %v1910
    %v5471 = vunpack.c.h.b16 %v1910
    %v5472 = vunpack.c.l.b16 %v1911
    %v5473 = vunpack.c.h.b16 %v1911
    %v5474 = vunpack.c.l.b16 %v1912
    %v5475 = vunpack.c.h.b16 %v1912
    %v5476 = vunpack.c.l.b16 %v1913
    %v5477 = vunpack.c.h.b16 %v1913
    %v5478 = vunpack.c.l.b16 %v1914
    %v5479 = vunpack.c.h.b16 %v1914
    %v5480 = vunpack.c.l.b16 %v1915
    %v5481 = vunpack.c.h.b16 %v1915
    %v5482 = vunpack.c.l.b16 %v1916
    %v5483 = vunpack.c.h.b16 %v1916
    %v5484 = vunpack.c.l.b16 %v1917
    %v5485 = vunpack.c.h.b16 %v1917
    %v5486 = vunpack.c.l.b16 %v1918
    %v5487 = vunpack.c.h.b16 %v1918
    %v5488 = vunpack.c.l.b16 %v1919
    %v5489 = vunpack.c.h.b16 %v1919
    %v5490 = vunpack.c.l.b16 %v1920
    %v5491 = vunpack.c.h.b16 %v1920
    %v5492 = vunpack.c.l.b16 %v1921
    %v5493 = vunpack.c.h.b16 %v1921
    %v5494 = vunpack.c.l.b16 %v1922
    %v5495 = vunpack.c.h.b16 %v1922
    %v5496 = vunpack.c.l.b16 %v1923
    %v5497 = vunpack.c.h.b16 %v1923
    %v5498 = vunpack.c.l.b16 %v1924
    %v5499 = vunpack.c.h.b16 %v1924
    %v5500 = vunpack.c.l.b16 %v1925
    %v5501 = vunpack.c.h.b16 %v1925
    %v5502 = vunpack.c.l.b16 %v1926
    %v5503 = vunpack.c.h.b16 %v1926
    %v5504 = vunpack.c.l.b16 %v1927
    %v5505 = vunpack.c.h.b16 %v1927
    %v5506 = vunpack.c.l.b16 %v1928
    %v5507 = vunpack.c.h.b16 %v1928
    %v5508 = vunpack.c.l.b16 %v1929
    %v5509 = vunpack.c.h.b16 %v1929
    %v5510 = vunpack.c.l.b16 %v1930
    %v5511 = vunpack.c.h.b16 %v1930
    %v5512 = vunpack.c.l.b16 %v1931
    %v5513 = vunpack.c.h.b16 %v1931
    %v5514 = vunpack.c.l.b16 %v1932
    %v5515 = vunpack.c.h.b16 %v1932
    %v5516 = vunpack.c.l.b16 %v1933
    %v5517 = vunpack.c.h.b16 %v1933
    %v5518 = vunpack.c.l.b16 %v1934
    %v5519 = vunpack.c.h.b16 %v1934
    %v5520 = vunpack.c.l.b16 %v1935
    %v5521 = vunpack.c.h.b16 %v1935
    %v5522 = vunpack.c.l.b16 %v1936
    %v5523 = vunpack.c.h.b16 %v1936
    %v5524 = vunpack.c.l.b16 %v1937
    %v5525 = vunpack.c.h.b16 %v1937
    %v5526 = vunpack.c.l.b16 %v1938
    %v5527 = vunpack.c.h.b16 %v1938
    %v5528 = vunpack.c.l.b16 %v1939
    %v5529 = vunpack.c.h.b16 %v1939
    %v5530 = vunpack.c.l.b16 %v1940
    %v5531 = vunpack.c.h.b16 %v1940
    %v5532 = vunpack.c.l.b16 %v1941
    %v5533 = vunpack.c.h.b16 %v1941
    %v5534 = vunpack.c.l.b16 %v1942
    %v5535 = vunpack.c.h.b16 %v1942
    %v5536 = vunpack.c.l.b16 %v1943
    %v5537 = vunpack.c.h.b16 %v1943
    %v5538 = vunpack.c.l.b16 %v1944
    %v5539 = vunpack.c.h.b16 %v1944
    %v5540 = vunpack.c.l.b16 %v1945
    %v5541 = vunpack.c.h.b16 %v1945
    %v5542 = vunpack.c.l.b16 %v1946
    %v5543 = vunpack.c.h.b16 %v1946
    %v5544 = vunpack.c.l.b16 %v1947
    %v5545 = vunpack.c.h.b16 %v1947
    %v5546 = vunpack.c.l.b16 %v1948
    %v5547 = vunpack.c.h.b16 %v1948
    %v5548 = vunpack.c.l.b16 %v1949
    %v5549 = vunpack.c.h.b16 %v1949
    %v5550 = vpack.c.b16 %v3156, %v3150
    %v5551 = vpack.c.b16 %v3157, %v3151
    %v5552 = vpack.c.b16 %v3158, %v3152
    %v5553 = vpack.c.b16 %v3159, %v3153
    %v5554 = vpack.c.b16 %v3160, %v3154
    %v5555 = vpack.c.b16 %v3161, %v3155
    %v5556 = vpack.c.b16 %v3168, %v3162
    %v5557 = vpack.c.b16 %v3169, %v3163
    %v5558 = vpack.c.b16 %v3170, %v3164
    %v5559 = vpack.c.b16 %v3171, %v3165
    %v5560 = vpack.c.b16 %v3172, %v3166
    %v5561 = vpack.c.b16 %v3173, %v3167
    %v5562 = vpack.c.b16 %v3180, %v3174
    %v5563 = vpack.c.b16 %v3181, %v3175
    %v5564 = vpack.c.b16 %v3182, %v3176
    %v5565 = vpack.c.b16 %v3183, %v3177
    %v5566 = vpack.c.b16 %v3184, %v3178
    %v5567 = vpack.c.b16 %v3185, %v3179
    %v5568 = vpack.c.b16 %v3192, %v3186
    %v5569 = vpack.c.b16 %v3193, %v3187
    %v5570 = vpack.c.b16 %v3194, %v3188
    %v5571 = vpack.c.b16 %v3195, %v3189
    %v5572 = vpack.c.b16 %v3196, %v3190
    %v5573 = vpack.c.b16 %v3197, %v3191
    %v5574 = vpack.c.b16 %v3204, %v3198
    %v5575 = vpack.c.b16 %v3205, %v3199
    %v5576 = vpack.c.b16 %v3206, %v3200
    %v5577 = vpack.c.b16 %v3207, %v3201
    %v5578 = vpack.c.b16 %v3208, %v3202
    %v5579 = vpack.c.b16 %v3209, %v3203
    %v5580 = vpack.c.b16 %v3216, %v3210
    %v5581 = vpack.c.b16 %v3217, %v3211
    %v5582 = vpack.c.b16 %v3218, %v3212
    %v5583 = vpack.c.b16 %v3219, %v3213
    %v5584 = vpack.c.b16 %v3220, %v3214
    %v5585 = vpack.c.b16 %v3221, %v3215
    %v5586 = vpack.c.b16 %v3228, %v3222
    %v5587 = vpack.c.b16 %v3229, %v3223
    %v5588 = vpack.c.b16 %v3230, %v3224
    %v5589 = vpack.c.b16 %v3231, %v3225
    %v5590 = vpack.c.b16 %v3232, %v3226
    %v5591 = vpack.c.b16 %v3233, %v3227
    %v5592 = vpack.c.b16 %v3240, %v3234
    %v5593 = vpack.c.b16 %v3241, %v3235
    %v5594 = vpack.c.b16 %v3242, %v3236
    %v5595 = vpack.c.b16 %v3243, %v3237
    %v5596 = vpack.c.b16 %v3244, %v3238
    %v5597 = vpack.c.b16 %v3245, %v3239
    %v5598 = vpack.c.b16 %v3252, %v3246
    %v5599 = vpack.c.b16 %v3253, %v3247
    %v5600 = vpack.c.b16 %v3254, %v3248
    %v5601 = vpack.c.b16 %v3255, %v3249
    %v5602 = vpack.c.b16 %v3256, %v3250
    %v5603 = vpack.c.b16 %v3257, %v3251
    %v5604 = vpack.c.b16 %v3264, %v3258
    %v5605 = vpack.c.b16 %v3265, %v3259
    %v5606 = vpack.c.b16 %v3266, %v3260
    %v5607 = vpack.c.b16 %v3267, %v3261
    %v5608 = vpack.c.b16 %v3268, %v3262
    %v5609 = vpack.c.b16 %v3269, %v3263
    %v5610 = vpack.c.b16 %v3276, %v3270
    %v5611 = vpack.c.b16 %v3277, %v3271
    %v5612 = vpack.c.b16 %v3278, %v3272
    %v5613 = vpack.c.b16 %v3279, %v3273
    %v5614 = vpack.c.b16 %v3280, %v3274
    %v5615 = vpack.c.b16 %v3281, %v3275
    %v5616 = vpack.c.b16 %v3288, %v3282
    %v5617 = vpack.c.b16 %v3289, %v3283
    %v5618 = vpack.c.b16 %v3290, %v3284
    %v5619 = vpack.c.b16 %v3291, %v3285
    %v5620 = vpack.c.b16 %v3292, %v3286
    %v5621 = vpack.c.b16 %v3293, %v3287
    %v5622 = vpack.c.b16 %v3300, %v3294
    %v5623 = vpack.c.b16 %v3301, %v3295
    %v5624 = vpack.c.b16 %v3302, %v3296
    %v5625 = vpack.c.b16 %v3303, %v3297
    %v5626 = vpack.c.b16 %v3304, %v3298
    %v5627 = vpack.c.b16 %v3305, %v3299
    %v5628 = vpack.c.b16 %v3312, %v3306
    %v5629 = vpack.c.b16 %v3313, %v3307
    %v5630 = vpack.c.b16 %v3314, %v3308
    %v5631 = vpack.c.b16 %v3315, %v3309
    %v5632 = vpack.c.b16 %v3316, %v3310
    %v5633 = vpack.c.b16 %v3317, %v3311
    %v5634 = vpack.c.b16 %v3324, %v3318
    %v5635 = vpack.c.b16 %v3325, %v3319
    %v5636 = vpack.c.b16 %v3326, %v3320
    %v5637 = vpack.c.b16 %v3327, %v3321
    %v5638 = vpack.c.b16 %v3328, %v3322
    %v5639 = vpack.c.b16 %v3329, %v3323
    %v5640 = vpack.c.b16 %v3336, %v3330
    %v5641 = vpack.c.b16 %v3337, %v3331
    %v5642 = vpack.c.b16 %v3338, %v3332
    %v5643 = vpack.c.b16 %v3339, %v3333
    %v5644 = vpack.c.b16 %v3340, %v3334
    %v5645 = vpack.c.b16 %v3341, %v3335
    %v5646 = vpack.c.b16 %v3348, %v3342
    %v5647 = vpack.c.b16 %v3349, %v3343
    %v5648 = vpack.c.b16 %v3350, %v3344
    %v5649 = vpack.c.b16 %v3351, %v3345
    %v5650 = vpack.c.b16 %v3352, %v3346
    %v5651 = vpack.c.b16 %v3353, %v3347
    %v5652 = vpack.c.b16 %v3360, %v3354
    %v5653 = vpack.c.b16 %v3361, %v3355
    %v5654 = vpack.c.b16 %v3362, %v3356
    %v5655 = vpack.c.b16 %v3363, %v3357
    %v5656 = vpack.c.b16 %v3364, %v3358
    %v5657 = vpack.c.b16 %v3365, %v3359
    %v5658 = vpack.c.b16 %v3372, %v3366
    %v5659 = vpack.c.b16 %v3373, %v3367
    %v5660 = vpack.c.b16 %v3374, %v3368
    %v5661 = vpack.c.b16 %v3375, %v3369
    %v5662 = vpack.c.b16 %v3376, %v3370
    %v5663 = vpack.c.b16 %v3377, %v3371
    %v5664 = vpack.c.b16 %v3384, %v3378
    %v5665 = vpack.c.b16 %v3385, %v3379
    %v5666 = vpack.c.b16 %v3386, %v3380
    %v5667 = vpack.c.b16 %v3387, %v3381
    %v5668 = vpack.c.b16 %v3388, %v3382
    %v5669 = vpack.c.b16 %v3389, %v3383
    %v5670 = vpack.c.b16 %v3396, %v3390
    %v5671 = vpack.c.b16 %v3397, %v3391
    %v5672 = vpack.c.b16 %v3398, %v3392
    %v5673 = vpack.c.b16 %v3399, %v3393
    %v5674 = vpack.c.b16 %v3400, %v3394
    %v5675 = vpack.c.b16 %v3401, %v3395
    %v5676 = vpack.c.b16 %v3408, %v3402
    %v5677 = vpack.c.b16 %v3409, %v3403
    %v5678 = vpack.c.b16 %v3410, %v3404
    %v5679 = vpack.c.b16 %v3411, %v3405
    %v5680 = vpack.c.b16 %v3412, %v3406
    %v5681 = vpack.c.b16 %v3413, %v3407
    %v5682 = vpack.c.b16 %v3420, %v3414
    %v5683 = vpack.c.b16 %v3421, %v3415
    %v5684 = vpack.c.b16 %v3422, %v3416
    %v5685 = vpack.c.b16 %v3423, %v3417
    %v5686 = vpack.c.b16 %v3424, %v3418
    %v5687 = vpack.c.b16 %v3425, %v3419
    %v5688 = vpack.c.b16 %v3432, %v3426
    %v5689 = vpack.c.b16 %v3433, %v3427
    %v5690 = vpack.c.b16 %v3434, %v3428
    %v5691 = vpack.c.b16 %v3435, %v3429
    %v5692 = vpack.c.b16 %v3436, %v3430
    %v5693 = vpack.c.b16 %v3437, %v3431
    %v5694 = vpack.c.b16 %v3444, %v3438
    %v5695 = vpack.c.b16 %v3445, %v3439
    %v5696 = vpack.c.b16 %v3446, %v3440
    %v5697 = vpack.c.b16 %v3447, %v3441
    %v5698 = vpack.c.b16 %v3448, %v3442
    %v5699 = vpack.c.b16 %v3449, %v3443
    %v5700 = vpack.c.b16 %v3456, %v3450
    %v5701 = vpack.c.b16 %v3457, %v3451
    %v5702 = vpack.c.b16 %v3458, %v3452
    %v5703 = vpack.c.b16 %v3459, %v3453
    %v5704 = vpack.c.b16 %v3460, %v3454
    %v5705 = vpack.c.b16 %v3461, %v3455
    %v5706 = vpack.c.b16 %v3468, %v3462
    %v5707 = vpack.c.b16 %v3469, %v3463
    %v5708 = vpack.c.b16 %v3470, %v3464
    %v5709 = vpack.c.b16 %v3471, %v3465
    %v5710 = vpack.c.b16 %v3472, %v3466
    %v5711 = vpack.c.b16 %v3473, %v3467
    %v5712 = vpack.c.b16 %v3480, %v3474
    %v5713 = vpack.c.b16 %v3481, %v3475
    %v5714 = vpack.c.b16 %v3482, %v3476
    %v5715 = vpack.c.b16 %v3483, %v3477
    %v5716 = vpack.c.b16 %v3484, %v3478
    %v5717 = vpack.c.b16 %v3485, %v3479
    %v5718 = vpack.c.b16 %v3492, %v3486
    %v5719 = vpack.c.b16 %v3493, %v3487
    %v5720 = vpack.c.b16 %v3494, %v3488
    %v5721 = vpack.c.b16 %v3495, %v3489
    %v5722 = vpack.c.b16 %v3496, %v3490
    %v5723 = vpack.c.b16 %v3497, %v3491
    %v5724 = vpack.c.b16 %v3504, %v3498
    %v5725 = vpack.c.b16 %v3505, %v3499
    %v5726 = vpack.c.b16 %v3506, %v3500
    %v5727 = vpack.c.b16 %v3507, %v3501
    %v5728 = vpack.c.b16 %v3508, %v3502
    %v5729 = vpack.c.b16 %v3509, %v3503
    %v5730 = vpack.c.b16 %v3516, %v3510
    %v5731 = vpack.c.b16 %v3517, %v3511
    %v5732 = vpack.c.b16 %v3518, %v3512
    %v5733 = vpack.c.b16 %v3519, %v3513
    %v5734 = vpack.c.b16 %v3520, %v3514
    %v5735 = vpack.c.b16 %v3521, %v3515
    %v5736 = vpack.c.b16 %v3528, %v3522
    %v5737 = vpack.c.b16 %v3529, %v3523
    %v5738 = vpack.c.b16 %v3530, %v3524
    %v5739 = vpack.c.b16 %v3531, %v3525
    %v5740 = vpack.c.b16 %v3532, %v3526
    %v5741 = vpack.c.b16 %v3533, %v3527
    %v5742 = vpack.c.b16 %v3540, %v3534
    %v5743 = vpack.c.b16 %v3541, %v3535
    %v5744 = vpack.c.b16 %v3542, %v3536
    %v5745 = vpack.c.b16 %v3543, %v3537
    %v5746 = vpack.c.b16 %v3544, %v3538
    %v5747 = vpack.c.b16 %v3545, %v3539
    %v5748 = vpack.c.b16 %v3552, %v3546
    %v5749 = vpack.c.b16 %v3553, %v3547
    %v5750 = vpack.c.b16 %v3554, %v3548
    %v5751 = vpack.c.b16 %v3555, %v3549
    %v5752 = vpack.c.b16 %v3556, %v3550
    %v5753 = vpack.c.b16 %v3557, %v3551
    %v5754 = vpack.c.b16 %v3564, %v3558
    %v5755 = vpack.c.b16 %v3565, %v3559
    %v5756 = vpack.c.b16 %v3566, %v3560
    %v5757 = vpack.c.b16 %v3567, %v3561
    %v5758 = vpack.c.b16 %v3568, %v3562
    %v5759 = vpack.c.b16 %v3569, %v3563
    %v5760 = vpack.c.b16 %v3576, %v3570
    %v5761 = vpack.c.b16 %v3577, %v3571
    %v5762 = vpack.c.b16 %v3578, %v3572
    %v5763 = vpack.c.b16 %v3579, %v3573
    %v5764 = vpack.c.b16 %v3580, %v3574
    %v5765 = vpack.c.b16 %v3581, %v3575
    %v5766 = vpack.c.b16 %v3588, %v3582
    %v5767 = vpack.c.b16 %v3589, %v3583
    %v5768 = vpack.c.b16 %v3590, %v3584
    %v5769 = vpack.c.b16 %v3591, %v3585
    %v5770 = vpack.c.b16 %v3592, %v3586
    %v5771 = vpack.c.b16 %v3593, %v3587
    %v5772 = vpack.c.b16 %v3600, %v3594
    %v5773 = vpack.c.b16 %v3601, %v3595
    %v5774 = vpack.c.b16 %v3602, %v3596
    %v5775 = vpack.c.b16 %v3603, %v3597
    %v5776 = vpack.c.b16 %v3604, %v3598
    %v5777 = vpack.c.b16 %v3605, %v3599
    %v5778 = vpack.c.b16 %v3612, %v3606
    %v5779 = vpack.c.b16 %v3613, %v3607
    %v5780 = vpack.c.b16 %v3614, %v3608
    %v5781 = vpack.c.b16 %v3615, %v3609
    %v5782 = vpack.c.b16 %v3616, %v3610
    %v5783 = vpack.c.b16 %v3617, %v3611
    %v5784 = vpack.c.b16 %v3624, %v3618
    %v5785 = vpack.c.b16 %v3625, %v3619
    %v5786 = vpack.c.b16 %v3626, %v3620
    %v5787 = vpack.c.b16 %v3627, %v3621
    %v5788 = vpack.c.b16 %v3628, %v3622
    %v5789 = vpack.c.b16 %v3629, %v3623
    %v5790 = vpack.c.b16 %v3636, %v3630
    %v5791 = vpack.c.b16 %v3637, %v3631
    %v5792 = vpack.c.b16 %v3638, %v3632
    %v5793 = vpack.c.b16 %v3639, %v3633
    %v5794 = vpack.c.b16 %v3640, %v3634
    %v5795 = vpack.c.b16 %v3641, %v3635
    %v5796 = vpack.c.b16 %v3648, %v3642
    %v5797 = vpack.c.b16 %v3649, %v3643
    %v5798 = vpack.c.b16 %v3650, %v3644
    %v5799 = vpack.c.b16 %v3651, %v3645
    %v5800 = vpack.c.b16 %v3652, %v3646
    %v5801 = vpack.c.b16 %v3653, %v3647
    %v5802 = vpack.c.b16 %v3660, %v3654
    %v5803 = vpack.c.b16 %v3661, %v3655
    %v5804 = vpack.c.b16 %v3662, %v3656
    %v5805 = vpack.c.b16 %v3663, %v3657
    %v5806 = vpack.c.b16 %v3664, %v3658
    %v5807 = vpack.c.b16 %v3665, %v3659
    %v5808 = vpack.c.b16 %v3672, %v3666
    %v5809 = vpack.c.b16 %v3673, %v3667
    %v5810 = vpack.c.b16 %v3674, %v3668
    %v5811 = vpack.c.b16 %v3675, %v3669
    %v5812 = vpack.c.b16 %v3676, %v3670
    %v5813 = vpack.c.b16 %v3677, %v3671
    %v5814 = vpack.c.b16 %v3684, %v3678
    %v5815 = vpack.c.b16 %v3685, %v3679
    %v5816 = vpack.c.b16 %v3686, %v3680
    %v5817 = vpack.c.b16 %v3687, %v3681
    %v5818 = vpack.c.b16 %v3688, %v3682
    %v5819 = vpack.c.b16 %v3689, %v3683
    %v5820 = vpack.c.b16 %v3696, %v3690
    %v5821 = vpack.c.b16 %v3697, %v3691
    %v5822 = vpack.c.b16 %v3698, %v3692
    %v5823 = vpack.c.b16 %v3699, %v3693
    %v5824 = vpack.c.b16 %v3700, %v3694
    %v5825 = vpack.c.b16 %v3701, %v3695
    %v5826 = vpack.c.b16 %v3708, %v3702
    %v5827 = vpack.c.b16 %v3709, %v3703
    %v5828 = vpack.c.b16 %v3710, %v3704
    %v5829 = vpack.c.b16 %v3711, %v3705
    %v5830 = vpack.c.b16 %v3712, %v3706
    %v5831 = vpack.c.b16 %v3713, %v3707
    %v5832 = vpack.c.b16 %v3720, %v3714
    %v5833 = vpack.c.b16 %v3721, %v3715
    %v5834 = vpack.c.b16 %v3722, %v3716
    %v5835 = vpack.c.b16 %v3723, %v3717
    %v5836 = vpack.c.b16 %v3724, %v3718
    %v5837 = vpack.c.b16 %v3725, %v3719
    %v5838 = vpack.c.b16 %v3732, %v3726
    %v5839 = vpack.c.b16 %v3733, %v3727
    %v5840 = vpack.c.b16 %v3734, %v3728
    %v5841 = vpack.c.b16 %v3735, %v3729
    %v5842 = vpack.c.b16 %v3736, %v3730
    %v5843 = vpack.c.b16 %v3737, %v3731
    %v5844 = vpack.c.b16 %v3744, %v3738
    %v5845 = vpack.c.b16 %v3745, %v3739
    %v5846 = vpack.c.b16 %v3746, %v3740
    %v5847 = vpack.c.b16 %v3747, %v3741
    %v5848 = vpack.c.b16 %v3748, %v3742
    %v5849 = vpack.c.b16 %v3749, %v3743
    %v5850 = vpack.c.b16 %v3756, %v3750
    %v5851 = vpack.c.b16 %v3757, %v3751
    %v5852 = vpack.c.b16 %v3758, %v3752
    %v5853 = vpack.c.b16 %v3759, %v3753
    %v5854 = vpack.c.b16 %v3760, %v3754
    %v5855 = vpack.c.b16 %v3761, %v3755
    %v5856 = vpack.c.b16 %v3768, %v3762
    %v5857 = vpack.c.b16 %v3769, %v3763
    %v5858 = vpack.c.b16 %v3770, %v3764
    %v5859 = vpack.c.b16 %v3771, %v3765
    %v5860 = vpack.c.b16 %v3772, %v3766
    %v5861 = vpack.c.b16 %v3773, %v3767
    %v5862 = vpack.c.b16 %v3780, %v3774
    %v5863 = vpack.c.b16 %v3781, %v3775
    %v5864 = vpack.c.b16 %v3782, %v3776
    %v5865 = vpack.c.b16 %v3783, %v3777
    %v5866 = vpack.c.b16 %v3784, %v3778
    %v5867 = vpack.c.b16 %v3785, %v3779
    %v5868 = vpack.c.b16 %v3792, %v3786
    %v5869 = vpack.c.b16 %v3793, %v3787
    %v5870 = vpack.c.b16 %v3794, %v3788
    %v5871 = vpack.c.b16 %v3795, %v3789
    %v5872 = vpack.c.b16 %v3796, %v3790
    %v5873 = vpack.c.b16 %v3797, %v3791
    %v5874 = vpack.c.b16 %v3804, %v3798
    %v5875 = vpack.c.b16 %v3805, %v3799
    %v5876 = vpack.c.b16 %v3806, %v3800
    %v5877 = vpack.c.b16 %v3807, %v3801
    %v5878 = vpack.c.b16 %v3808, %v3802
    %v5879 = vpack.c.b16 %v3809, %v3803
    %v5880 = vpack.c.b16 %v3816, %v3810
    %v5881 = vpack.c.b16 %v3817, %v3811
    %v5882 = vpack.c.b16 %v3818, %v3812
    %v5883 = vpack.c.b16 %v3819, %v3813
    %v5884 = vpack.c.b16 %v3820, %v3814
    %v5885 = vpack.c.b16 %v3821, %v3815
    %v5886 = vpack.c.b16 %v3828, %v3822
    %v5887 = vpack.c.b16 %v3829, %v3823
    %v5888 = vpack.c.b16 %v3830, %v3824
    %v5889 = vpack.c.b16 %v3831, %v3825
    %v5890 = vpack.c.b16 %v3832, %v3826
    %v5891 = vpack.c.b16 %v3833, %v3827
    %v5892 = vpack.c.b16 %v3840, %v3834
    %v5893 = vpack.c.b16 %v3841, %v3835
    %v5894 = vpack.c.b16 %v3842, %v3836
    %v5895 = vpack.c.b16 %v3843, %v3837
    %v5896 = vpack.c.b16 %v3844, %v3838
    %v5897 = vpack.c.b16 %v3845, %v3839
    %v5898 = vpack.c.b16 %v3852, %v3846
    %v5899 = vpack.c.b16 %v3853, %v3847
    %v5900 = vpack.c.b16 %v3854, %v3848
    %v5901 = vpack.c.b16 %v3855, %v3849
    %v5902 = vpack.c.b16 %v3856, %v3850
    %v5903 = vpack.c.b16 %v3857, %v3851
    %v5904 = vpack.c.b16 %v3864, %v3858
    %v5905 = vpack.c.b16 %v3865, %v3859
    %v5906 = vpack.c.b16 %v3866, %v3860
    %v5907 = vpack.c.b16 %v3867, %v3861
    %v5908 = vpack.c.b16 %v3868, %v3862
    %v5909 = vpack.c.b16 %v3869, %v3863
    %v5910 = vpack.c.b16 %v3876, %v3870
    %v5911 = vpack.c.b16 %v3877, %v3871
    %v5912 = vpack.c.b16 %v3878, %v3872
    %v5913 = vpack.c.b16 %v3879, %v3873
    %v5914 = vpack.c.b16 %v3880, %v3874
    %v5915 = vpack.c.b16 %v3881, %v3875
    %v5916 = vpack.c.b16 %v3888, %v3882
    %v5917 = vpack.c.b16 %v3889, %v3883
    %v5918 = vpack.c.b16 %v3890, %v3884
    %v5919 = vpack.c.b16 %v3891, %v3885
    %v5920 = vpack.c.b16 %v3892, %v3886
    %v5921 = vpack.c.b16 %v3893, %v3887
    %v5922 = vpack.c.b16 %v3900, %v3894
    %v5923 = vpack.c.b16 %v3901, %v3895
    %v5924 = vpack.c.b16 %v3902, %v3896
    %v5925 = vpack.c.b16 %v3903, %v3897
    %v5926 = vpack.c.b16 %v3904, %v3898
    %v5927 = vpack.c.b16 %v3905, %v3899
    %v5928 = vpack.c.b16 %v3912, %v3906
    %v5929 = vpack.c.b16 %v3913, %v3907
    %v5930 = vpack.c.b16 %v3914, %v3908
    %v5931 = vpack.c.b16 %v3915, %v3909
    %v5932 = vpack.c.b16 %v3916, %v3910
    %v5933 = vpack.c.b16 %v3917, %v3911
    %v5934 = vpack.c.b16 %v3924, %v3918
    %v5935 = vpack.c.b16 %v3925, %v3919
    %v5936 = vpack.c.b16 %v3926, %v3920
    %v5937 = vpack.c.b16 %v3927, %v3921
    %v5938 = vpack.c.b16 %v3928, %v3922
    %v5939 = vpack.c.b16 %v3929, %v3923
    %v5940 = vpack.c.b16 %v3936, %v3930
    %v5941 = vpack.c.b16 %v3937, %v3931
    %v5942 = vpack.c.b16 %v3938, %v3932
    %v5943 = vpack.c.b16 %v3939, %v3933
    %v5944 = vpack.c.b16 %v3940, %v3934
    %v5945 = vpack.c.b16 %v3941, %v3935
    %v5946 = vpack.c.b16 %v3948, %v3942
    %v5947 = vpack.c.b16 %v3949, %v3943
    %v5948 = vpack.c.b16 %v3950, %v3944
    %v5949 = vpack.c.b16 %v3951, %v3945
    %v5950 = vpack.c.b16 %v3952, %v3946
    %v5951 = vpack.c.b16 %v3953, %v3947
    %v5952 = vpack.c.b16 %v3960, %v3954
    %v5953 = vpack.c.b16 %v3961, %v3955
    %v5954 = vpack.c.b16 %v3962, %v3956
    %v5955 = vpack.c.b16 %v3963, %v3957
    %v5956 = vpack.c.b16 %v3964, %v3958
    %v5957 = vpack.c.b16 %v3965, %v3959
    %v5958 = vpack.c.b16 %v3972, %v3966
    %v5959 = vpack.c.b16 %v3973, %v3967
    %v5960 = vpack.c.b16 %v3974, %v3968
    %v5961 = vpack.c.b16 %v3975, %v3969
    %v5962 = vpack.c.b16 %v3976, %v3970
    %v5963 = vpack.c.b16 %v3977, %v3971
    %v5964 = vpack.c.b16 %v3984, %v3978
    %v5965 = vpack.c.b16 %v3985, %v3979
    %v5966 = vpack.c.b16 %v3986, %v3980
    %v5967 = vpack.c.b16 %v3987, %v3981
    %v5968 = vpack.c.b16 %v3988, %v3982
    %v5969 = vpack.c.b16 %v3989, %v3983
    %v5970 = vpack.c.b16 %v3996, %v3990
    %v5971 = vpack.c.b16 %v3997, %v3991
    %v5972 = vpack.c.b16 %v3998, %v3992
    %v5973 = vpack.c.b16 %v3999, %v3993
    %v5974 = vpack.c.b16 %v4000, %v3994
    %v5975 = vpack.c.b16 %v4001, %v3995
    %v5976 = vpack.c.b16 %v4008, %v4002
    %v5977 = vpack.c.b16 %v4009, %v4003
    %v5978 = vpack.c.b16 %v4010, %v4004
    %v5979 = vpack.c.b16 %v4011, %v4005
    %v5980 = vpack.c.b16 %v4012, %v4006
    %v5981 = vpack.c.b16 %v4013, %v4007
    %v5982 = vpack.c.b16 %v4020, %v4014
    %v5983 = vpack.c.b16 %v4021, %v4015
    %v5984 = vpack.c.b16 %v4022, %v4016
    %v5985 = vpack.c.b16 %v4023, %v4017
    %v5986 = vpack.c.b16 %v4024, %v4018
    %v5987 = vpack.c.b16 %v4025, %v4019
    %v5988 = vpack.c.b16 %v4032, %v4026
    %v5989 = vpack.c.b16 %v4033, %v4027
    %v5990 = vpack.c.b16 %v4034, %v4028
    %v5991 = vpack.c.b16 %v4035, %v4029
    %v5992 = vpack.c.b16 %v4036, %v4030
    %v5993 = vpack.c.b16 %v4037, %v4031
    %v5994 = vpack.c.b16 %v4044, %v4038
    %v5995 = vpack.c.b16 %v4045, %v4039
    %v5996 = vpack.c.b16 %v4046, %v4040
    %v5997 = vpack.c.b16 %v4047, %v4041
    %v5998 = vpack.c.b16 %v4048, %v4042
    %v5999 = vpack.c.b16 %v4049, %v4043
    %v6000 = vpack.c.b16 %v4056, %v4050
    %v6001 = vpack.c.b16 %v4057, %v4051
    %v6002 = vpack.c.b16 %v4058, %v4052
    %v6003 = vpack.c.b16 %v4059, %v4053
    %v6004 = vpack.c.b16 %v4060, %v4054
    %v6005 = vpack.c.b16 %v4061, %v4055
    %v6006 = vpack.c.b16 %v4068, %v4062
    %v6007 = vpack.c.b16 %v4069, %v4063
    %v6008 = vpack.c.b16 %v4070, %v4064
    %v6009 = vpack.c.b16 %v4071, %v4065
    %v6010 = vpack.c.b16 %v4072, %v4066
    %v6011 = vpack.c.b16 %v4073, %v4067
    %v6012 = vpack.c.b16 %v4080, %v4074
    %v6013 = vpack.c.b16 %v4081, %v4075
    %v6014 = vpack.c.b16 %v4082, %v4076
    %v6015 = vpack.c.b16 %v4083, %v4077
    %v6016 = vpack.c.b16 %v4084, %v4078
    %v6017 = vpack.c.b16 %v4085, %v4079
    %v6018 = vpack.c.b16 %v4092, %v4086
    %v6019 = vpack.c.b16 %v4093, %v4087
    %v6020 = vpack.c.b16 %v4094, %v4088
    %v6021 = vpack.c.b16 %v4095, %v4089
    %v6022 = vpack.c.b16 %v4096, %v4090
    %v6023 = vpack.c.b16 %v4097, %v4091
    %v6024 = vpack.c.b16 %v4104, %v4098
    %v6025 = vpack.c.b16 %v4105, %v4099
    %v6026 = vpack.c.b16 %v4106, %v4100
    %v6027 = vpack.c.b16 %v4107, %v4101
    %v6028 = vpack.c.b16 %v4108, %v4102
    %v6029 = vpack.c.b16 %v4109, %v4103
    %v6030 = vpack.c.b16 %v4116, %v4110
    %v6031 = vpack.c.b16 %v4117, %v4111
    %v6032 = vpack.c.b16 %v4118, %v4112
    %v6033 = vpack.c.b16 %v4119, %v4113
    %v6034 = vpack.c.b16 %v4120, %v4114
    %v6035 = vpack.c.b16 %v4121, %v4115
    %v6036 = vpack.c.b16 %v4128, %v4122
    %v6037 = vpack.c.b16 %v4129, %v4123
    %v6038 = vpack.c.b16 %v4130, %v4124
    %v6039 = vpack.c.b16 %v4131, %v4125
    %v6040 = vpack.c.b16 %v4132, %v4126
    %v6041 = vpack.c.b16 %v4133, %v4127
    %v6042 = vpack.c.b16 %v4140, %v4134
    %v6043 = vpack.c.b16 %v4141, %v4135
    %v6044 = vpack.c.b16 %v4142, %v4136
    %v6045 = vpack.c.b16 %v4143, %v4137
    %v6046 = vpack.c.b16 %v4144, %v4138
    %v6047 = vpack.c.b16 %v4145, %v4139
    %v6048 = vpack.c.b16 %v4152, %v4146
    %v6049 = vpack.c.b16 %v4153, %v4147
    %v6050 = vpack.c.b16 %v4154, %v4148
    %v6051 = vpack.c.b16 %v4155, %v4149
    %v6052 = vpack.c.b16 %v4156, %v4150
    %v6053 = vpack.c.b16 %v4157, %v4151
    %v6054 = vpack.c.b16 %v4164, %v4158
    %v6055 = vpack.c.b16 %v4165, %v4159
    %v6056 = vpack.c.b16 %v4166, %v4160
    %v6057 = vpack.c.b16 %v4167, %v4161
    %v6058 = vpack.c.b16 %v4168, %v4162
    %v6059 = vpack.c.b16 %v4169, %v4163
    %v6060 = vpack.c.b16 %v4176, %v4170
    %v6061 = vpack.c.b16 %v4177, %v4171
    %v6062 = vpack.c.b16 %v4178, %v4172
    %v6063 = vpack.c.b16 %v4179, %v4173
    %v6064 = vpack.c.b16 %v4180, %v4174
    %v6065 = vpack.c.b16 %v4181, %v4175
    %v6066 = vpack.c.b16 %v4188, %v4182
    %v6067 = vpack.c.b16 %v4189, %v4183
    %v6068 = vpack.c.b16 %v4190, %v4184
    %v6069 = vpack.c.b16 %v4191, %v4185
    %v6070 = vpack.c.b16 %v4192, %v4186
    %v6071 = vpack.c.b16 %v4193, %v4187
    %v6072 = vpack.c.b16 %v4200, %v4194
    %v6073 = vpack.c.b16 %v4201, %v4195
    %v6074 = vpack.c.b16 %v4202, %v4196
    %v6075 = vpack.c.b16 %v4203, %v4197
    %v6076 = vpack.c.b16 %v4204, %v4198
    %v6077 = vpack.c.b16 %v4205, %v4199
    %v6078 = vpack.c.b16 %v4212, %v4206
    %v6079 = vpack.c.b16 %v4213, %v4207
    %v6080 = vpack.c.b16 %v4214, %v4208
    %v6081 = vpack.c.b16 %v4215, %v4209
    %v6082 = vpack.c.b16 %v4216, %v4210
    %v6083 = vpack.c.b16 %v4217, %v4211
    %v6084 = vpack.c.b16 %v4224, %v4218
    %v6085 = vpack.c.b16 %v4225, %v4219
    %v6086 = vpack.c.b16 %v4226, %v4220
    %v6087 = vpack.c.b16 %v4227, %v4221
    %v6088 = vpack.c.b16 %v4228, %v4222
    %v6089 = vpack.c.b16 %v4229, %v4223
    %v6090 = vpack.c.b16 %v4236, %v4230
    %v6091 = vpack.c.b16 %v4237, %v4231
    %v6092 = vpack.c.b16 %v4238, %v4232
    %v6093 = vpack.c.b16 %v4239, %v4233
    %v6094 = vpack.c.b16 %v4240, %v4234
    %v6095 = vpack.c.b16 %v4241, %v4235
    %v6096 = vpack.c.b16 %v4248, %v4242
    %v6097 = vpack.c.b16 %v4249, %v4243
    %v6098 = vpack.c.b16 %v4250, %v4244
    %v6099 = vpack.c.b16 %v4251, %v4245
    %v6100 = vpack.c.b16 %v4252, %v4246
    %v6101 = vpack.c.b16 %v4253, %v4247
    %v6102 = vpack.c.b16 %v4260, %v4254
    %v6103 = vpack.c.b16 %v4261, %v4255
    %v6104 = vpack.c.b16 %v4262, %v4256
    %v6105 = vpack.c.b16 %v4263, %v4257
    %v6106 = vpack.c.b16 %v4264, %v4258
    %v6107 = vpack.c.b16 %v4265, %v4259
    %v6108 = vpack.c.b16 %v4272, %v4266
    %v6109 = vpack.c.b16 %v4273, %v4267
    %v6110 = vpack.c.b16 %v4274, %v4268
    %v6111 = vpack.c.b16 %v4275, %v4269
    %v6112 = vpack.c.b16 %v4276, %v4270
    %v6113 = vpack.c.b16 %v4277, %v4271
    %v6114 = vpack.c.b16 %v4284, %v4278
    %v6115 = vpack.c.b16 %v4285, %v4279
    %v6116 = vpack.c.b16 %v4286, %v4280
    %v6117 = vpack.c.b16 %v4287, %v4281
    %v6118 = vpack.c.b16 %v4288, %v4282
    %v6119 = vpack.c.b16 %v4289, %v4283
    %v6120 = vpack.c.b16 %v4296, %v4290
    %v6121 = vpack.c.b16 %v4297, %v4291
    %v6122 = vpack.c.b16 %v4298, %v4292
    %v6123 = vpack.c.b16 %v4299, %v4293
    %v6124 = vpack.c.b16 %v4300, %v4294
    %v6125 = vpack.c.b16 %v4301, %v4295
    %v6126 = vpack.c.b16 %v4308, %v4302
    %v6127 = vpack.c.b16 %v4309, %v4303
    %v6128 = vpack.c.b16 %v4310, %v4304
    %v6129 = vpack.c.b16 %v4311, %v4305
    %v6130 = vpack.c.b16 %v4312, %v4306
    %v6131 = vpack.c.b16 %v4313, %v4307
    %v6132 = vpack.c.b16 %v4320, %v4314
    %v6133 = vpack.c.b16 %v4321, %v4315
    %v6134 = vpack.c.b16 %v4322, %v4316
    %v6135 = vpack.c.b16 %v4323, %v4317
    %v6136 = vpack.c.b16 %v4324, %v4318
    %v6137 = vpack.c.b16 %v4325, %v4319
    %v6138 = vpack.c.b16 %v4332, %v4326
    %v6139 = vpack.c.b16 %v4333, %v4327
    %v6140 = vpack.c.b16 %v4334, %v4328
    %v6141 = vpack.c.b16 %v4335, %v4329
    %v6142 = vpack.c.b16 %v4336, %v4330
    %v6143 = vpack.c.b16 %v4337, %v4331
    %v6144 = vpack.c.b16 %v4344, %v4338
    %v6145 = vpack.c.b16 %v4345, %v4339
    %v6146 = vpack.c.b16 %v4346, %v4340
    %v6147 = vpack.c.b16 %v4347, %v4341
    %v6148 = vpack.c.b16 %v4348, %v4342
    %v6149 = vpack.c.b16 %v4349, %v4343
    %v6150 = vpack.c.b16 %v4356, %v4350
    %v6151 = vpack.c.b16 %v4357, %v4351
    %v6152 = vpack.c.b16 %v4358, %v4352
    %v6153 = vpack.c.b16 %v4359, %v4353
    %v6154 = vpack.c.b16 %v4360, %v4354
    %v6155 = vpack.c.b16 %v4361, %v4355
    %v6156 = vpack.c.b16 %v4368, %v4362
    %v6157 = vpack.c.b16 %v4369, %v4363
    %v6158 = vpack.c.b16 %v4370, %v4364
    %v6159 = vpack.c.b16 %v4371, %v4365
    %v6160 = vpack.c.b16 %v4372, %v4366
    %v6161 = vpack.c.b16 %v4373, %v4367
    %v6162 = vpack.c.b16 %v4380, %v4374
    %v6163 = vpack.c.b16 %v4381, %v4375
    %v6164 = vpack.c.b16 %v4382, %v4376
    %v6165 = vpack.c.b16 %v4383, %v4377
    %v6166 = vpack.c.b16 %v4384, %v4378
    %v6167 = vpack.c.b16 %v4385, %v4379
    %v6168 = vpack.c.b16 %v4392, %v4386
    %v6169 = vpack.c.b16 %v4393, %v4387
    %v6170 = vpack.c.b16 %v4394, %v4388
    %v6171 = vpack.c.b16 %v4395, %v4389
    %v6172 = vpack.c.b16 %v4396, %v4390
    %v6173 = vpack.c.b16 %v4397, %v4391
    %v6174 = vpack.c.b16 %v4404, %v4398
    %v6175 = vpack.c.b16 %v4405, %v4399
    %v6176 = vpack.c.b16 %v4406, %v4400
    %v6177 = vpack.c.b16 %v4407, %v4401
    %v6178 = vpack.c.b16 %v4408, %v4402
    %v6179 = vpack.c.b16 %v4409, %v4403
    %v6180 = vpack.c.b16 %v4416, %v4410
    %v6181 = vpack.c.b16 %v4417, %v4411
    %v6182 = vpack.c.b16 %v4418, %v4412
    %v6183 = vpack.c.b16 %v4419, %v4413
    %v6184 = vpack.c.b16 %v4420, %v4414
    %v6185 = vpack.c.b16 %v4421, %v4415
    %v6186 = vpack.c.b16 %v4428, %v4422
    %v6187 = vpack.c.b16 %v4429, %v4423
    %v6188 = vpack.c.b16 %v4430, %v4424
    %v6189 = vpack.c.b16 %v4431, %v4425
    %v6190 = vpack.c.b16 %v4432, %v4426
    %v6191 = vpack.c.b16 %v4433, %v4427
    %v6192 = vpack.c.b16 %v4440, %v4434
    %v6193 = vpack.c.b16 %v4441, %v4435
    %v6194 = vpack.c.b16 %v4442, %v4436
    %v6195 = vpack.c.b16 %v4443, %v4437
    %v6196 = vpack.c.b16 %v4444, %v4438
    %v6197 = vpack.c.b16 %v4445, %v4439
    %v6198 = vpack.c.b16 %v4452, %v4446
    %v6199 = vpack.c.b16 %v4453, %v4447
    %v6200 = vpack.c.b16 %v4454, %v4448
    %v6201 = vpack.c.b16 %v4455, %v4449
    %v6202 = vpack.c.b16 %v4456, %v4450
    %v6203 = vpack.c.b16 %v4457, %v4451
    %v6204 = vpack.c.b16 %v4464, %v4458
    %v6205 = vpack.c.b16 %v4465, %v4459
    %v6206 = vpack.c.b16 %v4466, %v4460
    %v6207 = vpack.c.b16 %v4467, %v4461
    %v6208 = vpack.c.b16 %v4468, %v4462
    %v6209 = vpack.c.b16 %v4469, %v4463
    %v6210 = vpack.c.b16 %v4476, %v4470
    %v6211 = vpack.c.b16 %v4477, %v4471
    %v6212 = vpack.c.b16 %v4478, %v4472
    %v6213 = vpack.c.b16 %v4479, %v4473
    %v6214 = vpack.c.b16 %v4480, %v4474
    %v6215 = vpack.c.b16 %v4481, %v4475
    %v6216 = vpack.c.b16 %v4488, %v4482
    %v6217 = vpack.c.b16 %v4489, %v4483
    %v6218 = vpack.c.b16 %v4490, %v4484
    %v6219 = vpack.c.b16 %v4491, %v4485
    %v6220 = vpack.c.b16 %v4492, %v4486
    %v6221 = vpack.c.b16 %v4493, %v4487
    %v6222 = vpack.c.b16 %v4500, %v4494
    %v6223 = vpack.c.b16 %v4501, %v4495
    %v6224 = vpack.c.b16 %v4502, %v4496
    %v6225 = vpack.c.b16 %v4503, %v4497
    %v6226 = vpack.c.b16 %v4504, %v4498
    %v6227 = vpack.c.b16 %v4505, %v4499
    %v6228 = vpack.c.b16 %v4512, %v4506
    %v6229 = vpack.c.b16 %v4513, %v4507
    %v6230 = vpack.c.b16 %v4514, %v4508
    %v6231 = vpack.c.b16 %v4515, %v4509
    %v6232 = vpack.c.b16 %v4516, %v4510
    %v6233 = vpack.c.b16 %v4517, %v4511
    %v6234 = vpack.c.b16 %v4524, %v4518
    %v6235 = vpack.c.b16 %v4525, %v4519
    %v6236 = vpack.c.b16 %v4526, %v4520
    %v6237 = vpack.c.b16 %v4527, %v4521
    %v6238 = vpack.c.b16 %v4528, %v4522
    %v6239 = vpack.c.b16 %v4529, %v4523
    %v6240 = vpack.c.b16 %v4536, %v4530
    %v6241 = vpack.c.b16 %v4537, %v4531
    %v6242 = vpack.c.b16 %v4538, %v4532
    %v6243 = vpack.c.b16 %v4539, %v4533
    %v6244 = vpack.c.b16 %v4540, %v4534
    %v6245 = vpack.c.b16 %v4541, %v4535
    %v6246 = vpack.c.b16 %v4548, %v4542
    %v6247 = vpack.c.b16 %v4549, %v4543
    %v6248 = vpack.c.b16 %v4550, %v4544
    %v6249 = vpack.c.b16 %v4551, %v4545
    %v6250 = vpack.c.b16 %v4552, %v4546
    %v6251 = vpack.c.b16 %v4553, %v4547
    %v6252 = vpack.c.b16 %v4560, %v4554
    %v6253 = vpack.c.b16 %v4561, %v4555
    %v6254 = vpack.c.b16 %v4562, %v4556
    %v6255 = vpack.c.b16 %v4563, %v4557
    %v6256 = vpack.c.b16 %v4564, %v4558
    %v6257 = vpack.c.b16 %v4565, %v4559
    %v6258 = vpack.c.b16 %v4572, %v4566
    %v6259 = vpack.c.b16 %v4573, %v4567
    %v6260 = vpack.c.b16 %v4574, %v4568
    %v6261 = vpack.c.b16 %v4575, %v4569
    %v6262 = vpack.c.b16 %v4576, %v4570
    %v6263 = vpack.c.b16 %v4577, %v4571
    %v6264 = vpack.c.b16 %v4584, %v4578
    %v6265 = vpack.c.b16 %v4585, %v4579
    %v6266 = vpack.c.b16 %v4586, %v4580
    %v6267 = vpack.c.b16 %v4587, %v4581
    %v6268 = vpack.c.b16 %v4588, %v4582
    %v6269 = vpack.c.b16 %v4589, %v4583
    %v6270 = vpack.c.b16 %v4596, %v4590
    %v6271 = vpack.c.b16 %v4597, %v4591
    %v6272 = vpack.c.b16 %v4598, %v4592
    %v6273 = vpack.c.b16 %v4599, %v4593
    %v6274 = vpack.c.b16 %v4600, %v4594
    %v6275 = vpack.c.b16 %v4601, %v4595
    %v6276 = vpack.c.b16 %v4608, %v4602
    %v6277 = vpack.c.b16 %v4609, %v4603
    %v6278 = vpack.c.b16 %v4610, %v4604
    %v6279 = vpack.c.b16 %v4611, %v4605
    %v6280 = vpack.c.b16 %v4612, %v4606
    %v6281 = vpack.c.b16 %v4613, %v4607
    %v6282 = vpack.c.b16 %v4620, %v4614
    %v6283 = vpack.c.b16 %v4621, %v4615
    %v6284 = vpack.c.b16 %v4622, %v4616
    %v6285 = vpack.c.b16 %v4623, %v4617
    %v6286 = vpack.c.b16 %v4624, %v4618
    %v6287 = vpack.c.b16 %v4625, %v4619
    %v6288 = vpack.c.b16 %v4632, %v4626
    %v6289 = vpack.c.b16 %v4633, %v4627
    %v6290 = vpack.c.b16 %v4634, %v4628
    %v6291 = vpack.c.b16 %v4635, %v4629
    %v6292 = vpack.c.b16 %v4636, %v4630
    %v6293 = vpack.c.b16 %v4637, %v4631
    %v6294 = vpack.c.b16 %v4644, %v4638
    %v6295 = vpack.c.b16 %v4645, %v4639
    %v6296 = vpack.c.b16 %v4646, %v4640
    %v6297 = vpack.c.b16 %v4647, %v4641
    %v6298 = vpack.c.b16 %v4648, %v4642
    %v6299 = vpack.c.b16 %v4649, %v4643
    %v6300 = vpack.c.b16 %v4656, %v4650
    %v6301 = vpack.c.b16 %v4657, %v4651
    %v6302 = vpack.c.b16 %v4658, %v4652
    %v6303 = vpack.c.b16 %v4659, %v4653
    %v6304 = vpack.c.b16 %v4660, %v4654
    %v6305 = vpack.c.b16 %v4661, %v4655
    %v6306 = vpack.c.b16 %v4668, %v4662
    %v6307 = vpack.c.b16 %v4669, %v4663
    %v6308 = vpack.c.b16 %v4670, %v4664
    %v6309 = vpack.c.b16 %v4671, %v4665
    %v6310 = vpack.c.b16 %v4672, %v4666
    %v6311 = vpack.c.b16 %v4673, %v4667
    %v6312 = vpack.c.b16 %v4680, %v4674
    %v6313 = vpack.c.b16 %v4681, %v4675
    %v6314 = vpack.c.b16 %v4682, %v4676
    %v6315 = vpack.c.b16 %v4683, %v4677
    %v6316 = vpack.c.b16 %v4684, %v4678
    %v6317 = vpack.c.b16 %v4685, %v4679
    %v6318 = vpack.c.b16 %v4692, %v4686
    %v6319 = vpack.c.b16 %v4693, %v4687
    %v6320 = vpack.c.b16 %v4694, %v4688
    %v6321 = vpack.c.b16 %v4695, %v4689
    %v6322 = vpack.c.b16 %v4696, %v4690
    %v6323 = vpack.c.b16 %v4697, %v4691
    %v6324 = vpack.c.b16 %v4704, %v4698
    %v6325 = vpack.c.b16 %v4705, %v4699
    %v6326 = vpack.c.b16 %v4706, %v4700
    %v6327 = vpack.c.b16 %v4707, %v4701
    %v6328 = vpack.c.b16 %v4708, %v4702
    %v6329 = vpack.c.b16 %v4709, %v4703
    %v6330 = vpack.c.b16 %v4716, %v4710
    %v6331 = vpack.c.b16 %v4717, %v4711
    %v6332 = vpack.c.b16 %v4718, %v4712
    %v6333 = vpack.c.b16 %v4719, %v4713
    %v6334 = vpack.c.b16 %v4720, %v4714
    %v6335 = vpack.c.b16 %v4721, %v4715
    %v6336 = vpack.c.b16 %v4728, %v4722
    %v6337 = vpack.c.b16 %v4729, %v4723
    %v6338 = vpack.c.b16 %v4730, %v4724
    %v6339 = vpack.c.b16 %v4731, %v4725
    %v6340 = vpack.c.b16 %v4732, %v4726
    %v6341 = vpack.c.b16 %v4733, %v4727
    %v6342 = vpack.c.b16 %v4740, %v4734
    %v6343 = vpack.c.b16 %v4741, %v4735
    %v6344 = vpack.c.b16 %v4742, %v4736
    %v6345 = vpack.c.b16 %v4743, %v4737
    %v6346 = vpack.c.b16 %v4744, %v4738
    %v6347 = vpack.c.b16 %v4745, %v4739
    %v6348 = vpack.c.b16 %v4752, %v4746
    %v6349 = vpack.c.b16 %v4753, %v4747
    %v6350 = vpack.c.b16 %v4754, %v4748
    %v6351 = vpack.c.b16 %v4755, %v4749
    %v6352 = vpack.c.b16 %v4756, %v4750
    %v6353 = vpack.c.b16 %v4757, %v4751
    %v6354 = vpack.c.b16 %v4764, %v4758
    %v6355 = vpack.c.b16 %v4765, %v4759
    %v6356 = vpack.c.b16 %v4766, %v4760
    %v6357 = vpack.c.b16 %v4767, %v4761
    %v6358 = vpack.c.b16 %v4768, %v4762
    %v6359 = vpack.c.b16 %v4769, %v4763
    %v6360 = vpack.c.b16 %v4776, %v4770
    %v6361 = vpack.c.b16 %v4777, %v4771
    %v6362 = vpack.c.b16 %v4778, %v4772
    %v6363 = vpack.c.b16 %v4779, %v4773
    %v6364 = vpack.c.b16 %v4780, %v4774
    %v6365 = vpack.c.b16 %v4781, %v4775
    %v6366 = vpack.c.b16 %v4788, %v4782
    %v6367 = vpack.c.b16 %v4789, %v4783
    %v6368 = vpack.c.b16 %v4790, %v4784
    %v6369 = vpack.c.b16 %v4791, %v4785
    %v6370 = vpack.c.b16 %v4792, %v4786
    %v6371 = vpack.c.b16 %v4793, %v4787
    %v6372 = vpack.c.b16 %v4800, %v4794
    %v6373 = vpack.c.b16 %v4801, %v4795
    %v6374 = vpack.c.b16 %v4802, %v4796
    %v6375 = vpack.c.b16 %v4803, %v4797
    %v6376 = vpack.c.b16 %v4804, %v4798
    %v6377 = vpack.c.b16 %v4805, %v4799
    %v6378 = vpack.c.b16 %v4812, %v4806
    %v6379 = vpack.c.b16 %v4813, %v4807
    %v6380 = vpack.c.b16 %v4814, %v4808
    %v6381 = vpack.c.b16 %v4815, %v4809
    %v6382 = vpack.c.b16 %v4816, %v4810
    %v6383 = vpack.c.b16 %v4817, %v4811
    %v6384 = vpack.c.b16 %v4824, %v4818
    %v6385 = vpack.c.b16 %v4825, %v4819
    %v6386 = vpack.c.b16 %v4826, %v4820
    %v6387 = vpack.c.b16 %v4827, %v4821
    %v6388 = vpack.c.b16 %v4828, %v4822
    %v6389 = vpack.c.b16 %v4829, %v4823
    %v6390 = vpack.c.b16 %v4836, %v4830
    %v6391 = vpack.c.b16 %v4837, %v4831
    %v6392 = vpack.c.b16 %v4838, %v4832
    %v6393 = vpack.c.b16 %v4839, %v4833
    %v6394 = vpack.c.b16 %v4840, %v4834
    %v6395 = vpack.c.b16 %v4841, %v4835
    %v6396 = vpack.c.b16 %v4848, %v4842
    %v6397 = vpack.c.b16 %v4849, %v4843
    %v6398 = vpack.c.b16 %v4850, %v4844
    %v6399 = vpack.c.b16 %v4851, %v4845
    %v6400 = vpack.c.b16 %v4852, %v4846
    %v6401 = vpack.c.b16 %v4853, %v4847
    %v6402 = vpack.c.b16 %v4860, %v4854
    %v6403 = vpack.c.b16 %v4861, %v4855
    %v6404 = vpack.c.b16 %v4862, %v4856
    %v6405 = vpack.c.b16 %v4863, %v4857
    %v6406 = vpack.c.b16 %v4864, %v4858
    %v6407 = vpack.c.b16 %v4865, %v4859
    %v6408 = vpack.c.b16 %v4872, %v4866
    %v6409 = vpack.c.b16 %v4873, %v4867
    %v6410 = vpack.c.b16 %v4874, %v4868
    %v6411 = vpack.c.b16 %v4875, %v4869
    %v6412 = vpack.c.b16 %v4876, %v4870
    %v6413 = vpack.c.b16 %v4877, %v4871
    %v6414 = vpack.c.b16 %v4884, %v4878
    %v6415 = vpack.c.b16 %v4885, %v4879
    %v6416 = vpack.c.b16 %v4886, %v4880
    %v6417 = vpack.c.b16 %v4887, %v4881
    %v6418 = vpack.c.b16 %v4888, %v4882
    %v6419 = vpack.c.b16 %v4889, %v4883
    %v6420 = vpack.c.b16 %v4896, %v4890
    %v6421 = vpack.c.b16 %v4897, %v4891
    %v6422 = vpack.c.b16 %v4898, %v4892
    %v6423 = vpack.c.b16 %v4899, %v4893
    %v6424 = vpack.c.b16 %v4900, %v4894
    %v6425 = vpack.c.b16 %v4901, %v4895
    %v6426 = vpack.c.b16 %v4908, %v4902
    %v6427 = vpack.c.b16 %v4909, %v4903
    %v6428 = vpack.c.b16 %v4910, %v4904
    %v6429 = vpack.c.b16 %v4911, %v4905
    %v6430 = vpack.c.b16 %v4912, %v4906
    %v6431 = vpack.c.b16 %v4913, %v4907
    %v6432 = vpack.c.b16 %v4920, %v4914
    %v6433 = vpack.c.b16 %v4921, %v4915
    %v6434 = vpack.c.b16 %v4922, %v4916
    %v6435 = vpack.c.b16 %v4923, %v4917
    %v6436 = vpack.c.b16 %v4924, %v4918
    %v6437 = vpack.c.b16 %v4925, %v4919
    %v6438 = vpack.c.b16 %v4932, %v4926
    %v6439 = vpack.c.b16 %v4933, %v4927
    %v6440 = vpack.c.b16 %v4934, %v4928
    %v6441 = vpack.c.b16 %v4935, %v4929
    %v6442 = vpack.c.b16 %v4936, %v4930
    %v6443 = vpack.c.b16 %v4937, %v4931
    %v6444 = vpack.c.b16 %v4944, %v4938
    %v6445 = vpack.c.b16 %v4945, %v4939
    %v6446 = vpack.c.b16 %v4946, %v4940
    %v6447 = vpack.c.b16 %v4947, %v4941
    %v6448 = vpack.c.b16 %v4948, %v4942
    %v6449 = vpack.c.b16 %v4949, %v4943
    %v6450 = vpack.c.b16 %v4956, %v4950
    %v6451 = vpack.c.b16 %v4957, %v4951
    %v6452 = vpack.c.b16 %v4958, %v4952
    %v6453 = vpack.c.b16 %v4959, %v4953
    %v6454 = vpack.c.b16 %v4960, %v4954
    %v6455 = vpack.c.b16 %v4961, %v4955
    %v6456 = vpack.c.b16 %v4968, %v4962
    %v6457 = vpack.c.b16 %v4969, %v4963
    %v6458 = vpack.c.b16 %v4970, %v4964
    %v6459 = vpack.c.b16 %v4971, %v4965
    %v6460 = vpack.c.b16 %v4972, %v4966
    %v6461 = vpack.c.b16 %v4973, %v4967
    %v6462 = vpack.c.b16 %v4980, %v4974
    %v6463 = vpack.c.b16 %v4981, %v4975
    %v6464 = vpack.c.b16 %v4982, %v4976
    %v6465 = vpack.c.b16 %v4983, %v4977
    %v6466 = vpack.c.b16 %v4984, %v4978
    %v6467 = vpack.c.b16 %v4985, %v4979
    %v6468 = vpack.c.b16 %v4992, %v4986
    %v6469 = vpack.c.b16 %v4993, %v4987
    %v6470 = vpack.c.b16 %v4994, %v4988
    %v6471 = vpack.c.b16 %v4995, %v4989
    %v6472 = vpack.c.b16 %v4996, %v4990
    %v6473 = vpack.c.b16 %v4997, %v4991
    %v6474 = vpack.c.b16 %v5004, %v4998
    %v6475 = vpack.c.b16 %v5005, %v4999
    %v6476 = vpack.c.b16 %v5006, %v5000
    %v6477 = vpack.c.b16 %v5007, %v5001
    %v6478 = vpack.c.b16 %v5008, %v5002
    %v6479 = vpack.c.b16 %v5009, %v5003
    %v6480 = vpack.c.b16 %v5016, %v5010
    %v6481 = vpack.c.b16 %v5017, %v5011
    %v6482 = vpack.c.b16 %v5018, %v5012
    %v6483 = vpack.c.b16 %v5019, %v5013
    %v6484 = vpack.c.b16 %v5020, %v5014
    %v6485 = vpack.c.b16 %v5021, %v5015
    %v6486 = vpack.c.b16 %v5028, %v5022
    %v6487 = vpack.c.b16 %v5029, %v5023
    %v6488 = vpack.c.b16 %v5030, %v5024
    %v6489 = vpack.c.b16 %v5031, %v5025
    %v6490 = vpack.c.b16 %v5032, %v5026
    %v6491 = vpack.c.b16 %v5033, %v5027
    %v6492 = vpack.c.b16 %v5040, %v5034
    %v6493 = vpack.c.b16 %v5041, %v5035
    %v6494 = vpack.c.b16 %v5042, %v5036
    %v6495 = vpack.c.b16 %v5043, %v5037
    %v6496 = vpack.c.b16 %v5044, %v5038
    %v6497 = vpack.c.b16 %v5045, %v5039
    %v6498 = vpack.c.b16 %v5052, %v5046
    %v6499 = vpack.c.b16 %v5053, %v5047
    %v6500 = vpack.c.b16 %v5054, %v5048
    %v6501 = vpack.c.b16 %v5055, %v5049
    %v6502 = vpack.c.b16 %v5056, %v5050
    %v6503 = vpack.c.b16 %v5057, %v5051
    %v6504 = vpack.c.b16 %v5064, %v5058
    %v6505 = vpack.c.b16 %v5065, %v5059
    %v6506 = vpack.c.b16 %v5066, %v5060
    %v6507 = vpack.c.b16 %v5067, %v5061
    %v6508 = vpack.c.b16 %v5068, %v5062
    %v6509 = vpack.c.b16 %v5069, %v5063
    %v6510 = vpack.c.b16 %v5076, %v5070
    %v6511 = vpack.c.b16 %v5077, %v5071
    %v6512 = vpack.c.b16 %v5078, %v5072
    %v6513 = vpack.c.b16 %v5079, %v5073
    %v6514 = vpack.c.b16 %v5080, %v5074
    %v6515 = vpack.c.b16 %v5081, %v5075
    %v6516 = vpack.c.b16 %v5088, %v5082
    %v6517 = vpack.c.b16 %v5089, %v5083
    %v6518 = vpack.c.b16 %v5090, %v5084
    %v6519 = vpack.c.b16 %v5091, %v5085
    %v6520 = vpack.c.b16 %v5092, %v5086
    %v6521 = vpack.c.b16 %v5093, %v5087
    %v6522 = vpack.c.b16 %v5100, %v5094
    %v6523 = vpack.c.b16 %v5101, %v5095
    %v6524 = vpack.c.b16 %v5102, %v5096
    %v6525 = vpack.c.b16 %v5103, %v5097
    %v6526 = vpack.c.b16 %v5104, %v5098
    %v6527 = vpack.c.b16 %v5105, %v5099
    %v6528 = vpack.c.b16 %v5112, %v5106
    %v6529 = vpack.c.b16 %v5113, %v5107
    %v6530 = vpack.c.b16 %v5114, %v5108
    %v6531 = vpack.c.b16 %v5115, %v5109
    %v6532 = vpack.c.b16 %v5116, %v5110
    %v6533 = vpack.c.b16 %v5117, %v5111
    %v6534 = vpack.c.b16 %v5124, %v5118
    %v6535 = vpack.c.b16 %v5125, %v5119
    %v6536 = vpack.c.b16 %v5126, %v5120
    %v6537 = vpack.c.b16 %v5127, %v5121
    %v6538 = vpack.c.b16 %v5128, %v5122
    %v6539 = vpack.c.b16 %v5129, %v5123
    %v6540 = vpack.c.b16 %v5136, %v5130
    %v6541 = vpack.c.b16 %v5137, %v5131
    %v6542 = vpack.c.b16 %v5138, %v5132
    %v6543 = vpack.c.b16 %v5139, %v5133
    %v6544 = vpack.c.b16 %v5140, %v5134
    %v6545 = vpack.c.b16 %v5141, %v5135
    %v6546 = vpack.c.b16 %v5148, %v5142
    %v6547 = vpack.c.b16 %v5149, %v5143
    %v6548 = vpack.c.b16 %v5150, %v5144
    %v6549 = vpack.c.b16 %v5151, %v5145
    %v6550 = vpack.c.b16 %v5152, %v5146
    %v6551 = vpack.c.b16 %v5153, %v5147
    %v6552 = vpack.c.b16 %v5160, %v5154
    %v6553 = vpack.c.b16 %v5161, %v5155
    %v6554 = vpack.c.b16 %v5162, %v5156
    %v6555 = vpack.c.b16 %v5163, %v5157
    %v6556 = vpack.c.b16 %v5164, %v5158
    %v6557 = vpack.c.b16 %v5165, %v5159
    %v6558 = vpack.c.b16 %v5172, %v5166
    %v6559 = vpack.c.b16 %v5173, %v5167
    %v6560 = vpack.c.b16 %v5174, %v5168
    %v6561 = vpack.c.b16 %v5175, %v5169
    %v6562 = vpack.c.b16 %v5176, %v5170
    %v6563 = vpack.c.b16 %v5177, %v5171
    %v6564 = vpack.c.b16 %v5184, %v5178
    %v6565 = vpack.c.b16 %v5185, %v5179
    %v6566 = vpack.c.b16 %v5186, %v5180
    %v6567 = vpack.c.b16 %v5187, %v5181
    %v6568 = vpack.c.b16 %v5188, %v5182
    %v6569 = vpack.c.b16 %v5189, %v5183
    %v6570 = vpack.c.b16 %v5196, %v5190
    %v6571 = vpack.c.b16 %v5197, %v5191
    %v6572 = vpack.c.b16 %v5198, %v5192
    %v6573 = vpack.c.b16 %v5199, %v5193
    %v6574 = vpack.c.b16 %v5200, %v5194
    %v6575 = vpack.c.b16 %v5201, %v5195
    %v6576 = vpack.c.b16 %v5208, %v5202
    %v6577 = vpack.c.b16 %v5209, %v5203
    %v6578 = vpack.c.b16 %v5210, %v5204
    %v6579 = vpack.c.b16 %v5211, %v5205
    %v6580 = vpack.c.b16 %v5212, %v5206
    %v6581 = vpack.c.b16 %v5213, %v5207
    %v6582 = vpack.c.b16 %v5220, %v5214
    %v6583 = vpack.c.b16 %v5221, %v5215
    %v6584 = vpack.c.b16 %v5222, %v5216
    %v6585 = vpack.c.b16 %v5223, %v5217
    %v6586 = vpack.c.b16 %v5224, %v5218
    %v6587 = vpack.c.b16 %v5225, %v5219
    %v6588 = vpack.c.b16 %v5232, %v5226
    %v6589 = vpack.c.b16 %v5233, %v5227
    %v6590 = vpack.c.b16 %v5234, %v5228
    %v6591 = vpack.c.b16 %v5235, %v5229
    %v6592 = vpack.c.b16 %v5236, %v5230
    %v6593 = vpack.c.b16 %v5237, %v5231
    %v6594 = vpack.c.b16 %v5244, %v5238
    %v6595 = vpack.c.b16 %v5245, %v5239
    %v6596 = vpack.c.b16 %v5246, %v5240
    %v6597 = vpack.c.b16 %v5247, %v5241
    %v6598 = vpack.c.b16 %v5248, %v5242
    %v6599 = vpack.c.b16 %v5249, %v5243
    %v6600 = vpack.c.b16 %v5256, %v5250
    %v6601 = vpack.c.b16 %v5257, %v5251
    %v6602 = vpack.c.b16 %v5258, %v5252
    %v6603 = vpack.c.b16 %v5259, %v5253
    %v6604 = vpack.c.b16 %v5260, %v5254
    %v6605 = vpack.c.b16 %v5261, %v5255
    %v6606 = vpack.c.b16 %v5268, %v5262
    %v6607 = vpack.c.b16 %v5269, %v5263
    %v6608 = vpack.c.b16 %v5270, %v5264
    %v6609 = vpack.c.b16 %v5271, %v5265
    %v6610 = vpack.c.b16 %v5272, %v5266
    %v6611 = vpack.c.b16 %v5273, %v5267
    %v6612 = vpack.c.b16 %v5280, %v5274
    %v6613 = vpack.c.b16 %v5281, %v5275
    %v6614 = vpack.c.b16 %v5282, %v5276
    %v6615 = vpack.c.b16 %v5283, %v5277
    %v6616 = vpack.c.b16 %v5284, %v5278
    %v6617 = vpack.c.b16 %v5285, %v5279
    %v6618 = vpack.c.b16 %v5292, %v5286
    %v6619 = vpack.c.b16 %v5293, %v5287
    %v6620 = vpack.c.b16 %v5294, %v5288
    %v6621 = vpack.c.b16 %v5295, %v5289
    %v6622 = vpack.c.b16 %v5296, %v5290
    %v6623 = vpack.c.b16 %v5297, %v5291
    %v6624 = vpack.c.b16 %v5304, %v5298
    %v6625 = vpack.c.b16 %v5305, %v5299
    %v6626 = vpack.c.b16 %v5306, %v5300
    %v6627 = vpack.c.b16 %v5307, %v5301
    %v6628 = vpack.c.b16 %v5308, %v5302
    %v6629 = vpack.c.b16 %v5309, %v5303
    %v6630 = vpack.c.b16 %v5316, %v5310
    %v6631 = vpack.c.b16 %v5317, %v5311
    %v6632 = vpack.c.b16 %v5318, %v5312
    %v6633 = vpack.c.b16 %v5319, %v5313
    %v6634 = vpack.c.b16 %v5320, %v5314
    %v6635 = vpack.c.b16 %v5321, %v5315
    %v6636 = vpack.c.b16 %v5328, %v5322
    %v6637 = vpack.c.b16 %v5329, %v5323
    %v6638 = vpack.c.b16 %v5330, %v5324
    %v6639 = vpack.c.b16 %v5331, %v5325
    %v6640 = vpack.c.b16 %v5332, %v5326
    %v6641 = vpack.c.b16 %v5333, %v5327
    %v6642 = vpack.c.b16 %v5340, %v5334
    %v6643 = vpack.c.b16 %v5341, %v5335
    %v6644 = vpack.c.b16 %v5342, %v5336
    %v6645 = vpack.c.b16 %v5343, %v5337
    %v6646 = vpack.c.b16 %v5344, %v5338
    %v6647 = vpack.c.b16 %v5345, %v5339
    %v6648 = vpack.c.b16 %v5352, %v5346
    %v6649 = vpack.c.b16 %v5353, %v5347
    %v6650 = vpack.c.b16 %v5354, %v5348
    %v6651 = vpack.c.b16 %v5355, %v5349
    %v6652 = vpack.c.b16 %v5356, %v5350
    %v6653 = vpack.c.b16 %v5357, %v5351
    %v6654 = vpack.c.b16 %v5364, %v5358
    %v6655 = vpack.c.b16 %v5365, %v5359
    %v6656 = vpack.c.b16 %v5366, %v5360
    %v6657 = vpack.c.b16 %v5367, %v5361
    %v6658 = vpack.c.b16 %v5368, %v5362
    %v6659 = vpack.c.b16 %v5369, %v5363
    %v6660 = vpack.c.b16 %v5376, %v5370
    %v6661 = vpack.c.b16 %v5377, %v5371
    %v6662 = vpack.c.b16 %v5378, %v5372
    %v6663 = vpack.c.b16 %v5379, %v5373
    %v6664 = vpack.c.b16 %v5380, %v5374
    %v6665 = vpack.c.b16 %v5381, %v5375
    %v6666 = vpack.c.b16 %v5388, %v5382
    %v6667 = vpack.c.b16 %v5389, %v5383
    %v6668 = vpack.c.b16 %v5390, %v5384
    %v6669 = vpack.c.b16 %v5391, %v5385
    %v6670 = vpack.c.b16 %v5392, %v5386
    %v6671 = vpack.c.b16 %v5393, %v5387
    %v6672 = vpack.c.b16 %v5400, %v5394
    %v6673 = vpack.c.b16 %v5401, %v5395
    %v6674 = vpack.c.b16 %v5402, %v5396
    %v6675 = vpack.c.b16 %v5403, %v5397
    %v6676 = vpack.c.b16 %v5404, %v5398
    %v6677 = vpack.c.b16 %v5405, %v5399
    %v6678 = vpack.c.b16 %v5412, %v5406
    %v6679 = vpack.c.b16 %v5413, %v5407
    %v6680 = vpack.c.b16 %v5414, %v5408
    %v6681 = vpack.c.b16 %v5415, %v5409
    %v6682 = vpack.c.b16 %v5416, %v5410
    %v6683 = vpack.c.b16 %v5417, %v5411
    %v6684 = vpack.c.b16 %v5424, %v5418
    %v6685 = vpack.c.b16 %v5425, %v5419
    %v6686 = vpack.c.b16 %v5426, %v5420
    %v6687 = vpack.c.b16 %v5427, %v5421
    %v6688 = vpack.c.b16 %v5428, %v5422
    %v6689 = vpack.c.b16 %v5429, %v5423
    %v6690 = vpack.c.b16 %v5436, %v5430
    %v6691 = vpack.c.b16 %v5437, %v5431
    %v6692 = vpack.c.b16 %v5438, %v5432
    %v6693 = vpack.c.b16 %v5439, %v5433
    %v6694 = vpack.c.b16 %v5440, %v5434
    %v6695 = vpack.c.b16 %v5441, %v5435
    %v6696 = vpack.c.b16 %v5448, %v5442
    %v6697 = vpack.c.b16 %v5449, %v5443
    %v6698 = vpack.c.b16 %v5450, %v5444
    %v6699 = vpack.c.b16 %v5451, %v5445
    %v6700 = vpack.c.b16 %v5452, %v5446
    %v6701 = vpack.c.b16 %v5453, %v5447
    %v6702 = vpack.c.b16 %v5460, %v5454
    %v6703 = vpack.c.b16 %v5461, %v5455
    %v6704 = vpack.c.b16 %v5462, %v5456
    %v6705 = vpack.c.b16 %v5463, %v5457
    %v6706 = vpack.c.b16 %v5464, %v5458
    %v6707 = vpack.c.b16 %v5465, %v5459
    %v6708 = vpack.c.b16 %v5472, %v5466
    %v6709 = vpack.c.b16 %v5473, %v5467
    %v6710 = vpack.c.b16 %v5474, %v5468
    %v6711 = vpack.c.b16 %v5475, %v5469
    %v6712 = vpack.c.b16 %v5476, %v5470
    %v6713 = vpack.c.b16 %v5477, %v5471
    %v6714 = vpack.c.b16 %v5484, %v5478
    %v6715 = vpack.c.b16 %v5485, %v5479
    %v6716 = vpack.c.b16 %v5486, %v5480
    %v6717 = vpack.c.b16 %v5487, %v5481
    %v6718 = vpack.c.b16 %v5488, %v5482
    %v6719 = vpack.c.b16 %v5489, %v5483
    %v6720 = vpack.c.b16 %v5496, %v5490
    %v6721 = vpack.c.b16 %v5497, %v5491
    %v6722 = vpack.c.b16 %v5498, %v5492
    %v6723 = vpack.c.b16 %v5499, %v5493
    %v6724 = vpack.c.b16 %v5500, %v5494
    %v6725 = vpack.c.b16 %v5501, %v5495
    %v6726 = vpack.c.b16 %v5508, %v5502
    %v6727 = vpack.c.b16 %v5509, %v5503
    %v6728 = vpack.c.b16 %v5510, %v5504
    %v6729 = vpack.c.b16 %v5511, %v5505
    %v6730 = vpack.c.b16 %v5512, %v5506
    %v6731 = vpack.c.b16 %v5513, %v5507
    %v6732 = vpack.c.b16 %v5520, %v5514
    %v6733 = vpack.c.b16 %v5521, %v5515
    %v6734 = vpack.c.b16 %v5522, %v5516
    %v6735 = vpack.c.b16 %v5523, %v5517
    %v6736 = vpack.c.b16 %v5524, %v5518
    %v6737 = vpack.c.b16 %v5525, %v5519
    %v6738 = vpack.c.b16 %v5532, %v5526
    %v6739 = vpack.c.b16 %v5533, %v5527
    %v6740 = vpack.c.b16 %v5534, %v5528
    %v6741 = vpack.c.b16 %v5535, %v5529
    %v6742 = vpack.c.b16 %v5536, %v5530
    %v6743 = vpack.c.b16 %v5537, %v5531
    %v6744 = vpack.c.b16 %v5544, %v5538
    %v6745 = vpack.c.b16 %v5545, %v5539
    %v6746 = vpack.c.b16 %v5546, %v5540
    %v6747 = vpack.c.b16 %v5547, %v5541
    %v6748 = vpack.c.b16 %v5548, %v5542
    %v6749 = vpack.c.b16 %v5549, %v5543
    %7950 = vmatprep.subr.bf16.mxu0 %v5593
    %7951 = vmatpush1.bf16.msra.mxu0 %v5592
    %7952 = vmatprep.subr.bf16.mxu0 %v5587
    %7953 = vmatpush1.bf16.msra.mxu0 %v5586
    %7954 = vmatprep.subr.bf16.mxu0 %v5581
    %7955 = vmatpush1.bf16.msra.mxu0 %v5580
    %7956 = vmatprep.subr.bf16.mxu0 %v5575
    %7957 = vmatpush1.bf16.msra.mxu0 %v5574
    %7958 = vmatprep.subr.bf16.mxu0 %v5569
    %7959 = vmatpush1.bf16.msra.mxu0 %v5568
    %7960 = vmatprep.subr.bf16.mxu0 %v5563
    %7961 = vmatpush1.bf16.msra.mxu0 %v5562
    %7962 = vmatprep.subr.bf16.mxu0 %v5557
    %7963 = vmatpush1.bf16.msra.mxu0 %v5556
    %7964 = vmatprep.subr.bf16.mxu0 %v5551
    %7965 = vmatpush1.bf16.msra.mxu0 %v5550
    %7966 = vmatprep.subr.bf16.mxu0 %v5641
    %7967 = vmatpush2.bf16.msra.mxu0 %v5640
    %7968 = vmatprep.subr.bf16.mxu0 %v5635
    %7969 = vmatpush2.bf16.msra.mxu0 %v5634
    %7970 = vmatprep.subr.bf16.mxu0 %v5629
    %7971 = vmatpush2.bf16.msra.mxu0 %v5628
    %7972 = vmatprep.subr.bf16.mxu0 %v5623
    %7973 = vmatpush2.bf16.msra.mxu0 %v5622
    %7974 = vmatprep.subr.bf16.mxu0 %v5617
    %7975 = vmatpush2.bf16.msra.mxu0 %v5616
    %7976 = vmatprep.subr.bf16.mxu0 %v5611
    %7977 = vmatpush2.bf16.msra.mxu0 %v5610
    %7978 = vmatprep.subr.bf16.mxu0 %v5605
    %7979 = vmatpush2.bf16.msra.mxu0 %v5604
    %7980 = vmatprep.subr.bf16.mxu0 %v5599
    %7981 = vmatpush2.bf16.msra.mxu0 %v5598
    %7982 = vmatprep.mubr.bf16.mxu0 %v726
    %7983 = vmatmul.mubr.bf16.gmra.mxu0 %v725
    %v7984 = vpop.f32.mrf.mxu0
    %v7985 = vadd.f32 0.0, %v7984
    %v7986 = vpop.f32.mrf.mxu0
    %v7987 = vadd.f32 0.0, %v7986
    %v7988 = vpop.f32.mrf.mxu0
    %v7989 = vpop.f32.mrf.mxu0
    %7990 = vdwg.mxu0
    %7991 = vmatprep.subr.bf16.mxu0 %v5689
    %7992 = vmatpush1.bf16.msra.mxu0 %v5688
    %7993 = vmatprep.subr.bf16.mxu0 %v5683
    %7994 = vmatpush1.bf16.msra.mxu0 %v5682
    %7995 = vmatprep.subr.bf16.mxu0 %v5677
    %7996 = vmatpush1.bf16.msra.mxu0 %v5676
    %7997 = vmatprep.subr.bf16.mxu0 %v5671
    %7998 = vmatpush1.bf16.msra.mxu0 %v5670
    %7999 = vmatprep.subr.bf16.mxu0 %v5665
    %8000 = vmatpush1.bf16.msra.mxu0 %v5664
    %8001 = vmatprep.subr.bf16.mxu0 %v5659
    %8002 = vmatpush1.bf16.msra.mxu0 %v5658
    %8003 = vmatprep.subr.bf16.mxu0 %v5653
    %8004 = vmatpush1.bf16.msra.mxu0 %v5652
    %8005 = vmatprep.subr.bf16.mxu0 %v5647
    %8006 = vmatpush1.bf16.msra.mxu0 %v5646
    %8007 = vmatprep.subr.bf16.mxu0 %v5737
    %8008 = vmatpush2.bf16.msra.mxu0 %v5736
    %8009 = vmatprep.subr.bf16.mxu0 %v5731
    %8010 = vmatpush2.bf16.msra.mxu0 %v5730
    %8011 = vmatprep.subr.bf16.mxu0 %v5725
    %8012 = vmatpush2.bf16.msra.mxu0 %v5724
    %8013 = vmatprep.subr.bf16.mxu0 %v5719
    %8014 = vmatpush2.bf16.msra.mxu0 %v5718
    %8015 = vmatprep.subr.bf16.mxu0 %v5713
    %8016 = vmatpush2.bf16.msra.mxu0 %v5712
    %8017 = vmatprep.subr.bf16.mxu0 %v5707
    %8018 = vmatpush2.bf16.msra.mxu0 %v5706
    %8019 = vmatprep.subr.bf16.mxu0 %v5701
    %8020 = vmatpush2.bf16.msra.mxu0 %v5700
    %8021 = vmatprep.subr.bf16.mxu0 %v5695
    %8022 = vmatpush2.bf16.msra.mxu0 %v5694
    %8023 = vmatprep.mubr.bf16.mxu0 %v728
    %8024 = vmatmul.mubr.bf16.gmra.mxu0 %v727
    %v8025 = vpop.f32.mrf.mxu0
    %v8026 = vadd.f32 %v7985, %v8025
    %v8027 = vpop.f32.mrf.mxu0
    %v8028 = vadd.f32 %v7987, %v8027
    %v8029 = vpop.f32.mrf.mxu0
    %v8030 = vpop.f32.mrf.mxu0
    %8031 = vdwg.mxu0
    %8032 = vmatprep.subr.bf16.mxu0 %v5785
    %8033 = vmatpush1.bf16.msra.mxu0 %v5784
    %8034 = vmatprep.subr.bf16.mxu0 %v5779
    %8035 = vmatpush1.bf16.msra.mxu0 %v5778
    %8036 = vmatprep.subr.bf16.mxu0 %v5773
    %8037 = vmatpush1.bf16.msra.mxu0 %v5772
    %8038 = vmatprep.subr.bf16.mxu0 %v5767
    %8039 = vmatpush1.bf16.msra.mxu0 %v5766
    %8040 = vmatprep.subr.bf16.mxu0 %v5761
    %8041 = vmatpush1.bf16.msra.mxu0 %v5760
    %8042 = vmatprep.subr.bf16.mxu0 %v5755
    %8043 = vmatpush1.bf16.msra.mxu0 %v5754
    %8044 = vmatprep.subr.bf16.mxu0 %v5749
    %8045 = vmatpush1.bf16.msra.mxu0 %v5748
    %8046 = vmatprep.subr.bf16.mxu0 %v5743
    %8047 = vmatpush1.bf16.msra.mxu0 %v5742
    %8048 = vmatprep.subr.bf16.mxu0 %v5833
    %8049 = vmatpush2.bf16.msra.mxu0 %v5832
    %8050 = vmatprep.subr.bf16.mxu0 %v5827
    %8051 = vmatpush2.bf16.msra.mxu0 %v5826
    %8052 = vmatprep.subr.bf16.mxu0 %v5821
    %8053 = vmatpush2.bf16.msra.mxu0 %v5820
    %8054 = vmatprep.subr.bf16.mxu0 %v5815
    %8055 = vmatpush2.bf16.msra.mxu0 %v5814
    %8056 = vmatprep.subr.bf16.mxu0 %v5809
    %8057 = vmatpush2.bf16.msra.mxu0 %v5808
    %8058 = vmatprep.subr.bf16.mxu0 %v5803
    %8059 = vmatpush2.bf16.msra.mxu0 %v5802
    %8060 = vmatprep.subr.bf16.mxu0 %v5797
    %8061 = vmatpush2.bf16.msra.mxu0 %v5796
    %8062 = vmatprep.subr.bf16.mxu0 %v5791
    %8063 = vmatpush2.bf16.msra.mxu0 %v5790
    %8064 = vmatprep.mubr.bf16.mxu0 %v730
    %8065 = vmatmul.mubr.bf16.gmra.mxu0 %v729
    %v8066 = vpop.f32.mrf.mxu0
    %v8067 = vadd.f32 %v8026, %v8066
    %v8068 = vpop.f32.mrf.mxu0
    %v8069 = vadd.f32 %v8028, %v8068
    %v8070 = vpop.f32.mrf.mxu0
    %v8071 = vpop.f32.mrf.mxu0
    %8072 = vdwg.mxu0
    %8073 = vmatprep.subr.bf16.mxu0 %v5881
    %8074 = vmatpush1.bf16.msra.mxu0 %v5880
    %8075 = vmatprep.subr.bf16.mxu0 %v5875
    %8076 = vmatpush1.bf16.msra.mxu0 %v5874
    %8077 = vmatprep.subr.bf16.mxu0 %v5869
    %8078 = vmatpush1.bf16.msra.mxu0 %v5868
    %8079 = vmatprep.subr.bf16.mxu0 %v5863
    %8080 = vmatpush1.bf16.msra.mxu0 %v5862
    %8081 = vmatprep.subr.bf16.mxu0 %v5857
    %8082 = vmatpush1.bf16.msra.mxu0 %v5856
    %8083 = vmatprep.subr.bf16.mxu0 %v5851
    %8084 = vmatpush1.bf16.msra.mxu0 %v5850
    %8085 = vmatprep.subr.bf16.mxu0 %v5845
    %8086 = vmatpush1.bf16.msra.mxu0 %v5844
    %8087 = vmatprep.subr.bf16.mxu0 %v5839
    %8088 = vmatpush1.bf16.msra.mxu0 %v5838
    %8089 = vmatprep.subr.bf16.mxu0 %v5929
    %8090 = vmatpush2.bf16.msra.mxu0 %v5928
    %8091 = vmatprep.subr.bf16.mxu0 %v5923
    %8092 = vmatpush2.bf16.msra.mxu0 %v5922
    %8093 = vmatprep.subr.bf16.mxu0 %v5917
    %8094 = vmatpush2.bf16.msra.mxu0 %v5916
    %8095 = vmatprep.subr.bf16.mxu0 %v5911
    %8096 = vmatpush2.bf16.msra.mxu0 %v5910
    %8097 = vmatprep.subr.bf16.mxu0 %v5905
    %8098 = vmatpush2.bf16.msra.mxu0 %v5904
    %8099 = vmatprep.subr.bf16.mxu0 %v5899
    %8100 = vmatpush2.bf16.msra.mxu0 %v5898
    %8101 = vmatprep.subr.bf16.mxu0 %v5893
    %8102 = vmatpush2.bf16.msra.mxu0 %v5892
    %8103 = vmatprep.subr.bf16.mxu0 %v5887
    %8104 = vmatpush2.bf16.msra.mxu0 %v5886
    %8105 = vmatprep.mubr.bf16.mxu0 %v732
    %8106 = vmatmul.mubr.bf16.gmra.mxu0 %v731
    %v8107 = vpop.f32.mrf.mxu0
    %v8108 = vadd.f32 %v8067, %v8107
    %v8109 = vpop.f32.mrf.mxu0
    %v8110 = vadd.f32 %v8069, %v8109
    %v8111 = vpop.f32.mrf.mxu0
    %v8112 = vpop.f32.mrf.mxu0
    %8113 = vdwg.mxu0
    %8114 = vmatprep.subr.bf16.mxu0 %v5977
    %8115 = vmatpush1.bf16.msra.mxu0 %v5976
    %8116 = vmatprep.subr.bf16.mxu0 %v5971
    %8117 = vmatpush1.bf16.msra.mxu0 %v5970
    %8118 = vmatprep.subr.bf16.mxu0 %v5965
    %8119 = vmatpush1.bf16.msra.mxu0 %v5964
    %8120 = vmatprep.subr.bf16.mxu0 %v5959
    %8121 = vmatpush1.bf16.msra.mxu0 %v5958
    %8122 = vmatprep.subr.bf16.mxu0 %v5953
    %8123 = vmatpush1.bf16.msra.mxu0 %v5952
    %8124 = vmatprep.subr.bf16.mxu0 %v5947
    %8125 = vmatpush1.bf16.msra.mxu0 %v5946
    %8126 = vmatprep.subr.bf16.mxu0 %v5941
    %8127 = vmatpush1.bf16.msra.mxu0 %v5940
    %8128 = vmatprep.subr.bf16.mxu0 %v5935
    %8129 = vmatpush1.bf16.msra.mxu0 %v5934
    %8130 = vmatprep.subr.bf16.mxu0 %v6025
    %8131 = vmatpush2.bf16.msra.mxu0 %v6024
    %8132 = vmatprep.subr.bf16.mxu0 %v6019
    %8133 = vmatpush2.bf16.msra.mxu0 %v6018
    %8134 = vmatprep.subr.bf16.mxu0 %v6013
    %8135 = vmatpush2.bf16.msra.mxu0 %v6012
    %8136 = vmatprep.subr.bf16.mxu0 %v6007
    %8137 = vmatpush2.bf16.msra.mxu0 %v6006
    %8138 = vmatprep.subr.bf16.mxu0 %v6001
    %8139 = vmatpush2.bf16.msra.mxu0 %v6000
    %8140 = vmatprep.subr.bf16.mxu0 %v5995
    %8141 = vmatpush2.bf16.msra.mxu0 %v5994
    %8142 = vmatprep.subr.bf16.mxu0 %v5989
    %8143 = vmatpush2.bf16.msra.mxu0 %v5988
    %8144 = vmatprep.subr.bf16.mxu0 %v5983
    %8145 = vmatpush2.bf16.msra.mxu0 %v5982
    %8146 = vmatprep.mubr.bf16.mxu0 %v734
    %8147 = vmatmul.mubr.bf16.gmra.mxu0 %v733
    %v8148 = vpop.f32.mrf.mxu0
    %v8149 = vadd.f32 %v8108, %v8148
    %v8150 = vpop.f32.mrf.mxu0
    %v8151 = vadd.f32 %v8110, %v8150
    %v8152 = vpop.f32.mrf.mxu0
    %v8153 = vpop.f32.mrf.mxu0
    %8154 = vdwg.mxu0
    %8155 = vmatprep.subr.bf16.mxu0 %v6073
    %8156 = vmatpush1.bf16.msra.mxu0 %v6072
    %8157 = vmatprep.subr.bf16.mxu0 %v6067
    %8158 = vmatpush1.bf16.msra.mxu0 %v6066
    %8159 = vmatprep.subr.bf16.mxu0 %v6061
    %8160 = vmatpush1.bf16.msra.mxu0 %v6060
    %8161 = vmatprep.subr.bf16.mxu0 %v6055
    %8162 = vmatpush1.bf16.msra.mxu0 %v6054
    %8163 = vmatprep.subr.bf16.mxu0 %v6049
    %8164 = vmatpush1.bf16.msra.mxu0 %v6048
    %8165 = vmatprep.subr.bf16.mxu0 %v6043
    %8166 = vmatpush1.bf16.msra.mxu0 %v6042
    %8167 = vmatprep.subr.bf16.mxu0 %v6037
    %8168 = vmatpush1.bf16.msra.mxu0 %v6036
    %8169 = vmatprep.subr.bf16.mxu0 %v6031
    %8170 = vmatpush1.bf16.msra.mxu0 %v6030
    %8171 = vmatprep.subr.bf16.mxu0 %v6121
    %8172 = vmatpush2.bf16.msra.mxu0 %v6120
    %8173 = vmatprep.subr.bf16.mxu0 %v6115
    %8174 = vmatpush2.bf16.msra.mxu0 %v6114
    %8175 = vmatprep.subr.bf16.mxu0 %v6109
    %8176 = vmatpush2.bf16.msra.mxu0 %v6108
    %8177 = vmatprep.subr.bf16.mxu0 %v6103
    %8178 = vmatpush2.bf16.msra.mxu0 %v6102
    %8179 = vmatprep.subr.bf16.mxu0 %v6097
    %8180 = vmatpush2.bf16.msra.mxu0 %v6096
    %8181 = vmatprep.subr.bf16.mxu0 %v6091
    %8182 = vmatpush2.bf16.msra.mxu0 %v6090
    %8183 = vmatprep.subr.bf16.mxu0 %v6085
    %8184 = vmatpush2.bf16.msra.mxu0 %v6084
    %8185 = vmatprep.subr.bf16.mxu0 %v6079
    %8186 = vmatpush2.bf16.msra.mxu0 %v6078
    %8187 = vmatprep.mubr.bf16.mxu0 %v736
    %8188 = vmatmul.mubr.bf16.gmra.mxu0 %v735
    %v8189 = vpop.f32.mrf.mxu0
    %v8190 = vadd.f32 %v8149, %v8189
    %v8191 = vpop.f32.mrf.mxu0
    %v8192 = vadd.f32 %v8151, %v8191
    %v8193 = vpop.f32.mrf.mxu0
    %v8194 = vpop.f32.mrf.mxu0
    %8195 = vdwg.mxu0
    %8196 = vmatprep.subr.bf16.mxu0 %v6169
    %8197 = vmatpush1.bf16.msra.mxu0 %v6168
    %8198 = vmatprep.subr.bf16.mxu0 %v6163
    %8199 = vmatpush1.bf16.msra.mxu0 %v6162
    %8200 = vmatprep.subr.bf16.mxu0 %v6157
    %8201 = vmatpush1.bf16.msra.mxu0 %v6156
    %8202 = vmatprep.subr.bf16.mxu0 %v6151
    %8203 = vmatpush1.bf16.msra.mxu0 %v6150
    %8204 = vmatprep.subr.bf16.mxu0 %v6145
    %8205 = vmatpush1.bf16.msra.mxu0 %v6144
    %8206 = vmatprep.subr.bf16.mxu0 %v6139
    %8207 = vmatpush1.bf16.msra.mxu0 %v6138
    %8208 = vmatprep.subr.bf16.mxu0 %v6133
    %8209 = vmatpush1.bf16.msra.mxu0 %v6132
    %8210 = vmatprep.subr.bf16.mxu0 %v6127
    %8211 = vmatpush1.bf16.msra.mxu0 %v6126
    %8212 = vmatprep.subr.bf16.mxu0 %v6217
    %8213 = vmatpush2.bf16.msra.mxu0 %v6216
    %8214 = vmatprep.subr.bf16.mxu0 %v6211
    %8215 = vmatpush2.bf16.msra.mxu0 %v6210
    %8216 = vmatprep.subr.bf16.mxu0 %v6205
    %8217 = vmatpush2.bf16.msra.mxu0 %v6204
    %8218 = vmatprep.subr.bf16.mxu0 %v6199
    %8219 = vmatpush2.bf16.msra.mxu0 %v6198
    %8220 = vmatprep.subr.bf16.mxu0 %v6193
    %8221 = vmatpush2.bf16.msra.mxu0 %v6192
    %8222 = vmatprep.subr.bf16.mxu0 %v6187
    %8223 = vmatpush2.bf16.msra.mxu0 %v6186
    %8224 = vmatprep.subr.bf16.mxu0 %v6181
    %8225 = vmatpush2.bf16.msra.mxu0 %v6180
    %8226 = vmatprep.subr.bf16.mxu0 %v6175
    %8227 = vmatpush2.bf16.msra.mxu0 %v6174
    %8228 = vmatprep.mubr.bf16.mxu0 %v738
    %8229 = vmatmul.mubr.bf16.gmra.mxu0 %v737
    %v8230 = vpop.f32.mrf.mxu0
    %v8231 = vadd.f32 %v8190, %v8230
    %v8232 = vpop.f32.mrf.mxu0
    %v8233 = vadd.f32 %v8192, %v8232
    %v8234 = vpop.f32.mrf.mxu0
    %v8235 = vpop.f32.mrf.mxu0
    %8236 = vdwg.mxu0
    %8237 = vmatprep.subr.bf16.mxu0 %v6265
    %8238 = vmatpush1.bf16.msra.mxu0 %v6264
    %8239 = vmatprep.subr.bf16.mxu0 %v6259
    %8240 = vmatpush1.bf16.msra.mxu0 %v6258
    %8241 = vmatprep.subr.bf16.mxu0 %v6253
    %8242 = vmatpush1.bf16.msra.mxu0 %v6252
    %8243 = vmatprep.subr.bf16.mxu0 %v6247
    %8244 = vmatpush1.bf16.msra.mxu0 %v6246
    %8245 = vmatprep.subr.bf16.mxu0 %v6241
    %8246 = vmatpush1.bf16.msra.mxu0 %v6240
    %8247 = vmatprep.subr.bf16.mxu0 %v6235
    %8248 = vmatpush1.bf16.msra.mxu0 %v6234
    %8249 = vmatprep.subr.bf16.mxu0 %v6229
    %8250 = vmatpush1.bf16.msra.mxu0 %v6228
    %8251 = vmatprep.subr.bf16.mxu0 %v6223
    %8252 = vmatpush1.bf16.msra.mxu0 %v6222
    %8253 = vmatprep.subr.bf16.mxu0 %v6313
    %8254 = vmatpush2.bf16.msra.mxu0 %v6312
    %8255 = vmatprep.subr.bf16.mxu0 %v6307
    %8256 = vmatpush2.bf16.msra.mxu0 %v6306
    %8257 = vmatprep.subr.bf16.mxu0 %v6301
    %8258 = vmatpush2.bf16.msra.mxu0 %v6300
    %8259 = vmatprep.subr.bf16.mxu0 %v6295
    %8260 = vmatpush2.bf16.msra.mxu0 %v6294
    %8261 = vmatprep.subr.bf16.mxu0 %v6289
    %8262 = vmatpush2.bf16.msra.mxu0 %v6288
    %8263 = vmatprep.subr.bf16.mxu0 %v6283
    %8264 = vmatpush2.bf16.msra.mxu0 %v6282
    %8265 = vmatprep.subr.bf16.mxu0 %v6277
    %8266 = vmatpush2.bf16.msra.mxu0 %v6276
    %8267 = vmatprep.subr.bf16.mxu0 %v6271
    %8268 = vmatpush2.bf16.msra.mxu0 %v6270
    %8269 = vmatprep.mubr.bf16.mxu0 %v740
    %8270 = vmatmul.mubr.bf16.gmra.mxu0 %v739
    %v8271 = vpop.f32.mrf.mxu0
    %v8272 = vadd.f32 %v8231, %v8271
    %v8273 = vpop.f32.mrf.mxu0
    %v8274 = vadd.f32 %v8233, %v8273
    %v8275 = vpop.f32.mrf.mxu0
    %v8276 = vpop.f32.mrf.mxu0
    %8277 = vdwg.mxu0
    %8278 = vmatprep.subr.bf16.mxu0 %v6361
    %8279 = vmatpush1.bf16.msra.mxu0 %v6360
    %8280 = vmatprep.subr.bf16.mxu0 %v6355
    %8281 = vmatpush1.bf16.msra.mxu0 %v6354
    %8282 = vmatprep.subr.bf16.mxu0 %v6349
    %8283 = vmatpush1.bf16.msra.mxu0 %v6348
    %8284 = vmatprep.subr.bf16.mxu0 %v6343
    %8285 = vmatpush1.bf16.msra.mxu0 %v6342
    %8286 = vmatprep.subr.bf16.mxu0 %v6337
    %8287 = vmatpush1.bf16.msra.mxu0 %v6336
    %8288 = vmatprep.subr.bf16.mxu0 %v6331
    %8289 = vmatpush1.bf16.msra.mxu0 %v6330
    %8290 = vmatprep.subr.bf16.mxu0 %v6325
    %8291 = vmatpush1.bf16.msra.mxu0 %v6324
    %8292 = vmatprep.subr.bf16.mxu0 %v6319
    %8293 = vmatpush1.bf16.msra.mxu0 %v6318
    %8294 = vmatprep.subr.bf16.mxu0 %v6409
    %8295 = vmatpush2.bf16.msra.mxu0 %v6408
    %8296 = vmatprep.subr.bf16.mxu0 %v6403
    %8297 = vmatpush2.bf16.msra.mxu0 %v6402
    %8298 = vmatprep.subr.bf16.mxu0 %v6397
    %8299 = vmatpush2.bf16.msra.mxu0 %v6396
    %8300 = vmatprep.subr.bf16.mxu0 %v6391
    %8301 = vmatpush2.bf16.msra.mxu0 %v6390
    %8302 = vmatprep.subr.bf16.mxu0 %v6385
    %8303 = vmatpush2.bf16.msra.mxu0 %v6384
    %8304 = vmatprep.subr.bf16.mxu0 %v6379
    %8305 = vmatpush2.bf16.msra.mxu0 %v6378
    %8306 = vmatprep.subr.bf16.mxu0 %v6373
    %8307 = vmatpush2.bf16.msra.mxu0 %v6372
    %8308 = vmatprep.subr.bf16.mxu0 %v6367
    %8309 = vmatpush2.bf16.msra.mxu0 %v6366
    %8310 = vmatprep.mubr.bf16.mxu0 %v742
    %8311 = vmatmul.mubr.bf16.gmra.mxu0 %v741
    %v8312 = vpop.f32.mrf.mxu0
    %v8313 = vadd.f32 %v8272, %v8312
    %v8314 = vpop.f32.mrf.mxu0
    %v8315 = vadd.f32 %v8274, %v8314
    %v8316 = vpop.f32.mrf.mxu0
    %v8317 = vpop.f32.mrf.mxu0
    %8318 = vdwg.mxu0
    %8319 = vmatprep.subr.bf16.mxu0 %v6457
    %8320 = vmatpush1.bf16.msra.mxu0 %v6456
    %8321 = vmatprep.subr.bf16.mxu0 %v6451
    %8322 = vmatpush1.bf16.msra.mxu0 %v6450
    %8323 = vmatprep.subr.bf16.mxu0 %v6445
    %8324 = vmatpush1.bf16.msra.mxu0 %v6444
    %8325 = vmatprep.subr.bf16.mxu0 %v6439
    %8326 = vmatpush1.bf16.msra.mxu0 %v6438
    %8327 = vmatprep.subr.bf16.mxu0 %v6433
    %8328 = vmatpush1.bf16.msra.mxu0 %v6432
    %8329 = vmatprep.subr.bf16.mxu0 %v6427
    %8330 = vmatpush1.bf16.msra.mxu0 %v6426
    %8331 = vmatprep.subr.bf16.mxu0 %v6421
    %8332 = vmatpush1.bf16.msra.mxu0 %v6420
    %8333 = vmatprep.subr.bf16.mxu0 %v6415
    %8334 = vmatpush1.bf16.msra.mxu0 %v6414
    %8335 = vmatprep.subr.bf16.mxu0 %v6505
    %8336 = vmatpush2.bf16.msra.mxu0 %v6504
    %8337 = vmatprep.subr.bf16.mxu0 %v6499
    %8338 = vmatpush2.bf16.msra.mxu0 %v6498
    %8339 = vmatprep.subr.bf16.mxu0 %v6493
    %8340 = vmatpush2.bf16.msra.mxu0 %v6492
    %8341 = vmatprep.subr.bf16.mxu0 %v6487
    %8342 = vmatpush2.bf16.msra.mxu0 %v6486
    %8343 = vmatprep.subr.bf16.mxu0 %v6481
    %8344 = vmatpush2.bf16.msra.mxu0 %v6480
    %8345 = vmatprep.subr.bf16.mxu0 %v6475
    %8346 = vmatpush2.bf16.msra.mxu0 %v6474
    %8347 = vmatprep.subr.bf16.mxu0 %v6469
    %8348 = vmatpush2.bf16.msra.mxu0 %v6468
    %8349 = vmatprep.subr.bf16.mxu0 %v6463
    %8350 = vmatpush2.bf16.msra.mxu0 %v6462
    %8351 = vmatprep.mubr.bf16.mxu0 %v744
    %8352 = vmatmul.mubr.bf16.gmra.mxu0 %v743
    %v8353 = vpop.f32.mrf.mxu0
    %v8354 = vadd.f32 %v8313, %v8353
    %v8355 = vpop.f32.mrf.mxu0
    %v8356 = vadd.f32 %v8315, %v8355
    %v8357 = vpop.f32.mrf.mxu0
    %v8358 = vpop.f32.mrf.mxu0
    %8359 = vdwg.mxu0
    %8360 = vmatprep.subr.bf16.mxu0 %v6553
    %8361 = vmatpush1.bf16.msra.mxu0 %v6552
    %8362 = vmatprep.subr.bf16.mxu0 %v6547
    %8363 = vmatpush1.bf16.msra.mxu0 %v6546
    %8364 = vmatprep.subr.bf16.mxu0 %v6541
    %8365 = vmatpush1.bf16.msra.mxu0 %v6540
    %8366 = vmatprep.subr.bf16.mxu0 %v6535
    %8367 = vmatpush1.bf16.msra.mxu0 %v6534
    %8368 = vmatprep.subr.bf16.mxu0 %v6529
    %8369 = vmatpush1.bf16.msra.mxu0 %v6528
    %8370 = vmatprep.subr.bf16.mxu0 %v6523
    %8371 = vmatpush1.bf16.msra.mxu0 %v6522
    %8372 = vmatprep.subr.bf16.mxu0 %v6517
    %8373 = vmatpush1.bf16.msra.mxu0 %v6516
    %8374 = vmatprep.subr.bf16.mxu0 %v6511
    %8375 = vmatpush1.bf16.msra.mxu0 %v6510
    %8376 = vmatprep.subr.bf16.mxu0 %v6601
    %8377 = vmatpush2.bf16.msra.mxu0 %v6600
    %8378 = vmatprep.subr.bf16.mxu0 %v6595
    %8379 = vmatpush2.bf16.msra.mxu0 %v6594
    %8380 = vmatprep.subr.bf16.mxu0 %v6589
    %8381 = vmatpush2.bf16.msra.mxu0 %v6588
    %8382 = vmatprep.subr.bf16.mxu0 %v6583
    %8383 = vmatpush2.bf16.msra.mxu0 %v6582
    %8384 = vmatprep.subr.bf16.mxu0 %v6577
    %8385 = vmatpush2.bf16.msra.mxu0 %v6576
    %8386 = vmatprep.subr.bf16.mxu0 %v6571
    %8387 = vmatpush2.bf16.msra.mxu0 %v6570
    %8388 = vmatprep.subr.bf16.mxu0 %v6565
    %8389 = vmatpush2.bf16.msra.mxu0 %v6564
    %8390 = vmatprep.subr.bf16.mxu0 %v6559
    %8391 = vmatpush2.bf16.msra.mxu0 %v6558
    %8392 = vmatprep.mubr.bf16.mxu0 %v746
    %8393 = vmatmul.mubr.bf16.gmra.mxu0 %v745
    %v8394 = vpop.f32.mrf.mxu0
    %v8395 = vadd.f32 %v8354, %v8394
    %v8396 = vpop.f32.mrf.mxu0
    %v8397 = vadd.f32 %v8356, %v8396
    %v8398 = vpop.f32.mrf.mxu0
    %v8399 = vpop.f32.mrf.mxu0
    %8400 = vdwg.mxu0
    %8401 = vmatprep.subr.bf16.mxu0 %v6649
    %8402 = vmatpush1.bf16.msra.mxu0 %v6648
    %8403 = vmatprep.subr.bf16.mxu0 %v6643
    %8404 = vmatpush1.bf16.msra.mxu0 %v6642
    %8405 = vmatprep.subr.bf16.mxu0 %v6637
    %8406 = vmatpush1.bf16.msra.mxu0 %v6636
    %8407 = vmatprep.subr.bf16.mxu0 %v6631
    %8408 = vmatpush1.bf16.msra.mxu0 %v6630
    %8409 = vmatprep.subr.bf16.mxu0 %v6625
    %8410 = vmatpush1.bf16.msra.mxu0 %v6624
    %8411 = vmatprep.subr.bf16.mxu0 %v6619
    %8412 = vmatpush1.bf16.msra.mxu0 %v6618
    %8413 = vmatprep.subr.bf16.mxu0 %v6613
    %8414 = vmatpush1.bf16.msra.mxu0 %v6612
    %8415 = vmatprep.subr.bf16.mxu0 %v6607
    %8416 = vmatpush1.bf16.msra.mxu0 %v6606
    %8417 = vmatprep.subr.bf16.mxu0 %v6697
    %8418 = vmatpush2.bf16.msra.mxu0 %v6696
    %8419 = vmatprep.subr.bf16.mxu0 %v6691
    %8420 = vmatpush2.bf16.msra.mxu0 %v6690
    %8421 = vmatprep.subr.bf16.mxu0 %v6685
    %8422 = vmatpush2.bf16.msra.mxu0 %v6684
    %8423 = vmatprep.subr.bf16.mxu0 %v6679
    %8424 = vmatpush2.bf16.msra.mxu0 %v6678
    %8425 = vmatprep.subr.bf16.mxu0 %v6673
    %8426 = vmatpush2.bf16.msra.mxu0 %v6672
    %8427 = vmatprep.subr.bf16.mxu0 %v6667
    %8428 = vmatpush2.bf16.msra.mxu0 %v6666
    %8429 = vmatprep.subr.bf16.mxu0 %v6661
    %8430 = vmatpush2.bf16.msra.mxu0 %v6660
    %8431 = vmatprep.subr.bf16.mxu0 %v6655
    %8432 = vmatpush2.bf16.msra.mxu0 %v6654
    %8433 = vmatprep.mubr.bf16.mxu0 %v748
    %8434 = vmatmul.mubr.bf16.gmra.mxu0 %v747
    %v8435 = vpop.f32.mrf.mxu0
    %v8436 = vadd.f32 %v8395, %v8435
    %v8437 = vpop.f32.mrf.mxu0
    %v8438 = vadd.f32 %v8397, %v8437
    %v8439 = vpop.f32.mrf.mxu0
    %v8440 = vpop.f32.mrf.mxu0
    %8441 = vdwg.mxu0
    %8442 = vmatprep.subr.bf16.mxu0 %v6745
    %8443 = vmatpush1.bf16.msra.mxu0 %v6744
    %8444 = vmatprep.subr.bf16.mxu0 %v6739
    %8445 = vmatpush1.bf16.msra.mxu0 %v6738
    %8446 = vmatprep.subr.bf16.mxu0 %v6733
    %8447 = vmatpush1.bf16.msra.mxu0 %v6732
    %8448 = vmatprep.subr.bf16.mxu0 %v6727
    %8449 = vmatpush1.bf16.msra.mxu0 %v6726
    %8450 = vmatprep.subr.bf16.mxu0 %v6721
    %8451 = vmatpush1.bf16.msra.mxu0 %v6720
    %8452 = vmatprep.subr.bf16.mxu0 %v6715
    %8453 = vmatpush1.bf16.msra.mxu0 %v6714
    %8454 = vmatprep.subr.bf16.mxu0 %v6709
    %8455 = vmatpush1.bf16.msra.mxu0 %v6708
    %8456 = vmatprep.subr.bf16.mxu0 %v6703
    %8457 = vmatpush1.bf16.msra.mxu0 %v6702
    %8458 = vmatprep.subr.bf16.mxu0 0
    %8459 = vmatpush2.bf16.msra.mxu0 0
    %8460 = vmatprep.subr.bf16.mxu0 0
    %8461 = vmatpush2.bf16.msra.mxu0 0
    %8462 = vmatprep.subr.bf16.mxu0 0
    %8463 = vmatpush2.bf16.msra.mxu0 0
    %8464 = vmatprep.subr.bf16.mxu0 0
    %8465 = vmatpush2.bf16.msra.mxu0 0
    %8466 = vmatprep.subr.bf16.mxu0 0
    %8467 = vmatpush2.bf16.msra.mxu0 0
    %8468 = vmatprep.subr.bf16.mxu0 0
    %8469 = vmatpush2.bf16.msra.mxu0 0
    %8470 = vmatprep.subr.bf16.mxu0 0
    %8471 = vmatpush2.bf16.msra.mxu0 0
    %8472 = vmatprep.subr.bf16.mxu0 0
    %8473 = vmatpush2.bf16.msra.mxu0 0
    %8474 = vmatprep.mubr.bf16.mxu0 0
    %8475 = vmatmul.mubr.bf16.gmra.mxu0 %v749
    %v8476 = vpop.f32.mrf.mxu0
    %v8477 = vadd.f32 %v8436, %v8476
    %v8478 = vpop.f32.mrf.mxu0
    %v8479 = vadd.f32 %v8438, %v8478
    %v8480 = vpop.f32.mrf.mxu0
    %v8481 = vpop.f32.mrf.mxu0
    %8482 = vdwg.mxu0
    %8483 = vmatprep.subr.bf16.mxu0 %v5595
    %8484 = vmatpush1.bf16.msra.mxu0 %v5594
    %8485 = vmatprep.subr.bf16.mxu0 %v5589
    %8486 = vmatpush1.bf16.msra.mxu0 %v5588
    %8487 = vmatprep.subr.bf16.mxu0 %v5583
    %8488 = vmatpush1.bf16.msra.mxu0 %v5582
    %8489 = vmatprep.subr.bf16.mxu0 %v5577
    %8490 = vmatpush1.bf16.msra.mxu0 %v5576
    %8491 = vmatprep.subr.bf16.mxu0 %v5571
    %8492 = vmatpush1.bf16.msra.mxu0 %v5570
    %8493 = vmatprep.subr.bf16.mxu0 %v5565
    %8494 = vmatpush1.bf16.msra.mxu0 %v5564
    %8495 = vmatprep.subr.bf16.mxu0 %v5559
    %8496 = vmatpush1.bf16.msra.mxu0 %v5558
    %8497 = vmatprep.subr.bf16.mxu0 %v5553
    %8498 = vmatpush1.bf16.msra.mxu0 %v5552
    %8499 = vmatprep.subr.bf16.mxu0 %v5643
    %8500 = vmatpush2.bf16.msra.mxu0 %v5642
    %8501 = vmatprep.subr.bf16.mxu0 %v5637
    %8502 = vmatpush2.bf16.msra.mxu0 %v5636
    %8503 = vmatprep.subr.bf16.mxu0 %v5631
    %8504 = vmatpush2.bf16.msra.mxu0 %v5630
    %8505 = vmatprep.subr.bf16.mxu0 %v5625
    %8506 = vmatpush2.bf16.msra.mxu0 %v5624
    %8507 = vmatprep.subr.bf16.mxu0 %v5619
    %8508 = vmatpush2.bf16.msra.mxu0 %v5618
    %8509 = vmatprep.subr.bf16.mxu0 %v5613
    %8510 = vmatpush2.bf16.msra.mxu0 %v5612
    %8511 = vmatprep.subr.bf16.mxu0 %v5607
    %8512 = vmatpush2.bf16.msra.mxu0 %v5606
    %8513 = vmatprep.subr.bf16.mxu0 %v5601
    %8514 = vmatpush2.bf16.msra.mxu0 %v5600
    %8515 = vmatprep.mubr.bf16.mxu0 %v726
    %8516 = vmatmul.mubr.bf16.gmra.mxu0 %v725
    %v8517 = vpop.f32.mrf.mxu0
    %v8518 = vadd.f32 0.0, %v8517
    %v8519 = vpop.f32.mrf.mxu0
    %v8520 = vadd.f32 0.0, %v8519
    %v8521 = vpop.f32.mrf.mxu0
    %v8522 = vpop.f32.mrf.mxu0
    %8523 = vdwg.mxu0
    %8524 = vmatprep.subr.bf16.mxu0 %v5691
    %8525 = vmatpush1.bf16.msra.mxu0 %v5690
    %8526 = vmatprep.subr.bf16.mxu0 %v5685
    %8527 = vmatpush1.bf16.msra.mxu0 %v5684
    %8528 = vmatprep.subr.bf16.mxu0 %v5679
    %8529 = vmatpush1.bf16.msra.mxu0 %v5678
    %8530 = vmatprep.subr.bf16.mxu0 %v5673
    %8531 = vmatpush1.bf16.msra.mxu0 %v5672
    %8532 = vmatprep.subr.bf16.mxu0 %v5667
    %8533 = vmatpush1.bf16.msra.mxu0 %v5666
    %8534 = vmatprep.subr.bf16.mxu0 %v5661
    %8535 = vmatpush1.bf16.msra.mxu0 %v5660
    %8536 = vmatprep.subr.bf16.mxu0 %v5655
    %8537 = vmatpush1.bf16.msra.mxu0 %v5654
    %8538 = vmatprep.subr.bf16.mxu0 %v5649
    %8539 = vmatpush1.bf16.msra.mxu0 %v5648
    %8540 = vmatprep.subr.bf16.mxu0 %v5739
    %8541 = vmatpush2.bf16.msra.mxu0 %v5738
    %8542 = vmatprep.subr.bf16.mxu0 %v5733
    %8543 = vmatpush2.bf16.msra.mxu0 %v5732
    %8544 = vmatprep.subr.bf16.mxu0 %v5727
    %8545 = vmatpush2.bf16.msra.mxu0 %v5726
    %8546 = vmatprep.subr.bf16.mxu0 %v5721
    %8547 = vmatpush2.bf16.msra.mxu0 %v5720
    %8548 = vmatprep.subr.bf16.mxu0 %v5715
    %8549 = vmatpush2.bf16.msra.mxu0 %v5714
    %8550 = vmatprep.subr.bf16.mxu0 %v5709
    %8551 = vmatpush2.bf16.msra.mxu0 %v5708
    %8552 = vmatprep.subr.bf16.mxu0 %v5703
    %8553 = vmatpush2.bf16.msra.mxu0 %v5702
    %8554 = vmatprep.subr.bf16.mxu0 %v5697
    %8555 = vmatpush2.bf16.msra.mxu0 %v5696
    %8556 = vmatprep.mubr.bf16.mxu0 %v728
    %8557 = vmatmul.mubr.bf16.gmra.mxu0 %v727
    %v8558 = vpop.f32.mrf.mxu0
    %v8559 = vadd.f32 %v8518, %v8558
    %v8560 = vpop.f32.mrf.mxu0
    %v8561 = vadd.f32 %v8520, %v8560
    %v8562 = vpop.f32.mrf.mxu0
    %v8563 = vpop.f32.mrf.mxu0
    %8564 = vdwg.mxu0
    %8565 = vmatprep.subr.bf16.mxu0 %v5787
    %8566 = vmatpush1.bf16.msra.mxu0 %v5786
    %8567 = vmatprep.subr.bf16.mxu0 %v5781
    %8568 = vmatpush1.bf16.msra.mxu0 %v5780
    %8569 = vmatprep.subr.bf16.mxu0 %v5775
    %8570 = vmatpush1.bf16.msra.mxu0 %v5774
    %8571 = vmatprep.subr.bf16.mxu0 %v5769
    %8572 = vmatpush1.bf16.msra.mxu0 %v5768
    %8573 = vmatprep.subr.bf16.mxu0 %v5763
    %8574 = vmatpush1.bf16.msra.mxu0 %v5762
    %8575 = vmatprep.subr.bf16.mxu0 %v5757
    %8576 = vmatpush1.bf16.msra.mxu0 %v5756
    %8577 = vmatprep.subr.bf16.mxu0 %v5751
    %8578 = vmatpush1.bf16.msra.mxu0 %v5750
    %8579 = vmatprep.subr.bf16.mxu0 %v5745
    %8580 = vmatpush1.bf16.msra.mxu0 %v5744
    %8581 = vmatprep.subr.bf16.mxu0 %v5835
    %8582 = vmatpush2.bf16.msra.mxu0 %v5834
    %8583 = vmatprep.subr.bf16.mxu0 %v5829
    %8584 = vmatpush2.bf16.msra.mxu0 %v5828
    %8585 = vmatprep.subr.bf16.mxu0 %v5823
    %8586 = vmatpush2.bf16.msra.mxu0 %v5822
    %8587 = vmatprep.subr.bf16.mxu0 %v5817
    %8588 = vmatpush2.bf16.msra.mxu0 %v5816
    %8589 = vmatprep.subr.bf16.mxu0 %v5811
    %8590 = vmatpush2.bf16.msra.mxu0 %v5810
    %8591 = vmatprep.subr.bf16.mxu0 %v5805
    %8592 = vmatpush2.bf16.msra.mxu0 %v5804
    %8593 = vmatprep.subr.bf16.mxu0 %v5799
    %8594 = vmatpush2.bf16.msra.mxu0 %v5798
    %8595 = vmatprep.subr.bf16.mxu0 %v5793
    %8596 = vmatpush2.bf16.msra.mxu0 %v5792
    %8597 = vmatprep.mubr.bf16.mxu0 %v730
    %8598 = vmatmul.mubr.bf16.gmra.mxu0 %v729
    %v8599 = vpop.f32.mrf.mxu0
    %v8600 = vadd.f32 %v8559, %v8599
    %v8601 = vpop.f32.mrf.mxu0
    %v8602 = vadd.f32 %v8561, %v8601
    %v8603 = vpop.f32.mrf.mxu0
    %v8604 = vpop.f32.mrf.mxu0
    %8605 = vdwg.mxu0
    %8606 = vmatprep.subr.bf16.mxu0 %v5883
    %8607 = vmatpush1.bf16.msra.mxu0 %v5882
    %8608 = vmatprep.subr.bf16.mxu0 %v5877
    %8609 = vmatpush1.bf16.msra.mxu0 %v5876
    %8610 = vmatprep.subr.bf16.mxu0 %v5871
    %8611 = vmatpush1.bf16.msra.mxu0 %v5870
    %8612 = vmatprep.subr.bf16.mxu0 %v5865
    %8613 = vmatpush1.bf16.msra.mxu0 %v5864
    %8614 = vmatprep.subr.bf16.mxu0 %v5859
    %8615 = vmatpush1.bf16.msra.mxu0 %v5858
    %8616 = vmatprep.subr.bf16.mxu0 %v5853
    %8617 = vmatpush1.bf16.msra.mxu0 %v5852
    %8618 = vmatprep.subr.bf16.mxu0 %v5847
    %8619 = vmatpush1.bf16.msra.mxu0 %v5846
    %8620 = vmatprep.subr.bf16.mxu0 %v5841
    %8621 = vmatpush1.bf16.msra.mxu0 %v5840
    %8622 = vmatprep.subr.bf16.mxu0 %v5931
    %8623 = vmatpush2.bf16.msra.mxu0 %v5930
    %8624 = vmatprep.subr.bf16.mxu0 %v5925
    %8625 = vmatpush2.bf16.msra.mxu0 %v5924
    %8626 = vmatprep.subr.bf16.mxu0 %v5919
    %8627 = vmatpush2.bf16.msra.mxu0 %v5918
    %8628 = vmatprep.subr.bf16.mxu0 %v5913
    %8629 = vmatpush2.bf16.msra.mxu0 %v5912
    %8630 = vmatprep.subr.bf16.mxu0 %v5907
    %8631 = vmatpush2.bf16.msra.mxu0 %v5906
    %8632 = vmatprep.subr.bf16.mxu0 %v5901
    %8633 = vmatpush2.bf16.msra.mxu0 %v5900
    %8634 = vmatprep.subr.bf16.mxu0 %v5895
    %8635 = vmatpush2.bf16.msra.mxu0 %v5894
    %8636 = vmatprep.subr.bf16.mxu0 %v5889
    %8637 = vmatpush2.bf16.msra.mxu0 %v5888
    %8638 = vmatprep.mubr.bf16.mxu0 %v732
    %8639 = vmatmul.mubr.bf16.gmra.mxu0 %v731
    %v8640 = vpop.f32.mrf.mxu0
    %v8641 = vadd.f32 %v8600, %v8640
    %v8642 = vpop.f32.mrf.mxu0
    %v8643 = vadd.f32 %v8602, %v8642
    %v8644 = vpop.f32.mrf.mxu0
    %v8645 = vpop.f32.mrf.mxu0
    %8646 = vdwg.mxu0
    %8647 = vmatprep.subr.bf16.mxu0 %v5979
    %8648 = vmatpush1.bf16.msra.mxu0 %v5978
    %8649 = vmatprep.subr.bf16.mxu0 %v5973
    %8650 = vmatpush1.bf16.msra.mxu0 %v5972
    %8651 = vmatprep.subr.bf16.mxu0 %v5967
    %8652 = vmatpush1.bf16.msra.mxu0 %v5966
    %8653 = vmatprep.subr.bf16.mxu0 %v5961
    %8654 = vmatpush1.bf16.msra.mxu0 %v5960
    %8655 = vmatprep.subr.bf16.mxu0 %v5955
    %8656 = vmatpush1.bf16.msra.mxu0 %v5954
    %8657 = vmatprep.subr.bf16.mxu0 %v5949
    %8658 = vmatpush1.bf16.msra.mxu0 %v5948
    %8659 = vmatprep.subr.bf16.mxu0 %v5943
    %8660 = vmatpush1.bf16.msra.mxu0 %v5942
    %8661 = vmatprep.subr.bf16.mxu0 %v5937
    %8662 = vmatpush1.bf16.msra.mxu0 %v5936
    %8663 = vmatprep.subr.bf16.mxu0 %v6027
    %8664 = vmatpush2.bf16.msra.mxu0 %v6026
    %8665 = vmatprep.subr.bf16.mxu0 %v6021
    %8666 = vmatpush2.bf16.msra.mxu0 %v6020
    %8667 = vmatprep.subr.bf16.mxu0 %v6015
    %8668 = vmatpush2.bf16.msra.mxu0 %v6014
    %8669 = vmatprep.subr.bf16.mxu0 %v6009
    %8670 = vmatpush2.bf16.msra.mxu0 %v6008
    %8671 = vmatprep.subr.bf16.mxu0 %v6003
    %8672 = vmatpush2.bf16.msra.mxu0 %v6002
    %8673 = vmatprep.subr.bf16.mxu0 %v5997
    %8674 = vmatpush2.bf16.msra.mxu0 %v5996
    %8675 = vmatprep.subr.bf16.mxu0 %v5991
    %8676 = vmatpush2.bf16.msra.mxu0 %v5990
    %8677 = vmatprep.subr.bf16.mxu0 %v5985
    %8678 = vmatpush2.bf16.msra.mxu0 %v5984
    %8679 = vmatprep.mubr.bf16.mxu0 %v734
    %8680 = vmatmul.mubr.bf16.gmra.mxu0 %v733
    %v8681 = vpop.f32.mrf.mxu0
    %v8682 = vadd.f32 %v8641, %v8681
    %v8683 = vpop.f32.mrf.mxu0
    %v8684 = vadd.f32 %v8643, %v8683
    %v8685 = vpop.f32.mrf.mxu0
    %v8686 = vpop.f32.mrf.mxu0
    %8687 = vdwg.mxu0
    %8688 = vmatprep.subr.bf16.mxu0 %v6075
    %8689 = vmatpush1.bf16.msra.mxu0 %v6074
    %8690 = vmatprep.subr.bf16.mxu0 %v6069
    %8691 = vmatpush1.bf16.msra.mxu0 %v6068
    %8692 = vmatprep.subr.bf16.mxu0 %v6063
    %8693 = vmatpush1.bf16.msra.mxu0 %v6062
    %8694 = vmatprep.subr.bf16.mxu0 %v6057
    %8695 = vmatpush1.bf16.msra.mxu0 %v6056
    %8696 = vmatprep.subr.bf16.mxu0 %v6051
    %8697 = vmatpush1.bf16.msra.mxu0 %v6050
    %8698 = vmatprep.subr.bf16.mxu0 %v6045
    %8699 = vmatpush1.bf16.msra.mxu0 %v6044
    %8700 = vmatprep.subr.bf16.mxu0 %v6039
    %8701 = vmatpush1.bf16.msra.mxu0 %v6038
    %8702 = vmatprep.subr.bf16.mxu0 %v6033
    %8703 = vmatpush1.bf16.msra.mxu0 %v6032
    %8704 = vmatprep.subr.bf16.mxu0 %v6123
    %8705 = vmatpush2.bf16.msra.mxu0 %v6122
    %8706 = vmatprep.subr.bf16.mxu0 %v6117
    %8707 = vmatpush2.bf16.msra.mxu0 %v6116
    %8708 = vmatprep.subr.bf16.mxu0 %v6111
    %8709 = vmatpush2.bf16.msra.mxu0 %v6110
    %8710 = vmatprep.subr.bf16.mxu0 %v6105
    %8711 = vmatpush2.bf16.msra.mxu0 %v6104
    %8712 = vmatprep.subr.bf16.mxu0 %v6099
    %8713 = vmatpush2.bf16.msra.mxu0 %v6098
    %8714 = vmatprep.subr.bf16.mxu0 %v6093
    %8715 = vmatpush2.bf16.msra.mxu0 %v6092
    %8716 = vmatprep.subr.bf16.mxu0 %v6087
    %8717 = vmatpush2.bf16.msra.mxu0 %v6086
    %8718 = vmatprep.subr.bf16.mxu0 %v6081
    %8719 = vmatpush2.bf16.msra.mxu0 %v6080
    %8720 = vmatprep.mubr.bf16.mxu0 %v736
    %8721 = vmatmul.mubr.bf16.gmra.mxu0 %v735
    %v8722 = vpop.f32.mrf.mxu0
    %v8723 = vadd.f32 %v8682, %v8722
    %v8724 = vpop.f32.mrf.mxu0
    %v8725 = vadd.f32 %v8684, %v8724
    %v8726 = vpop.f32.mrf.mxu0
    %v8727 = vpop.f32.mrf.mxu0
    %8728 = vdwg.mxu0
    %8729 = vmatprep.subr.bf16.mxu0 %v6171
    %8730 = vmatpush1.bf16.msra.mxu0 %v6170
    %8731 = vmatprep.subr.bf16.mxu0 %v6165
    %8732 = vmatpush1.bf16.msra.mxu0 %v6164
    %8733 = vmatprep.subr.bf16.mxu0 %v6159
    %8734 = vmatpush1.bf16.msra.mxu0 %v6158
    %8735 = vmatprep.subr.bf16.mxu0 %v6153
    %8736 = vmatpush1.bf16.msra.mxu0 %v6152
    %8737 = vmatprep.subr.bf16.mxu0 %v6147
    %8738 = vmatpush1.bf16.msra.mxu0 %v6146
    %8739 = vmatprep.subr.bf16.mxu0 %v6141
    %8740 = vmatpush1.bf16.msra.mxu0 %v6140
    %8741 = vmatprep.subr.bf16.mxu0 %v6135
    %8742 = vmatpush1.bf16.msra.mxu0 %v6134
    %8743 = vmatprep.subr.bf16.mxu0 %v6129
    %8744 = vmatpush1.bf16.msra.mxu0 %v6128
    %8745 = vmatprep.subr.bf16.mxu0 %v6219
    %8746 = vmatpush2.bf16.msra.mxu0 %v6218
    %8747 = vmatprep.subr.bf16.mxu0 %v6213
    %8748 = vmatpush2.bf16.msra.mxu0 %v6212
    %8749 = vmatprep.subr.bf16.mxu0 %v6207
    %8750 = vmatpush2.bf16.msra.mxu0 %v6206
    %8751 = vmatprep.subr.bf16.mxu0 %v6201
    %8752 = vmatpush2.bf16.msra.mxu0 %v6200
    %8753 = vmatprep.subr.bf16.mxu0 %v6195
    %8754 = vmatpush2.bf16.msra.mxu0 %v6194
    %8755 = vmatprep.subr.bf16.mxu0 %v6189
    %8756 = vmatpush2.bf16.msra.mxu0 %v6188
    %8757 = vmatprep.subr.bf16.mxu0 %v6183
    %8758 = vmatpush2.bf16.msra.mxu0 %v6182
    %8759 = vmatprep.subr.bf16.mxu0 %v6177
    %8760 = vmatpush2.bf16.msra.mxu0 %v6176
    %8761 = vmatprep.mubr.bf16.mxu0 %v738
    %8762 = vmatmul.mubr.bf16.gmra.mxu0 %v737
    %v8763 = vpop.f32.mrf.mxu0
    %v8764 = vadd.f32 %v8723, %v8763
    %v8765 = vpop.f32.mrf.mxu0
    %v8766 = vadd.f32 %v8725, %v8765
    %v8767 = vpop.f32.mrf.mxu0
    %v8768 = vpop.f32.mrf.mxu0
    %8769 = vdwg.mxu0
    %8770 = vmatprep.subr.bf16.mxu0 %v6267
    %8771 = vmatpush1.bf16.msra.mxu0 %v6266
    %8772 = vmatprep.subr.bf16.mxu0 %v6261
    %8773 = vmatpush1.bf16.msra.mxu0 %v6260
    %8774 = vmatprep.subr.bf16.mxu0 %v6255
    %8775 = vmatpush1.bf16.msra.mxu0 %v6254
    %8776 = vmatprep.subr.bf16.mxu0 %v6249
    %8777 = vmatpush1.bf16.msra.mxu0 %v6248
    %8778 = vmatprep.subr.bf16.mxu0 %v6243
    %8779 = vmatpush1.bf16.msra.mxu0 %v6242
    %8780 = vmatprep.subr.bf16.mxu0 %v6237
    %8781 = vmatpush1.bf16.msra.mxu0 %v6236
    %8782 = vmatprep.subr.bf16.mxu0 %v6231
    %8783 = vmatpush1.bf16.msra.mxu0 %v6230
    %8784 = vmatprep.subr.bf16.mxu0 %v6225
    %8785 = vmatpush1.bf16.msra.mxu0 %v6224
    %8786 = vmatprep.subr.bf16.mxu0 %v6315
    %8787 = vmatpush2.bf16.msra.mxu0 %v6314
    %8788 = vmatprep.subr.bf16.mxu0 %v6309
    %8789 = vmatpush2.bf16.msra.mxu0 %v6308
    %8790 = vmatprep.subr.bf16.mxu0 %v6303
    %8791 = vmatpush2.bf16.msra.mxu0 %v6302
    %8792 = vmatprep.subr.bf16.mxu0 %v6297
    %8793 = vmatpush2.bf16.msra.mxu0 %v6296
    %8794 = vmatprep.subr.bf16.mxu0 %v6291
    %8795 = vmatpush2.bf16.msra.mxu0 %v6290
    %8796 = vmatprep.subr.bf16.mxu0 %v6285
    %8797 = vmatpush2.bf16.msra.mxu0 %v6284
    %8798 = vmatprep.subr.bf16.mxu0 %v6279
    %8799 = vmatpush2.bf16.msra.mxu0 %v6278
    %8800 = vmatprep.subr.bf16.mxu0 %v6273
    %8801 = vmatpush2.bf16.msra.mxu0 %v6272
    %8802 = vmatprep.mubr.bf16.mxu0 %v740
    %8803 = vmatmul.mubr.bf16.gmra.mxu0 %v739
    %v8804 = vpop.f32.mrf.mxu0
    %v8805 = vadd.f32 %v8764, %v8804
    %v8806 = vpop.f32.mrf.mxu0
    %v8807 = vadd.f32 %v8766, %v8806
    %v8808 = vpop.f32.mrf.mxu0
    %v8809 = vpop.f32.mrf.mxu0
    %8810 = vdwg.mxu0
    %8811 = vmatprep.subr.bf16.mxu0 %v6363
    %8812 = vmatpush1.bf16.msra.mxu0 %v6362
    %8813 = vmatprep.subr.bf16.mxu0 %v6357
    %8814 = vmatpush1.bf16.msra.mxu0 %v6356
    %8815 = vmatprep.subr.bf16.mxu0 %v6351
    %8816 = vmatpush1.bf16.msra.mxu0 %v6350
    %8817 = vmatprep.subr.bf16.mxu0 %v6345
    %8818 = vmatpush1.bf16.msra.mxu0 %v6344
    %8819 = vmatprep.subr.bf16.mxu0 %v6339
    %8820 = vmatpush1.bf16.msra.mxu0 %v6338
    %8821 = vmatprep.subr.bf16.mxu0 %v6333
    %8822 = vmatpush1.bf16.msra.mxu0 %v6332
    %8823 = vmatprep.subr.bf16.mxu0 %v6327
    %8824 = vmatpush1.bf16.msra.mxu0 %v6326
    %8825 = vmatprep.subr.bf16.mxu0 %v6321
    %8826 = vmatpush1.bf16.msra.mxu0 %v6320
    %8827 = vmatprep.subr.bf16.mxu0 %v6411
    %8828 = vmatpush2.bf16.msra.mxu0 %v6410
    %8829 = vmatprep.subr.bf16.mxu0 %v6405
    %8830 = vmatpush2.bf16.msra.mxu0 %v6404
    %8831 = vmatprep.subr.bf16.mxu0 %v6399
    %8832 = vmatpush2.bf16.msra.mxu0 %v6398
    %8833 = vmatprep.subr.bf16.mxu0 %v6393
    %8834 = vmatpush2.bf16.msra.mxu0 %v6392
    %8835 = vmatprep.subr.bf16.mxu0 %v6387
    %8836 = vmatpush2.bf16.msra.mxu0 %v6386
    %8837 = vmatprep.subr.bf16.mxu0 %v6381
    %8838 = vmatpush2.bf16.msra.mxu0 %v6380
    %8839 = vmatprep.subr.bf16.mxu0 %v6375
    %8840 = vmatpush2.bf16.msra.mxu0 %v6374
    %8841 = vmatprep.subr.bf16.mxu0 %v6369
    %8842 = vmatpush2.bf16.msra.mxu0 %v6368
    %8843 = vmatprep.mubr.bf16.mxu0 %v742
    %8844 = vmatmul.mubr.bf16.gmra.mxu0 %v741
    %v8845 = vpop.f32.mrf.mxu0
    %v8846 = vadd.f32 %v8805, %v8845
    %v8847 = vpop.f32.mrf.mxu0
    %v8848 = vadd.f32 %v8807, %v8847
    %v8849 = vpop.f32.mrf.mxu0
    %v8850 = vpop.f32.mrf.mxu0
    %8851 = vdwg.mxu0
    %8852 = vmatprep.subr.bf16.mxu0 %v6459
    %8853 = vmatpush1.bf16.msra.mxu0 %v6458
    %8854 = vmatprep.subr.bf16.mxu0 %v6453
    %8855 = vmatpush1.bf16.msra.mxu0 %v6452
    %8856 = vmatprep.subr.bf16.mxu0 %v6447
    %8857 = vmatpush1.bf16.msra.mxu0 %v6446
    %8858 = vmatprep.subr.bf16.mxu0 %v6441
    %8859 = vmatpush1.bf16.msra.mxu0 %v6440
    %8860 = vmatprep.subr.bf16.mxu0 %v6435
    %8861 = vmatpush1.bf16.msra.mxu0 %v6434
    %8862 = vmatprep.subr.bf16.mxu0 %v6429
    %8863 = vmatpush1.bf16.msra.mxu0 %v6428
    %8864 = vmatprep.subr.bf16.mxu0 %v6423
    %8865 = vmatpush1.bf16.msra.mxu0 %v6422
    %8866 = vmatprep.subr.bf16.mxu0 %v6417
    %8867 = vmatpush1.bf16.msra.mxu0 %v6416
    %8868 = vmatprep.subr.bf16.mxu0 %v6507
    %8869 = vmatpush2.bf16.msra.mxu0 %v6506
    %8870 = vmatprep.subr.bf16.mxu0 %v6501
    %8871 = vmatpush2.bf16.msra.mxu0 %v6500
    %8872 = vmatprep.subr.bf16.mxu0 %v6495
    %8873 = vmatpush2.bf16.msra.mxu0 %v6494
    %8874 = vmatprep.subr.bf16.mxu0 %v6489
    %8875 = vmatpush2.bf16.msra.mxu0 %v6488
    %8876 = vmatprep.subr.bf16.mxu0 %v6483
    %8877 = vmatpush2.bf16.msra.mxu0 %v6482
    %8878 = vmatprep.subr.bf16.mxu0 %v6477
    %8879 = vmatpush2.bf16.msra.mxu0 %v6476
    %8880 = vmatprep.subr.bf16.mxu0 %v6471
    %8881 = vmatpush2.bf16.msra.mxu0 %v6470
    %8882 = vmatprep.subr.bf16.mxu0 %v6465
    %8883 = vmatpush2.bf16.msra.mxu0 %v6464
    %8884 = vmatprep.mubr.bf16.mxu0 %v744
    %8885 = vmatmul.mubr.bf16.gmra.mxu0 %v743
    %v8886 = vpop.f32.mrf.mxu0
    %v8887 = vadd.f32 %v8846, %v8886
    %v8888 = vpop.f32.mrf.mxu0
    %v8889 = vadd.f32 %v8848, %v8888
    %v8890 = vpop.f32.mrf.mxu0
    %v8891 = vpop.f32.mrf.mxu0
    %8892 = vdwg.mxu0
    %8893 = vmatprep.subr.bf16.mxu0 %v6555
    %8894 = vmatpush1.bf16.msra.mxu0 %v6554
    %8895 = vmatprep.subr.bf16.mxu0 %v6549
    %8896 = vmatpush1.bf16.msra.mxu0 %v6548
    %8897 = vmatprep.subr.bf16.mxu0 %v6543
    %8898 = vmatpush1.bf16.msra.mxu0 %v6542
    %8899 = vmatprep.subr.bf16.mxu0 %v6537
    %8900 = vmatpush1.bf16.msra.mxu0 %v6536
    %8901 = vmatprep.subr.bf16.mxu0 %v6531
    %8902 = vmatpush1.bf16.msra.mxu0 %v6530
    %8903 = vmatprep.subr.bf16.mxu0 %v6525
    %8904 = vmatpush1.bf16.msra.mxu0 %v6524
    %8905 = vmatprep.subr.bf16.mxu0 %v6519
    %8906 = vmatpush1.bf16.msra.mxu0 %v6518
    %8907 = vmatprep.subr.bf16.mxu0 %v6513
    %8908 = vmatpush1.bf16.msra.mxu0 %v6512
    %8909 = vmatprep.subr.bf16.mxu0 %v6603
    %8910 = vmatpush2.bf16.msra.mxu0 %v6602
    %8911 = vmatprep.subr.bf16.mxu0 %v6597
    %8912 = vmatpush2.bf16.msra.mxu0 %v6596
    %8913 = vmatprep.subr.bf16.mxu0 %v6591
    %8914 = vmatpush2.bf16.msra.mxu0 %v6590
    %8915 = vmatprep.subr.bf16.mxu0 %v6585
    %8916 = vmatpush2.bf16.msra.mxu0 %v6584
    %8917 = vmatprep.subr.bf16.mxu0 %v6579
    %8918 = vmatpush2.bf16.msra.mxu0 %v6578
    %8919 = vmatprep.subr.bf16.mxu0 %v6573
    %8920 = vmatpush2.bf16.msra.mxu0 %v6572
    %8921 = vmatprep.subr.bf16.mxu0 %v6567
    %8922 = vmatpush2.bf16.msra.mxu0 %v6566
    %8923 = vmatprep.subr.bf16.mxu0 %v6561
    %8924 = vmatpush2.bf16.msra.mxu0 %v6560
    %8925 = vmatprep.mubr.bf16.mxu0 %v746
    %8926 = vmatmul.mubr.bf16.gmra.mxu0 %v745
    %v8927 = vpop.f32.mrf.mxu0
    %v8928 = vadd.f32 %v8887, %v8927
    %v8929 = vpop.f32.mrf.mxu0
    %v8930 = vadd.f32 %v8889, %v8929
    %v8931 = vpop.f32.mrf.mxu0
    %v8932 = vpop.f32.mrf.mxu0
    %8933 = vdwg.mxu0
    %8934 = vmatprep.subr.bf16.mxu0 %v6651
    %8935 = vmatpush1.bf16.msra.mxu0 %v6650
    %8936 = vmatprep.subr.bf16.mxu0 %v6645
    %8937 = vmatpush1.bf16.msra.mxu0 %v6644
    %8938 = vmatprep.subr.bf16.mxu0 %v6639
    %8939 = vmatpush1.bf16.msra.mxu0 %v6638
    %8940 = vmatprep.subr.bf16.mxu0 %v6633
    %8941 = vmatpush1.bf16.msra.mxu0 %v6632
    %8942 = vmatprep.subr.bf16.mxu0 %v6627
    %8943 = vmatpush1.bf16.msra.mxu0 %v6626
    %8944 = vmatprep.subr.bf16.mxu0 %v6621
    %8945 = vmatpush1.bf16.msra.mxu0 %v6620
    %8946 = vmatprep.subr.bf16.mxu0 %v6615
    %8947 = vmatpush1.bf16.msra.mxu0 %v6614
    %8948 = vmatprep.subr.bf16.mxu0 %v6609
    %8949 = vmatpush1.bf16.msra.mxu0 %v6608
    %8950 = vmatprep.subr.bf16.mxu0 %v6699
    %8951 = vmatpush2.bf16.msra.mxu0 %v6698
    %8952 = vmatprep.subr.bf16.mxu0 %v6693
    %8953 = vmatpush2.bf16.msra.mxu0 %v6692
    %8954 = vmatprep.subr.bf16.mxu0 %v6687
    %8955 = vmatpush2.bf16.msra.mxu0 %v6686
    %8956 = vmatprep.subr.bf16.mxu0 %v6681
    %8957 = vmatpush2.bf16.msra.mxu0 %v6680
    %8958 = vmatprep.subr.bf16.mxu0 %v6675
    %8959 = vmatpush2.bf16.msra.mxu0 %v6674
    %8960 = vmatprep.subr.bf16.mxu0 %v6669
    %8961 = vmatpush2.bf16.msra.mxu0 %v6668
    %8962 = vmatprep.subr.bf16.mxu0 %v6663
    %8963 = vmatpush2.bf16.msra.mxu0 %v6662
    %8964 = vmatprep.subr.bf16.mxu0 %v6657
    %8965 = vmatpush2.bf16.msra.mxu0 %v6656
    %8966 = vmatprep.mubr.bf16.mxu0 %v748
    %8967 = vmatmul.mubr.bf16.gmra.mxu0 %v747
    %v8968 = vpop.f32.mrf.mxu0
    %v8969 = vadd.f32 %v8928, %v8968
    %v8970 = vpop.f32.mrf.mxu0
    %v8971 = vadd.f32 %v8930, %v8970
    %v8972 = vpop.f32.mrf.mxu0
    %v8973 = vpop.f32.mrf.mxu0
    %8974 = vdwg.mxu0
    %8975 = vmatprep.subr.bf16.mxu0 %v6747
    %8976 = vmatpush1.bf16.msra.mxu0 %v6746
    %8977 = vmatprep.subr.bf16.mxu0 %v6741
    %8978 = vmatpush1.bf16.msra.mxu0 %v6740
    %8979 = vmatprep.subr.bf16.mxu0 %v6735
    %8980 = vmatpush1.bf16.msra.mxu0 %v6734
    %8981 = vmatprep.subr.bf16.mxu0 %v6729
    %8982 = vmatpush1.bf16.msra.mxu0 %v6728
    %8983 = vmatprep.subr.bf16.mxu0 %v6723
    %8984 = vmatpush1.bf16.msra.mxu0 %v6722
    %8985 = vmatprep.subr.bf16.mxu0 %v6717
    %8986 = vmatpush1.bf16.msra.mxu0 %v6716
    %8987 = vmatprep.subr.bf16.mxu0 %v6711
    %8988 = vmatpush1.bf16.msra.mxu0 %v6710
    %8989 = vmatprep.subr.bf16.mxu0 %v6705
    %8990 = vmatpush1.bf16.msra.mxu0 %v6704
    %8991 = vmatprep.subr.bf16.mxu0 0
    %8992 = vmatpush2.bf16.msra.mxu0 0
    %8993 = vmatprep.subr.bf16.mxu0 0
    %8994 = vmatpush2.bf16.msra.mxu0 0
    %8995 = vmatprep.subr.bf16.mxu0 0
    %8996 = vmatpush2.bf16.msra.mxu0 0
    %8997 = vmatprep.subr.bf16.mxu0 0
    %8998 = vmatpush2.bf16.msra.mxu0 0
    %8999 = vmatprep.subr.bf16.mxu0 0
    %9000 = vmatpush2.bf16.msra.mxu0 0
    %9001 = vmatprep.subr.bf16.mxu0 0
    %9002 = vmatpush2.bf16.msra.mxu0 0
    %9003 = vmatprep.subr.bf16.mxu0 0
    %9004 = vmatpush2.bf16.msra.mxu0 0
    %9005 = vmatprep.subr.bf16.mxu0 0
    %9006 = vmatpush2.bf16.msra.mxu0 0
    %9007 = vmatprep.mubr.bf16.mxu0 0
    %9008 = vmatmul.mubr.bf16.gmra.mxu0 %v749
    %v9009 = vpop.f32.mrf.mxu0
    %v9010 = vadd.f32 %v8969, %v9009
    %v9011 = vpop.f32.mrf.mxu0
    %v9012 = vadd.f32 %v8971, %v9011
    %v9013 = vpop.f32.mrf.mxu0
    %v9014 = vpop.f32.mrf.mxu0
    %9015 = vdwg.mxu0
    %9016 = vmatprep.subr.bf16.mxu0 %v5597
    %9017 = vmatpush1.bf16.msra.mxu0 %v5596
    %9018 = vmatprep.subr.bf16.mxu0 %v5591
    %9019 = vmatpush1.bf16.msra.mxu0 %v5590
    %9020 = vmatprep.subr.bf16.mxu0 %v5585
    %9021 = vmatpush1.bf16.msra.mxu0 %v5584
    %9022 = vmatprep.subr.bf16.mxu0 %v5579
    %9023 = vmatpush1.bf16.msra.mxu0 %v5578
    %9024 = vmatprep.subr.bf16.mxu0 %v5573
    %9025 = vmatpush1.bf16.msra.mxu0 %v5572
    %9026 = vmatprep.subr.bf16.mxu0 %v5567
    %9027 = vmatpush1.bf16.msra.mxu0 %v5566
    %9028 = vmatprep.subr.bf16.mxu0 %v5561
    %9029 = vmatpush1.bf16.msra.mxu0 %v5560
    %9030 = vmatprep.subr.bf16.mxu0 %v5555
    %9031 = vmatpush1.bf16.msra.mxu0 %v5554
    %9032 = vmatprep.subr.bf16.mxu0 %v5645
    %9033 = vmatpush2.bf16.msra.mxu0 %v5644
    %9034 = vmatprep.subr.bf16.mxu0 %v5639
    %9035 = vmatpush2.bf16.msra.mxu0 %v5638
    %9036 = vmatprep.subr.bf16.mxu0 %v5633
    %9037 = vmatpush2.bf16.msra.mxu0 %v5632
    %9038 = vmatprep.subr.bf16.mxu0 %v5627
    %9039 = vmatpush2.bf16.msra.mxu0 %v5626
    %9040 = vmatprep.subr.bf16.mxu0 %v5621
    %9041 = vmatpush2.bf16.msra.mxu0 %v5620
    %9042 = vmatprep.subr.bf16.mxu0 %v5615
    %9043 = vmatpush2.bf16.msra.mxu0 %v5614
    %9044 = vmatprep.subr.bf16.mxu0 %v5609
    %9045 = vmatpush2.bf16.msra.mxu0 %v5608
    %9046 = vmatprep.subr.bf16.mxu0 %v5603
    %9047 = vmatpush2.bf16.msra.mxu0 %v5602
    %9048 = vmatprep.mubr.bf16.mxu0 %v726
    %9049 = vmatmul.mubr.bf16.gmra.mxu0 %v725
    %v9050 = vpop.f32.mrf.mxu0
    %v9051 = vadd.f32 0.0, %v9050
    %v9052 = vpop.f32.mrf.mxu0
    %v9053 = vadd.f32 0.0, %v9052
    %v9054 = vpop.f32.mrf.mxu0
    %v9055 = vpop.f32.mrf.mxu0
    %9056 = vdwg.mxu0
    %9057 = vmatprep.subr.bf16.mxu0 %v5693
    %9058 = vmatpush1.bf16.msra.mxu0 %v5692
    %9059 = vmatprep.subr.bf16.mxu0 %v5687
    %9060 = vmatpush1.bf16.msra.mxu0 %v5686
    %9061 = vmatprep.subr.bf16.mxu0 %v5681
    %9062 = vmatpush1.bf16.msra.mxu0 %v5680
    %9063 = vmatprep.subr.bf16.mxu0 %v5675
    %9064 = vmatpush1.bf16.msra.mxu0 %v5674
    %9065 = vmatprep.subr.bf16.mxu0 %v5669
    %9066 = vmatpush1.bf16.msra.mxu0 %v5668
    %9067 = vmatprep.subr.bf16.mxu0 %v5663
    %9068 = vmatpush1.bf16.msra.mxu0 %v5662
    %9069 = vmatprep.subr.bf16.mxu0 %v5657
    %9070 = vmatpush1.bf16.msra.mxu0 %v5656
    %9071 = vmatprep.subr.bf16.mxu0 %v5651
    %9072 = vmatpush1.bf16.msra.mxu0 %v5650
    %9073 = vmatprep.subr.bf16.mxu0 %v5741
    %9074 = vmatpush2.bf16.msra.mxu0 %v5740
    %9075 = vmatprep.subr.bf16.mxu0 %v5735
    %9076 = vmatpush2.bf16.msra.mxu0 %v5734
    %9077 = vmatprep.subr.bf16.mxu0 %v5729
    %9078 = vmatpush2.bf16.msra.mxu0 %v5728
    %9079 = vmatprep.subr.bf16.mxu0 %v5723
    %9080 = vmatpush2.bf16.msra.mxu0 %v5722
    %9081 = vmatprep.subr.bf16.mxu0 %v5717
    %9082 = vmatpush2.bf16.msra.mxu0 %v5716
    %9083 = vmatprep.subr.bf16.mxu0 %v5711
    %9084 = vmatpush2.bf16.msra.mxu0 %v5710
    %9085 = vmatprep.subr.bf16.mxu0 %v5705
    %9086 = vmatpush2.bf16.msra.mxu0 %v5704
    %9087 = vmatprep.subr.bf16.mxu0 %v5699
    %9088 = vmatpush2.bf16.msra.mxu0 %v5698
    %9089 = vmatprep.mubr.bf16.mxu0 %v728
    %9090 = vmatmul.mubr.bf16.gmra.mxu0 %v727
    %v9091 = vpop.f32.mrf.mxu0
    %v9092 = vadd.f32 %v9051, %v9091
    %v9093 = vpop.f32.mrf.mxu0
    %v9094 = vadd.f32 %v9053, %v9093
    %v9095 = vpop.f32.mrf.mxu0
    %v9096 = vpop.f32.mrf.mxu0
    %9097 = vdwg.mxu0
    %9098 = vmatprep.subr.bf16.mxu0 %v5789
    %9099 = vmatpush1.bf16.msra.mxu0 %v5788
    %9100 = vmatprep.subr.bf16.mxu0 %v5783
    %9101 = vmatpush1.bf16.msra.mxu0 %v5782
    %9102 = vmatprep.subr.bf16.mxu0 %v5777
    %9103 = vmatpush1.bf16.msra.mxu0 %v5776
    %9104 = vmatprep.subr.bf16.mxu0 %v5771
    %9105 = vmatpush1.bf16.msra.mxu0 %v5770
    %9106 = vmatprep.subr.bf16.mxu0 %v5765
    %9107 = vmatpush1.bf16.msra.mxu0 %v5764
    %9108 = vmatprep.subr.bf16.mxu0 %v5759
    %9109 = vmatpush1.bf16.msra.mxu0 %v5758
    %9110 = vmatprep.subr.bf16.mxu0 %v5753
    %9111 = vmatpush1.bf16.msra.mxu0 %v5752
    %9112 = vmatprep.subr.bf16.mxu0 %v5747
    %9113 = vmatpush1.bf16.msra.mxu0 %v5746
    %9114 = vmatprep.subr.bf16.mxu0 %v5837
    %9115 = vmatpush2.bf16.msra.mxu0 %v5836
    %9116 = vmatprep.subr.bf16.mxu0 %v5831
    %9117 = vmatpush2.bf16.msra.mxu0 %v5830
    %9118 = vmatprep.subr.bf16.mxu0 %v5825
    %9119 = vmatpush2.bf16.msra.mxu0 %v5824
    %9120 = vmatprep.subr.bf16.mxu0 %v5819
    %9121 = vmatpush2.bf16.msra.mxu0 %v5818
    %9122 = vmatprep.subr.bf16.mxu0 %v5813
    %9123 = vmatpush2.bf16.msra.mxu0 %v5812
    %9124 = vmatprep.subr.bf16.mxu0 %v5807
    %9125 = vmatpush2.bf16.msra.mxu0 %v5806
    %9126 = vmatprep.subr.bf16.mxu0 %v5801
    %9127 = vmatpush2.bf16.msra.mxu0 %v5800
    %9128 = vmatprep.subr.bf16.mxu0 %v5795
    %9129 = vmatpush2.bf16.msra.mxu0 %v5794
    %9130 = vmatprep.mubr.bf16.mxu0 %v730
    %9131 = vmatmul.mubr.bf16.gmra.mxu0 %v729
    %v9132 = vpop.f32.mrf.mxu0
    %v9133 = vadd.f32 %v9092, %v9132
    %v9134 = vpop.f32.mrf.mxu0
    %v9135 = vadd.f32 %v9094, %v9134
    %v9136 = vpop.f32.mrf.mxu0
    %v9137 = vpop.f32.mrf.mxu0
    %9138 = vdwg.mxu0
    %9139 = vmatprep.subr.bf16.mxu0 %v5885
    %9140 = vmatpush1.bf16.msra.mxu0 %v5884
    %9141 = vmatprep.subr.bf16.mxu0 %v5879
    %9142 = vmatpush1.bf16.msra.mxu0 %v5878
    %9143 = vmatprep.subr.bf16.mxu0 %v5873
    %9144 = vmatpush1.bf16.msra.mxu0 %v5872
    %9145 = vmatprep.subr.bf16.mxu0 %v5867
    %9146 = vmatpush1.bf16.msra.mxu0 %v5866
    %9147 = vmatprep.subr.bf16.mxu0 %v5861
    %9148 = vmatpush1.bf16.msra.mxu0 %v5860
    %9149 = vmatprep.subr.bf16.mxu0 %v5855
    %9150 = vmatpush1.bf16.msra.mxu0 %v5854
    %9151 = vmatprep.subr.bf16.mxu0 %v5849
    %9152 = vmatpush1.bf16.msra.mxu0 %v5848
    %9153 = vmatprep.subr.bf16.mxu0 %v5843
    %9154 = vmatpush1.bf16.msra.mxu0 %v5842
    %9155 = vmatprep.subr.bf16.mxu0 %v5933
    %9156 = vmatpush2.bf16.msra.mxu0 %v5932
    %9157 = vmatprep.subr.bf16.mxu0 %v5927
    %9158 = vmatpush2.bf16.msra.mxu0 %v5926
    %9159 = vmatprep.subr.bf16.mxu0 %v5921
    %9160 = vmatpush2.bf16.msra.mxu0 %v5920
    %9161 = vmatprep.subr.bf16.mxu0 %v5915
    %9162 = vmatpush2.bf16.msra.mxu0 %v5914
    %9163 = vmatprep.subr.bf16.mxu0 %v5909
    %9164 = vmatpush2.bf16.msra.mxu0 %v5908
    %9165 = vmatprep.subr.bf16.mxu0 %v5903
    %9166 = vmatpush2.bf16.msra.mxu0 %v5902
    %9167 = vmatprep.subr.bf16.mxu0 %v5897
    %9168 = vmatpush2.bf16.msra.mxu0 %v5896
    %9169 = vmatprep.subr.bf16.mxu0 %v5891
    %9170 = vmatpush2.bf16.msra.mxu0 %v5890
    %9171 = vmatprep.mubr.bf16.mxu0 %v732
    %9172 = vmatmul.mubr.bf16.gmra.mxu0 %v731
    %v9173 = vpop.f32.mrf.mxu0
    %v9174 = vadd.f32 %v9133, %v9173
    %v9175 = vpop.f32.mrf.mxu0
    %v9176 = vadd.f32 %v9135, %v9175
    %v9177 = vpop.f32.mrf.mxu0
    %v9178 = vpop.f32.mrf.mxu0
    %9179 = vdwg.mxu0
    %9180 = vmatprep.subr.bf16.mxu0 %v5981
    %9181 = vmatpush1.bf16.msra.mxu0 %v5980
    %9182 = vmatprep.subr.bf16.mxu0 %v5975
    %9183 = vmatpush1.bf16.msra.mxu0 %v5974
    %9184 = vmatprep.subr.bf16.mxu0 %v5969
    %9185 = vmatpush1.bf16.msra.mxu0 %v5968
    %9186 = vmatprep.subr.bf16.mxu0 %v5963
    %9187 = vmatpush1.bf16.msra.mxu0 %v5962
    %9188 = vmatprep.subr.bf16.mxu0 %v5957
    %9189 = vmatpush1.bf16.msra.mxu0 %v5956
    %9190 = vmatprep.subr.bf16.mxu0 %v5951
    %9191 = vmatpush1.bf16.msra.mxu0 %v5950
    %9192 = vmatprep.subr.bf16.mxu0 %v5945
    %9193 = vmatpush1.bf16.msra.mxu0 %v5944
    %9194 = vmatprep.subr.bf16.mxu0 %v5939
    %9195 = vmatpush1.bf16.msra.mxu0 %v5938
    %9196 = vmatprep.subr.bf16.mxu0 %v6029
    %9197 = vmatpush2.bf16.msra.mxu0 %v6028
    %9198 = vmatprep.subr.bf16.mxu0 %v6023
    %9199 = vmatpush2.bf16.msra.mxu0 %v6022
    %9200 = vmatprep.subr.bf16.mxu0 %v6017
    %9201 = vmatpush2.bf16.msra.mxu0 %v6016
    %9202 = vmatprep.subr.bf16.mxu0 %v6011
    %9203 = vmatpush2.bf16.msra.mxu0 %v6010
    %9204 = vmatprep.subr.bf16.mxu0 %v6005
    %9205 = vmatpush2.bf16.msra.mxu0 %v6004
    %9206 = vmatprep.subr.bf16.mxu0 %v5999
    %9207 = vmatpush2.bf16.msra.mxu0 %v5998
    %9208 = vmatprep.subr.bf16.mxu0 %v5993
    %9209 = vmatpush2.bf16.msra.mxu0 %v5992
    %9210 = vmatprep.subr.bf16.mxu0 %v5987
    %9211 = vmatpush2.bf16.msra.mxu0 %v5986
    %9212 = vmatprep.mubr.bf16.mxu0 %v734
    %9213 = vmatmul.mubr.bf16.gmra.mxu0 %v733
    %v9214 = vpop.f32.mrf.mxu0
    %v9215 = vadd.f32 %v9174, %v9214
    %v9216 = vpop.f32.mrf.mxu0
    %v9217 = vadd.f32 %v9176, %v9216
    %v9218 = vpop.f32.mrf.mxu0
    %v9219 = vpop.f32.mrf.mxu0
    %9220 = vdwg.mxu0
    %9221 = vmatprep.subr.bf16.mxu0 %v6077
    %9222 = vmatpush1.bf16.msra.mxu0 %v6076
    %9223 = vmatprep.subr.bf16.mxu0 %v6071
    %9224 = vmatpush1.bf16.msra.mxu0 %v6070
    %9225 = vmatprep.subr.bf16.mxu0 %v6065
    %9226 = vmatpush1.bf16.msra.mxu0 %v6064
    %9227 = vmatprep.subr.bf16.mxu0 %v6059
    %9228 = vmatpush1.bf16.msra.mxu0 %v6058
    %9229 = vmatprep.subr.bf16.mxu0 %v6053
    %9230 = vmatpush1.bf16.msra.mxu0 %v6052
    %9231 = vmatprep.subr.bf16.mxu0 %v6047
    %9232 = vmatpush1.bf16.msra.mxu0 %v6046
    %9233 = vmatprep.subr.bf16.mxu0 %v6041
    %9234 = vmatpush1.bf16.msra.mxu0 %v6040
    %9235 = vmatprep.subr.bf16.mxu0 %v6035
    %9236 = vmatpush1.bf16.msra.mxu0 %v6034
    %9237 = vmatprep.subr.bf16.mxu0 %v6125
    %9238 = vmatpush2.bf16.msra.mxu0 %v6124
    %9239 = vmatprep.subr.bf16.mxu0 %v6119
    %9240 = vmatpush2.bf16.msra.mxu0 %v6118
    %9241 = vmatprep.subr.bf16.mxu0 %v6113
    %9242 = vmatpush2.bf16.msra.mxu0 %v6112
    %9243 = vmatprep.subr.bf16.mxu0 %v6107
    %9244 = vmatpush2.bf16.msra.mxu0 %v6106
    %9245 = vmatprep.subr.bf16.mxu0 %v6101
    %9246 = vmatpush2.bf16.msra.mxu0 %v6100
    %9247 = vmatprep.subr.bf16.mxu0 %v6095
    %9248 = vmatpush2.bf16.msra.mxu0 %v6094
    %9249 = vmatprep.subr.bf16.mxu0 %v6089
    %9250 = vmatpush2.bf16.msra.mxu0 %v6088
    %9251 = vmatprep.subr.bf16.mxu0 %v6083
    %9252 = vmatpush2.bf16.msra.mxu0 %v6082
    %9253 = vmatprep.mubr.bf16.mxu0 %v736
    %9254 = vmatmul.mubr.bf16.gmra.mxu0 %v735
    %v9255 = vpop.f32.mrf.mxu0
    %v9256 = vadd.f32 %v9215, %v9255
    %v9257 = vpop.f32.mrf.mxu0
    %v9258 = vadd.f32 %v9217, %v9257
    %v9259 = vpop.f32.mrf.mxu0
    %v9260 = vpop.f32.mrf.mxu0
    %9261 = vdwg.mxu0
    %9262 = vmatprep.subr.bf16.mxu0 %v6173
    %9263 = vmatpush1.bf16.msra.mxu0 %v6172
    %9264 = vmatprep.subr.bf16.mxu0 %v6167
    %9265 = vmatpush1.bf16.msra.mxu0 %v6166
    %9266 = vmatprep.subr.bf16.mxu0 %v6161
    %9267 = vmatpush1.bf16.msra.mxu0 %v6160
    %9268 = vmatprep.subr.bf16.mxu0 %v6155
    %9269 = vmatpush1.bf16.msra.mxu0 %v6154
    %9270 = vmatprep.subr.bf16.mxu0 %v6149
    %9271 = vmatpush1.bf16.msra.mxu0 %v6148
    %9272 = vmatprep.subr.bf16.mxu0 %v6143
    %9273 = vmatpush1.bf16.msra.mxu0 %v6142
    %9274 = vmatprep.subr.bf16.mxu0 %v6137
    %9275 = vmatpush1.bf16.msra.mxu0 %v6136
    %9276 = vmatprep.subr.bf16.mxu0 %v6131
    %9277 = vmatpush1.bf16.msra.mxu0 %v6130
    %9278 = vmatprep.subr.bf16.mxu0 %v6221
    %9279 = vmatpush2.bf16.msra.mxu0 %v6220
    %9280 = vmatprep.subr.bf16.mxu0 %v6215
    %9281 = vmatpush2.bf16.msra.mxu0 %v6214
    %9282 = vmatprep.subr.bf16.mxu0 %v6209
    %9283 = vmatpush2.bf16.msra.mxu0 %v6208
    %9284 = vmatprep.subr.bf16.mxu0 %v6203
    %9285 = vmatpush2.bf16.msra.mxu0 %v6202
    %9286 = vmatprep.subr.bf16.mxu0 %v6197
    %9287 = vmatpush2.bf16.msra.mxu0 %v6196
    %9288 = vmatprep.subr.bf16.mxu0 %v6191
    %9289 = vmatpush2.bf16.msra.mxu0 %v6190
    %9290 = vmatprep.subr.bf16.mxu0 %v6185
    %9291 = vmatpush2.bf16.msra.mxu0 %v6184
    %9292 = vmatprep.subr.bf16.mxu0 %v6179
    %9293 = vmatpush2.bf16.msra.mxu0 %v6178
    %9294 = vmatprep.mubr.bf16.mxu0 %v738
    %9295 = vmatmul.mubr.bf16.gmra.mxu0 %v737
    %v9296 = vpop.f32.mrf.mxu0
    %v9297 = vadd.f32 %v9256, %v9296
    %v9298 = vpop.f32.mrf.mxu0
    %v9299 = vadd.f32 %v9258, %v9298
    %v9300 = vpop.f32.mrf.mxu0
    %v9301 = vpop.f32.mrf.mxu0
    %9302 = vdwg.mxu0
    %9303 = vmatprep.subr.bf16.mxu0 %v6269
    %9304 = vmatpush1.bf16.msra.mxu0 %v6268
    %9305 = vmatprep.subr.bf16.mxu0 %v6263
    %9306 = vmatpush1.bf16.msra.mxu0 %v6262
    %9307 = vmatprep.subr.bf16.mxu0 %v6257
    %9308 = vmatpush1.bf16.msra.mxu0 %v6256
    %9309 = vmatprep.subr.bf16.mxu0 %v6251
    %9310 = vmatpush1.bf16.msra.mxu0 %v6250
    %9311 = vmatprep.subr.bf16.mxu0 %v6245
    %9312 = vmatpush1.bf16.msra.mxu0 %v6244
    %9313 = vmatprep.subr.bf16.mxu0 %v6239
    %9314 = vmatpush1.bf16.msra.mxu0 %v6238
    %9315 = vmatprep.subr.bf16.mxu0 %v6233
    %9316 = vmatpush1.bf16.msra.mxu0 %v6232
    %9317 = vmatprep.subr.bf16.mxu0 %v6227
    %9318 = vmatpush1.bf16.msra.mxu0 %v6226
    %9319 = vmatprep.subr.bf16.mxu0 %v6317
    %9320 = vmatpush2.bf16.msra.mxu0 %v6316
    %9321 = vmatprep.subr.bf16.mxu0 %v6311
    %9322 = vmatpush2.bf16.msra.mxu0 %v6310
    %9323 = vmatprep.subr.bf16.mxu0 %v6305
    %9324 = vmatpush2.bf16.msra.mxu0 %v6304
    %9325 = vmatprep.subr.bf16.mxu0 %v6299
    %9326 = vmatpush2.bf16.msra.mxu0 %v6298
    %9327 = vmatprep.subr.bf16.mxu0 %v6293
    %9328 = vmatpush2.bf16.msra.mxu0 %v6292
    %9329 = vmatprep.subr.bf16.mxu0 %v6287
    %9330 = vmatpush2.bf16.msra.mxu0 %v6286
    %9331 = vmatprep.subr.bf16.mxu0 %v6281
    %9332 = vmatpush2.bf16.msra.mxu0 %v6280
    %9333 = vmatprep.subr.bf16.mxu0 %v6275
    %9334 = vmatpush2.bf16.msra.mxu0 %v6274
    %9335 = vmatprep.mubr.bf16.mxu0 %v740
    %9336 = vmatmul.mubr.bf16.gmra.mxu0 %v739
    %v9337 = vpop.f32.mrf.mxu0
    %v9338 = vadd.f32 %v9297, %v9337
    %v9339 = vpop.f32.mrf.mxu0
    %v9340 = vadd.f32 %v9299, %v9339
    %v9341 = vpop.f32.mrf.mxu0
    %v9342 = vpop.f32.mrf.mxu0
    %9343 = vdwg.mxu0
    %9344 = vmatprep.subr.bf16.mxu0 %v6365
    %9345 = vmatpush1.bf16.msra.mxu0 %v6364
    %9346 = vmatprep.subr.bf16.mxu0 %v6359
    %9347 = vmatpush1.bf16.msra.mxu0 %v6358
    %9348 = vmatprep.subr.bf16.mxu0 %v6353
    %9349 = vmatpush1.bf16.msra.mxu0 %v6352
    %9350 = vmatprep.subr.bf16.mxu0 %v6347
    %9351 = vmatpush1.bf16.msra.mxu0 %v6346
    %9352 = vmatprep.subr.bf16.mxu0 %v6341
    %9353 = vmatpush1.bf16.msra.mxu0 %v6340
    %9354 = vmatprep.subr.bf16.mxu0 %v6335
    %9355 = vmatpush1.bf16.msra.mxu0 %v6334
    %9356 = vmatprep.subr.bf16.mxu0 %v6329
    %9357 = vmatpush1.bf16.msra.mxu0 %v6328
    %9358 = vmatprep.subr.bf16.mxu0 %v6323
    %9359 = vmatpush1.bf16.msra.mxu0 %v6322
    %9360 = vmatprep.subr.bf16.mxu0 %v6413
    %9361 = vmatpush2.bf16.msra.mxu0 %v6412
    %9362 = vmatprep.subr.bf16.mxu0 %v6407
    %9363 = vmatpush2.bf16.msra.mxu0 %v6406
    %9364 = vmatprep.subr.bf16.mxu0 %v6401
    %9365 = vmatpush2.bf16.msra.mxu0 %v6400
    %9366 = vmatprep.subr.bf16.mxu0 %v6395
    %9367 = vmatpush2.bf16.msra.mxu0 %v6394
    %9368 = vmatprep.subr.bf16.mxu0 %v6389
    %9369 = vmatpush2.bf16.msra.mxu0 %v6388
    %9370 = vmatprep.subr.bf16.mxu0 %v6383
    %9371 = vmatpush2.bf16.msra.mxu0 %v6382
    %9372 = vmatprep.subr.bf16.mxu0 %v6377
    %9373 = vmatpush2.bf16.msra.mxu0 %v6376
    %9374 = vmatprep.subr.bf16.mxu0 %v6371
    %9375 = vmatpush2.bf16.msra.mxu0 %v6370
    %9376 = vmatprep.mubr.bf16.mxu0 %v742
    %9377 = vmatmul.mubr.bf16.gmra.mxu0 %v741
    %v9378 = vpop.f32.mrf.mxu0
    %v9379 = vadd.f32 %v9338, %v9378
    %v9380 = vpop.f32.mrf.mxu0
    %v9381 = vadd.f32 %v9340, %v9380
    %v9382 = vpop.f32.mrf.mxu0
    %v9383 = vpop.f32.mrf.mxu0
    %9384 = vdwg.mxu0
    %9385 = vmatprep.subr.bf16.mxu0 %v6461
    %9386 = vmatpush1.bf16.msra.mxu0 %v6460
    %9387 = vmatprep.subr.bf16.mxu0 %v6455
    %9388 = vmatpush1.bf16.msra.mxu0 %v6454
    %9389 = vmatprep.subr.bf16.mxu0 %v6449
    %9390 = vmatpush1.bf16.msra.mxu0 %v6448
    %9391 = vmatprep.subr.bf16.mxu0 %v6443
    %9392 = vmatpush1.bf16.msra.mxu0 %v6442
    %9393 = vmatprep.subr.bf16.mxu0 %v6437
    %9394 = vmatpush1.bf16.msra.mxu0 %v6436
    %9395 = vmatprep.subr.bf16.mxu0 %v6431
    %9396 = vmatpush1.bf16.msra.mxu0 %v6430
    %9397 = vmatprep.subr.bf16.mxu0 %v6425
    %9398 = vmatpush1.bf16.msra.mxu0 %v6424
    %9399 = vmatprep.subr.bf16.mxu0 %v6419
    %9400 = vmatpush1.bf16.msra.mxu0 %v6418
    %9401 = vmatprep.subr.bf16.mxu0 %v6509
    %9402 = vmatpush2.bf16.msra.mxu0 %v6508
    %9403 = vmatprep.subr.bf16.mxu0 %v6503
    %9404 = vmatpush2.bf16.msra.mxu0 %v6502
    %9405 = vmatprep.subr.bf16.mxu0 %v6497
    %9406 = vmatpush2.bf16.msra.mxu0 %v6496
    %9407 = vmatprep.subr.bf16.mxu0 %v6491
    %9408 = vmatpush2.bf16.msra.mxu0 %v6490
    %9409 = vmatprep.subr.bf16.mxu0 %v6485
    %9410 = vmatpush2.bf16.msra.mxu0 %v6484
    %9411 = vmatprep.subr.bf16.mxu0 %v6479
    %9412 = vmatpush2.bf16.msra.mxu0 %v6478
    %9413 = vmatprep.subr.bf16.mxu0 %v6473
    %9414 = vmatpush2.bf16.msra.mxu0 %v6472
    %9415 = vmatprep.subr.bf16.mxu0 %v6467
    %9416 = vmatpush2.bf16.msra.mxu0 %v6466
    %9417 = vmatprep.mubr.bf16.mxu0 %v744
    %9418 = vmatmul.mubr.bf16.gmra.mxu0 %v743
    %v9419 = vpop.f32.mrf.mxu0
    %v9420 = vadd.f32 %v9379, %v9419
    %v9421 = vpop.f32.mrf.mxu0
    %v9422 = vadd.f32 %v9381, %v9421
    %v9423 = vpop.f32.mrf.mxu0
    %v9424 = vpop.f32.mrf.mxu0
    %9425 = vdwg.mxu0
    %9426 = vmatprep.subr.bf16.mxu0 %v6557
    %9427 = vmatpush1.bf16.msra.mxu0 %v6556
    %9428 = vmatprep.subr.bf16.mxu0 %v6551
    %9429 = vmatpush1.bf16.msra.mxu0 %v6550
    %9430 = vmatprep.subr.bf16.mxu0 %v6545
    %9431 = vmatpush1.bf16.msra.mxu0 %v6544
    %9432 = vmatprep.subr.bf16.mxu0 %v6539
    %9433 = vmatpush1.bf16.msra.mxu0 %v6538
    %9434 = vmatprep.subr.bf16.mxu0 %v6533
    %9435 = vmatpush1.bf16.msra.mxu0 %v6532
    %9436 = vmatprep.subr.bf16.mxu0 %v6527
    %9437 = vmatpush1.bf16.msra.mxu0 %v6526
    %9438 = vmatprep.subr.bf16.mxu0 %v6521
    %9439 = vmatpush1.bf16.msra.mxu0 %v6520
    %9440 = vmatprep.subr.bf16.mxu0 %v6515
    %9441 = vmatpush1.bf16.msra.mxu0 %v6514
    %9442 = vmatprep.subr.bf16.mxu0 %v6605
    %9443 = vmatpush2.bf16.msra.mxu0 %v6604
    %9444 = vmatprep.subr.bf16.mxu0 %v6599
    %9445 = vmatpush2.bf16.msra.mxu0 %v6598
    %9446 = vmatprep.subr.bf16.mxu0 %v6593
    %9447 = vmatpush2.bf16.msra.mxu0 %v6592
    %9448 = vmatprep.subr.bf16.mxu0 %v6587
    %9449 = vmatpush2.bf16.msra.mxu0 %v6586
    %9450 = vmatprep.subr.bf16.mxu0 %v6581
    %9451 = vmatpush2.bf16.msra.mxu0 %v6580
    %9452 = vmatprep.subr.bf16.mxu0 %v6575
    %9453 = vmatpush2.bf16.msra.mxu0 %v6574
    %9454 = vmatprep.subr.bf16.mxu0 %v6569
    %9455 = vmatpush2.bf16.msra.mxu0 %v6568
    %9456 = vmatprep.subr.bf16.mxu0 %v6563
    %9457 = vmatpush2.bf16.msra.mxu0 %v6562
    %9458 = vmatprep.mubr.bf16.mxu0 %v746
    %9459 = vmatmul.mubr.bf16.gmra.mxu0 %v745
    %v9460 = vpop.f32.mrf.mxu0
    %v9461 = vadd.f32 %v9420, %v9460
    %v9462 = vpop.f32.mrf.mxu0
    %v9463 = vadd.f32 %v9422, %v9462
    %v9464 = vpop.f32.mrf.mxu0
    %v9465 = vpop.f32.mrf.mxu0
    %9466 = vdwg.mxu0
    %9467 = vmatprep.subr.bf16.mxu0 %v6653
    %9468 = vmatpush1.bf16.msra.mxu0 %v6652
    %9469 = vmatprep.subr.bf16.mxu0 %v6647
    %9470 = vmatpush1.bf16.msra.mxu0 %v6646
    %9471 = vmatprep.subr.bf16.mxu0 %v6641
    %9472 = vmatpush1.bf16.msra.mxu0 %v6640
    %9473 = vmatprep.subr.bf16.mxu0 %v6635
    %9474 = vmatpush1.bf16.msra.mxu0 %v6634
    %9475 = vmatprep.subr.bf16.mxu0 %v6629
    %9476 = vmatpush1.bf16.msra.mxu0 %v6628
    %9477 = vmatprep.subr.bf16.mxu0 %v6623
    %9478 = vmatpush1.bf16.msra.mxu0 %v6622
    %9479 = vmatprep.subr.bf16.mxu0 %v6617
    %9480 = vmatpush1.bf16.msra.mxu0 %v6616
    %9481 = vmatprep.subr.bf16.mxu0 %v6611
    %9482 = vmatpush1.bf16.msra.mxu0 %v6610
    %9483 = vmatprep.subr.bf16.mxu0 %v6701
    %9484 = vmatpush2.bf16.msra.mxu0 %v6700
    %9485 = vmatprep.subr.bf16.mxu0 %v6695
    %9486 = vmatpush2.bf16.msra.mxu0 %v6694
    %9487 = vmatprep.subr.bf16.mxu0 %v6689
    %9488 = vmatpush2.bf16.msra.mxu0 %v6688
    %9489 = vmatprep.subr.bf16.mxu0 %v6683
    %9490 = vmatpush2.bf16.msra.mxu0 %v6682
    %9491 = vmatprep.subr.bf16.mxu0 %v6677
    %9492 = vmatpush2.bf16.msra.mxu0 %v6676
    %9493 = vmatprep.subr.bf16.mxu0 %v6671
    %9494 = vmatpush2.bf16.msra.mxu0 %v6670
    %9495 = vmatprep.subr.bf16.mxu0 %v6665
    %9496 = vmatpush2.bf16.msra.mxu0 %v6664
    %9497 = vmatprep.subr.bf16.mxu0 %v6659
    %9498 = vmatpush2.bf16.msra.mxu0 %v6658
    %9499 = vmatprep.mubr.bf16.mxu0 %v748
    %9500 = vmatmul.mubr.bf16.gmra.mxu0 %v747
    %v9501 = vpop.f32.mrf.mxu0
    %v9502 = vadd.f32 %v9461, %v9501
    %v9503 = vpop.f32.mrf.mxu0
    %v9504 = vadd.f32 %v9463, %v9503
    %v9505 = vpop.f32.mrf.mxu0
    %v9506 = vpop.f32.mrf.mxu0
    %9507 = vdwg.mxu0
    %9508 = vmatprep.subr.bf16.mxu0 %v6749
    %9509 = vmatpush1.bf16.msra.mxu0 %v6748
    %9510 = vmatprep.subr.bf16.mxu0 %v6743
    %9511 = vmatpush1.bf16.msra.mxu0 %v6742
    %9512 = vmatprep.subr.bf16.mxu0 %v6737
    %9513 = vmatpush1.bf16.msra.mxu0 %v6736
    %9514 = vmatprep.subr.bf16.mxu0 %v6731
    %9515 = vmatpush1.bf16.msra.mxu0 %v6730
    %9516 = vmatprep.subr.bf16.mxu0 %v6725
    %9517 = vmatpush1.bf16.msra.mxu0 %v6724
    %9518 = vmatprep.subr.bf16.mxu0 %v6719
    %9519 = vmatpush1.bf16.msra.mxu0 %v6718
    %9520 = vmatprep.subr.bf16.mxu0 %v6713
    %9521 = vmatpush1.bf16.msra.mxu0 %v6712
    %9522 = vmatprep.subr.bf16.mxu0 %v6707
    %9523 = vmatpush1.bf16.msra.mxu0 %v6706
    %9524 = vmatprep.subr.bf16.mxu0 0
    %9525 = vmatpush2.bf16.msra.mxu0 0
    %9526 = vmatprep.subr.bf16.mxu0 0
    %9527 = vmatpush2.bf16.msra.mxu0 0
    %9528 = vmatprep.subr.bf16.mxu0 0
    %9529 = vmatpush2.bf16.msra.mxu0 0
    %9530 = vmatprep.subr.bf16.mxu0 0
    %9531 = vmatpush2.bf16.msra.mxu0 0
    %9532 = vmatprep.subr.bf16.mxu0 0
    %9533 = vmatpush2.bf16.msra.mxu0 0
    %9534 = vmatprep.subr.bf16.mxu0 0
    %9535 = vmatpush2.bf16.msra.mxu0 0
    %9536 = vmatprep.subr.bf16.mxu0 0
    %9537 = vmatpush2.bf16.msra.mxu0 0
    %9538 = vmatprep.subr.bf16.mxu0 0
    %9539 = vmatpush2.bf16.msra.mxu0 0
    %9540 = vmatprep.mubr.bf16.mxu0 0
    %9541 = vmatmul.mubr.bf16.gmra.mxu0 %v749
    %v9542 = vpop.f32.mrf.mxu0
    %v9543 = vadd.f32 %v9502, %v9542
    %v9544 = vpop.f32.mrf.mxu0
    %v9545 = vadd.f32 %v9504, %v9544
    %v9546 = vpop.f32.mrf.mxu0
    %v9547 = vpop.f32.mrf.mxu0
    %9548 = vdwg.mxu0
    %v9549 = vmax.f32 %v8477, 0.0
    %v9550 = vmax.f32 %v8479, 0.0
    %v9551 = vmax.f32 %v9010, 0.0
    %v9552 = vmax.f32 %v9012, 0.0
    %v9553 = vmax.f32 %v9543, 0.0
    %v9554 = vmax.f32 %v9545, 0.0
    %v9555 = vpack.c.bf16 %v9549, %v9549
    %v9556 = vpack.c.bf16 %v9550, %v9550
    %v9557 = vpack.c.bf16 %v9551, %v9551
    %v9558 = vpack.c.bf16 %v9552, %v9552
    %v9559 = vpack.c.bf16 %v9553, %v9553
    %v9560 = vpack.c.bf16 %v9554, %v9554
    %v9561 = vld [vmem:[%s4] sm:$0xf]
    %v9562 = vld [vmem:[%s4 + $0x4] sm:$0xf]
    %v9563 = vld [vmem:[%s4 + $0x8] sm:$0xf]
    %v9564 = vld [vmem:[%s4 + $0xc] sm:$0xf]
    %v9565 = vld [vmem:[%s4 + $0x10] sm:$0xf]
    %v9566 = vld [vmem:[%s4 + $0x14] sm:$0xf]
    %v9567 = vld [vmem:[%s4 + $0x18] sm:$0xf]
    %v9568 = vld [vmem:[%s4 + $0x1c] sm:$0xf]
    %v9569 = vld [vmem:[%s4 + $0x20] sm:$0xf]
    %v9570 = vld [vmem:[%s4 + $0x24] sm:$0xf]
    %v9571 = vld [vmem:[%s4 + $0x28] sm:$0xf]
    %v9572 = vld [vmem:[%s4 + $0x2c] sm:$0xf]
    %v9573 = vld [vmem:[%s4 + $0x30] sm:$0xf]
    %v9574 = vld [vmem:[%s4 + $0x34] sm:$0xf]
    %v9575 = vld [vmem:[%s4 + $0x38] sm:$0xf]
    %v9576 = vld [vmem:[%s4 + $0x3c] sm:$0xf]
    %v9577 = vld [vmem:[%s4 + $0x40] sm:$0xf]
    %v9578 = vld [vmem:[%s4 + $0x44] sm:$0xf]
    %v9579 = vld [vmem:[%s4 + $0x48] sm:$0xf]
    %v9580 = vld [vmem:[%s4 + $0x4c] sm:$0xf]
    %v9581 = vld [vmem:[%s4 + $0x50] sm:$0xf]
    %v9582 = vld [vmem:[%s4 + $0x54] sm:$0xf]
    %v9583 = vld [vmem:[%s4 + $0x58] sm:$0xf]
    %v9584 = vld [vmem:[%s4 + $0x5c] sm:$0xf]
    %v9585 = vld [vmem:[%s4 + $0x60] sm:$0xf]
    %v9586 = vld [vmem:[%s4 + $0x64] sm:$0xf]
    %v9587 = vld [vmem:[%s4 + $0x68] sm:$0xf]
    %v9588 = vld [vmem:[%s4 + $0x6c] sm:$0xf]
    %v9589 = vld [vmem:[%s4 + $0x70] sm:$0xf]
    %v9590 = vld [vmem:[%s4 + $0x74] sm:$0xf]
    %v9591 = vld [vmem:[%s4 + $0x78] sm:$0xf]
    %v9592 = vld [vmem:[%s4 + $0x7c] sm:$0xf]
    %v9593 = vld [vmem:[%s4 + $0x80] sm:$0xf]
    %v9594 = vld [vmem:[%s4 + $0x84] sm:$0xf]
    %v9595 = vld [vmem:[%s4 + $0x88] sm:$0xf]
    %v9596 = vld [vmem:[%s4 + $0x8c] sm:$0xf]
    %v9597 = vld [vmem:[%s4 + $0x90] sm:$0xf]
    %v9598 = vld [vmem:[%s4 + $0x94] sm:$0xf]
    %v9599 = vld [vmem:[%s4 + $0x98] sm:$0xf]
    %v9600 = vld [vmem:[%s4 + $0x9c] sm:$0xf]
    %v9601 = vld [vmem:[%s4 + $0xa0] sm:$0xf]
    %v9602 = vld [vmem:[%s4 + $0xa4] sm:$0xf]
    %v9603 = vld [vmem:[%s4 + $0xa8] sm:$0xf]
    %v9604 = vld [vmem:[%s4 + $0xac] sm:$0xf]
    %v9605 = vld [vmem:[%s4 + $0xb0] sm:$0xf]
    %v9606 = vld [vmem:[%s4 + $0xb4] sm:$0xf]
    %v9607 = vld [vmem:[%s4 + $0xb8] sm:$0xf]
    %v9608 = vld [vmem:[%s4 + $0xbc] sm:$0xf]
    %v9609 = vld [vmem:[%s4 + $0xc0] sm:$0xf]
    %v9610 = vld [vmem:[%s4 + $0xc4] sm:$0xf]
    %v9611 = vld [vmem:[%s4 + $0xc8] sm:$0xf]
    %v9612 = vld [vmem:[%s4 + $0xcc] sm:$0xf]
    %v9613 = vld [vmem:[%s4 + $0xd0] sm:$0xf]
    %v9614 = vld [vmem:[%s4 + $0xd4] sm:$0xf]
    %v9615 = vld [vmem:[%s4 + $0xd8] sm:$0xf]
    %v9616 = vld [vmem:[%s4 + $0xdc] sm:$0xf]
    %v9617 = vld [vmem:[%s4 + $0xe0] sm:$0xf]
    %v9618 = vld [vmem:[%s4 + $0xe4] sm:$0xf]
    %v9619 = vld [vmem:[%s4 + $0xe8] sm:$0xf]
    %v9620 = vld [vmem:[%s4 + $0xec] sm:$0xf]
    %v9621 = vld [vmem:[%s4 + $0xf0] sm:$0xf]
    %v9622 = vld [vmem:[%s4 + $0xf4] sm:$0xf]
    %v9623 = vld [vmem:[%s4 + $0xf8] sm:$0xf]
    %v9624 = vld [vmem:[%s4 + $0xfc] sm:$0xf]
    %v9625 = vld [vmem:[%s4 + $0x100] sm:$0xf]
    %v9626 = vld [vmem:[%s4 + $0x104] sm:$0xf]
    %v9627 = vld [vmem:[%s4 + $0x108] sm:$0xf]
    %v9628 = vld [vmem:[%s4 + $0x10c] sm:$0xf]
    %v9629 = vld [vmem:[%s4 + $0x110] sm:$0xf]
    %v9630 = vld [vmem:[%s4 + $0x114] sm:$0xf]
    %v9631 = vld [vmem:[%s4 + $0x118] sm:$0xf]
    %v9632 = vld [vmem:[%s4 + $0x11c] sm:$0xf]
    %v9633 = vld [vmem:[%s4 + $0x120] sm:$0xf]
    %v9634 = vld [vmem:[%s4 + $0x124] sm:$0xf]
    %v9635 = vld [vmem:[%s4 + $0x128] sm:$0xf]
    %v9636 = vld [vmem:[%s4 + $0x12c] sm:$0xf]
    %v9637 = vld [vmem:[%s4 + $0x130] sm:$0xf]
    %v9638 = vld [vmem:[%s4 + $0x134] sm:$0xf]
    %v9639 = vld [vmem:[%s4 + $0x138] sm:$0xf]
    %v9640 = vld [vmem:[%s4 + $0x13c] sm:$0xf]
    %v9641 = vld [vmem:[%s4 + $0x140] sm:$0xf]
    %v9642 = vld [vmem:[%s4 + $0x144] sm:$0xf]
    %v9643 = vld [vmem:[%s4 + $0x148] sm:$0xf]
    %v9644 = vld [vmem:[%s4 + $0x14c] sm:$0xf]
    %v9645 = vld [vmem:[%s4 + $0x150] sm:$0xf]
    %v9646 = vld [vmem:[%s4 + $0x154] sm:$0xf]
    %v9647 = vld [vmem:[%s4 + $0x158] sm:$0xf]
    %v9648 = vld [vmem:[%s4 + $0x15c] sm:$0xf]
    %v9649 = vld [vmem:[%s4 + $0x160] sm:$0xf]
    %v9650 = vld [vmem:[%s4 + $0x164] sm:$0xf]
    %v9651 = vld [vmem:[%s4 + $0x168] sm:$0xf]
    %v9652 = vld [vmem:[%s4 + $0x16c] sm:$0xf]
    %v9653 = vld [vmem:[%s4 + $0x170] sm:$0xf]
    %v9654 = vld [vmem:[%s4 + $0x174] sm:$0xf]
    %v9655 = vld [vmem:[%s4 + $0x178] sm:$0xf]
    %v9656 = vld [vmem:[%s4 + $0x17c] sm:$0xf]
    %v9657 = vld [vmem:[#allocation8] sm:$0x1]
    %v9659 = vlaneseq
    %v9660 = vshrl.u32 %v9659, 7
    %v9661 = vsub.s32 0, %v9660
    %v9662 = vrot.slane %v9657, %v9661
    %v9760 = vunpack.c.l.b16 %v9561
    %v9761 = vunpack.c.l.b16 %v9562
    %v9762 = vunpack.c.l.b16 %v9563
    %v9763 = vunpack.c.l.b16 %v9564
    %v9764 = vunpack.c.l.b16 %v9565
    %v9765 = vunpack.c.l.b16 %v9566
    %v9766 = vunpack.c.l.b16 %v9567
    %v9767 = vunpack.c.l.b16 %v9568
    %v9768 = vunpack.c.l.b16 %v9569
    %v9769 = vunpack.c.l.b16 %v9570
    %v9770 = vunpack.c.l.b16 %v9571
    %v9771 = vunpack.c.l.b16 %v9572
    %v9772 = vunpack.c.l.b16 %v9573
    %v9773 = vunpack.c.l.b16 %v9574
    %v9774 = vunpack.c.l.b16 %v9575
    %v9775 = vunpack.c.l.b16 %v9576
    %v9776 = vunpack.c.l.b16 %v9577
    %v9777 = vunpack.c.l.b16 %v9578
    %v9778 = vunpack.c.l.b16 %v9579
    %v9779 = vunpack.c.l.b16 %v9580
    %v9780 = vunpack.c.l.b16 %v9581
    %v9781 = vunpack.c.l.b16 %v9582
    %v9782 = vunpack.c.l.b16 %v9583
    %v9783 = vunpack.c.l.b16 %v9584
    %v9784 = vunpack.c.l.b16 %v9585
    %v9785 = vunpack.c.l.b16 %v9586
    %v9786 = vunpack.c.l.b16 %v9587
    %v9787 = vunpack.c.l.b16 %v9588
    %v9788 = vunpack.c.l.b16 %v9589
    %v9789 = vunpack.c.l.b16 %v9590
    %v9790 = vunpack.c.l.b16 %v9591
    %v9791 = vunpack.c.l.b16 %v9592
    %v9792 = vunpack.c.l.b16 %v9593
    %v9793 = vunpack.c.l.b16 %v9594
    %v9794 = vunpack.c.l.b16 %v9595
    %v9795 = vunpack.c.l.b16 %v9596
    %v9796 = vunpack.c.l.b16 %v9597
    %v9797 = vunpack.c.l.b16 %v9598
    %v9798 = vunpack.c.l.b16 %v9599
    %v9799 = vunpack.c.l.b16 %v9600
    %v9800 = vunpack.c.l.b16 %v9601
    %v9801 = vunpack.c.l.b16 %v9602
    %v9802 = vunpack.c.l.b16 %v9603
    %v9803 = vunpack.c.l.b16 %v9604
    %v9804 = vunpack.c.l.b16 %v9605
    %v9805 = vunpack.c.l.b16 %v9606
    %v9806 = vunpack.c.l.b16 %v9607
    %v9807 = vunpack.c.l.b16 %v9608
    %v9808 = vunpack.c.l.b16 %v9609
    %v9809 = vunpack.c.l.b16 %v9610
    %v9810 = vunpack.c.l.b16 %v9611
    %v9811 = vunpack.c.l.b16 %v9612
    %v9812 = vunpack.c.l.b16 %v9613
    %v9813 = vunpack.c.l.b16 %v9614
    %v9814 = vunpack.c.l.b16 %v9615
    %v9815 = vunpack.c.l.b16 %v9616
    %v9816 = vunpack.c.l.b16 %v9617
    %v9817 = vunpack.c.l.b16 %v9618
    %v9818 = vunpack.c.l.b16 %v9619
    %v9819 = vunpack.c.l.b16 %v9620
    %v9820 = vunpack.c.l.b16 %v9621
    %v9821 = vunpack.c.l.b16 %v9622
    %v9822 = vunpack.c.l.b16 %v9623
    %v9823 = vunpack.c.l.b16 %v9624
    %v9824 = vunpack.c.l.b16 %v9625
    %v9825 = vunpack.c.l.b16 %v9626
    %v9826 = vunpack.c.l.b16 %v9627
    %v9827 = vunpack.c.l.b16 %v9628
    %v9828 = vunpack.c.l.b16 %v9629
    %v9829 = vunpack.c.l.b16 %v9630
    %v9830 = vunpack.c.l.b16 %v9631
    %v9831 = vunpack.c.l.b16 %v9632
    %v9832 = vunpack.c.l.b16 %v9633
    %v9833 = vunpack.c.l.b16 %v9634
    %v9834 = vunpack.c.l.b16 %v9635
    %v9835 = vunpack.c.l.b16 %v9636
    %v9836 = vunpack.c.l.b16 %v9637
    %v9837 = vunpack.c.l.b16 %v9638
    %v9838 = vunpack.c.l.b16 %v9639
    %v9839 = vunpack.c.l.b16 %v9640
    %v9840 = vunpack.c.l.b16 %v9641
    %v9841 = vunpack.c.l.b16 %v9642
    %v9842 = vunpack.c.l.b16 %v9643
    %v9843 = vunpack.c.l.b16 %v9644
    %v9844 = vunpack.c.l.b16 %v9645
    %v9845 = vunpack.c.l.b16 %v9646
    %v9846 = vunpack.c.l.b16 %v9647
    %v9847 = vunpack.c.l.b16 %v9648
    %v9848 = vunpack.c.l.b16 %v9649
    %v9849 = vunpack.c.l.b16 %v9650
    %v9850 = vunpack.c.l.b16 %v9651
    %v9851 = vunpack.c.l.b16 %v9652
    %v9852 = vunpack.c.l.b16 %v9653
    %v9853 = vunpack.c.l.b16 %v9654
    %v9854 = vunpack.c.l.b16 %v9655
    %v9855 = vunpack.c.l.b16 %v9656
    %v9856 = vpack.c.b16 %v9761, %v9760
    %v9857 = vpack.c.b16 %v9763, %v9762
    %v9858 = vpack.c.b16 %v9765, %v9764
    %v9859 = vpack.c.b16 %v9767, %v9766
    %v9860 = vpack.c.b16 %v9769, %v9768
    %v9861 = vpack.c.b16 %v9771, %v9770
    %v9862 = vpack.c.b16 %v9773, %v9772
    %v9863 = vpack.c.b16 %v9775, %v9774
    %v9864 = vpack.c.b16 %v9777, %v9776
    %v9865 = vpack.c.b16 %v9779, %v9778
    %v9866 = vpack.c.b16 %v9781, %v9780
    %v9867 = vpack.c.b16 %v9783, %v9782
    %v9868 = vpack.c.b16 %v9785, %v9784
    %v9869 = vpack.c.b16 %v9787, %v9786
    %v9870 = vpack.c.b16 %v9789, %v9788
    %v9871 = vpack.c.b16 %v9791, %v9790
    %v9872 = vpack.c.b16 %v9793, %v9792
    %v9873 = vpack.c.b16 %v9795, %v9794
    %v9874 = vpack.c.b16 %v9797, %v9796
    %v9875 = vpack.c.b16 %v9799, %v9798
    %v9876 = vpack.c.b16 %v9801, %v9800
    %v9877 = vpack.c.b16 %v9803, %v9802
    %v9878 = vpack.c.b16 %v9805, %v9804
    %v9879 = vpack.c.b16 %v9807, %v9806
    %v9880 = vpack.c.b16 %v9809, %v9808
    %v9881 = vpack.c.b16 %v9811, %v9810
    %v9882 = vpack.c.b16 %v9813, %v9812
    %v9883 = vpack.c.b16 %v9815, %v9814
    %v9884 = vpack.c.b16 %v9817, %v9816
    %v9885 = vpack.c.b16 %v9819, %v9818
    %v9886 = vpack.c.b16 %v9821, %v9820
    %v9887 = vpack.c.b16 %v9823, %v9822
    %v9888 = vpack.c.b16 %v9825, %v9824
    %v9889 = vpack.c.b16 %v9827, %v9826
    %v9890 = vpack.c.b16 %v9829, %v9828
    %v9891 = vpack.c.b16 %v9831, %v9830
    %v9892 = vpack.c.b16 %v9833, %v9832
    %v9893 = vpack.c.b16 %v9835, %v9834
    %v9894 = vpack.c.b16 %v9837, %v9836
    %v9895 = vpack.c.b16 %v9839, %v9838
    %v9896 = vpack.c.b16 %v9841, %v9840
    %v9897 = vpack.c.b16 %v9843, %v9842
    %v9898 = vpack.c.b16 %v9845, %v9844
    %v9899 = vpack.c.b16 %v9847, %v9846
    %v9900 = vpack.c.b16 %v9849, %v9848
    %v9901 = vpack.c.b16 %v9851, %v9850
    %v9902 = vpack.c.b16 %v9853, %v9852
    %v9903 = vpack.c.b16 %v9855, %v9854
    %9952 = vmatprep.subr.bf16.mxu0 0
    %9953 = vmatpush1.bf16.msra.mxu0 %v9863
    %9954 = vmatprep.subr.bf16.mxu0 0
    %9955 = vmatpush1.bf16.msra.mxu0 %v9862
    %9956 = vmatprep.subr.bf16.mxu0 0
    %9957 = vmatpush1.bf16.msra.mxu0 %v9861
    %9958 = vmatprep.subr.bf16.mxu0 0
    %9959 = vmatpush1.bf16.msra.mxu0 %v9860
    %9960 = vmatprep.subr.bf16.mxu0 0
    %9961 = vmatpush1.bf16.msra.mxu0 %v9859
    %9962 = vmatprep.subr.bf16.mxu0 0
    %9963 = vmatpush1.bf16.msra.mxu0 %v9858
    %9964 = vmatprep.subr.bf16.mxu0 0
    %9965 = vmatpush1.bf16.msra.mxu0 %v9857
    %9966 = vmatprep.subr.bf16.mxu0 0
    %9967 = vmatpush1.bf16.msra.mxu0 %v9856
    %9968 = vmatprep.subr.bf16.mxu0 0
    %9969 = vmatpush2.bf16.msra.mxu0 %v9871
    %9970 = vmatprep.subr.bf16.mxu0 0
    %9971 = vmatpush2.bf16.msra.mxu0 %v9870
    %9972 = vmatprep.subr.bf16.mxu0 0
    %9973 = vmatpush2.bf16.msra.mxu0 %v9869
    %9974 = vmatprep.subr.bf16.mxu0 0
    %9975 = vmatpush2.bf16.msra.mxu0 %v9868
    %9976 = vmatprep.subr.bf16.mxu0 0
    %9977 = vmatpush2.bf16.msra.mxu0 %v9867
    %9978 = vmatprep.subr.bf16.mxu0 0
    %9979 = vmatpush2.bf16.msra.mxu0 %v9866
    %9980 = vmatprep.subr.bf16.mxu0 0
    %9981 = vmatpush2.bf16.msra.mxu0 %v9865
    %9982 = vmatprep.subr.bf16.mxu0 0
    %9983 = vmatpush2.bf16.msra.mxu0 %v9864
    %9984 = vmatprep.mubr.bf16.mxu0 %v9556
    %9985 = vmatmul.mubr.bf16.gmra.mxu0 %v9555
    %v9986 = vpop.f32.mrf.mxu0
    %v9987 = vadd.f32 %v9662, %v9986
    %v9988 = vpop.f32.mrf.mxu0
    %v9989 = vpop.f32.mrf.mxu0
    %v9990 = vpop.f32.mrf.mxu0
    %9991 = vdwg.mxu0
    %9992 = vmatprep.subr.bf16.mxu0 0
    %9993 = vmatpush1.bf16.msra.mxu0 %v9879
    %9994 = vmatprep.subr.bf16.mxu0 0
    %9995 = vmatpush1.bf16.msra.mxu0 %v9878
    %9996 = vmatprep.subr.bf16.mxu0 0
    %9997 = vmatpush1.bf16.msra.mxu0 %v9877
    %9998 = vmatprep.subr.bf16.mxu0 0
    %9999 = vmatpush1.bf16.msra.mxu0 %v9876
    %10000 = vmatprep.subr.bf16.mxu0 0
    %10001 = vmatpush1.bf16.msra.mxu0 %v9875
    %10002 = vmatprep.subr.bf16.mxu0 0
    %10003 = vmatpush1.bf16.msra.mxu0 %v9874
    %10004 = vmatprep.subr.bf16.mxu0 0
    %10005 = vmatpush1.bf16.msra.mxu0 %v9873
    %10006 = vmatprep.subr.bf16.mxu0 0
    %10007 = vmatpush1.bf16.msra.mxu0 %v9872
    %10008 = vmatprep.subr.bf16.mxu0 0
    %10009 = vmatpush2.bf16.msra.mxu0 %v9887
    %10010 = vmatprep.subr.bf16.mxu0 0
    %10011 = vmatpush2.bf16.msra.mxu0 %v9886
    %10012 = vmatprep.subr.bf16.mxu0 0
    %10013 = vmatpush2.bf16.msra.mxu0 %v9885
    %10014 = vmatprep.subr.bf16.mxu0 0
    %10015 = vmatpush2.bf16.msra.mxu0 %v9884
    %10016 = vmatprep.subr.bf16.mxu0 0
    %10017 = vmatpush2.bf16.msra.mxu0 %v9883
    %10018 = vmatprep.subr.bf16.mxu0 0
    %10019 = vmatpush2.bf16.msra.mxu0 %v9882
    %10020 = vmatprep.subr.bf16.mxu0 0
    %10021 = vmatpush2.bf16.msra.mxu0 %v9881
    %10022 = vmatprep.subr.bf16.mxu0 0
    %10023 = vmatpush2.bf16.msra.mxu0 %v9880
    %10024 = vmatprep.mubr.bf16.mxu0 %v9558
    %10025 = vmatmul.mubr.bf16.gmra.mxu0 %v9557
    %v10026 = vpop.f32.mrf.mxu0
    %v10027 = vadd.f32 %v9987, %v10026
    %v10028 = vpop.f32.mrf.mxu0
    %v10029 = vpop.f32.mrf.mxu0
    %v10030 = vpop.f32.mrf.mxu0
    %10031 = vdwg.mxu0
    %10032 = vmatprep.subr.bf16.mxu0 0
    %10033 = vmatpush1.bf16.msra.mxu0 %v9895
    %10034 = vmatprep.subr.bf16.mxu0 0
    %10035 = vmatpush1.bf16.msra.mxu0 %v9894
    %10036 = vmatprep.subr.bf16.mxu0 0
    %10037 = vmatpush1.bf16.msra.mxu0 %v9893
    %10038 = vmatprep.subr.bf16.mxu0 0
    %10039 = vmatpush1.bf16.msra.mxu0 %v9892
    %10040 = vmatprep.subr.bf16.mxu0 0
    %10041 = vmatpush1.bf16.msra.mxu0 %v9891
    %10042 = vmatprep.subr.bf16.mxu0 0
    %10043 = vmatpush1.bf16.msra.mxu0 %v9890
    %10044 = vmatprep.subr.bf16.mxu0 0
    %10045 = vmatpush1.bf16.msra.mxu0 %v9889
    %10046 = vmatprep.subr.bf16.mxu0 0
    %10047 = vmatpush1.bf16.msra.mxu0 %v9888
    %10048 = vmatprep.subr.bf16.mxu0 0
    %10049 = vmatpush2.bf16.msra.mxu0 %v9903
    %10050 = vmatprep.subr.bf16.mxu0 0
    %10051 = vmatpush2.bf16.msra.mxu0 %v9902
    %10052 = vmatprep.subr.bf16.mxu0 0
    %10053 = vmatpush2.bf16.msra.mxu0 %v9901
    %10054 = vmatprep.subr.bf16.mxu0 0
    %10055 = vmatpush2.bf16.msra.mxu0 %v9900
    %10056 = vmatprep.subr.bf16.mxu0 0
    %10057 = vmatpush2.bf16.msra.mxu0 %v9899
    %10058 = vmatprep.subr.bf16.mxu0 0
    %10059 = vmatpush2.bf16.msra.mxu0 %v9898
    %10060 = vmatprep.subr.bf16.mxu0 0
    %10061 = vmatpush2.bf16.msra.mxu0 %v9897
    %10062 = vmatprep.subr.bf16.mxu0 0
    %10063 = vmatpush2.bf16.msra.mxu0 %v9896
    %10064 = vmatprep.mubr.bf16.mxu0 %v9560
    %10065 = vmatmul.mubr.bf16.gmra.mxu0 %v9559
    %v10066 = vpop.f32.mrf.mxu0
    %v10067 = vadd.f32 %v10027, %v10066
    %v10068 = vpop.f32.mrf.mxu0
    %v10069 = vpop.f32.mrf.mxu0
    %v10070 = vpop.f32.mrf.mxu0
    %10071 = vdwg.mxu0
    %vm10072 = vcmask 74752
    %10073 = vst.msk [vmem:[#allocation10] sm:$0x3] %vm10072, %v10067
    // Predicated region
    $region42: #{tpu_custom_call.1} parent=1 // pred_check
      _
    $region43: #{tpu_custom_call.1} parent=1 // pred_check_branch
      %10075 = sbr.rel (0) target = $region45
    $region44: #{tpu_custom_call.1} parent=1 // pred_region
      %s10077 = ssub.s32 32, 32
      %10078 = vsyncadd [#allocation4], %s10077
      %s10080 = sshll.u32 [#allocation10], 4
      %s10081 = int_to_ptr.vmem [resolvable:$true] %s10080
      %10083 = dma.vmem_to_hbm [thread:$0]  %s10081, 32, %s6, [#allocation4]
    $region45: #{tpu_custom_call.1} parent=1 // pred_fallthru
      _
    // Predicated region
    $region46: #{tpu_custom_call.1} parent=1 // pred_check
      _
    $region47: #{tpu_custom_call.1} parent=1 // pred_check_branch
      %10085 = sbr.rel (0) target = $region49
    $region48: #{tpu_custom_call.1} parent=1 // pred_region
      %10086 = dma.done [#allocation4], 32
    $region49: #{tpu_custom_call.1} parent=1 // pred_fallthru
      _
    %10087 = vsyncpa [#allocation3], 1
    %10088 = vsyncpa [#allocation6], 1
    %10089 = vsyncpa [#allocation9], 1
    %10090 = vsyncpa [#allocation4], 1

</llo_original>
